<compile_context>
chip_gen: v7x
topology: tpu7x:2x2x1
jax: 0.10.0
libtpu: 0.0.40
codegen_flags: <defaults>
</compile_context>

<pallas_src>
import functools

import jax
import jax.numpy as jnp
import numpy as np
from jax.experimental import pallas as pl
from jax.experimental.pallas import tpu as pltpu


_TAPS3 = tuple((dy, dx) for dy in range(3) for dx in range(3))


def _fused_encoder_kernel(
    corr_ref,     # (1, HW, Cc)   correlation volume, flattened spatially
    patch_ref,    # (1, HW, 128)  7x7x2 im2col of flow, zero-padded 98 -> 128
    wc1_ref,      # (Cc, 96)      convc1 weight (1x1)
    bc1_ref,      # (1, 96)
    wf1_ref,      # (128, 64)     convf1 weight, im2col-flattened + padded
    bf1_ref,      # (1, 64)
    wf2_ref,      # (9, 64, 32)   convf2 weight per tap
    bf2_ref,      # (1, 32)
    wcv_ref,      # (9, 128, 128) final conv weight per tap, Cout padded 80->128
    bcv_ref,      # (1, 128)      final conv bias, padded 80->128
    out_ref,      # (1, HW, 128)  lane-dense output (82 real channels)
    flo_pad,      # VMEM scratch (H+2, W+2, 64)  halo for convf2
    cf_pad,       # VMEM scratch (H+2, W+2, 128) halo for final conv (= cor_flo)
    *, H, W,
):
    HW = H * W
    f32 = jnp.float32

    # ---- convc1 (1x1, Cc -> 96) + ReLU : one MXU matmul -------------------
    cor = jnp.dot(corr_ref[0].astype(f32), wc1_ref[...].astype(f32),
                  preferred_element_type=f32)
    cor = jnp.maximum(cor + bc1_ref[...], 0.0)                    # (HW, 96)

    # ---- convf1 (7x7, 2 -> 64) + ReLU : single im2col matmul (K = 128) ----
    flo = jnp.dot(patch_ref[0].astype(f32), wf1_ref[...].astype(f32),
                  preferred_element_type=f32)
    flo = jnp.maximum(flo + bf1_ref[...], 0.0)                    # (HW, 64)

    # Keep flo in a zero-halo'd VMEM buffer so the 3x3 conv reads shifted
    # windows directly (no HBM round-trip, no wrapper pad).
    flo_pad[...] = jnp.zeros(flo_pad.shape, f32)
    flo_pad[1:H + 1, 1:W + 1, :] = flo.reshape(H, W, 64)

    # ---- convf2 (3x3, 64 -> 32) + ReLU : 9 taps, contraction dim 64 -------
    acc2 = jnp.zeros((HW, 32), f32)
    for t, (dy, dx) in enumerate(_TAPS3):
        patch = flo_pad[dy:dy + H, dx:dx + W, :].reshape(HW, 64)
        acc2 = acc2 + jnp.dot(patch, wf2_ref[t], preferred_element_type=f32)
    flo2 = jnp.maximum(acc2 + bf2_ref[...], 0.0)                  # (HW, 32)

    # ---- cor_flo concat: write both halves into one 128-lane halo buffer --
    cf_pad[...] = jnp.zeros(cf_pad.shape, f32)
    cf_pad[1:H + 1, 1:W + 1, 0:96] = cor.reshape(H, W, 96)
    cf_pad[1:H + 1, 1:W + 1, 96:128] = flo2.reshape(H, W, 32)

    # ---- conv (3x3, 128 -> 80, padded to 128) + ReLU -----------------------
    acc3 = jnp.zeros((HW, 128), f32)
    for t, (dy, dx) in enumerate(_TAPS3):
        patch = cf_pad[dy:dy + H, dx:dx + W, :].reshape(HW, 128)
        acc3 = acc3 + jnp.dot(patch, wcv_ref[t], preferred_element_type=f32)
    out = jnp.maximum(acc3 + bcv_ref[...], 0.0)                   # (HW, 128)

    # Lane-dense 128-wide store (channels 80.. are exactly zero because the
    # weight/bias columns were zero-padded), then drop the raw flow
    # passthrough into channels [80:82].  The centre tap (dy=dx=3) of the 7x7
    # im2col patches is the original flow, at patch channels [48:50].
    out_ref[0, :, :] = out.astype(out_ref.dtype)
    out_ref[0, :, 80:82] = patch_ref[0, :, 48:50].astype(out_ref.dtype)


def init_params(key, cor_planes):
    """Deterministic parameter init. Weights stored as (K, K, Cin, Cout) [HWIO]."""
    specs = {
        "convc1": (1, cor_planes, 96),
        "convf1": (7, 2, 64),
        "convf2": (3, 64, 32),
        "conv":   (3, 128, 80),
    }
    params = {}
    keys = jax.random.split(key, 2 * len(specs))
    for i, (name, (k, cin, cout)) in enumerate(specs.items()):
        fan_in = k * k * cin
        bound = 1.0 / np.sqrt(fan_in)
        params[name + "_w"] = jax.random.uniform(
            keys[2 * i], (k, k, cin, cout), jnp.float32, -bound, bound
        )
        params[name + "_b"] = jax.random.uniform(
            keys[2 * i + 1], (cout,), jnp.float32, -bound, bound
        )
    return params


def small_motion_encoder(params, flow_nchw, corr_nchw):
    """Matches SmallMotionEncoder.forward. Inputs/outputs are NCHW like PyTorch."""
    N, _, H, W = flow_nchw.shape
    Cc = corr_nchw.shape[1]
    HW = H * W

    flow = jnp.transpose(flow_nchw, (0, 2, 3, 1))         # (N, H, W, 2)
    corr = jnp.transpose(corr_nchw, (0, 2, 3, 1))         # (N, H, W, Cc)

    # im2col for convf1 (7x7, Cin=2): channel order (dy, dx, c); pad 98 -> 128
    # so the in-kernel matmul has a dense, lane-aligned contraction dim.
    fp = jnp.pad(flow, ((0, 0), (3, 3), (3, 3), (0, 0)))
    patches = jnp.concatenate(
        [fp[:, dy:dy + H, dx:dx + W, :] for dy in range(7) for dx in range(7)],
        axis=-1,
    )                                                      # (N, H, W, 98)
    patches = jnp.pad(patches, ((0, 0), (0, 0), (0, 0), (0, 128 - 98)))
    patches2d = patches.reshape(N, HW, 128)
    corr2d = corr.reshape(N, HW, Cc)

    # Pre-flatten weights into dense 2-D / 3-D MXU operands.
    wc1 = params["convc1_w"].reshape(Cc, 96)
    wf1 = jnp.pad(params["convf1_w"].reshape(98, 64), ((0, 128 - 98), (0, 0)))
    wf2 = params["convf2_w"].reshape(9, 64, 32)
    wcv = jnp.pad(params["conv_w"], ((0, 0), (0, 0), (0, 0), (0, 48))).reshape(9, 128, 128)
    bc1 = params["convc1_b"].reshape(1, 96)
    bf1 = params["convf1_b"].reshape(1, 64)
    bf2 = params["convf2_b"].reshape(1, 32)
    bcv = jnp.pad(params["conv_b"], (0, 48)).reshape(1, 128)

    kernel = functools.partial(_fused_encoder_kernel, H=H, W=W)
    out128 = pl.pallas_call(
        kernel,
        out_shape=jax.ShapeDtypeStruct((N, HW, 128), flow_nchw.dtype),
        grid=(N,),
        in_specs=[
            pl.BlockSpec((1, HW, Cc), lambda n: (n, 0, 0)),
            pl.BlockSpec((1, HW, 128), lambda n: (n, 0, 0)),
            pl.BlockSpec((Cc, 96), lambda n: (0, 0)),
            pl.BlockSpec((1, 96), lambda n: (0, 0)),
            pl.BlockSpec((128, 64), lambda n: (0, 0)),
            pl.BlockSpec((1, 64), lambda n: (0, 0)),
            pl.BlockSpec((9, 64, 32), lambda n: (0, 0, 0)),
            pl.BlockSpec((1, 32), lambda n: (0, 0)),
            pl.BlockSpec((9, 128, 128), lambda n: (0, 0, 0)),
            pl.BlockSpec((1, 128), lambda n: (0, 0)),
        ],
        out_specs=pl.BlockSpec((1, HW, 128), lambda n: (n, 0, 0)),
        scratch_shapes=[
            pltpu.VMEM((H + 2, W + 2, 64), jnp.float32),
            pltpu.VMEM((H + 2, W + 2, 128), jnp.float32),
        ],
        compiler_params=pltpu.CompilerParams(dimension_semantics=("parallel",)),
    )(corr2d, patches2d, wc1, bc1, wf1, bf1, wf2, bf2, wcv, bcv)

    # TODO(synk): at real DEQ-Flow resolutions add a spatial grid axis
    # (tile H*W) so v7x's two TensorCores both get work and VMEM stays bounded.
    out = out128[:, :, :82].reshape(N, H, W, 82)
    return jnp.transpose(out, (0, 3, 1, 2))                # back to NCHW


# ----------------------------- reference ------------------------------------
def _ref_conv(x, w, b, relu=True):
    y = jax.lax.conv_general_dilated(
        x, w, window_strides=(1, 1), padding="SAME",
        dimension_numbers=("NHWC", "HWIO", "NHWC"),
    ) + b
    return jnp.maximum(y, 0.0) if relu else y


def _reference(params, flow_nchw, corr_nchw):
    flow = jnp.transpose(flow_nchw, (0, 2, 3, 1))
    corr = jnp.transpose(corr_nchw, (0, 2, 3, 1))
    cor = _ref_conv(corr, params["convc1_w"], params["convc1_b"])
    flo = _ref_conv(flow, params["convf1_w"], params["convf1_b"])
    flo = _ref_conv(flo, params["convf2_w"], params["convf2_b"])
    cor_flo = jnp.concatenate([cor, flo], axis=-1)
    out = _ref_conv(cor_flo, params["conv_w"], params["conv_b"])
    out = jnp.concatenate([out, flow], axis=-1)
    return jnp.transpose(out, (0, 3, 1, 2))


if __name__ == "__main__":
    # args.corr_levels = 1, args.corr_radius = 1 -> cor_planes = 1 * (2*1+1)**2 = 9
    corr_levels, corr_radius = 1, 1
    cor_planes = corr_levels * (2 * corr_radius + 1) ** 2
    N, H, W = 2, 16, 16

    key = jax.random.PRNGKey(0)
    k_params, k_flow, k_corr = jax.random.split(key, 3)
    params = init_params(k_params, cor_planes)
    flow = jax.random.normal(k_flow, (N, 2, H, W), jnp.float32)
    corr = jax.random.normal(k_corr, (N, cor_planes, H, W), jnp.float32)

    out = jax.block_until_ready(small_motion_encoder(params, flow, corr))
    assert out.shape == (N, 82, H, W), out.shape

    ref = jax.block_until_ready(_reference(params, flow, corr))
    np.testing.assert_allclose(np.asarray(out), np.asarray(ref), rtol=1e-4, atol=1e-4)

    print("KERNEL_OK")
</pallas_src>

<mosaic_0001>
module attributes {stable_mosaic.version = 11 : i64} {
  func.func @_fused_encoder_kernel(%arg0: i32, %arg1: memref<1x256x9xf32, #tpu.memory_space<vmem>>, %arg2: memref<1x256x128xf32, #tpu.memory_space<vmem>>, %arg3: memref<9x96xf32, #tpu.memory_space<vmem>>, %arg4: memref<1x96xf32, #tpu.memory_space<vmem>>, %arg5: memref<128x64xf32, #tpu.memory_space<vmem>>, %arg6: memref<1x64xf32, #tpu.memory_space<vmem>>, %arg7: memref<9x64x32xf32, #tpu.memory_space<vmem>>, %arg8: memref<1x32xf32, #tpu.memory_space<vmem>>, %arg9: memref<9x128x128xf32, #tpu.memory_space<vmem>>, %arg10: memref<1x128xf32, #tpu.memory_space<vmem>>, %arg11: memref<1x256x128xf32, #tpu.memory_space<vmem>>, %arg12: memref<18x18x64xf32, #tpu.memory_space<vmem>>, %arg13: memref<18x18x128xf32, #tpu.memory_space<vmem>>) attributes {dimension_semantics = [#tpu.dimension_semantics<parallel>], iteration_bounds = array<i64: 2>, scalar_prefetch = 0 : i64, scratch_operands = 2 : i64, tpu.core_type = #tpu.core_type<tc>, window_params = [{transform_indices = @transform_0, window_bounds = array<i64: 1, 256, 9>}, {transform_indices = @transform_1, window_bounds = array<i64: 1, 256, 128>}, {pipeline_mode = #tpu.pipeline_mode<synchronous>, transform_indices = @transform_2, window_bounds = array<i64: 9, 96>}, {pipeline_mode = #tpu.pipeline_mode<synchronous>, transform_indices = @transform_3, window_bounds = array<i64: 1, 96>}, {pipeline_mode = #tpu.pipeline_mode<synchronous>, transform_indices = @transform_4, window_bounds = array<i64: 128, 64>}, {pipeline_mode = #tpu.pipeline_mode<synchronous>, transform_indices = @transform_5, window_bounds = array<i64: 1, 64>}, {pipeline_mode = #tpu.pipeline_mode<synchronous>, transform_indices = @transform_6, window_bounds = array<i64: 9, 64, 32>}, {pipeline_mode = #tpu.pipeline_mode<synchronous>, transform_indices = @transform_7, window_bounds = array<i64: 1, 32>}, {pipeline_mode = #tpu.pipeline_mode<synchronous>, transform_indices = @transform_8, window_bounds = array<i64: 9, 128, 128>}, {pipeline_mode = #tpu.pipeline_mode<synchronous>, transform_indices = @transform_9, window_bounds = array<i64: 1, 128>}, {transform_indices = @transform_10, window_bounds = array<i64: 1, 256, 128>}]} {
    %c0 = arith.constant 0 : index
    %c0_0 = arith.constant 0 : index
    %c0_1 = arith.constant 0 : index
    %0 = vector.load %arg1[%c0, %c0_0, %c0_1] : memref<1x256x9xf32, #tpu.memory_space<vmem>>, vector<1x256x9xf32>
    %1 = vector.shape_cast %0 : vector<1x256x9xf32> to vector<256x9xf32>
    %c0_2 = arith.constant 0 : index
    %c0_3 = arith.constant 0 : index
    %2 = vector.load %arg3[%c0_2, %c0_3] : memref<9x96xf32, #tpu.memory_space<vmem>>, vector<9x96xf32>
    %cst = arith.constant dense<0.000000e+00> : vector<256x96xf32>
    %3 = tpu.matmul %1, %2, %cst {dimension_numbers = #tpu.dot_dimension_numbers<[1], [0], [0], [1], [0, 0, 1, 1], [], []>} : vector<256x9xf32>, vector<9x96xf32>, vector<256x96xf32> -> vector<256x96xf32>
    %c0_4 = arith.constant 0 : index
    %c0_5 = arith.constant 0 : index
    %4 = vector.load %arg4[%c0_4, %c0_5] : memref<1x96xf32, #tpu.memory_space<vmem>>, vector<1x96xf32>
    %5 = vector.broadcast %4 : vector<1x96xf32> to vector<256x96xf32>
    %6 = arith.addf %3, %5 : vector<256x96xf32>
    %cst_6 = arith.constant 0.000000e+00 : f32
    %7 = vector.broadcast %cst_6 : f32 to vector<256x96xf32>
    %8 = arith.maximumf %6, %7 : vector<256x96xf32>
    %c0_7 = arith.constant 0 : index
    %c0_8 = arith.constant 0 : index
    %c0_9 = arith.constant 0 : index
    %9 = vector.load %arg2[%c0_7, %c0_8, %c0_9] : memref<1x256x128xf32, #tpu.memory_space<vmem>>, vector<1x256x128xf32>
    %10 = vector.shape_cast %9 : vector<1x256x128xf32> to vector<256x128xf32>
    %c0_10 = arith.constant 0 : index
    %c0_11 = arith.constant 0 : index
    %11 = vector.load %arg5[%c0_10, %c0_11] : memref<128x64xf32, #tpu.memory_space<vmem>>, vector<128x64xf32>
    %cst_12 = arith.constant dense<0.000000e+00> : vector<256x64xf32>
    %12 = tpu.matmul %10, %11, %cst_12 {dimension_numbers = #tpu.dot_dimension_numbers<[1], [0], [0], [1], [0, 0, 1, 1], [], []>} : vector<256x128xf32>, vector<128x64xf32>, vector<256x64xf32> -> vector<256x64xf32>
    %c0_13 = arith.constant 0 : index
    %c0_14 = arith.constant 0 : index
    %13 = vector.load %arg6[%c0_13, %c0_14] : memref<1x64xf32, #tpu.memory_space<vmem>>, vector<1x64xf32>
    %14 = vector.broadcast %13 : vector<1x64xf32> to vector<256x64xf32>
    %15 = arith.addf %12, %14 : vector<256x64xf32>
    %cst_15 = arith.constant 0.000000e+00 : f32
    %16 = vector.broadcast %cst_15 : f32 to vector<256x64xf32>
    %17 = arith.maximumf %15, %16 : vector<256x64xf32>
    %cst_16 = arith.constant 0.000000e+00 : f32
    %18 = vector.broadcast %cst_16 : f32 to vector<18x18x64xf32>
    %c0_17 = arith.constant 0 : index
    %c0_18 = arith.constant 0 : index
    %c0_19 = arith.constant 0 : index
    %19 = vector.load %arg12[%c0_17, %c0_18, %c0_19] : memref<18x18x64xf32, #tpu.memory_space<vmem>>, vector<18x18x64xf32>
    tpu.vector_store %arg12[%c0_17, %c0_18, %c0_19], %18 {strides = array<i32>} : memref<18x18x64xf32, #tpu.memory_space<vmem>>, vector<18x18x64xf32>,
    %20 = vector.shape_cast %17 : vector<256x64xf32> to vector<16x16x64xf32>
    %c1 = arith.constant 1 : index
    %c1_20 = arith.constant 1 : index
    %c0_21 = arith.constant 0 : index
    %21 = vector.load %arg12[%c1, %c1_20, %c0_21] : memref<18x18x64xf32, #tpu.memory_space<vmem>>, vector<16x16x64xf32>
    tpu.vector_store %arg12[%c1, %c1_20, %c0_21], %20 {strides = array<i32>} : memref<18x18x64xf32, #tpu.memory_space<vmem>>, vector<16x16x64xf32>,
    %cst_22 = arith.constant 0.000000e+00 : f32
    %22 = vector.broadcast %cst_22 : f32 to vector<256x32xf32>
    %c0_23 = arith.constant 0 : index
    %c0_24 = arith.constant 0 : index
    %c0_25 = arith.constant 0 : index
    %23 = vector.load %arg12[%c0_23, %c0_24, %c0_25] : memref<18x18x64xf32, #tpu.memory_space<vmem>>, vector<16x16x64xf32>
    %24 = vector.shape_cast %23 : vector<16x16x64xf32> to vector<256x64xf32>
    %c0_26 = arith.constant 0 : index
    %c0_27 = arith.constant 0 : index
    %c0_28 = arith.constant 0 : index
    %25 = vector.load %arg7[%c0_26, %c0_27, %c0_28] : memref<9x64x32xf32, #tpu.memory_space<vmem>>, vector<1x64x32xf32>
    %26 = vector.shape_cast %25 : vector<1x64x32xf32> to vector<64x32xf32>
    %cst_29 = arith.constant dense<0.000000e+00> : vector<256x32xf32>
    %27 = tpu.matmul %24, %26, %cst_29 {dimension_numbers = #tpu.dot_dimension_numbers<[1], [0], [0], [1], [0, 0, 1, 1], [], []>} : vector<256x64xf32>, vector<64x32xf32>, vector<256x32xf32> -> vector<256x32xf32>
    %28 = arith.addf %22, %27 : vector<256x32xf32>
    %c0_30 = arith.constant 0 : index
    %c1_31 = arith.constant 1 : index
    %c0_32 = arith.constant 0 : index
    %29 = vector.load %arg12[%c0_30, %c1_31, %c0_32] : memref<18x18x64xf32, #tpu.memory_space<vmem>>, vector<16x16x64xf32>
    %30 = vector.shape_cast %29 : vector<16x16x64xf32> to vector<256x64xf32>
    %c1_33 = arith.constant 1 : index
    %c0_34 = arith.constant 0 : index
    %c0_35 = arith.constant 0 : index
    %31 = vector.load %arg7[%c1_33, %c0_34, %c0_35] : memref<9x64x32xf32, #tpu.memory_space<vmem>>, vector<1x64x32xf32>
    %32 = vector.shape_cast %31 : vector<1x64x32xf32> to vector<64x32xf32>
    %cst_36 = arith.constant dense<0.000000e+00> : vector<256x32xf32>
    %33 = tpu.matmul %30, %32, %cst_36 {dimension_numbers = #tpu.dot_dimension_numbers<[1], [0], [0], [1], [0, 0, 1, 1], [], []>} : vector<256x64xf32>, vector<64x32xf32>, vector<256x32xf32> -> vector<256x32xf32>
    %34 = arith.addf %28, %33 : vector<256x32xf32>
    %c0_37 = arith.constant 0 : index
    %c2 = arith.constant 2 : index
    %c0_38 = arith.constant 0 : index
    %35 = vector.load %arg12[%c0_37, %c2, %c0_38] : memref<18x18x64xf32, #tpu.memory_space<vmem>>, vector<16x16x64xf32>
    %36 = vector.shape_cast %35 : vector<16x16x64xf32> to vector<256x64xf32>
    %c2_39 = arith.constant 2 : index
    %c0_40 = arith.constant 0 : index
    %c0_41 = arith.constant 0 : index
    %37 = vector.load %arg7[%c2_39, %c0_40, %c0_41] : memref<9x64x32xf32, #tpu.memory_space<vmem>>, vector<1x64x32xf32>
    %38 = vector.shape_cast %37 : vector<1x64x32xf32> to vector<64x32xf32>
    %cst_42 = arith.constant dense<0.000000e+00> : vector<256x32xf32>
    %39 = tpu.matmul %36, %38, %cst_42 {dimension_numbers = #tpu.dot_dimension_numbers<[1], [0], [0], [1], [0, 0, 1, 1], [], []>} : vector<256x64xf32>, vector<64x32xf32>, vector<256x32xf32> -> vector<256x32xf32>
    %40 = arith.addf %34, %39 : vector<256x32xf32>
    %c1_43 = arith.constant 1 : index
    %c0_44 = arith.constant 0 : index
    %c0_45 = arith.constant 0 : index
    %41 = vector.load %arg12[%c1_43, %c0_44, %c0_45] : memref<18x18x64xf32, #tpu.memory_space<vmem>>, vector<16x16x64xf32>
    %42 = vector.shape_cast %41 : vector<16x16x64xf32> to vector<256x64xf32>
    %c3 = arith.constant 3 : index
    %c0_46 = arith.constant 0 : index
    %c0_47 = arith.constant 0 : index
    %43 = vector.load %arg7[%c3, %c0_46, %c0_47] : memref<9x64x32xf32, #tpu.memory_space<vmem>>, vector<1x64x32xf32>
    %44 = vector.shape_cast %43 : vector<1x64x32xf32> to vector<64x32xf32>
    %cst_48 = arith.constant dense<0.000000e+00> : vector<256x32xf32>
    %45 = tpu.matmul %42, %44, %cst_48 {dimension_numbers = #tpu.dot_dimension_numbers<[1], [0], [0], [1], [0, 0, 1, 1], [], []>} : vector<256x64xf32>, vector<64x32xf32>, vector<256x32xf32> -> vector<256x32xf32>
    %46 = arith.addf %40, %45 : vector<256x32xf32>
    %c1_49 = arith.constant 1 : index
    %c1_50 = arith.constant 1 : index
    %c0_51 = arith.constant 0 : index
    %47 = vector.load %arg12[%c1_49, %c1_50, %c0_51] : memref<18x18x64xf32, #tpu.memory_space<vmem>>, vector<16x16x64xf32>
    %48 = vector.shape_cast %47 : vector<16x16x64xf32> to vector<256x64xf32>
    %c4 = arith.constant 4 : index
    %c0_52 = arith.constant 0 : index
    %c0_53 = arith.constant 0 : index
    %49 = vector.load %arg7[%c4, %c0_52, %c0_53] : memref<9x64x32xf32, #tpu.memory_space<vmem>>, vector<1x64x32xf32>
    %50 = vector.shape_cast %49 : vector<1x64x32xf32> to vector<64x32xf32>
    %cst_54 = arith.constant dense<0.000000e+00> : vector<256x32xf32>
    %51 = tpu.matmul %48, %50, %cst_54 {dimension_numbers = #tpu.dot_dimension_numbers<[1], [0], [0], [1], [0, 0, 1, 1], [], []>} : vector<256x64xf32>, vector<64x32xf32>, vector<256x32xf32> -> vector<256x32xf32>
    %52 = arith.addf %46, %51 : vector<256x32xf32>
    %c1_55 = arith.constant 1 : index
    %c2_56 = arith.constant 2 : index
    %c0_57 = arith.constant 0 : index
    %53 = vector.load %arg12[%c1_55, %c2_56, %c0_57] : memref<18x18x64xf32, #tpu.memory_space<vmem>>, vector<16x16x64xf32>
    %54 = vector.shape_cast %53 : vector<16x16x64xf32> to vector<256x64xf32>
    %c5 = arith.constant 5 : index
    %c0_58 = arith.constant 0 : index
    %c0_59 = arith.constant 0 : index
    %55 = vector.load %arg7[%c5, %c0_58, %c0_59] : memref<9x64x32xf32, #tpu.memory_space<vmem>>, vector<1x64x32xf32>
    %56 = vector.shape_cast %55 : vector<1x64x32xf32> to vector<64x32xf32>
    %cst_60 = arith.constant dense<0.000000e+00> : vector<256x32xf32>
    %57 = tpu.matmul %54, %56, %cst_60 {dimension_numbers = #tpu.dot_dimension_numbers<[1], [0], [0], [1], [0, 0, 1, 1], [], []>} : vector<256x64xf32>, vector<64x32xf32>, vector<256x32xf32> -> vector<256x32xf32>
    %58 = arith.addf %52, %57 : vector<256x32xf32>
    %c2_61 = arith.constant 2 : index
    %c0_62 = arith.constant 0 : index
    %c0_63 = arith.constant 0 : index
    %59 = vector.load %arg12[%c2_61, %c0_62, %c0_63] : memref<18x18x64xf32, #tpu.memory_space<vmem>>, vector<16x16x64xf32>
    %60 = vector.shape_cast %59 : vector<16x16x64xf32> to vector<256x64xf32>
    %c6 = arith.constant 6 : index
    %c0_64 = arith.constant 0 : index
    %c0_65 = arith.constant 0 : index
    %61 = vector.load %arg7[%c6, %c0_64, %c0_65] : memref<9x64x32xf32, #tpu.memory_space<vmem>>, vector<1x64x32xf32>
    %62 = vector.shape_cast %61 : vector<1x64x32xf32> to vector<64x32xf32>
    %cst_66 = arith.constant dense<0.000000e+00> : vector<256x32xf32>
    %63 = tpu.matmul %60, %62, %cst_66 {dimension_numbers = #tpu.dot_dimension_numbers<[1], [0], [0], [1], [0, 0, 1, 1], [], []>} : vector<256x64xf32>, vector<64x32xf32>, vector<256x32xf32> -> vector<256x32xf32>
    %64 = arith.addf %58, %63 : vector<256x32xf32>
    %c2_67 = arith.constant 2 : index
    %c1_68 = arith.constant 1 : index
    %c0_69 = arith.constant 0 : index
    %65 = vector.load %arg12[%c2_67, %c1_68, %c0_69] : memref<18x18x64xf32, #tpu.memory_space<vmem>>, vector<16x16x64xf32>
    %66 = vector.shape_cast %65 : vector<16x16x64xf32> to vector<256x64xf32>
    %c7 = arith.constant 7 : index
    %c0_70 = arith.constant 0 : index
    %c0_71 = arith.constant 0 : index
    %67 = vector.load %arg7[%c7, %c0_70, %c0_71] : memref<9x64x32xf32, #tpu.memory_space<vmem>>, vector<1x64x32xf32>
    %68 = vector.shape_cast %67 : vector<1x64x32xf32> to vector<64x32xf32>
    %cst_72 = arith.constant dense<0.000000e+00> : vector<256x32xf32>
    %69 = tpu.matmul %66, %68, %cst_72 {dimension_numbers = #tpu.dot_dimension_numbers<[1], [0], [0], [1], [0, 0, 1, 1], [], []>} : vector<256x64xf32>, vector<64x32xf32>, vector<256x32xf32> -> vector<256x32xf32>
    %70 = arith.addf %64, %69 : vector<256x32xf32>
    %c2_73 = arith.constant 2 : index
    %c2_74 = arith.constant 2 : index
    %c0_75 = arith.constant 0 : index
    %71 = vector.load %arg12[%c2_73, %c2_74, %c0_75] : memref<18x18x64xf32, #tpu.memory_space<vmem>>, vector<16x16x64xf32>
    %72 = vector.shape_cast %71 : vector<16x16x64xf32> to vector<256x64xf32>
    %c8 = arith.constant 8 : index
    %c0_76 = arith.constant 0 : index
    %c0_77 = arith.constant 0 : index
    %73 = vector.load %arg7[%c8, %c0_76, %c0_77] : memref<9x64x32xf32, #tpu.memory_space<vmem>>, vector<1x64x32xf32>
    %74 = vector.shape_cast %73 : vector<1x64x32xf32> to vector<64x32xf32>
    %cst_78 = arith.constant dense<0.000000e+00> : vector<256x32xf32>
    %75 = tpu.matmul %72, %74, %cst_78 {dimension_numbers = #tpu.dot_dimension_numbers<[1], [0], [0], [1], [0, 0, 1, 1], [], []>} : vector<256x64xf32>, vector<64x32xf32>, vector<256x32xf32> -> vector<256x32xf32>
    %76 = arith.addf %70, %75 : vector<256x32xf32>
    %c0_79 = arith.constant 0 : index
    %c0_80 = arith.constant 0 : index
    %77 = vector.load %arg8[%c0_79, %c0_80] : memref<1x32xf32, #tpu.memory_space<vmem>>, vector<1x32xf32>
    %78 = vector.broadcast %77 : vector<1x32xf32> to vector<256x32xf32>
    %79 = arith.addf %76, %78 : vector<256x32xf32>
    %cst_81 = arith.constant 0.000000e+00 : f32
    %80 = vector.broadcast %cst_81 : f32 to vector<256x32xf32>
    %81 = arith.maximumf %79, %80 : vector<256x32xf32>
    %cst_82 = arith.constant 0.000000e+00 : f32
    %82 = vector.broadcast %cst_82 : f32 to vector<18x18x128xf32>
    %c0_83 = arith.constant 0 : index
    %c0_84 = arith.constant 0 : index
    %c0_85 = arith.constant 0 : index
    %83 = vector.load %arg13[%c0_83, %c0_84, %c0_85] : memref<18x18x128xf32, #tpu.memory_space<vmem>>, vector<18x18x128xf32>
    tpu.vector_store %arg13[%c0_83, %c0_84, %c0_85], %82 {strides = array<i32>} : memref<18x18x128xf32, #tpu.memory_space<vmem>>, vector<18x18x128xf32>,
    %84 = vector.shape_cast %8 : vector<256x96xf32> to vector<16x16x96xf32>
    %c1_86 = arith.constant 1 : index
    %c1_87 = arith.constant 1 : index
    %c0_88 = arith.constant 0 : index
    %85 = vector.load %arg13[%c1_86, %c1_87, %c0_88] : memref<18x18x128xf32, #tpu.memory_space<vmem>>, vector<16x16x96xf32>
    tpu.vector_store %arg13[%c1_86, %c1_87, %c0_88], %84 {strides = array<i32>} : memref<18x18x128xf32, #tpu.memory_space<vmem>>, vector<16x16x96xf32>,
    %86 = vector.shape_cast %81 : vector<256x32xf32> to vector<16x16x32xf32>
    %c1_89 = arith.constant 1 : index
    %c1_90 = arith.constant 1 : index
    %c96 = arith.constant 96 : index
    %87 = vector.load %arg13[%c1_89, %c1_90, %c96] : memref<18x18x128xf32, #tpu.memory_space<vmem>>, vector<16x16x32xf32>
    tpu.vector_store %arg13[%c1_89, %c1_90, %c96], %86 {strides = array<i32>} : memref<18x18x128xf32, #tpu.memory_space<vmem>>, vector<16x16x32xf32>,
    %cst_91 = arith.constant 0.000000e+00 : f32
    %88 = vector.broadcast %cst_91 : f32 to vector<256x128xf32>
    %c0_92 = arith.constant 0 : index
    %c0_93 = arith.constant 0 : index
    %c0_94 = arith.constant 0 : index
    %89 = vector.load %arg13[%c0_92, %c0_93, %c0_94] : memref<18x18x128xf32, #tpu.memory_space<vmem>>, vector<16x16x128xf32>
    %90 = vector.shape_cast %89 : vector<16x16x128xf32> to vector<256x128xf32>
    %c0_95 = arith.constant 0 : index
    %c0_96 = arith.constant 0 : index
    %c0_97 = arith.constant 0 : index
    %91 = vector.load %arg9[%c0_95, %c0_96, %c0_97] : memref<9x128x128xf32, #tpu.memory_space<vmem>>, vector<1x128x128xf32>
    %92 = vector.shape_cast %91 : vector<1x128x128xf32> to vector<128x128xf32>
    %cst_98 = arith.constant dense<0.000000e+00> : vector<256x128xf32>
    %93 = tpu.matmul %90, %92, %cst_98 {dimension_numbers = #tpu.dot_dimension_numbers<[1], [0], [0], [1], [0, 0, 1, 1], [], []>} : vector<256x128xf32>, vector<128x128xf32>, vector<256x128xf32> -> vector<256x128xf32>
    %94 = arith.addf %88, %93 : vector<256x128xf32>
    %c0_99 = arith.constant 0 : index
    %c1_100 = arith.constant 1 : index
    %c0_101 = arith.constant 0 : index
    %95 = vector.load %arg13[%c0_99, %c1_100, %c0_101] : memref<18x18x128xf32, #tpu.memory_space<vmem>>, vector<16x16x128xf32>
    %96 = vector.shape_cast %95 : vector<16x16x128xf32> to vector<256x128xf32>
    %c1_102 = arith.constant 1 : index
    %c0_103 = arith.constant 0 : index
    %c0_104 = arith.constant 0 : index
    %97 = vector.load %arg9[%c1_102, %c0_103, %c0_104] : memref<9x128x128xf32, #tpu.memory_space<vmem>>, vector<1x128x128xf32>
    %98 = vector.shape_cast %97 : vector<1x128x128xf32> to vector<128x128xf32>
    %cst_105 = arith.constant dense<0.000000e+00> : vector<256x128xf32>
    %99 = tpu.matmul %96, %98, %cst_105 {dimension_numbers = #tpu.dot_dimension_numbers<[1], [0], [0], [1], [0, 0, 1, 1], [], []>} : vector<256x128xf32>, vector<128x128xf32>, vector<256x128xf32> -> vector<256x128xf32>
    %100 = arith.addf %94, %99 : vector<256x128xf32>
    %c0_106 = arith.constant 0 : index
    %c2_107 = arith.constant 2 : index
    %c0_108 = arith.constant 0 : index
    %101 = vector.load %arg13[%c0_106, %c2_107, %c0_108] : memref<18x18x128xf32, #tpu.memory_space<vmem>>, vector<16x16x128xf32>
    %102 = vector.shape_cast %101 : vector<16x16x128xf32> to vector<256x128xf32>
    %c2_109 = arith.constant 2 : index
    %c0_110 = arith.constant 0 : index
    %c0_111 = arith.constant 0 : index
    %103 = vector.load %arg9[%c2_109, %c0_110, %c0_111] : memref<9x128x128xf32, #tpu.memory_space<vmem>>, vector<1x128x128xf32>
    %104 = vector.shape_cast %103 : vector<1x128x128xf32> to vector<128x128xf32>
    %cst_112 = arith.constant dense<0.000000e+00> : vector<256x128xf32>
    %105 = tpu.matmul %102, %104, %cst_112 {dimension_numbers = #tpu.dot_dimension_numbers<[1], [0], [0], [1], [0, 0, 1, 1], [], []>} : vector<256x128xf32>, vector<128x128xf32>, vector<256x128xf32> -> vector<256x128xf32>
    %106 = arith.addf %100, %105 : vector<256x128xf32>
    %c1_113 = arith.constant 1 : index
    %c0_114 = arith.constant 0 : index
    %c0_115 = arith.constant 0 : index
    %107 = vector.load %arg13[%c1_113, %c0_114, %c0_115] : memref<18x18x128xf32, #tpu.memory_space<vmem>>, vector<16x16x128xf32>
    %108 = vector.shape_cast %107 : vector<16x16x128xf32> to vector<256x128xf32>
    %c3_116 = arith.constant 3 : index
    %c0_117 = arith.constant 0 : index
    %c0_118 = arith.constant 0 : index
    %109 = vector.load %arg9[%c3_116, %c0_117, %c0_118] : memref<9x128x128xf32, #tpu.memory_space<vmem>>, vector<1x128x128xf32>
    %110 = vector.shape_cast %109 : vector<1x128x128xf32> to vector<128x128xf32>
    %cst_119 = arith.constant dense<0.000000e+00> : vector<256x128xf32>
    %111 = tpu.matmul %108, %110, %cst_119 {dimension_numbers = #tpu.dot_dimension_numbers<[1], [0], [0], [1], [0, 0, 1, 1], [], []>} : vector<256x128xf32>, vector<128x128xf32>, vector<256x128xf32> -> vector<256x128xf32>
    %112 = arith.addf %106, %111 : vector<256x128xf32>
    %c1_120 = arith.constant 1 : index
    %c1_121 = arith.constant 1 : index
    %c0_122 = arith.constant 0 : index
    %113 = vector.load %arg13[%c1_120, %c1_121, %c0_122] : memref<18x18x128xf32, #tpu.memory_space<vmem>>, vector<16x16x128xf32>
    %114 = vector.shape_cast %113 : vector<16x16x128xf32> to vector<256x128xf32>
    %c4_123 = arith.constant 4 : index
    %c0_124 = arith.constant 0 : index
    %c0_125 = arith.constant 0 : index
    %115 = vector.load %arg9[%c4_123, %c0_124, %c0_125] : memref<9x128x128xf32, #tpu.memory_space<vmem>>, vector<1x128x128xf32>
    %116 = vector.shape_cast %115 : vector<1x128x128xf32> to vector<128x128xf32>
    %cst_126 = arith.constant dense<0.000000e+00> : vector<256x128xf32>
    %117 = tpu.matmul %114, %116, %cst_126 {dimension_numbers = #tpu.dot_dimension_numbers<[1], [0], [0], [1], [0, 0, 1, 1], [], []>} : vector<256x128xf32>, vector<128x128xf32>, vector<256x128xf32> -> vector<256x128xf32>
    %118 = arith.addf %112, %117 : vector<256x128xf32>
    %c1_127 = arith.constant 1 : index
    %c2_128 = arith.constant 2 : index
    %c0_129 = arith.constant 0 : index
    %119 = vector.load %arg13[%c1_127, %c2_128, %c0_129] : memref<18x18x128xf32, #tpu.memory_space<vmem>>, vector<16x16x128xf32>
    %120 = vector.shape_cast %119 : vector<16x16x128xf32> to vector<256x128xf32>
    %c5_130 = arith.constant 5 : index
    %c0_131 = arith.constant 0 : index
    %c0_132 = arith.constant 0 : index
    %121 = vector.load %arg9[%c5_130, %c0_131, %c0_132] : memref<9x128x128xf32, #tpu.memory_space<vmem>>, vector<1x128x128xf32>
    %122 = vector.shape_cast %121 : vector<1x128x128xf32> to vector<128x128xf32>
    %cst_133 = arith.constant dense<0.000000e+00> : vector<256x128xf32>
    %123 = tpu.matmul %120, %122, %cst_133 {dimension_numbers = #tpu.dot_dimension_numbers<[1], [0], [0], [1], [0, 0, 1, 1], [], []>} : vector<256x128xf32>, vector<128x128xf32>, vector<256x128xf32> -> vector<256x128xf32>
    %124 = arith.addf %118, %123 : vector<256x128xf32>
    %c2_134 = arith.constant 2 : index
    %c0_135 = arith.constant 0 : index
    %c0_136 = arith.constant 0 : index
    %125 = vector.load %arg13[%c2_134, %c0_135, %c0_136] : memref<18x18x128xf32, #tpu.memory_space<vmem>>, vector<16x16x128xf32>
    %126 = vector.shape_cast %125 : vector<16x16x128xf32> to vector<256x128xf32>
    %c6_137 = arith.constant 6 : index
    %c0_138 = arith.constant 0 : index
    %c0_139 = arith.constant 0 : index
    %127 = vector.load %arg9[%c6_137, %c0_138, %c0_139] : memref<9x128x128xf32, #tpu.memory_space<vmem>>, vector<1x128x128xf32>
    %128 = vector.shape_cast %127 : vector<1x128x128xf32> to vector<128x128xf32>
    %cst_140 = arith.constant dense<0.000000e+00> : vector<256x128xf32>
    %129 = tpu.matmul %126, %128, %cst_140 {dimension_numbers = #tpu.dot_dimension_numbers<[1], [0], [0], [1], [0, 0, 1, 1], [], []>} : vector<256x128xf32>, vector<128x128xf32>, vector<256x128xf32> -> vector<256x128xf32>
    %130 = arith.addf %124, %129 : vector<256x128xf32>
    %c2_141 = arith.constant 2 : index
    %c1_142 = arith.constant 1 : index
    %c0_143 = arith.constant 0 : index
    %131 = vector.load %arg13[%c2_141, %c1_142, %c0_143] : memref<18x18x128xf32, #tpu.memory_space<vmem>>, vector<16x16x128xf32>
    %132 = vector.shape_cast %131 : vector<16x16x128xf32> to vector<256x128xf32>
    %c7_144 = arith.constant 7 : index
    %c0_145 = arith.constant 0 : index
    %c0_146 = arith.constant 0 : index
    %133 = vector.load %arg9[%c7_144, %c0_145, %c0_146] : memref<9x128x128xf32, #tpu.memory_space<vmem>>, vector<1x128x128xf32>
    %134 = vector.shape_cast %133 : vector<1x128x128xf32> to vector<128x128xf32>
    %cst_147 = arith.constant dense<0.000000e+00> : vector<256x128xf32>
    %135 = tpu.matmul %132, %134, %cst_147 {dimension_numbers = #tpu.dot_dimension_numbers<[1], [0], [0], [1], [0, 0, 1, 1], [], []>} : vector<256x128xf32>, vector<128x128xf32>, vector<256x128xf32> -> vector<256x128xf32>
    %136 = arith.addf %130, %135 : vector<256x128xf32>
    %c2_148 = arith.constant 2 : index
    %c2_149 = arith.constant 2 : index
    %c0_150 = arith.constant 0 : index
    %137 = vector.load %arg13[%c2_148, %c2_149, %c0_150] : memref<18x18x128xf32, #tpu.memory_space<vmem>>, vector<16x16x128xf32>
    %138 = vector.shape_cast %137 : vector<16x16x128xf32> to vector<256x128xf32>
    %c8_151 = arith.constant 8 : index
    %c0_152 = arith.constant 0 : index
    %c0_153 = arith.constant 0 : index
    %139 = vector.load %arg9[%c8_151, %c0_152, %c0_153] : memref<9x128x128xf32, #tpu.memory_space<vmem>>, vector<1x128x128xf32>
    %140 = vector.shape_cast %139 : vector<1x128x128xf32> to vector<128x128xf32>
    %cst_154 = arith.constant dense<0.000000e+00> : vector<256x128xf32>
    %141 = tpu.matmul %138, %140, %cst_154 {dimension_numbers = #tpu.dot_dimension_numbers<[1], [0], [0], [1], [0, 0, 1, 1], [], []>} : vector<256x128xf32>, vector<128x128xf32>, vector<256x128xf32> -> vector<256x128xf32>
    %142 = arith.addf %136, %141 : vector<256x128xf32>
    %c0_155 = arith.constant 0 : index
    %c0_156 = arith.constant 0 : index
    %143 = vector.load %arg10[%c0_155, %c0_156] : memref<1x128xf32, #tpu.memory_space<vmem>>, vector<1x128xf32>
    %144 = vector.broadcast %143 : vector<1x128xf32> to vector<256x128xf32>
    %145 = arith.addf %142, %144 : vector<256x128xf32>
    %cst_157 = arith.constant 0.000000e+00 : f32
    %146 = vector.broadcast %cst_157 : f32 to vector<256x128xf32>
    %147 = arith.maximumf %145, %146 : vector<256x128xf32>
    %c0_158 = arith.constant 0 : index
    %c0_159 = arith.constant 0 : index
    %c0_160 = arith.constant 0 : index
    %148 = vector.load %arg11[%c0_158, %c0_159, %c0_160] : memref<1x256x128xf32, #tpu.memory_space<vmem>>, vector<1x256x128xf32>
    %149 = vector.shape_cast %148 : vector<1x256x128xf32> to vector<256x128xf32>
    %150 = vector.shape_cast %147 : vector<256x128xf32> to vector<1x256x128xf32>
    tpu.vector_store %arg11[%c0_158, %c0_159, %c0_160], %150 {strides = array<i32>} : memref<1x256x128xf32, #tpu.memory_space<vmem>>, vector<1x256x128xf32>,
    %c0_161 = arith.constant 0 : index
    %c0_162 = arith.constant 0 : index
    %c48 = arith.constant 48 : index
    %151 = vector.load %arg2[%c0_161, %c0_162, %c48] : memref<1x256x128xf32, #tpu.memory_space<vmem>>, vector<1x256x2xf32>
    %152 = vector.shape_cast %151 : vector<1x256x2xf32> to vector<256x2xf32>
    %c0_163 = arith.constant 0 : index
    %c0_164 = arith.constant 0 : index
    %c80 = arith.constant 80 : index
    %153 = vector.load %arg11[%c0_163, %c0_164, %c80] : memref<1x256x128xf32, #tpu.memory_space<vmem>>, vector<1x256x2xf32>
    %154 = vector.shape_cast %153 : vector<1x256x2xf32> to vector<256x2xf32>
    %155 = vector.shape_cast %152 : vector<256x2xf32> to vector<1x256x2xf32>
    tpu.vector_store %arg11[%c0_163, %c0_164, %c80], %155 {strides = array<i32>} : memref<1x256x128xf32, #tpu.memory_space<vmem>>, vector<1x256x2xf32>,
    return
  }
  func.func @transform_0(%arg0: i32) -> (i32, i32, i32) {
    %c0_i32 = arith.constant 0 : i32
    %c0_i32_0 = arith.constant 0 : i32
    %c0_i32_1 = arith.constant 0 : i32
    return %arg0, %c0_i32, %c0_i32_0 : i32, i32, i32
  }
  func.func @transform_1(%arg0: i32) -> (i32, i32, i32) {
    %c0_i32 = arith.constant 0 : i32
    %c0_i32_0 = arith.constant 0 : i32
    %c0_i32_1 = arith.constant 0 : i32
    return %arg0, %c0_i32, %c0_i32_0 : i32, i32, i32
  }
  func.func @transform_2(%arg0: i32) -> (i32, i32) {
    %c0_i32 = arith.constant 0 : i32
    %c0_i32_0 = arith.constant 0 : i32
    %c0_i32_1 = arith.constant 0 : i32
    return %c0_i32, %c0_i32_0 : i32, i32
  }
  func.func @transform_3(%arg0: i32) -> (i32, i32) {
    %c0_i32 = arith.constant 0 : i32
    %c0_i32_0 = arith.constant 0 : i32
    %c0_i32_1 = arith.constant 0 : i32
    return %c0_i32, %c0_i32_0 : i32, i32
  }
  func.func @transform_4(%arg0: i32) -> (i32, i32) {
    %c0_i32 = arith.constant 0 : i32
    %c0_i32_0 = arith.constant 0 : i32
    %c0_i32_1 = arith.constant 0 : i32
    return %c0_i32, %c0_i32_0 : i32, i32
  }
  func.func @transform_5(%arg0: i32) -> (i32, i32) {
    %c0_i32 = arith.constant 0 : i32
    %c0_i32_0 = arith.constant 0 : i32
    %c0_i32_1 = arith.constant 0 : i32
    return %c0_i32, %c0_i32_0 : i32, i32
  }
  func.func @transform_6(%arg0: i32) -> (i32, i32, i32) {
    %c0_i32 = arith.constant 0 : i32
    %c0_i32_0 = arith.constant 0 : i32
    %c0_i32_1 = arith.constant 0 : i32
    %c0_i32_2 = arith.constant 0 : i32
    return %c0_i32, %c0_i32_0, %c0_i32_1 : i32, i32, i32
  }
  func.func @transform_7(%arg0: i32) -> (i32, i32) {
    %c0_i32 = arith.constant 0 : i32
    %c0_i32_0 = arith.constant 0 : i32
    %c0_i32_1 = arith.constant 0 : i32
    return %c0_i32, %c0_i32_0 : i32, i32
  }
  func.func @transform_8(%arg0: i32) -> (i32, i32, i32) {
    %c0_i32 = arith.constant 0 : i32
    %c0_i32_0 = arith.constant 0 : i32
    %c0_i32_1 = arith.constant 0 : i32
    %c0_i32_2 = arith.constant 0 : i32
    return %c0_i32, %c0_i32_0, %c0_i32_1 : i32, i32, i32
  }
  func.func @transform_9(%arg0: i32) -> (i32, i32) {
    %c0_i32 = arith.constant 0 : i32
    %c0_i32_0 = arith.constant 0 : i32
    %c0_i32_1 = arith.constant 0 : i32
    return %c0_i32, %c0_i32_0 : i32, i32
  }
  func.func @transform_10(%arg0: i32) -> (i32, i32, i32) {
    %c0_i32 = arith.constant 0 : i32
    %c0_i32_0 = arith.constant 0 : i32
    %c0_i32_1 = arith.constant 0 : i32
    return %arg0, %c0_i32, %c0_i32_0 : i32, i32, i32
  }
}

</mosaic_0001>

<llo_original>
// kernel: tpu_custom_call.1
$region0: #{tpu_custom_call.1}
  #allocation0 [shape = 'u32[]', space=smem, size = 0x4, offset = 0x4, fixed_abs, tag = 'smem constant byte address 0x4 - core index']
  #allocation1 [shape = 'u32[144,128]{1,0:T(1,128)}', space=vmem, size = 0x12000, scoped, tag = 'internal scratch']
  #allocation2 [shape = 'f32[18,18,64]{2,1,0:T(8,128)}', space=vmem, size = 0x36000, scoped, tag = 'scratch operand']
  #allocation3 [shape = 'f32[18,18,128]{2,1,0:T(8,128)}', space=vmem, size = 0x36000, scoped, tag = 'scratch operand']
  %s0 = inlined_call_operand.vmem [shape: f32[2,256,9], index: 0, kind: input, shape index: {}]
  %s1 = inlined_call_operand.hbm [shape: f32[2,256,128], index: 1, kind: input, shape index: {}]
  %s2 = inlined_call_operand.vmem [shape: f32[9,96], index: 2, kind: input, shape index: {}]
  %s3 = inlined_call_operand.vmem [shape: f32[1,96], index: 3, kind: input, shape index: {}]
  %s4 = inlined_call_operand.vmem [shape: f32[128,64], index: 4, kind: input, shape index: {}]
  %s5 = inlined_call_operand.vmem [shape: f32[1,64], index: 5, kind: input, shape index: {}]
  %s6 = inlined_call_operand.vmem [shape: f32[9,64,32], index: 6, kind: input, shape index: {}]
  %s7 = inlined_call_operand.vmem [shape: f32[1,32], index: 7, kind: input, shape index: {}]
  %s8 = inlined_call_operand.vmem [shape: f32[9,128,128], index: 8, kind: input, shape index: {}]
  %s9 = inlined_call_operand.vmem [shape: f32[1,128], index: 9, kind: input, shape index: {}]
  %s10 = inlined_call_operand.hbm [shape: f32[2,256,128], index: 10, kind: output, shape index: {}]
  %s11 = sld [smem:[#allocation0]]
  $region77: #{tpu_custom_call.1} parent=0
    _
  %s13 = ssub.s32 1, %s11
  %s14 = scalar_select 0, %s13, %s11
  $region1: #{tpu_custom_call.1} parent=0
    #allocation4 [shape = 'u8[262144]{0}', space=vmem, size = 0x40000, scoped, tag = 'input window, operand 1']
    #allocation5 [shape = 's32[2]{0}', space=sflag, size = 0x8, scoped, tag = 'scoped memory for tpu_custom_call.1']
    #allocation6 [shape = 's32[2]{0}', space=sflag, size = 0x8, scoped, tag = 'scoped memory for tpu_custom_call.1']
    #allocation7 [shape = 'u8[262144]{0}', space=vmem, size = 0x40000, scoped, tag = 'output window, operand 0']
    %15 = vsyncpa [#allocation5], 0
    %s16 = scalar_lea.sflag [#allocation5], 1
    %17 = vsyncpa %s16, 0
    %18 = vsyncpa [#allocation6], 0
    %s19 = scalar_lea.sflag [#allocation6], 1
    %20 = vsyncpa %s19, 0
    loop: start=0, step=1, limit=4
    $region2: #{tpu_custom_call.1} parent=1 // loop_pre_header
      _
    $region3: #{tpu_custom_call.1} parent=1 // loop_header
      %s22 = sphi 0, %s26
      %p23 = scmp.ge.s32.totalorder %s22, 4
      %s32 = sphi 0, %s34
      %s35 = sphi 0, %s32
      %s36 = sphi 0, %s35
      %s52 = sphi 0, %s36
      %s58 = sphi 0, %s60
      %s61 = sphi 0, %s58
      %s62 = sphi 0, %s61
      %s78 = sphi 0, %s62
      %s82 = sphi 0, %s82
      %s84 = sphi 0, %s82
      %s85 = sphi 0, %s84
      %s99 = sphi 0, %s85
      %s103 = sphi 0, %s103
      %s105 = sphi 0, %s103
      %s106 = sphi 0, %s105
      %s120 = sphi 0, %s106
      %s124 = sphi 0, %s124
      %s126 = sphi 0, %s124
      %s127 = sphi 0, %s126
      %s141 = sphi 0, %s127
      %s145 = sphi 0, %s145
      %s147 = sphi 0, %s145
      %s148 = sphi 0, %s147
      %s162 = sphi 0, %s148
      %s166 = sphi 0, %s166
      %s168 = sphi 0, %s166
      %s169 = sphi 0, %s168
      %s183 = sphi 0, %s169
      %s187 = sphi 0, %s187
      %s189 = sphi 0, %s187
      %s190 = sphi 0, %s189
      %s204 = sphi 0, %s190
      %s208 = sphi 0, %s208
      %s210 = sphi 0, %s208
      %s211 = sphi 0, %s210
      %s225 = sphi 0, %s211
      %s229 = sphi 0, %s229
      %s231 = sphi 0, %s229
      %s232 = sphi 0, %s231
      %s246 = sphi 0, %s232
      %s252 = sphi 0, %s254
      %s255 = sphi 0, %s252
      %s256 = sphi 0, %s255
      %s272 = sphi 0, %s256
    $region4: #{tpu_custom_call.1} parent=1 // loop_header_branch
      %25 = sbr.rel (%p23) target = $region8
    $region5: #{tpu_custom_call.1} parent=1 // loop_body
      %s27 = ssub.s32 %s22, 1
      %s28 = ssub.s32 %s22, 2
      %s29 = sadd.s32 %s22, 1
      %s30 = ssub.s32 %s22, %s29
      %p31 = scmp.eq.s32.totalorder %s30, 0
      %s33 = sadd.s32 %s32, 1
      %s34 = scalar_select %p31, %s32, %s33
      %p37 = pneg %p31
      %p38 = scmp.eq.s32.totalorder %s22, 1
      %p39 = por %p37, %p38
      %p40 = scmp.ne.s32.totalorder %s32, %s35
      %p41 = scmp.eq.s32.totalorder %s22, 0
      %p42 = por %p40, %p41
      %p43 = scmp.ne.s32.totalorder %s32, %s35
      %p44 = scmp.eq.s32.totalorder %s27, 1
      %p45 = por %p43, %p44
      %p46 = scmp.ne.s32.totalorder %s35, %s36
      %p47 = scmp.eq.s32.totalorder %s27, 0
      %p48 = por %p46, %p47
      %p49 = scmp.ne.s32.totalorder %s35, %s36
      %p50 = scmp.eq.s32.totalorder %s28, 1
      %p51 = por %p49, %p50
      %p53 = scmp.ne.s32.totalorder %s36, %s52
      %p54 = scmp.eq.s32.totalorder %s28, 0
      %p55 = por %p53, %p54
      %s56 = ssub.s32 %s22, %s29
      %p57 = scmp.eq.s32.totalorder %s56, 0
      %s59 = sadd.s32 %s58, 1
      %s60 = scalar_select %p57, %s58, %s59
      %p63 = pneg %p57
      %p64 = scmp.eq.s32.totalorder %s22, 1
      %p65 = por %p63, %p64
      %p66 = scmp.ne.s32.totalorder %s58, %s61
      %p67 = scmp.eq.s32.totalorder %s22, 0
      %p68 = por %p66, %p67
      %p69 = scmp.ne.s32.totalorder %s58, %s61
      %p70 = scmp.eq.s32.totalorder %s27, 1
      %p71 = por %p69, %p70
      %p72 = scmp.ne.s32.totalorder %s61, %s62
      %p73 = scmp.eq.s32.totalorder %s27, 0
      %p74 = por %p72, %p73
      %p75 = scmp.ne.s32.totalorder %s61, %s62
      %p76 = scmp.eq.s32.totalorder %s28, 1
      %p77 = por %p75, %p76
      %p79 = scmp.ne.s32.totalorder %s62, %s78
      %p80 = scmp.eq.s32.totalorder %s28, 0
      %p81 = por %p79, %p80
      %s83 = sadd.s32 %s82, 1
      %p86 = scmp.eq.s32.totalorder %s22, 1
      %p87 = scmp.ne.s32.totalorder %s82, %s84
      %p88 = scmp.eq.s32.totalorder %s22, 0
      %p89 = por %p87, %p88
      %p90 = scmp.ne.s32.totalorder %s82, %s84
      %p91 = scmp.eq.s32.totalorder %s27, 1
      %p92 = por %p90, %p91
      %p93 = scmp.ne.s32.totalorder %s84, %s85
      %p94 = scmp.eq.s32.totalorder %s27, 0
      %p95 = por %p93, %p94
      %p96 = scmp.ne.s32.totalorder %s84, %s85
      %p97 = scmp.eq.s32.totalorder %s28, 1
      %p98 = por %p96, %p97
      %p100 = scmp.ne.s32.totalorder %s85, %s99
      %p101 = scmp.eq.s32.totalorder %s28, 0
      %p102 = por %p100, %p101
      %s104 = sadd.s32 %s103, 1
      %p107 = scmp.eq.s32.totalorder %s22, 1
      %p108 = scmp.ne.s32.totalorder %s103, %s105
      %p109 = scmp.eq.s32.totalorder %s22, 0
      %p110 = por %p108, %p109
      %p111 = scmp.ne.s32.totalorder %s103, %s105
      %p112 = scmp.eq.s32.totalorder %s27, 1
      %p113 = por %p111, %p112
      %p114 = scmp.ne.s32.totalorder %s105, %s106
      %p115 = scmp.eq.s32.totalorder %s27, 0
      %p116 = por %p114, %p115
      %p117 = scmp.ne.s32.totalorder %s105, %s106
      %p118 = scmp.eq.s32.totalorder %s28, 1
      %p119 = por %p117, %p118
      %p121 = scmp.ne.s32.totalorder %s106, %s120
      %p122 = scmp.eq.s32.totalorder %s28, 0
      %p123 = por %p121, %p122
      %s125 = sadd.s32 %s124, 1
      %p128 = scmp.eq.s32.totalorder %s22, 1
      %p129 = scmp.ne.s32.totalorder %s124, %s126
      %p130 = scmp.eq.s32.totalorder %s22, 0
      %p131 = por %p129, %p130
      %p132 = scmp.ne.s32.totalorder %s124, %s126
      %p133 = scmp.eq.s32.totalorder %s27, 1
      %p134 = por %p132, %p133
      %p135 = scmp.ne.s32.totalorder %s126, %s127
      %p136 = scmp.eq.s32.totalorder %s27, 0
      %p137 = por %p135, %p136
      %p138 = scmp.ne.s32.totalorder %s126, %s127
      %p139 = scmp.eq.s32.totalorder %s28, 1
      %p140 = por %p138, %p139
      %p142 = scmp.ne.s32.totalorder %s127, %s141
      %p143 = scmp.eq.s32.totalorder %s28, 0
      %p144 = por %p142, %p143
      %s146 = sadd.s32 %s145, 1
      %p149 = scmp.eq.s32.totalorder %s22, 1
      %p150 = scmp.ne.s32.totalorder %s145, %s147
      %p151 = scmp.eq.s32.totalorder %s22, 0
      %p152 = por %p150, %p151
      %p153 = scmp.ne.s32.totalorder %s145, %s147
      %p154 = scmp.eq.s32.totalorder %s27, 1
      %p155 = por %p153, %p154
      %p156 = scmp.ne.s32.totalorder %s147, %s148
      %p157 = scmp.eq.s32.totalorder %s27, 0
      %p158 = por %p156, %p157
      %p159 = scmp.ne.s32.totalorder %s147, %s148
      %p160 = scmp.eq.s32.totalorder %s28, 1
      %p161 = por %p159, %p160
      %p163 = scmp.ne.s32.totalorder %s148, %s162
      %p164 = scmp.eq.s32.totalorder %s28, 0
      %p165 = por %p163, %p164
      %s167 = sadd.s32 %s166, 1
      %p170 = scmp.eq.s32.totalorder %s22, 1
      %p171 = scmp.ne.s32.totalorder %s166, %s168
      %p172 = scmp.eq.s32.totalorder %s22, 0
      %p173 = por %p171, %p172
      %p174 = scmp.ne.s32.totalorder %s166, %s168
      %p175 = scmp.eq.s32.totalorder %s27, 1
      %p176 = por %p174, %p175
      %p177 = scmp.ne.s32.totalorder %s168, %s169
      %p178 = scmp.eq.s32.totalorder %s27, 0
      %p179 = por %p177, %p178
      %p180 = scmp.ne.s32.totalorder %s168, %s169
      %p181 = scmp.eq.s32.totalorder %s28, 1
      %p182 = por %p180, %p181
      %p184 = scmp.ne.s32.totalorder %s169, %s183
      %p185 = scmp.eq.s32.totalorder %s28, 0
      %p186 = por %p184, %p185
      %s188 = sadd.s32 %s187, 1
      %p191 = scmp.eq.s32.totalorder %s22, 1
      %p192 = scmp.ne.s32.totalorder %s187, %s189
      %p193 = scmp.eq.s32.totalorder %s22, 0
      %p194 = por %p192, %p193
      %p195 = scmp.ne.s32.totalorder %s187, %s189
      %p196 = scmp.eq.s32.totalorder %s27, 1
      %p197 = por %p195, %p196
      %p198 = scmp.ne.s32.totalorder %s189, %s190
      %p199 = scmp.eq.s32.totalorder %s27, 0
      %p200 = por %p198, %p199
      %p201 = scmp.ne.s32.totalorder %s189, %s190
      %p202 = scmp.eq.s32.totalorder %s28, 1
      %p203 = por %p201, %p202
      %p205 = scmp.ne.s32.totalorder %s190, %s204
      %p206 = scmp.eq.s32.totalorder %s28, 0
      %p207 = por %p205, %p206
      %s209 = sadd.s32 %s208, 1
      %p212 = scmp.eq.s32.totalorder %s22, 1
      %p213 = scmp.ne.s32.totalorder %s208, %s210
      %p214 = scmp.eq.s32.totalorder %s22, 0
      %p215 = por %p213, %p214
      %p216 = scmp.ne.s32.totalorder %s208, %s210
      %p217 = scmp.eq.s32.totalorder %s27, 1
      %p218 = por %p216, %p217
      %p219 = scmp.ne.s32.totalorder %s210, %s211
      %p220 = scmp.eq.s32.totalorder %s27, 0
      %p221 = por %p219, %p220
      %p222 = scmp.ne.s32.totalorder %s210, %s211
      %p223 = scmp.eq.s32.totalorder %s28, 1
      %p224 = por %p222, %p223
      %p226 = scmp.ne.s32.totalorder %s211, %s225
      %p227 = scmp.eq.s32.totalorder %s28, 0
      %p228 = por %p226, %p227
      %s230 = sadd.s32 %s229, 1
      %p233 = scmp.eq.s32.totalorder %s22, 1
      %p234 = scmp.ne.s32.totalorder %s229, %s231
      %p235 = scmp.eq.s32.totalorder %s22, 0
      %p236 = por %p234, %p235
      %p237 = scmp.ne.s32.totalorder %s229, %s231
      %p238 = scmp.eq.s32.totalorder %s27, 1
      %p239 = por %p237, %p238
      %p240 = scmp.ne.s32.totalorder %s231, %s232
      %p241 = scmp.eq.s32.totalorder %s27, 0
      %p242 = por %p240, %p241
      %p243 = scmp.ne.s32.totalorder %s231, %s232
      %p244 = scmp.eq.s32.totalorder %s28, 1
      %p245 = por %p243, %p244
      %p247 = scmp.ne.s32.totalorder %s232, %s246
      %p248 = scmp.eq.s32.totalorder %s28, 0
      %p249 = por %p247, %p248
      %s250 = ssub.s32 %s22, %s29
      %p251 = scmp.eq.s32.totalorder %s250, 0
      %s253 = sadd.s32 %s252, 1
      %s254 = scalar_select %p251, %s252, %s253
      %p257 = pneg %p251
      %p258 = scmp.eq.s32.totalorder %s22, 1
      %p259 = por %p257, %p258
      %p260 = scmp.ne.s32.totalorder %s252, %s255
      %p261 = scmp.eq.s32.totalorder %s22, 0
      %p262 = por %p260, %p261
      %p263 = scmp.ne.s32.totalorder %s252, %s255
      %p264 = scmp.eq.s32.totalorder %s27, 1
      %p265 = por %p263, %p264
      %p266 = scmp.ne.s32.totalorder %s255, %s256
      %p267 = scmp.eq.s32.totalorder %s27, 0
      %p268 = por %p266, %p267
      %p269 = scmp.ne.s32.totalorder %s255, %s256
      %p270 = scmp.eq.s32.totalorder %s28, 1
      %p271 = por %p269, %p270
      %p273 = scmp.ne.s32.totalorder %s256, %s272
      %p274 = scmp.eq.s32.totalorder %s28, 0
      %p275 = por %p273, %p274
      %p276 = scmp.le.s32.totalorder 1, %s22
      %p277 = scmp.lt.s32.totalorder %s22, 3
      %p278 = pnand %p276, %p277
      %p279 = pneg %p278
      // Predicated region
      $region9: #{tpu_custom_call.1} parent=5 // pred_check
        _
      $region10: #{tpu_custom_call.1} parent=5 // pred_check_branch
        %281 = sbr.rel (%p278) target = $region12
      $region11: #{tpu_custom_call.1} parent=5 // pred_region
        %s282 = ssub.s32 %s22, 1
        // Predicated region
        $region13: #{tpu_custom_call.1} parent=11 // pred_check
          %p283 = pneg %p95
        $region14: #{tpu_custom_call.1} parent=11 // pred_check_branch
          %285 = sbr.rel (%p283) target = $region16
        $region15: #{tpu_custom_call.1} parent=11 // pred_region
          _
        $region16: #{tpu_custom_call.1} parent=11 // pred_fallthru
          _
        // Predicated region
        $region17: #{tpu_custom_call.1} parent=11 // pred_check
          %p286 = pneg %p116
        $region18: #{tpu_custom_call.1} parent=11 // pred_check_branch
          %288 = sbr.rel (%p286) target = $region20
        $region19: #{tpu_custom_call.1} parent=11 // pred_region
          _
        $region20: #{tpu_custom_call.1} parent=11 // pred_fallthru
          _
        // Predicated region
        $region21: #{tpu_custom_call.1} parent=11 // pred_check
          %p289 = pneg %p137
        $region22: #{tpu_custom_call.1} parent=11 // pred_check_branch
          %291 = sbr.rel (%p289) target = $region24
        $region23: #{tpu_custom_call.1} parent=11 // pred_region
          _
        $region24: #{tpu_custom_call.1} parent=11 // pred_fallthru
          _
        // Predicated region
        $region25: #{tpu_custom_call.1} parent=11 // pred_check
          %p292 = pneg %p158
        $region26: #{tpu_custom_call.1} parent=11 // pred_check_branch
          %294 = sbr.rel (%p292) target = $region28
        $region27: #{tpu_custom_call.1} parent=11 // pred_region
          _
        $region28: #{tpu_custom_call.1} parent=11 // pred_fallthru
          _
        // Predicated region
        $region29: #{tpu_custom_call.1} parent=11 // pred_check
          %p295 = pneg %p179
        $region30: #{tpu_custom_call.1} parent=11 // pred_check_branch
          %297 = sbr.rel (%p295) target = $region32
        $region31: #{tpu_custom_call.1} parent=11 // pred_region
          _
        $region32: #{tpu_custom_call.1} parent=11 // pred_fallthru
          _
        // Predicated region
        $region33: #{tpu_custom_call.1} parent=11 // pred_check
          %p298 = pneg %p200
        $region34: #{tpu_custom_call.1} parent=11 // pred_check_branch
          %300 = sbr.rel (%p298) target = $region36
        $region35: #{tpu_custom_call.1} parent=11 // pred_region
          _
        $region36: #{tpu_custom_call.1} parent=11 // pred_fallthru
          _
        // Predicated region
        $region37: #{tpu_custom_call.1} parent=11 // pred_check
          %p301 = pneg %p221
        $region38: #{tpu_custom_call.1} parent=11 // pred_check_branch
          %303 = sbr.rel (%p301) target = $region40
        $region39: #{tpu_custom_call.1} parent=11 // pred_region
          _
        $region40: #{tpu_custom_call.1} parent=11 // pred_fallthru
          _
        // Predicated region
        $region41: #{tpu_custom_call.1} parent=11 // pred_check
          %p304 = pneg %p242
        $region42: #{tpu_custom_call.1} parent=11 // pred_check_branch
          %306 = sbr.rel (%p304) target = $region44
        $region43: #{tpu_custom_call.1} parent=11 // pred_region
          _
        $region44: #{tpu_custom_call.1} parent=11 // pred_fallthru
          _
      $region12: #{tpu_custom_call.1} parent=5 // pred_fallthru
        _
      %p307 = scmp.lt.s32.totalorder %s22, 2
      // Predicated region
      $region45: #{tpu_custom_call.1} parent=5 // pred_check
        %p308 = pneg %p307
      $region46: #{tpu_custom_call.1} parent=5 // pred_check_branch
        %310 = sbr.rel (%p308) target = $region48
      $region47: #{tpu_custom_call.1} parent=5 // pred_region
        // Predicated region
        $region49: #{tpu_custom_call.1} parent=47 // pred_check
          %p311 = pneg %p42
        $region50: #{tpu_custom_call.1} parent=47 // pred_check_branch
          %313 = sbr.rel (%p311) target = $region52
        $region51: #{tpu_custom_call.1} parent=47 // pred_region
          %p314 = scmp.lt.s32.totalorder %s22, 1
          %s315 = scalar_select %p314, %s22, 1
          %s316 = smul.addr %s315, 32
          %s317 = smul.addr %s316, 8
          %s318 = scalar_lea.vmem %s0, %s317
        $region52: #{tpu_custom_call.1} parent=47 // pred_fallthru
          _
        // Predicated region
        $region53: #{tpu_custom_call.1} parent=47 // pred_check
          %p319 = pneg %p68
        $region54: #{tpu_custom_call.1} parent=47 // pred_check_branch
          %321 = sbr.rel (%p319) target = $region56
        $region55: #{tpu_custom_call.1} parent=47 // pred_region
          %s322 = sand.u32 %s58, 1
          %s323 = scalar_lea.sflag [#allocation5], %s322
          %s324 = sand.u32 %s58, 1
          %s325 = smul.addr %s324, 256
          %s326 = scalar_lea.vmem [#allocation4], %s325
          %s328 = ssub.s32 4096, 4096
          %329 = vsyncadd %s323, %s328
          %s330 = smul.addr %s22, 32
          %s331 = smul.addr %s330, 128
          %s332 = scalar_lea.hbm %s1, %s331
          %s333 = sshll.u32 %s326, 4
          %s334 = int_to_ptr.vmem [resolvable:$true] %s333
          %339 = dma.hbm_to_vmem [thread:$0]  %s332, 4096, %s334, %s323, 128, 128, 8
        $region56: #{tpu_custom_call.1} parent=47 // pred_fallthru
          _
      $region48: #{tpu_custom_call.1} parent=5 // pred_fallthru
        _
      %p340 = scmp.le.s32.totalorder 1, %s22
      %p341 = scmp.lt.s32.totalorder %s22, 3
      %p342 = pnand %p340, %p341
      %p343 = pneg %p342
      // Predicated region
      $region57: #{tpu_custom_call.1} parent=5 // pred_check
        _
      $region58: #{tpu_custom_call.1} parent=5 // pred_check_branch
        %345 = sbr.rel (%p342) target = $region60
      $region59: #{tpu_custom_call.1} parent=5 // pred_region
        %s346 = ssub.s32 %s22, 1
        %s347 = sand.u32 %s61, 1
        %s348 = scalar_lea.sflag [#allocation5], %s347
        %s349 = sand.u32 %s61, 1
        %s350 = smul.addr %s349, 256
        %s351 = scalar_lea.vmem [#allocation4], %s350
        // Predicated region
        $region61: #{tpu_custom_call.1} parent=59 // pred_check
          %p352 = pneg %p74
        $region62: #{tpu_custom_call.1} parent=59 // pred_check_branch
          %354 = sbr.rel (%p352) target = $region64
        $region63: #{tpu_custom_call.1} parent=59 // pred_region
          %355 = dma.done %s348, 4096
        $region64: #{tpu_custom_call.1} parent=59 // pred_fallthru
          _
        %p356 = scmp.lt.s32.totalorder %s27, 1
        %s357 = scalar_select %p356, %s27, 1
        %s358 = smul.addr %s357, 32
        %s359 = smul.addr %s358, 8
        %s360 = scalar_lea.vmem %s0, %s359
        %p361 = pneg %p48
        %p362 = pneg %p45
        %s363 = sand.u32 %s61, 1
        %s364 = scalar_lea.sflag [#allocation5], %s363
        %s365 = sand.u32 %s61, 1
        %s366 = smul.addr %s365, 256
        %s367 = scalar_lea.vmem [#allocation4], %s366
        %p368 = pneg %p74
        %p369 = pneg %p71
        %p370 = pneg %p95
        %p371 = pneg %p92
        %p372 = pneg %p116
        %p373 = pneg %p113
        %p374 = pneg %p137
        %p375 = pneg %p134
        %p376 = pneg %p158
        %p377 = pneg %p155
        %p378 = pneg %p179
        %p379 = pneg %p176
        %p380 = pneg %p200
        %p381 = pneg %p197
        %p382 = pneg %p221
        %p383 = pneg %p218
        %p384 = pneg %p242
        %p385 = pneg %p239
        %p386 = pneg %p268
        %p387 = pneg %p265
        %s388 = sand.u32 %s255, 1
        %s389 = scalar_lea.sflag [#allocation6], %s388
        %s390 = sand.u32 %s255, 1
        %s391 = smul.addr %s390, 256
        %s392 = scalar_lea.vmem [#allocation7], %s391
        %p393 = scmp.lt.s32.totalorder %s27, 1
        %s394 = scalar_select %p393, %s27, 1
        %s395 = smul.addr %s394, 32
        %s396 = smul.addr %s395, 8
        %s397 = scalar_lea.vmem %s0, %s396
        %v398 = vld [vmem:[%s397] sm:$0xff]
        %v399 = vld [vmem:[%s397 + $0x8] sm:$0xff]
        %v400 = vld [vmem:[%s397 + $0x10] sm:$0xff]
        %v401 = vld [vmem:[%s397 + $0x18] sm:$0xff]
        %v402 = vld [vmem:[%s397 + $0x20] sm:$0xff]
        %v403 = vld [vmem:[%s397 + $0x28] sm:$0xff]
        %v404 = vld [vmem:[%s397 + $0x30] sm:$0xff]
        %v405 = vld [vmem:[%s397 + $0x38] sm:$0xff]
        %v406 = vld [vmem:[%s397 + $0x40] sm:$0xff]
        %v407 = vld [vmem:[%s397 + $0x48] sm:$0xff]
        %v408 = vld [vmem:[%s397 + $0x50] sm:$0xff]
        %v409 = vld [vmem:[%s397 + $0x58] sm:$0xff]
        %v410 = vld [vmem:[%s397 + $0x60] sm:$0xff]
        %v411 = vld [vmem:[%s397 + $0x68] sm:$0xff]
        %v412 = vld [vmem:[%s397 + $0x70] sm:$0xff]
        %v413 = vld [vmem:[%s397 + $0x78] sm:$0xff]
        %v414 = vld [vmem:[%s397 + $0x80] sm:$0xff]
        %v415 = vld [vmem:[%s397 + $0x88] sm:$0xff]
        %v416 = vld [vmem:[%s397 + $0x90] sm:$0xff]
        %v417 = vld [vmem:[%s397 + $0x98] sm:$0xff]
        %v418 = vld [vmem:[%s397 + $0xa0] sm:$0xff]
        %v419 = vld [vmem:[%s397 + $0xa8] sm:$0xff]
        %v420 = vld [vmem:[%s397 + $0xb0] sm:$0xff]
        %v421 = vld [vmem:[%s397 + $0xb8] sm:$0xff]
        %v422 = vld [vmem:[%s397 + $0xc0] sm:$0xff]
        %v423 = vld [vmem:[%s397 + $0xc8] sm:$0xff]
        %v424 = vld [vmem:[%s397 + $0xd0] sm:$0xff]
        %v425 = vld [vmem:[%s397 + $0xd8] sm:$0xff]
        %v426 = vld [vmem:[%s397 + $0xe0] sm:$0xff]
        %v427 = vld [vmem:[%s397 + $0xe8] sm:$0xff]
        %v428 = vld [vmem:[%s397 + $0xf0] sm:$0xff]
        %v429 = vld [vmem:[%s397 + $0xf8] sm:$0xff]
        %v430 = vld [vmem:[%s2] sm:$0xff]
        %v431 = vld [vmem:[%s2 + $0x8] sm:$0x1]
        %v432 = vld [vmem:[%s3] sm:$0x1]
        %v434 = vlaneseq
        %v435 = vshrl.u32 %v434, 7
        %v436 = vsub.s32 0, %v435
        %v437 = vrot.slane %v432, %v436
        %vm439 = vcmask 72704
        %v441 = vsel %vm439, %v398, 0
        %v444 = vsel %vm439, %v399, 0
        %v447 = vsel %vm439, %v400, 0
        %v450 = vsel %vm439, %v401, 0
        %v453 = vsel %vm439, %v402, 0
        %v456 = vsel %vm439, %v403, 0
        %v459 = vsel %vm439, %v404, 0
        %v462 = vsel %vm439, %v405, 0
        %v465 = vsel %vm439, %v406, 0
        %v468 = vsel %vm439, %v407, 0
        %v471 = vsel %vm439, %v408, 0
        %v474 = vsel %vm439, %v409, 0
        %v477 = vsel %vm439, %v410, 0
        %v480 = vsel %vm439, %v411, 0
        %v483 = vsel %vm439, %v412, 0
        %v486 = vsel %vm439, %v413, 0
        %v489 = vsel %vm439, %v414, 0
        %v492 = vsel %vm439, %v415, 0
        %v495 = vsel %vm439, %v416, 0
        %v498 = vsel %vm439, %v417, 0
        %v501 = vsel %vm439, %v418, 0
        %v504 = vsel %vm439, %v419, 0
        %v507 = vsel %vm439, %v420, 0
        %v510 = vsel %vm439, %v421, 0
        %v513 = vsel %vm439, %v422, 0
        %v516 = vsel %vm439, %v423, 0
        %v519 = vsel %vm439, %v424, 0
        %v522 = vsel %vm439, %v425, 0
        %v525 = vsel %vm439, %v426, 0
        %v528 = vsel %vm439, %v427, 0
        %v531 = vsel %vm439, %v428, 0
        %v534 = vsel %vm439, %v429, 0
        %vm536 = vcmask 1040384
        %v538 = vsel %vm536, %v431, 0
        %540 = vmatprep.subr.mxu0 0.0
        %541 = vmatpush1.msra.mxu0 %v430
        %542 = vmatprep.subr.mxu0 0.0
        %543 = vmatpush1.msra.mxu0 %v538
        %544 = vmatprep.subr.mxu0 0.0
        %545 = vmatpush1.msra.mxu0 0.0
        %546 = vmatprep.subr.mxu0 0.0
        %547 = vmatpush1.msra.mxu0 0.0
        %548 = vmatprep.subr.mxu0 0.0
        %549 = vmatpush1.msra.mxu0 0.0
        %550 = vmatprep.subr.mxu0 0.0
        %551 = vmatpush1.msra.mxu0 0.0
        %552 = vmatprep.subr.mxu0 0.0
        %553 = vmatpush1.msra.mxu0 0.0
        %554 = vmatprep.subr.mxu0 0.0
        %555 = vmatpush1.msra.mxu0 0.0
        %556 = vmatprep.subr.mxu0 0.0
        %557 = vmatpush1.msra.mxu0 0.0
        %558 = vmatprep.subr.mxu0 0.0
        %559 = vmatpush1.msra.mxu0 0.0
        %560 = vmatprep.subr.mxu0 0.0
        %561 = vmatpush1.msra.mxu0 0.0
        %562 = vmatprep.subr.mxu0 0.0
        %563 = vmatpush1.msra.mxu0 0.0
        %564 = vmatprep.subr.mxu0 0.0
        %565 = vmatpush1.msra.mxu0 0.0
        %566 = vmatprep.subr.mxu0 0.0
        %567 = vmatpush1.msra.mxu0 0.0
        %568 = vmatprep.subr.mxu0 0.0
        %569 = vmatpush1.msra.mxu0 0.0
        %570 = vmatprep.subr.mxu0 0.0
        %571 = vmatpush1.msra.mxu0 0.0
        %572 = vmatprep.subr.mxu0 0.0
        %573 = vmatpush1.msra.mxu0 0.0
        %574 = vmatprep.subr.mxu0 0.0
        %575 = vmatpush1.msra.mxu0 0.0
        %576 = vmatprep.subr.mxu0 0.0
        %577 = vmatpush1.msra.mxu0 0.0
        %578 = vmatprep.subr.mxu0 0.0
        %579 = vmatpush1.msra.mxu0 0.0
        %580 = vmatprep.subr.mxu0 0.0
        %581 = vmatpush1.msra.mxu0 0.0
        %582 = vmatprep.subr.mxu0 0.0
        %583 = vmatpush1.msra.mxu0 0.0
        %584 = vmatprep.subr.mxu0 0.0
        %585 = vmatpush1.msra.mxu0 0.0
        %586 = vmatprep.subr.mxu0 0.0
        %587 = vmatpush1.msra.mxu0 0.0
        %588 = vmatprep.subr.mxu0 0.0
        %589 = vmatpush1.msra.mxu0 0.0
        %590 = vmatprep.subr.mxu0 0.0
        %591 = vmatpush1.msra.mxu0 0.0
        %592 = vmatprep.subr.mxu0 0.0
        %593 = vmatpush1.msra.mxu0 0.0
        %594 = vmatprep.subr.mxu0 0.0
        %595 = vmatpush1.msra.mxu0 0.0
        %596 = vmatprep.subr.mxu0 0.0
        %597 = vmatpush1.msra.mxu0 0.0
        %598 = vmatprep.subr.mxu0 0.0
        %599 = vmatpush1.msra.mxu0 0.0
        %600 = vmatprep.subr.mxu0 0.0
        %601 = vmatpush1.msra.mxu0 0.0
        %602 = vmatprep.subr.mxu0 0.0
        %603 = vmatpush1.msra.mxu0 0.0
        %604 = vmatprep.mubr.f32.mxu0 0.0
        %605 = vmatmul.mubr.f32.gmra.mrb[0].mxu0 %v441
        %v606 = vpop.f32.mrb[0].mxu0
        %v607 = vadd.f32 %v437, %v606
        %v608 = vpop.f32.mrb[0].mxu0
        %609 = vmatprep.mubr.f32.mxu0 0.0
        %610 = vmatmul.mubr.f32.gmra.mrb[0].mxu0 %v444
        %v611 = vpop.f32.mrb[0].mxu0
        %v612 = vadd.f32 %v437, %v611
        %v613 = vpop.f32.mrb[0].mxu0
        %614 = vmatprep.mubr.f32.mxu0 0.0
        %615 = vmatmul.mubr.f32.gmra.mrb[0].mxu0 %v447
        %v616 = vpop.f32.mrb[0].mxu0
        %v617 = vadd.f32 %v437, %v616
        %v618 = vpop.f32.mrb[0].mxu0
        %619 = vmatprep.mubr.f32.mxu0 0.0
        %620 = vmatmul.mubr.f32.gmra.mrb[0].mxu0 %v450
        %v621 = vpop.f32.mrb[0].mxu0
        %v622 = vadd.f32 %v437, %v621
        %v623 = vpop.f32.mrb[0].mxu0
        %624 = vmatprep.mubr.f32.mxu0 0.0
        %625 = vmatmul.mubr.f32.gmra.mrb[0].mxu0 %v453
        %v626 = vpop.f32.mrb[0].mxu0
        %v627 = vadd.f32 %v437, %v626
        %v628 = vpop.f32.mrb[0].mxu0
        %629 = vmatprep.mubr.f32.mxu0 0.0
        %630 = vmatmul.mubr.f32.gmra.mrb[0].mxu0 %v456
        %v631 = vpop.f32.mrb[0].mxu0
        %v632 = vadd.f32 %v437, %v631
        %v633 = vpop.f32.mrb[0].mxu0
        %634 = vmatprep.mubr.f32.mxu0 0.0
        %635 = vmatmul.mubr.f32.gmra.mrb[0].mxu0 %v459
        %v636 = vpop.f32.mrb[0].mxu0
        %v637 = vadd.f32 %v437, %v636
        %v638 = vpop.f32.mrb[0].mxu0
        %639 = vmatprep.mubr.f32.mxu0 0.0
        %640 = vmatmul.mubr.f32.gmra.mrb[0].mxu0 %v462
        %v641 = vpop.f32.mrb[0].mxu0
        %v642 = vadd.f32 %v437, %v641
        %v643 = vpop.f32.mrb[0].mxu0
        %644 = vmatprep.mubr.f32.mxu0 0.0
        %645 = vmatmul.mubr.f32.gmra.mrb[0].mxu0 %v465
        %v646 = vpop.f32.mrb[0].mxu0
        %v647 = vadd.f32 %v437, %v646
        %v648 = vpop.f32.mrb[0].mxu0
        %649 = vmatprep.mubr.f32.mxu0 0.0
        %650 = vmatmul.mubr.f32.gmra.mrb[0].mxu0 %v468
        %v651 = vpop.f32.mrb[0].mxu0
        %v652 = vadd.f32 %v437, %v651
        %v653 = vpop.f32.mrb[0].mxu0
        %654 = vmatprep.mubr.f32.mxu0 0.0
        %655 = vmatmul.mubr.f32.gmra.mrb[0].mxu0 %v471
        %v656 = vpop.f32.mrb[0].mxu0
        %v657 = vadd.f32 %v437, %v656
        %v658 = vpop.f32.mrb[0].mxu0
        %659 = vmatprep.mubr.f32.mxu0 0.0
        %660 = vmatmul.mubr.f32.gmra.mrb[0].mxu0 %v474
        %v661 = vpop.f32.mrb[0].mxu0
        %v662 = vadd.f32 %v437, %v661
        %v663 = vpop.f32.mrb[0].mxu0
        %664 = vmatprep.mubr.f32.mxu0 0.0
        %665 = vmatmul.mubr.f32.gmra.mrb[0].mxu0 %v477
        %v666 = vpop.f32.mrb[0].mxu0
        %v667 = vadd.f32 %v437, %v666
        %v668 = vpop.f32.mrb[0].mxu0
        %669 = vmatprep.mubr.f32.mxu0 0.0
        %670 = vmatmul.mubr.f32.gmra.mrb[0].mxu0 %v480
        %v671 = vpop.f32.mrb[0].mxu0
        %v672 = vadd.f32 %v437, %v671
        %v673 = vpop.f32.mrb[0].mxu0
        %674 = vmatprep.mubr.f32.mxu0 0.0
        %675 = vmatmul.mubr.f32.gmra.mrb[0].mxu0 %v483
        %v676 = vpop.f32.mrb[0].mxu0
        %v677 = vadd.f32 %v437, %v676
        %v678 = vpop.f32.mrb[0].mxu0
        %679 = vmatprep.mubr.f32.mxu0 0.0
        %680 = vmatmul.mubr.f32.gmra.mrb[0].mxu0 %v486
        %v681 = vpop.f32.mrb[0].mxu0
        %v682 = vadd.f32 %v437, %v681
        %v683 = vpop.f32.mrb[0].mxu0
        %684 = vmatprep.mubr.f32.mxu0 0.0
        %685 = vmatmul.mubr.f32.gmra.mrb[0].mxu0 %v489
        %v686 = vpop.f32.mrb[0].mxu0
        %v687 = vadd.f32 %v437, %v686
        %v688 = vpop.f32.mrb[0].mxu0
        %689 = vmatprep.mubr.f32.mxu0 0.0
        %690 = vmatmul.mubr.f32.gmra.mrb[0].mxu0 %v492
        %v691 = vpop.f32.mrb[0].mxu0
        %v692 = vadd.f32 %v437, %v691
        %v693 = vpop.f32.mrb[0].mxu0
        %694 = vmatprep.mubr.f32.mxu0 0.0
        %695 = vmatmul.mubr.f32.gmra.mrb[0].mxu0 %v495
        %v696 = vpop.f32.mrb[0].mxu0
        %v697 = vadd.f32 %v437, %v696
        %v698 = vpop.f32.mrb[0].mxu0
        %699 = vmatprep.mubr.f32.mxu0 0.0
        %700 = vmatmul.mubr.f32.gmra.mrb[0].mxu0 %v498
        %v701 = vpop.f32.mrb[0].mxu0
        %v702 = vadd.f32 %v437, %v701
        %v703 = vpop.f32.mrb[0].mxu0
        %704 = vmatprep.mubr.f32.mxu0 0.0
        %705 = vmatmul.mubr.f32.gmra.mrb[0].mxu0 %v501
        %v706 = vpop.f32.mrb[0].mxu0
        %v707 = vadd.f32 %v437, %v706
        %v708 = vpop.f32.mrb[0].mxu0
        %709 = vmatprep.mubr.f32.mxu0 0.0
        %710 = vmatmul.mubr.f32.gmra.mrb[0].mxu0 %v504
        %v711 = vpop.f32.mrb[0].mxu0
        %v712 = vadd.f32 %v437, %v711
        %v713 = vpop.f32.mrb[0].mxu0
        %714 = vmatprep.mubr.f32.mxu0 0.0
        %715 = vmatmul.mubr.f32.gmra.mrb[0].mxu0 %v507
        %v716 = vpop.f32.mrb[0].mxu0
        %v717 = vadd.f32 %v437, %v716
        %v718 = vpop.f32.mrb[0].mxu0
        %719 = vmatprep.mubr.f32.mxu0 0.0
        %720 = vmatmul.mubr.f32.gmra.mrb[0].mxu0 %v510
        %v721 = vpop.f32.mrb[0].mxu0
        %v722 = vadd.f32 %v437, %v721
        %v723 = vpop.f32.mrb[0].mxu0
        %724 = vmatprep.mubr.f32.mxu0 0.0
        %725 = vmatmul.mubr.f32.gmra.mrb[0].mxu0 %v513
        %v726 = vpop.f32.mrb[0].mxu0
        %v727 = vadd.f32 %v437, %v726
        %v728 = vpop.f32.mrb[0].mxu0
        %729 = vmatprep.mubr.f32.mxu0 0.0
        %730 = vmatmul.mubr.f32.gmra.mrb[0].mxu0 %v516
        %v731 = vpop.f32.mrb[0].mxu0
        %v732 = vadd.f32 %v437, %v731
        %v733 = vpop.f32.mrb[0].mxu0
        %734 = vmatprep.mubr.f32.mxu0 0.0
        %735 = vmatmul.mubr.f32.gmra.mrb[0].mxu0 %v519
        %v736 = vpop.f32.mrb[0].mxu0
        %v737 = vadd.f32 %v437, %v736
        %v738 = vpop.f32.mrb[0].mxu0
        %739 = vmatprep.mubr.f32.mxu0 0.0
        %740 = vmatmul.mubr.f32.gmra.mrb[0].mxu0 %v522
        %v741 = vpop.f32.mrb[0].mxu0
        %v742 = vadd.f32 %v437, %v741
        %v743 = vpop.f32.mrb[0].mxu0
        %744 = vmatprep.mubr.f32.mxu0 0.0
        %745 = vmatmul.mubr.f32.gmra.mrb[0].mxu0 %v525
        %v746 = vpop.f32.mrb[0].mxu0
        %v747 = vadd.f32 %v437, %v746
        %v748 = vpop.f32.mrb[0].mxu0
        %749 = vmatprep.mubr.f32.mxu0 0.0
        %750 = vmatmul.mubr.f32.gmra.mrb[0].mxu0 %v528
        %v751 = vpop.f32.mrb[0].mxu0
        %v752 = vadd.f32 %v437, %v751
        %v753 = vpop.f32.mrb[0].mxu0
        %754 = vmatprep.mubr.f32.mxu0 0.0
        %755 = vmatmul.mubr.f32.gmra.mrb[0].mxu0 %v531
        %v756 = vpop.f32.mrb[0].mxu0
        %v757 = vadd.f32 %v437, %v756
        %v758 = vpop.f32.mrb[0].mxu0
        %759 = vmatprep.mubr.f32.mxu0 0.0
        %760 = vmatmul.mubr.f32.gmra.mrb[0].mxu0 %v534
        %v761 = vpop.f32.mrb[0].mxu0
        %v762 = vadd.f32 %v437, %v761
        %v763 = vpop.f32.mrb[0].mxu0
        %764 = vdwg.mxu0
        %v765 = vmax.f32 %v607, 0.0
        %v766 = vmax.f32 %v612, 0.0
        %v767 = vmax.f32 %v617, 0.0
        %v768 = vmax.f32 %v622, 0.0
        %v769 = vmax.f32 %v627, 0.0
        %v770 = vmax.f32 %v632, 0.0
        %v771 = vmax.f32 %v637, 0.0
        %v772 = vmax.f32 %v642, 0.0
        %v773 = vmax.f32 %v647, 0.0
        %v774 = vmax.f32 %v652, 0.0
        %v775 = vmax.f32 %v657, 0.0
        %v776 = vmax.f32 %v662, 0.0
        %v777 = vmax.f32 %v667, 0.0
        %v778 = vmax.f32 %v672, 0.0
        %v779 = vmax.f32 %v677, 0.0
        %v780 = vmax.f32 %v682, 0.0
        %v781 = vmax.f32 %v687, 0.0
        %v782 = vmax.f32 %v692, 0.0
        %v783 = vmax.f32 %v697, 0.0
        %v784 = vmax.f32 %v702, 0.0
        %v785 = vmax.f32 %v707, 0.0
        %v786 = vmax.f32 %v712, 0.0
        %v787 = vmax.f32 %v717, 0.0
        %v788 = vmax.f32 %v722, 0.0
        %v789 = vmax.f32 %v727, 0.0
        %v790 = vmax.f32 %v732, 0.0
        %v791 = vmax.f32 %v737, 0.0
        %v792 = vmax.f32 %v742, 0.0
        %v793 = vmax.f32 %v747, 0.0
        %v794 = vmax.f32 %v752, 0.0
        %v795 = vmax.f32 %v757, 0.0
        %v796 = vmax.f32 %v762, 0.0
        %v797 = vld [vmem:[%s351] sm:$0xff]
        %v798 = vld [vmem:[%s351 + $0x8] sm:$0xff]
        %v799 = vld [vmem:[%s351 + $0x10] sm:$0xff]
        %v800 = vld [vmem:[%s351 + $0x18] sm:$0xff]
        %v801 = vld [vmem:[%s351 + $0x20] sm:$0xff]
        %v802 = vld [vmem:[%s351 + $0x28] sm:$0xff]
        %v803 = vld [vmem:[%s351 + $0x30] sm:$0xff]
        %v804 = vld [vmem:[%s351 + $0x38] sm:$0xff]
        %v805 = vld [vmem:[%s351 + $0x40] sm:$0xff]
        %v806 = vld [vmem:[%s351 + $0x48] sm:$0xff]
        %v807 = vld [vmem:[%s351 + $0x50] sm:$0xff]
        %v808 = vld [vmem:[%s351 + $0x58] sm:$0xff]
        %v809 = vld [vmem:[%s351 + $0x60] sm:$0xff]
        %v810 = vld [vmem:[%s351 + $0x68] sm:$0xff]
        %v811 = vld [vmem:[%s351 + $0x70] sm:$0xff]
        %v812 = vld [vmem:[%s351 + $0x78] sm:$0xff]
        %v813 = vld [vmem:[%s351 + $0x80] sm:$0xff]
        %v814 = vld [vmem:[%s351 + $0x88] sm:$0xff]
        %v815 = vld [vmem:[%s351 + $0x90] sm:$0xff]
        %v816 = vld [vmem:[%s351 + $0x98] sm:$0xff]
        %v817 = vld [vmem:[%s351 + $0xa0] sm:$0xff]
        %v818 = vld [vmem:[%s351 + $0xa8] sm:$0xff]
        %v819 = vld [vmem:[%s351 + $0xb0] sm:$0xff]
        %v820 = vld [vmem:[%s351 + $0xb8] sm:$0xff]
        %v821 = vld [vmem:[%s351 + $0xc0] sm:$0xff]
        %v822 = vld [vmem:[%s351 + $0xc8] sm:$0xff]
        %v823 = vld [vmem:[%s351 + $0xd0] sm:$0xff]
        %v824 = vld [vmem:[%s351 + $0xd8] sm:$0xff]
        %v825 = vld [vmem:[%s351 + $0xe0] sm:$0xff]
        %v826 = vld [vmem:[%s351 + $0xe8] sm:$0xff]
        %v827 = vld [vmem:[%s351 + $0xf0] sm:$0xff]
        %v828 = vld [vmem:[%s351 + $0xf8] sm:$0xff]
        %v829 = vld [vmem:[%s4] sm:$0xff]
        %v830 = vld [vmem:[%s4 + $0x8] sm:$0xff]
        %v831 = vld [vmem:[%s4 + $0x10] sm:$0xff]
        %v832 = vld [vmem:[%s4 + $0x18] sm:$0xff]
        %v833 = vld [vmem:[%s4 + $0x20] sm:$0xff]
        %v834 = vld [vmem:[%s4 + $0x28] sm:$0xff]
        %v835 = vld [vmem:[%s4 + $0x30] sm:$0xff]
        %v836 = vld [vmem:[%s4 + $0x38] sm:$0xff]
        %v837 = vld [vmem:[%s4 + $0x40] sm:$0xff]
        %v838 = vld [vmem:[%s4 + $0x48] sm:$0xff]
        %v839 = vld [vmem:[%s4 + $0x50] sm:$0xff]
        %v840 = vld [vmem:[%s4 + $0x58] sm:$0xff]
        %v841 = vld [vmem:[%s4 + $0x60] sm:$0xff]
        %v842 = vld [vmem:[%s4 + $0x68] sm:$0xff]
        %v843 = vld [vmem:[%s4 + $0x70] sm:$0xff]
        %v844 = vld [vmem:[%s4 + $0x78] sm:$0xff]
        %v845 = vld [vmem:[%s5] sm:$0x1]
        %v847 = vlaneseq
        %v848 = vshrl.u32 %v847, 7
        %v849 = vsub.s32 0, %v848
        %v850 = vrot.slane %v845, %v849
        %852 = vmatprep.subr.mxu0 0.0
        %853 = vmatpush1.msra.mxu0 %v829
        %854 = vmatprep.subr.mxu0 0.0
        %855 = vmatpush1.msra.mxu0 %v830
        %856 = vmatprep.subr.mxu0 0.0
        %857 = vmatpush1.msra.mxu0 %v831
        %858 = vmatprep.subr.mxu0 0.0
        %859 = vmatpush1.msra.mxu0 %v832
        %860 = vmatprep.subr.mxu0 0.0
        %861 = vmatpush1.msra.mxu0 %v833
        %862 = vmatprep.subr.mxu0 0.0
        %863 = vmatpush1.msra.mxu0 %v834
        %864 = vmatprep.subr.mxu0 0.0
        %865 = vmatpush1.msra.mxu0 %v835
        %866 = vmatprep.subr.mxu0 0.0
        %867 = vmatpush1.msra.mxu0 %v836
        %868 = vmatprep.subr.mxu0 0.0
        %869 = vmatpush1.msra.mxu0 %v837
        %870 = vmatprep.subr.mxu0 0.0
        %871 = vmatpush1.msra.mxu0 %v838
        %872 = vmatprep.subr.mxu0 0.0
        %873 = vmatpush1.msra.mxu0 %v839
        %874 = vmatprep.subr.mxu0 0.0
        %875 = vmatpush1.msra.mxu0 %v840
        %876 = vmatprep.subr.mxu0 0.0
        %877 = vmatpush1.msra.mxu0 %v841
        %878 = vmatprep.subr.mxu0 0.0
        %879 = vmatpush1.msra.mxu0 %v842
        %880 = vmatprep.subr.mxu0 0.0
        %881 = vmatpush1.msra.mxu0 %v843
        %882 = vmatprep.subr.mxu0 0.0
        %883 = vmatpush1.msra.mxu0 %v844
        %884 = vmatprep.subr.mxu0 0.0
        %885 = vmatpush1.msra.mxu0 0.0
        %886 = vmatprep.subr.mxu0 0.0
        %887 = vmatpush1.msra.mxu0 0.0
        %888 = vmatprep.subr.mxu0 0.0
        %889 = vmatpush1.msra.mxu0 0.0
        %890 = vmatprep.subr.mxu0 0.0
        %891 = vmatpush1.msra.mxu0 0.0
        %892 = vmatprep.subr.mxu0 0.0
        %893 = vmatpush1.msra.mxu0 0.0
        %894 = vmatprep.subr.mxu0 0.0
        %895 = vmatpush1.msra.mxu0 0.0
        %896 = vmatprep.subr.mxu0 0.0
        %897 = vmatpush1.msra.mxu0 0.0
        %898 = vmatprep.subr.mxu0 0.0
        %899 = vmatpush1.msra.mxu0 0.0
        %900 = vmatprep.subr.mxu0 0.0
        %901 = vmatpush1.msra.mxu0 0.0
        %902 = vmatprep.subr.mxu0 0.0
        %903 = vmatpush1.msra.mxu0 0.0
        %904 = vmatprep.subr.mxu0 0.0
        %905 = vmatpush1.msra.mxu0 0.0
        %906 = vmatprep.subr.mxu0 0.0
        %907 = vmatpush1.msra.mxu0 0.0
        %908 = vmatprep.subr.mxu0 0.0
        %909 = vmatpush1.msra.mxu0 0.0
        %910 = vmatprep.subr.mxu0 0.0
        %911 = vmatpush1.msra.mxu0 0.0
        %912 = vmatprep.subr.mxu0 0.0
        %913 = vmatpush1.msra.mxu0 0.0
        %914 = vmatprep.subr.mxu0 0.0
        %915 = vmatpush1.msra.mxu0 0.0
        %916 = vmatprep.mubr.f32.mxu0 0.0
        %917 = vmatmul.mubr.f32.gmra.mrb[0].mxu0 %v797
        %v918 = vpop.f32.mrb[0].mxu0
        %v919 = vadd.f32 %v850, %v918
        %v920 = vpop.f32.mrb[0].mxu0
        %921 = vmatprep.mubr.f32.mxu0 0.0
        %922 = vmatmul.mubr.f32.gmra.mrb[0].mxu0 %v798
        %v923 = vpop.f32.mrb[0].mxu0
        %v924 = vadd.f32 %v850, %v923
        %v925 = vpop.f32.mrb[0].mxu0
        %926 = vmatprep.mubr.f32.mxu0 0.0
        %927 = vmatmul.mubr.f32.gmra.mrb[0].mxu0 %v799
        %v928 = vpop.f32.mrb[0].mxu0
        %v929 = vadd.f32 %v850, %v928
        %v930 = vpop.f32.mrb[0].mxu0
        %931 = vmatprep.mubr.f32.mxu0 0.0
        %932 = vmatmul.mubr.f32.gmra.mrb[0].mxu0 %v800
        %v933 = vpop.f32.mrb[0].mxu0
        %v934 = vadd.f32 %v850, %v933
        %v935 = vpop.f32.mrb[0].mxu0
        %936 = vmatprep.mubr.f32.mxu0 0.0
        %937 = vmatmul.mubr.f32.gmra.mrb[0].mxu0 %v801
        %v938 = vpop.f32.mrb[0].mxu0
        %v939 = vadd.f32 %v850, %v938
        %v940 = vpop.f32.mrb[0].mxu0
        %941 = vmatprep.mubr.f32.mxu0 0.0
        %942 = vmatmul.mubr.f32.gmra.mrb[0].mxu0 %v802
        %v943 = vpop.f32.mrb[0].mxu0
        %v944 = vadd.f32 %v850, %v943
        %v945 = vpop.f32.mrb[0].mxu0
        %946 = vmatprep.mubr.f32.mxu0 0.0
        %947 = vmatmul.mubr.f32.gmra.mrb[0].mxu0 %v803
        %v948 = vpop.f32.mrb[0].mxu0
        %v949 = vadd.f32 %v850, %v948
        %v950 = vpop.f32.mrb[0].mxu0
        %951 = vmatprep.mubr.f32.mxu0 0.0
        %952 = vmatmul.mubr.f32.gmra.mrb[0].mxu0 %v804
        %v953 = vpop.f32.mrb[0].mxu0
        %v954 = vadd.f32 %v850, %v953
        %v955 = vpop.f32.mrb[0].mxu0
        %956 = vmatprep.mubr.f32.mxu0 0.0
        %957 = vmatmul.mubr.f32.gmra.mrb[0].mxu0 %v805
        %v958 = vpop.f32.mrb[0].mxu0
        %v959 = vadd.f32 %v850, %v958
        %v960 = vpop.f32.mrb[0].mxu0
        %961 = vmatprep.mubr.f32.mxu0 0.0
        %962 = vmatmul.mubr.f32.gmra.mrb[0].mxu0 %v806
        %v963 = vpop.f32.mrb[0].mxu0
        %v964 = vadd.f32 %v850, %v963
        %v965 = vpop.f32.mrb[0].mxu0
        %966 = vmatprep.mubr.f32.mxu0 0.0
        %967 = vmatmul.mubr.f32.gmra.mrb[0].mxu0 %v807
        %v968 = vpop.f32.mrb[0].mxu0
        %v969 = vadd.f32 %v850, %v968
        %v970 = vpop.f32.mrb[0].mxu0
        %971 = vmatprep.mubr.f32.mxu0 0.0
        %972 = vmatmul.mubr.f32.gmra.mrb[0].mxu0 %v808
        %v973 = vpop.f32.mrb[0].mxu0
        %v974 = vadd.f32 %v850, %v973
        %v975 = vpop.f32.mrb[0].mxu0
        %976 = vmatprep.mubr.f32.mxu0 0.0
        %977 = vmatmul.mubr.f32.gmra.mrb[0].mxu0 %v809
        %v978 = vpop.f32.mrb[0].mxu0
        %v979 = vadd.f32 %v850, %v978
        %v980 = vpop.f32.mrb[0].mxu0
        %981 = vmatprep.mubr.f32.mxu0 0.0
        %982 = vmatmul.mubr.f32.gmra.mrb[0].mxu0 %v810
        %v983 = vpop.f32.mrb[0].mxu0
        %v984 = vadd.f32 %v850, %v983
        %v985 = vpop.f32.mrb[0].mxu0
        %986 = vmatprep.mubr.f32.mxu0 0.0
        %987 = vmatmul.mubr.f32.gmra.mrb[0].mxu0 %v811
        %v988 = vpop.f32.mrb[0].mxu0
        %v989 = vadd.f32 %v850, %v988
        %v990 = vpop.f32.mrb[0].mxu0
        %991 = vmatprep.mubr.f32.mxu0 0.0
        %992 = vmatmul.mubr.f32.gmra.mrb[0].mxu0 %v812
        %v993 = vpop.f32.mrb[0].mxu0
        %v994 = vadd.f32 %v850, %v993
        %v995 = vpop.f32.mrb[0].mxu0
        %996 = vmatprep.mubr.f32.mxu0 0.0
        %997 = vmatmul.mubr.f32.gmra.mrb[0].mxu0 %v813
        %v998 = vpop.f32.mrb[0].mxu0
        %v999 = vadd.f32 %v850, %v998
        %v1000 = vpop.f32.mrb[0].mxu0
        %1001 = vmatprep.mubr.f32.mxu0 0.0
        %1002 = vmatmul.mubr.f32.gmra.mrb[0].mxu0 %v814
        %v1003 = vpop.f32.mrb[0].mxu0
        %v1004 = vadd.f32 %v850, %v1003
        %v1005 = vpop.f32.mrb[0].mxu0
        %1006 = vmatprep.mubr.f32.mxu0 0.0
        %1007 = vmatmul.mubr.f32.gmra.mrb[0].mxu0 %v815
        %v1008 = vpop.f32.mrb[0].mxu0
        %v1009 = vadd.f32 %v850, %v1008
        %v1010 = vpop.f32.mrb[0].mxu0
        %1011 = vmatprep.mubr.f32.mxu0 0.0
        %1012 = vmatmul.mubr.f32.gmra.mrb[0].mxu0 %v816
        %v1013 = vpop.f32.mrb[0].mxu0
        %v1014 = vadd.f32 %v850, %v1013
        %v1015 = vpop.f32.mrb[0].mxu0
        %1016 = vmatprep.mubr.f32.mxu0 0.0
        %1017 = vmatmul.mubr.f32.gmra.mrb[0].mxu0 %v817
        %v1018 = vpop.f32.mrb[0].mxu0
        %v1019 = vadd.f32 %v850, %v1018
        %v1020 = vpop.f32.mrb[0].mxu0
        %1021 = vmatprep.mubr.f32.mxu0 0.0
        %1022 = vmatmul.mubr.f32.gmra.mrb[0].mxu0 %v818
        %v1023 = vpop.f32.mrb[0].mxu0
        %v1024 = vadd.f32 %v850, %v1023
        %v1025 = vpop.f32.mrb[0].mxu0
        %1026 = vmatprep.mubr.f32.mxu0 0.0
        %1027 = vmatmul.mubr.f32.gmra.mrb[0].mxu0 %v819
        %v1028 = vpop.f32.mrb[0].mxu0
        %v1029 = vadd.f32 %v850, %v1028
        %v1030 = vpop.f32.mrb[0].mxu0
        %1031 = vmatprep.mubr.f32.mxu0 0.0
        %1032 = vmatmul.mubr.f32.gmra.mrb[0].mxu0 %v820
        %v1033 = vpop.f32.mrb[0].mxu0
        %v1034 = vadd.f32 %v850, %v1033
        %v1035 = vpop.f32.mrb[0].mxu0
        %1036 = vmatprep.mubr.f32.mxu0 0.0
        %1037 = vmatmul.mubr.f32.gmra.mrb[0].mxu0 %v821
        %v1038 = vpop.f32.mrb[0].mxu0
        %v1039 = vadd.f32 %v850, %v1038
        %v1040 = vpop.f32.mrb[0].mxu0
        %1041 = vmatprep.mubr.f32.mxu0 0.0
        %1042 = vmatmul.mubr.f32.gmra.mrb[0].mxu0 %v822
        %v1043 = vpop.f32.mrb[0].mxu0
        %v1044 = vadd.f32 %v850, %v1043
        %v1045 = vpop.f32.mrb[0].mxu0
        %1046 = vmatprep.mubr.f32.mxu0 0.0
        %1047 = vmatmul.mubr.f32.gmra.mrb[0].mxu0 %v823
        %v1048 = vpop.f32.mrb[0].mxu0
        %v1049 = vadd.f32 %v850, %v1048
        %v1050 = vpop.f32.mrb[0].mxu0
        %1051 = vmatprep.mubr.f32.mxu0 0.0
        %1052 = vmatmul.mubr.f32.gmra.mrb[0].mxu0 %v824
        %v1053 = vpop.f32.mrb[0].mxu0
        %v1054 = vadd.f32 %v850, %v1053
        %v1055 = vpop.f32.mrb[0].mxu0
        %1056 = vmatprep.mubr.f32.mxu0 0.0
        %1057 = vmatmul.mubr.f32.gmra.mrb[0].mxu0 %v825
        %v1058 = vpop.f32.mrb[0].mxu0
        %v1059 = vadd.f32 %v850, %v1058
        %v1060 = vpop.f32.mrb[0].mxu0
        %1061 = vmatprep.mubr.f32.mxu0 0.0
        %1062 = vmatmul.mubr.f32.gmra.mrb[0].mxu0 %v826
        %v1063 = vpop.f32.mrb[0].mxu0
        %v1064 = vadd.f32 %v850, %v1063
        %v1065 = vpop.f32.mrb[0].mxu0
        %1066 = vmatprep.mubr.f32.mxu0 0.0
        %1067 = vmatmul.mubr.f32.gmra.mrb[0].mxu0 %v827
        %v1068 = vpop.f32.mrb[0].mxu0
        %v1069 = vadd.f32 %v850, %v1068
        %v1070 = vpop.f32.mrb[0].mxu0
        %1071 = vmatprep.mubr.f32.mxu0 0.0
        %1072 = vmatmul.mubr.f32.gmra.mrb[0].mxu0 %v828
        %v1073 = vpop.f32.mrb[0].mxu0
        %v1074 = vadd.f32 %v850, %v1073
        %v1075 = vpop.f32.mrb[0].mxu0
        %1076 = vdwg.mxu0
        %v1077 = vmax.f32 %v919, 0.0
        %v1078 = vmax.f32 %v924, 0.0
        %v1079 = vmax.f32 %v929, 0.0
        %v1080 = vmax.f32 %v934, 0.0
        %v1081 = vmax.f32 %v939, 0.0
        %v1082 = vmax.f32 %v944, 0.0
        %v1083 = vmax.f32 %v949, 0.0
        %v1084 = vmax.f32 %v954, 0.0
        %v1085 = vmax.f32 %v959, 0.0
        %v1086 = vmax.f32 %v964, 0.0
        %v1087 = vmax.f32 %v969, 0.0
        %v1088 = vmax.f32 %v974, 0.0
        %v1089 = vmax.f32 %v979, 0.0
        %v1090 = vmax.f32 %v984, 0.0
        %v1091 = vmax.f32 %v989, 0.0
        %v1092 = vmax.f32 %v994, 0.0
        %v1093 = vmax.f32 %v999, 0.0
        %v1094 = vmax.f32 %v1004, 0.0
        %v1095 = vmax.f32 %v1009, 0.0
        %v1096 = vmax.f32 %v1014, 0.0
        %v1097 = vmax.f32 %v1019, 0.0
        %v1098 = vmax.f32 %v1024, 0.0
        %v1099 = vmax.f32 %v1029, 0.0
        %v1100 = vmax.f32 %v1034, 0.0
        %v1101 = vmax.f32 %v1039, 0.0
        %v1102 = vmax.f32 %v1044, 0.0
        %v1103 = vmax.f32 %v1049, 0.0
        %v1104 = vmax.f32 %v1054, 0.0
        %v1105 = vmax.f32 %v1059, 0.0
        %v1106 = vmax.f32 %v1064, 0.0
        %v1107 = vmax.f32 %v1069, 0.0
        %v1108 = vmax.f32 %v1074, 0.0
        %vm1109 = vcmask 523264
        %1110 = vst.msk [vmem:[#allocation2] sm:$0xff] %vm1109, 0.0
        %1111 = vst.msk [vmem:[#allocation2 + $0x8] sm:$0xff] %vm1109, 0.0
        %vm1112 = vcmask 517120
        %1113 = vst.msk [vmem:[#allocation2 + $0x10] sm:$0x3] %vm1112, 0.0
        %1114 = vst.msk [vmem:[#allocation2 + $0x18] sm:$0xff] %vm1109, 0.0
        %1115 = vst.msk [vmem:[#allocation2 + $0x20] sm:$0xff] %vm1109, 0.0
        %1116 = vst.msk [vmem:[#allocation2 + $0x28] sm:$0x3] %vm1112, 0.0
        %1117 = vst.msk [vmem:[#allocation2 + $0x30] sm:$0xff] %vm1109, 0.0
        %1118 = vst.msk [vmem:[#allocation2 + $0x38] sm:$0xff] %vm1109, 0.0
        %1119 = vst.msk [vmem:[#allocation2 + $0x40] sm:$0x3] %vm1112, 0.0
        %1120 = vst.msk [vmem:[#allocation2 + $0x48] sm:$0xff] %vm1109, 0.0
        %1121 = vst.msk [vmem:[#allocation2 + $0x50] sm:$0xff] %vm1109, 0.0
        %1122 = vst.msk [vmem:[#allocation2 + $0x58] sm:$0x3] %vm1112, 0.0
        %1123 = vst.msk [vmem:[#allocation2 + $0x60] sm:$0xff] %vm1109, 0.0
        %1124 = vst.msk [vmem:[#allocation2 + $0x68] sm:$0xff] %vm1109, 0.0
        %1125 = vst.msk [vmem:[#allocation2 + $0x70] sm:$0x3] %vm1112, 0.0
        %1126 = vst.msk [vmem:[#allocation2 + $0x78] sm:$0xff] %vm1109, 0.0
        %1127 = vst.msk [vmem:[#allocation2 + $0x80] sm:$0xff] %vm1109, 0.0
        %1128 = vst.msk [vmem:[#allocation2 + $0x88] sm:$0x3] %vm1112, 0.0
        %1129 = vst.msk [vmem:[#allocation2 + $0x90] sm:$0xff] %vm1109, 0.0
        %1130 = vst.msk [vmem:[#allocation2 + $0x98] sm:$0xff] %vm1109, 0.0
        %1131 = vst.msk [vmem:[#allocation2 + $0xa0] sm:$0x3] %vm1112, 0.0
        %1132 = vst.msk [vmem:[#allocation2 + $0xa8] sm:$0xff] %vm1109, 0.0
        %1133 = vst.msk [vmem:[#allocation2 + $0xb0] sm:$0xff] %vm1109, 0.0
        %1134 = vst.msk [vmem:[#allocation2 + $0xb8] sm:$0x3] %vm1112, 0.0
        %1135 = vst.msk [vmem:[#allocation2 + $0xc0] sm:$0xff] %vm1109, 0.0
        %1136 = vst.msk [vmem:[#allocation2 + $0xc8] sm:$0xff] %vm1109, 0.0
        %1137 = vst.msk [vmem:[#allocation2 + $0xd0] sm:$0x3] %vm1112, 0.0
        %1138 = vst.msk [vmem:[#allocation2 + $0xd8] sm:$0xff] %vm1109, 0.0
        %1139 = vst.msk [vmem:[#allocation2 + $0xe0] sm:$0xff] %vm1109, 0.0
        %1140 = vst.msk [vmem:[#allocation2 + $0xe8] sm:$0x3] %vm1112, 0.0
        %1141 = vst.msk [vmem:[#allocation2 + $0xf0] sm:$0xff] %vm1109, 0.0
        %1142 = vst.msk [vmem:[#allocation2 + $0xf8] sm:$0xff] %vm1109, 0.0
        %1143 = vst.msk [vmem:[#allocation2 + $0x100] sm:$0x3] %vm1112, 0.0
        %1144 = vst.msk [vmem:[#allocation2 + $0x108] sm:$0xff] %vm1109, 0.0
        %1145 = vst.msk [vmem:[#allocation2 + $0x110] sm:$0xff] %vm1109, 0.0
        %1146 = vst.msk [vmem:[#allocation2 + $0x118] sm:$0x3] %vm1112, 0.0
        %1147 = vst.msk [vmem:[#allocation2 + $0x120] sm:$0xff] %vm1109, 0.0
        %1148 = vst.msk [vmem:[#allocation2 + $0x128] sm:$0xff] %vm1109, 0.0
        %1149 = vst.msk [vmem:[#allocation2 + $0x130] sm:$0x3] %vm1112, 0.0
        %1150 = vst.msk [vmem:[#allocation2 + $0x138] sm:$0xff] %vm1109, 0.0
        %1151 = vst.msk [vmem:[#allocation2 + $0x140] sm:$0xff] %vm1109, 0.0
        %1152 = vst.msk [vmem:[#allocation2 + $0x148] sm:$0x3] %vm1112, 0.0
        %1153 = vst.msk [vmem:[#allocation2 + $0x150] sm:$0xff] %vm1109, 0.0
        %1154 = vst.msk [vmem:[#allocation2 + $0x158] sm:$0xff] %vm1109, 0.0
        %1155 = vst.msk [vmem:[#allocation2 + $0x160] sm:$0x3] %vm1112, 0.0
        %1156 = vst.msk [vmem:[#allocation2 + $0x168] sm:$0xff] %vm1109, 0.0
        %1157 = vst.msk [vmem:[#allocation2 + $0x170] sm:$0xff] %vm1109, 0.0
        %1158 = vst.msk [vmem:[#allocation2 + $0x178] sm:$0x3] %vm1112, 0.0
        %1159 = vst.msk [vmem:[#allocation2 + $0x180] sm:$0xff] %vm1109, 0.0
        %1160 = vst.msk [vmem:[#allocation2 + $0x188] sm:$0xff] %vm1109, 0.0
        %1161 = vst.msk [vmem:[#allocation2 + $0x190] sm:$0x3] %vm1112, 0.0
        %1162 = vst.msk [vmem:[#allocation2 + $0x198] sm:$0xff] %vm1109, 0.0
        %1163 = vst.msk [vmem:[#allocation2 + $0x1a0] sm:$0xff] %vm1109, 0.0
        %1164 = vst.msk [vmem:[#allocation2 + $0x1a8] sm:$0x3] %vm1112, 0.0
        %s1165 = scalar_lea.vmem [#allocation2], 24
        %1166 = vst.msk [vmem:[%s1165 + $0x1] sm:$0xff] %vm1109, %v1077
        %1167 = vst.msk [vmem:[%s1165 + $0x9] sm:$0xff] %vm1109, %v1078
        %1168 = vst.msk [vmem:[%s1165 + $0x19] sm:$0xff] %vm1109, %v1079
        %1169 = vst.msk [vmem:[%s1165 + $0x21] sm:$0xff] %vm1109, %v1080
        %1170 = vst.msk [vmem:[%s1165 + $0x31] sm:$0xff] %vm1109, %v1081
        %1171 = vst.msk [vmem:[%s1165 + $0x39] sm:$0xff] %vm1109, %v1082
        %1172 = vst.msk [vmem:[%s1165 + $0x49] sm:$0xff] %vm1109, %v1083
        %1173 = vst.msk [vmem:[%s1165 + $0x51] sm:$0xff] %vm1109, %v1084
        %1174 = vst.msk [vmem:[%s1165 + $0x61] sm:$0xff] %vm1109, %v1085
        %1175 = vst.msk [vmem:[%s1165 + $0x69] sm:$0xff] %vm1109, %v1086
        %1176 = vst.msk [vmem:[%s1165 + $0x79] sm:$0xff] %vm1109, %v1087
        %1177 = vst.msk [vmem:[%s1165 + $0x81] sm:$0xff] %vm1109, %v1088
        %1178 = vst.msk [vmem:[%s1165 + $0x91] sm:$0xff] %vm1109, %v1089
        %1179 = vst.msk [vmem:[%s1165 + $0x99] sm:$0xff] %vm1109, %v1090
        %1180 = vst.msk [vmem:[%s1165 + $0xa9] sm:$0xff] %vm1109, %v1091
        %1181 = vst.msk [vmem:[%s1165 + $0xb1] sm:$0xff] %vm1109, %v1092
        %1182 = vst.msk [vmem:[%s1165 + $0xc1] sm:$0xff] %vm1109, %v1093
        %1183 = vst.msk [vmem:[%s1165 + $0xc9] sm:$0xff] %vm1109, %v1094
        %1184 = vst.msk [vmem:[%s1165 + $0xd9] sm:$0xff] %vm1109, %v1095
        %1185 = vst.msk [vmem:[%s1165 + $0xe1] sm:$0xff] %vm1109, %v1096
        %1186 = vst.msk [vmem:[%s1165 + $0xf1] sm:$0xff] %vm1109, %v1097
        %1187 = vst.msk [vmem:[%s1165 + $0xf9] sm:$0xff] %vm1109, %v1098
        %1188 = vst.msk [vmem:[%s1165 + $0x109] sm:$0xff] %vm1109, %v1099
        %1189 = vst.msk [vmem:[%s1165 + $0x111] sm:$0xff] %vm1109, %v1100
        %1190 = vst.msk [vmem:[%s1165 + $0x121] sm:$0xff] %vm1109, %v1101
        %1191 = vst.msk [vmem:[%s1165 + $0x129] sm:$0xff] %vm1109, %v1102
        %1192 = vst.msk [vmem:[%s1165 + $0x139] sm:$0xff] %vm1109, %v1103
        %1193 = vst.msk [vmem:[%s1165 + $0x141] sm:$0xff] %vm1109, %v1104
        %1194 = vst.msk [vmem:[%s1165 + $0x151] sm:$0xff] %vm1109, %v1105
        %1195 = vst.msk [vmem:[%s1165 + $0x159] sm:$0xff] %vm1109, %v1106
        %1196 = vst.msk [vmem:[%s1165 + $0x169] sm:$0xff] %vm1109, %v1107
        %1197 = vst.msk [vmem:[%s1165 + $0x171] sm:$0xff] %vm1109, %v1108
        %v1198 = vld [vmem:[#allocation2] sm:$0xff]
        %v1199 = vld [vmem:[#allocation2 + $0x8] sm:$0xff]
        %v1200 = vld [vmem:[#allocation2 + $0x18] sm:$0xff]
        %v1201 = vld [vmem:[#allocation2 + $0x20] sm:$0xff]
        %v1202 = vld [vmem:[#allocation2 + $0x30] sm:$0xff]
        %v1203 = vld [vmem:[#allocation2 + $0x38] sm:$0xff]
        %v1204 = vld [vmem:[#allocation2 + $0x48] sm:$0xff]
        %v1205 = vld [vmem:[#allocation2 + $0x50] sm:$0xff]
        %v1206 = vld [vmem:[#allocation2 + $0x60] sm:$0xff]
        %v1207 = vld [vmem:[#allocation2 + $0x68] sm:$0xff]
        %v1208 = vld [vmem:[#allocation2 + $0x78] sm:$0xff]
        %v1209 = vld [vmem:[#allocation2 + $0x80] sm:$0xff]
        %v1210 = vld [vmem:[#allocation2 + $0x90] sm:$0xff]
        %v1211 = vld [vmem:[#allocation2 + $0x98] sm:$0xff]
        %v1212 = vld [vmem:[#allocation2 + $0xa8] sm:$0xff]
        %v1213 = vld [vmem:[#allocation2 + $0xb0] sm:$0xff]
        %v1214 = vld [vmem:[#allocation2 + $0xc0] sm:$0xff]
        %v1215 = vld [vmem:[#allocation2 + $0xc8] sm:$0xff]
        %v1216 = vld [vmem:[#allocation2 + $0xd8] sm:$0xff]
        %v1217 = vld [vmem:[#allocation2 + $0xe0] sm:$0xff]
        %v1218 = vld [vmem:[#allocation2 + $0xf0] sm:$0xff]
        %v1219 = vld [vmem:[#allocation2 + $0xf8] sm:$0xff]
        %v1220 = vld [vmem:[#allocation2 + $0x108] sm:$0xff]
        %v1221 = vld [vmem:[#allocation2 + $0x110] sm:$0xff]
        %v1222 = vld [vmem:[#allocation2 + $0x120] sm:$0xff]
        %v1223 = vld [vmem:[#allocation2 + $0x128] sm:$0xff]
        %v1224 = vld [vmem:[#allocation2 + $0x138] sm:$0xff]
        %v1225 = vld [vmem:[#allocation2 + $0x140] sm:$0xff]
        %v1226 = vld [vmem:[#allocation2 + $0x150] sm:$0xff]
        %v1227 = vld [vmem:[#allocation2 + $0x158] sm:$0xff]
        %v1228 = vld [vmem:[#allocation2 + $0x168] sm:$0xff]
        %v1229 = vld [vmem:[#allocation2 + $0x170] sm:$0xff]
        %v1230 = vld [vmem:[%s6] sm:$0xff]
        %v1231 = vld [vmem:[%s6 + $0x8] sm:$0xff]
        %v1232 = vld [vmem:[%s6 + $0x10] sm:$0xff]
        %v1233 = vld [vmem:[%s6 + $0x18] sm:$0xff]
        %v1234 = vld [vmem:[%s6 + $0x20] sm:$0xff]
        %v1235 = vld [vmem:[%s6 + $0x28] sm:$0xff]
        %v1236 = vld [vmem:[%s6 + $0x30] sm:$0xff]
        %v1237 = vld [vmem:[%s6 + $0x38] sm:$0xff]
        %v1238 = vld [vmem:[#allocation2 + $0x1] sm:$0xff]
        %v1239 = vld [vmem:[#allocation2 + $0x9] sm:$0xff]
        %v1240 = vld [vmem:[#allocation2 + $0x19] sm:$0xff]
        %v1241 = vld [vmem:[#allocation2 + $0x21] sm:$0xff]
        %v1242 = vld [vmem:[#allocation2 + $0x31] sm:$0xff]
        %v1243 = vld [vmem:[#allocation2 + $0x39] sm:$0xff]
        %v1244 = vld [vmem:[#allocation2 + $0x49] sm:$0xff]
        %v1245 = vld [vmem:[#allocation2 + $0x51] sm:$0xff]
        %v1246 = vld [vmem:[#allocation2 + $0x61] sm:$0xff]
        %v1247 = vld [vmem:[#allocation2 + $0x69] sm:$0xff]
        %v1248 = vld [vmem:[#allocation2 + $0x79] sm:$0xff]
        %v1249 = vld [vmem:[#allocation2 + $0x81] sm:$0xff]
        %v1250 = vld [vmem:[#allocation2 + $0x91] sm:$0xff]
        %v1251 = vld [vmem:[#allocation2 + $0x99] sm:$0xff]
        %v1252 = vld [vmem:[#allocation2 + $0xa9] sm:$0xff]
        %v1253 = vld [vmem:[#allocation2 + $0xb1] sm:$0xff]
        %v1254 = vld [vmem:[#allocation2 + $0xc1] sm:$0xff]
        %v1255 = vld [vmem:[#allocation2 + $0xc9] sm:$0xff]
        %v1256 = vld [vmem:[#allocation2 + $0xd9] sm:$0xff]
        %v1257 = vld [vmem:[#allocation2 + $0xe1] sm:$0xff]
        %v1258 = vld [vmem:[#allocation2 + $0xf1] sm:$0xff]
        %v1259 = vld [vmem:[#allocation2 + $0xf9] sm:$0xff]
        %v1260 = vld [vmem:[#allocation2 + $0x109] sm:$0xff]
        %v1261 = vld [vmem:[#allocation2 + $0x111] sm:$0xff]
        %v1262 = vld [vmem:[#allocation2 + $0x121] sm:$0xff]
        %v1263 = vld [vmem:[#allocation2 + $0x129] sm:$0xff]
        %v1264 = vld [vmem:[#allocation2 + $0x139] sm:$0xff]
        %v1265 = vld [vmem:[#allocation2 + $0x141] sm:$0xff]
        %v1266 = vld [vmem:[#allocation2 + $0x151] sm:$0xff]
        %v1267 = vld [vmem:[#allocation2 + $0x159] sm:$0xff]
        %v1268 = vld [vmem:[#allocation2 + $0x169] sm:$0xff]
        %v1269 = vld [vmem:[#allocation2 + $0x171] sm:$0xff]
        %s1270 = scalar_lea.vmem %s6, 64
        %v1271 = vld [vmem:[%s1270] sm:$0xff]
        %v1272 = vld [vmem:[%s1270 + $0x8] sm:$0xff]
        %v1273 = vld [vmem:[%s1270 + $0x10] sm:$0xff]
        %v1274 = vld [vmem:[%s1270 + $0x18] sm:$0xff]
        %v1275 = vld [vmem:[%s1270 + $0x20] sm:$0xff]
        %v1276 = vld [vmem:[%s1270 + $0x28] sm:$0xff]
        %v1277 = vld [vmem:[%s1270 + $0x30] sm:$0xff]
        %v1278 = vld [vmem:[%s1270 + $0x38] sm:$0xff]
        %v1280 = vsel %vm1109, %v1238, 0
        %v1283 = vsel %vm1109, %v1239, 0
        %v1286 = vsel %vm1109, %v1240, 0
        %v1289 = vsel %vm1109, %v1241, 0
        %v1292 = vsel %vm1109, %v1242, 0
        %v1295 = vsel %vm1109, %v1243, 0
        %v1298 = vsel %vm1109, %v1244, 0
        %v1301 = vsel %vm1109, %v1245, 0
        %v1304 = vsel %vm1109, %v1246, 0
        %v1307 = vsel %vm1109, %v1247, 0
        %v1310 = vsel %vm1109, %v1248, 0
        %v1313 = vsel %vm1109, %v1249, 0
        %v1316 = vsel %vm1109, %v1250, 0
        %v1319 = vsel %vm1109, %v1251, 0
        %v1322 = vsel %vm1109, %v1252, 0
        %v1325 = vsel %vm1109, %v1253, 0
        %v1328 = vsel %vm1109, %v1254, 0
        %v1331 = vsel %vm1109, %v1255, 0
        %v1334 = vsel %vm1109, %v1256, 0
        %v1337 = vsel %vm1109, %v1257, 0
        %v1340 = vsel %vm1109, %v1258, 0
        %v1343 = vsel %vm1109, %v1259, 0
        %v1346 = vsel %vm1109, %v1260, 0
        %v1349 = vsel %vm1109, %v1261, 0
        %v1352 = vsel %vm1109, %v1262, 0
        %v1355 = vsel %vm1109, %v1263, 0
        %v1358 = vsel %vm1109, %v1264, 0
        %v1361 = vsel %vm1109, %v1265, 0
        %v1364 = vsel %vm1109, %v1266, 0
        %v1367 = vsel %vm1109, %v1267, 0
        %v1370 = vsel %vm1109, %v1268, 0
        %v1373 = vsel %vm1109, %v1269, 0
        %1375 = vmatprep.subr.mxu0 0.0
        %1376 = vmatpush1.msra.mxu0 %v1271
        %1377 = vmatprep.subr.mxu0 0.0
        %1378 = vmatpush1.msra.mxu0 %v1272
        %1379 = vmatprep.subr.mxu0 0.0
        %1380 = vmatpush1.msra.mxu0 %v1273
        %1381 = vmatprep.subr.mxu0 0.0
        %1382 = vmatpush1.msra.mxu0 %v1274
        %1383 = vmatprep.subr.mxu0 0.0
        %1384 = vmatpush1.msra.mxu0 %v1275
        %1385 = vmatprep.subr.mxu0 0.0
        %1386 = vmatpush1.msra.mxu0 %v1276
        %1387 = vmatprep.subr.mxu0 0.0
        %1388 = vmatpush1.msra.mxu0 %v1277
        %1389 = vmatprep.subr.mxu0 0.0
        %1390 = vmatpush1.msra.mxu0 %v1278
        %1391 = vmatprep.subr.mxu0 0.0
        %1392 = vmatpush1.msra.mxu0 0.0
        %1393 = vmatprep.subr.mxu0 0.0
        %1394 = vmatpush1.msra.mxu0 0.0
        %1395 = vmatprep.subr.mxu0 0.0
        %1396 = vmatpush1.msra.mxu0 0.0
        %1397 = vmatprep.subr.mxu0 0.0
        %1398 = vmatpush1.msra.mxu0 0.0
        %1399 = vmatprep.subr.mxu0 0.0
        %1400 = vmatpush1.msra.mxu0 0.0
        %1401 = vmatprep.subr.mxu0 0.0
        %1402 = vmatpush1.msra.mxu0 0.0
        %1403 = vmatprep.subr.mxu0 0.0
        %1404 = vmatpush1.msra.mxu0 0.0
        %1405 = vmatprep.subr.mxu0 0.0
        %1406 = vmatpush1.msra.mxu0 0.0
        %1407 = vmatprep.subr.mxu0 0.0
        %1408 = vmatpush1.msra.mxu0 0.0
        %1409 = vmatprep.subr.mxu0 0.0
        %1410 = vmatpush1.msra.mxu0 0.0
        %1411 = vmatprep.subr.mxu0 0.0
        %1412 = vmatpush1.msra.mxu0 0.0
        %1413 = vmatprep.subr.mxu0 0.0
        %1414 = vmatpush1.msra.mxu0 0.0
        %1415 = vmatprep.subr.mxu0 0.0
        %1416 = vmatpush1.msra.mxu0 0.0
        %1417 = vmatprep.subr.mxu0 0.0
        %1418 = vmatpush1.msra.mxu0 0.0
        %1419 = vmatprep.subr.mxu0 0.0
        %1420 = vmatpush1.msra.mxu0 0.0
        %1421 = vmatprep.subr.mxu0 0.0
        %1422 = vmatpush1.msra.mxu0 0.0
        %1423 = vmatprep.subr.mxu0 0.0
        %1424 = vmatpush1.msra.mxu0 0.0
        %1425 = vmatprep.subr.mxu0 0.0
        %1426 = vmatpush1.msra.mxu0 0.0
        %1427 = vmatprep.subr.mxu0 0.0
        %1428 = vmatpush1.msra.mxu0 0.0
        %1429 = vmatprep.subr.mxu0 0.0
        %1430 = vmatpush1.msra.mxu0 0.0
        %1431 = vmatprep.subr.mxu0 0.0
        %1432 = vmatpush1.msra.mxu0 0.0
        %1433 = vmatprep.subr.mxu0 0.0
        %1434 = vmatpush1.msra.mxu0 0.0
        %1435 = vmatprep.subr.mxu0 0.0
        %1436 = vmatpush1.msra.mxu0 0.0
        %1437 = vmatprep.subr.mxu0 0.0
        %1438 = vmatpush1.msra.mxu0 0.0
        %1439 = vmatprep.mubr.f32.mxu0 0.0
        %1440 = vmatmul.mubr.f32.gmra.mrb[0].mxu0 %v1280
        %v1441 = vpop.f32.mrb[0].mxu0
        %v1442 = vadd.f32 0.0, %v1441
        %v1443 = vpop.f32.mrb[0].mxu0
        %1444 = vmatprep.mubr.f32.mxu0 0.0
        %1445 = vmatmul.mubr.f32.gmra.mrb[0].mxu0 %v1283
        %v1446 = vpop.f32.mrb[0].mxu0
        %v1447 = vadd.f32 0.0, %v1446
        %v1448 = vpop.f32.mrb[0].mxu0
        %1449 = vmatprep.mubr.f32.mxu0 0.0
        %1450 = vmatmul.mubr.f32.gmra.mrb[0].mxu0 %v1286
        %v1451 = vpop.f32.mrb[0].mxu0
        %v1452 = vadd.f32 0.0, %v1451
        %v1453 = vpop.f32.mrb[0].mxu0
        %1454 = vmatprep.mubr.f32.mxu0 0.0
        %1455 = vmatmul.mubr.f32.gmra.mrb[0].mxu0 %v1289
        %v1456 = vpop.f32.mrb[0].mxu0
        %v1457 = vadd.f32 0.0, %v1456
        %v1458 = vpop.f32.mrb[0].mxu0
        %1459 = vmatprep.mubr.f32.mxu0 0.0
        %1460 = vmatmul.mubr.f32.gmra.mrb[0].mxu0 %v1292
        %v1461 = vpop.f32.mrb[0].mxu0
        %v1462 = vadd.f32 0.0, %v1461
        %v1463 = vpop.f32.mrb[0].mxu0
        %1464 = vmatprep.mubr.f32.mxu0 0.0
        %1465 = vmatmul.mubr.f32.gmra.mrb[0].mxu0 %v1295
        %v1466 = vpop.f32.mrb[0].mxu0
        %v1467 = vadd.f32 0.0, %v1466
        %v1468 = vpop.f32.mrb[0].mxu0
        %1469 = vmatprep.mubr.f32.mxu0 0.0
        %1470 = vmatmul.mubr.f32.gmra.mrb[0].mxu0 %v1298
        %v1471 = vpop.f32.mrb[0].mxu0
        %v1472 = vadd.f32 0.0, %v1471
        %v1473 = vpop.f32.mrb[0].mxu0
        %1474 = vmatprep.mubr.f32.mxu0 0.0
        %1475 = vmatmul.mubr.f32.gmra.mrb[0].mxu0 %v1301
        %v1476 = vpop.f32.mrb[0].mxu0
        %v1477 = vadd.f32 0.0, %v1476
        %v1478 = vpop.f32.mrb[0].mxu0
        %1479 = vmatprep.mubr.f32.mxu0 0.0
        %1480 = vmatmul.mubr.f32.gmra.mrb[0].mxu0 %v1304
        %v1481 = vpop.f32.mrb[0].mxu0
        %v1482 = vadd.f32 0.0, %v1481
        %v1483 = vpop.f32.mrb[0].mxu0
        %1484 = vmatprep.mubr.f32.mxu0 0.0
        %1485 = vmatmul.mubr.f32.gmra.mrb[0].mxu0 %v1307
        %v1486 = vpop.f32.mrb[0].mxu0
        %v1487 = vadd.f32 0.0, %v1486
        %v1488 = vpop.f32.mrb[0].mxu0
        %1489 = vmatprep.mubr.f32.mxu0 0.0
        %1490 = vmatmul.mubr.f32.gmra.mrb[0].mxu0 %v1310
        %v1491 = vpop.f32.mrb[0].mxu0
        %v1492 = vadd.f32 0.0, %v1491
        %v1493 = vpop.f32.mrb[0].mxu0
        %1494 = vmatprep.mubr.f32.mxu0 0.0
        %1495 = vmatmul.mubr.f32.gmra.mrb[0].mxu0 %v1313
        %v1496 = vpop.f32.mrb[0].mxu0
        %v1497 = vadd.f32 0.0, %v1496
        %v1498 = vpop.f32.mrb[0].mxu0
        %1499 = vmatprep.mubr.f32.mxu0 0.0
        %1500 = vmatmul.mubr.f32.gmra.mrb[0].mxu0 %v1316
        %v1501 = vpop.f32.mrb[0].mxu0
        %v1502 = vadd.f32 0.0, %v1501
        %v1503 = vpop.f32.mrb[0].mxu0
        %1504 = vmatprep.mubr.f32.mxu0 0.0
        %1505 = vmatmul.mubr.f32.gmra.mrb[0].mxu0 %v1319
        %v1506 = vpop.f32.mrb[0].mxu0
        %v1507 = vadd.f32 0.0, %v1506
        %v1508 = vpop.f32.mrb[0].mxu0
        %1509 = vmatprep.mubr.f32.mxu0 0.0
        %1510 = vmatmul.mubr.f32.gmra.mrb[0].mxu0 %v1322
        %v1511 = vpop.f32.mrb[0].mxu0
        %v1512 = vadd.f32 0.0, %v1511
        %v1513 = vpop.f32.mrb[0].mxu0
        %1514 = vmatprep.mubr.f32.mxu0 0.0
        %1515 = vmatmul.mubr.f32.gmra.mrb[0].mxu0 %v1325
        %v1516 = vpop.f32.mrb[0].mxu0
        %v1517 = vadd.f32 0.0, %v1516
        %v1518 = vpop.f32.mrb[0].mxu0
        %1519 = vmatprep.mubr.f32.mxu0 0.0
        %1520 = vmatmul.mubr.f32.gmra.mrb[0].mxu0 %v1328
        %v1521 = vpop.f32.mrb[0].mxu0
        %v1522 = vadd.f32 0.0, %v1521
        %v1523 = vpop.f32.mrb[0].mxu0
        %1524 = vmatprep.mubr.f32.mxu0 0.0
        %1525 = vmatmul.mubr.f32.gmra.mrb[0].mxu0 %v1331
        %v1526 = vpop.f32.mrb[0].mxu0
        %v1527 = vadd.f32 0.0, %v1526
        %v1528 = vpop.f32.mrb[0].mxu0
        %1529 = vmatprep.mubr.f32.mxu0 0.0
        %1530 = vmatmul.mubr.f32.gmra.mrb[0].mxu0 %v1334
        %v1531 = vpop.f32.mrb[0].mxu0
        %v1532 = vadd.f32 0.0, %v1531
        %v1533 = vpop.f32.mrb[0].mxu0
        %1534 = vmatprep.mubr.f32.mxu0 0.0
        %1535 = vmatmul.mubr.f32.gmra.mrb[0].mxu0 %v1337
        %v1536 = vpop.f32.mrb[0].mxu0
        %v1537 = vadd.f32 0.0, %v1536
        %v1538 = vpop.f32.mrb[0].mxu0
        %1539 = vmatprep.mubr.f32.mxu0 0.0
        %1540 = vmatmul.mubr.f32.gmra.mrb[0].mxu0 %v1340
        %v1541 = vpop.f32.mrb[0].mxu0
        %v1542 = vadd.f32 0.0, %v1541
        %v1543 = vpop.f32.mrb[0].mxu0
        %1544 = vmatprep.mubr.f32.mxu0 0.0
        %1545 = vmatmul.mubr.f32.gmra.mrb[0].mxu0 %v1343
        %v1546 = vpop.f32.mrb[0].mxu0
        %v1547 = vadd.f32 0.0, %v1546
        %v1548 = vpop.f32.mrb[0].mxu0
        %1549 = vmatprep.mubr.f32.mxu0 0.0
        %1550 = vmatmul.mubr.f32.gmra.mrb[0].mxu0 %v1346
        %v1551 = vpop.f32.mrb[0].mxu0
        %v1552 = vadd.f32 0.0, %v1551
        %v1553 = vpop.f32.mrb[0].mxu0
        %1554 = vmatprep.mubr.f32.mxu0 0.0
        %1555 = vmatmul.mubr.f32.gmra.mrb[0].mxu0 %v1349
        %v1556 = vpop.f32.mrb[0].mxu0
        %v1557 = vadd.f32 0.0, %v1556
        %v1558 = vpop.f32.mrb[0].mxu0
        %1559 = vmatprep.mubr.f32.mxu0 0.0
        %1560 = vmatmul.mubr.f32.gmra.mrb[0].mxu0 %v1352
        %v1561 = vpop.f32.mrb[0].mxu0
        %v1562 = vadd.f32 0.0, %v1561
        %v1563 = vpop.f32.mrb[0].mxu0
        %1564 = vmatprep.mubr.f32.mxu0 0.0
        %1565 = vmatmul.mubr.f32.gmra.mrb[0].mxu0 %v1355
        %v1566 = vpop.f32.mrb[0].mxu0
        %v1567 = vadd.f32 0.0, %v1566
        %v1568 = vpop.f32.mrb[0].mxu0
        %1569 = vmatprep.mubr.f32.mxu0 0.0
        %1570 = vmatmul.mubr.f32.gmra.mrb[0].mxu0 %v1358
        %v1571 = vpop.f32.mrb[0].mxu0
        %v1572 = vadd.f32 0.0, %v1571
        %v1573 = vpop.f32.mrb[0].mxu0
        %1574 = vmatprep.mubr.f32.mxu0 0.0
        %1575 = vmatmul.mubr.f32.gmra.mrb[0].mxu0 %v1361
        %v1576 = vpop.f32.mrb[0].mxu0
        %v1577 = vadd.f32 0.0, %v1576
        %v1578 = vpop.f32.mrb[0].mxu0
        %1579 = vmatprep.mubr.f32.mxu0 0.0
        %1580 = vmatmul.mubr.f32.gmra.mrb[0].mxu0 %v1364
        %v1581 = vpop.f32.mrb[0].mxu0
        %v1582 = vadd.f32 0.0, %v1581
        %v1583 = vpop.f32.mrb[0].mxu0
        %1584 = vmatprep.mubr.f32.mxu0 0.0
        %1585 = vmatmul.mubr.f32.gmra.mrb[0].mxu0 %v1367
        %v1586 = vpop.f32.mrb[0].mxu0
        %v1587 = vadd.f32 0.0, %v1586
        %v1588 = vpop.f32.mrb[0].mxu0
        %1589 = vmatprep.mubr.f32.mxu0 0.0
        %1590 = vmatmul.mubr.f32.gmra.mrb[0].mxu0 %v1370
        %v1591 = vpop.f32.mrb[0].mxu0
        %v1592 = vadd.f32 0.0, %v1591
        %v1593 = vpop.f32.mrb[0].mxu0
        %1594 = vmatprep.mubr.f32.mxu0 0.0
        %1595 = vmatmul.mubr.f32.gmra.mrb[0].mxu0 %v1373
        %v1596 = vpop.f32.mrb[0].mxu0
        %v1597 = vadd.f32 0.0, %v1596
        %v1598 = vpop.f32.mrb[0].mxu0
        %1599 = vdwg.mxu0
        %v1601 = vsel %vm1109, %v1198, 0
        %v1604 = vsel %vm1109, %v1199, 0
        %v1607 = vsel %vm1109, %v1200, 0
        %v1610 = vsel %vm1109, %v1201, 0
        %v1613 = vsel %vm1109, %v1202, 0
        %v1616 = vsel %vm1109, %v1203, 0
        %v1619 = vsel %vm1109, %v1204, 0
        %v1622 = vsel %vm1109, %v1205, 0
        %v1625 = vsel %vm1109, %v1206, 0
        %v1628 = vsel %vm1109, %v1207, 0
        %v1631 = vsel %vm1109, %v1208, 0
        %v1634 = vsel %vm1109, %v1209, 0
        %v1637 = vsel %vm1109, %v1210, 0
        %v1640 = vsel %vm1109, %v1211, 0
        %v1643 = vsel %vm1109, %v1212, 0
        %v1646 = vsel %vm1109, %v1213, 0
        %v1649 = vsel %vm1109, %v1214, 0
        %v1652 = vsel %vm1109, %v1215, 0
        %v1655 = vsel %vm1109, %v1216, 0
        %v1658 = vsel %vm1109, %v1217, 0
        %v1661 = vsel %vm1109, %v1218, 0
        %v1664 = vsel %vm1109, %v1219, 0
        %v1667 = vsel %vm1109, %v1220, 0
        %v1670 = vsel %vm1109, %v1221, 0
        %v1673 = vsel %vm1109, %v1222, 0
        %v1676 = vsel %vm1109, %v1223, 0
        %v1679 = vsel %vm1109, %v1224, 0
        %v1682 = vsel %vm1109, %v1225, 0
        %v1685 = vsel %vm1109, %v1226, 0
        %v1688 = vsel %vm1109, %v1227, 0
        %v1691 = vsel %vm1109, %v1228, 0
        %v1694 = vsel %vm1109, %v1229, 0
        %1696 = vmatprep.subr.mxu0 0.0
        %1697 = vmatpush1.msra.mxu0 %v1230
        %1698 = vmatprep.subr.mxu0 0.0
        %1699 = vmatpush1.msra.mxu0 %v1231
        %1700 = vmatprep.subr.mxu0 0.0
        %1701 = vmatpush1.msra.mxu0 %v1232
        %1702 = vmatprep.subr.mxu0 0.0
        %1703 = vmatpush1.msra.mxu0 %v1233
        %1704 = vmatprep.subr.mxu0 0.0
        %1705 = vmatpush1.msra.mxu0 %v1234
        %1706 = vmatprep.subr.mxu0 0.0
        %1707 = vmatpush1.msra.mxu0 %v1235
        %1708 = vmatprep.subr.mxu0 0.0
        %1709 = vmatpush1.msra.mxu0 %v1236
        %1710 = vmatprep.subr.mxu0 0.0
        %1711 = vmatpush1.msra.mxu0 %v1237
        %1712 = vmatprep.subr.mxu0 0.0
        %1713 = vmatpush1.msra.mxu0 0.0
        %1714 = vmatprep.subr.mxu0 0.0
        %1715 = vmatpush1.msra.mxu0 0.0
        %1716 = vmatprep.subr.mxu0 0.0
        %1717 = vmatpush1.msra.mxu0 0.0
        %1718 = vmatprep.subr.mxu0 0.0
        %1719 = vmatpush1.msra.mxu0 0.0
        %1720 = vmatprep.subr.mxu0 0.0
        %1721 = vmatpush1.msra.mxu0 0.0
        %1722 = vmatprep.subr.mxu0 0.0
        %1723 = vmatpush1.msra.mxu0 0.0
        %1724 = vmatprep.subr.mxu0 0.0
        %1725 = vmatpush1.msra.mxu0 0.0
        %1726 = vmatprep.subr.mxu0 0.0
        %1727 = vmatpush1.msra.mxu0 0.0
        %1728 = vmatprep.subr.mxu0 0.0
        %1729 = vmatpush1.msra.mxu0 0.0
        %1730 = vmatprep.subr.mxu0 0.0
        %1731 = vmatpush1.msra.mxu0 0.0
        %1732 = vmatprep.subr.mxu0 0.0
        %1733 = vmatpush1.msra.mxu0 0.0
        %1734 = vmatprep.subr.mxu0 0.0
        %1735 = vmatpush1.msra.mxu0 0.0
        %1736 = vmatprep.subr.mxu0 0.0
        %1737 = vmatpush1.msra.mxu0 0.0
        %1738 = vmatprep.subr.mxu0 0.0
        %1739 = vmatpush1.msra.mxu0 0.0
        %1740 = vmatprep.subr.mxu0 0.0
        %1741 = vmatpush1.msra.mxu0 0.0
        %1742 = vmatprep.subr.mxu0 0.0
        %1743 = vmatpush1.msra.mxu0 0.0
        %1744 = vmatprep.subr.mxu0 0.0
        %1745 = vmatpush1.msra.mxu0 0.0
        %1746 = vmatprep.subr.mxu0 0.0
        %1747 = vmatpush1.msra.mxu0 0.0
        %1748 = vmatprep.subr.mxu0 0.0
        %1749 = vmatpush1.msra.mxu0 0.0
        %1750 = vmatprep.subr.mxu0 0.0
        %1751 = vmatpush1.msra.mxu0 0.0
        %1752 = vmatprep.subr.mxu0 0.0
        %1753 = vmatpush1.msra.mxu0 0.0
        %1754 = vmatprep.subr.mxu0 0.0
        %1755 = vmatpush1.msra.mxu0 0.0
        %1756 = vmatprep.subr.mxu0 0.0
        %1757 = vmatpush1.msra.mxu0 0.0
        %1758 = vmatprep.subr.mxu0 0.0
        %1759 = vmatpush1.msra.mxu0 0.0
        %1760 = vmatprep.mubr.f32.mxu0 0.0
        %1761 = vmatmul.mubr.f32.gmra.mrb[0].mxu0 %v1601
        %v1762 = vpop.f32.mrb[0].mxu0
        %v1763 = vadd.f32 %v1442, %v1762
        %v1764 = vpop.f32.mrb[0].mxu0
        %1765 = vmatprep.mubr.f32.mxu0 0.0
        %1766 = vmatmul.mubr.f32.gmra.mrb[0].mxu0 %v1604
        %v1767 = vpop.f32.mrb[0].mxu0
        %v1768 = vadd.f32 %v1447, %v1767
        %v1769 = vpop.f32.mrb[0].mxu0
        %1770 = vmatprep.mubr.f32.mxu0 0.0
        %1771 = vmatmul.mubr.f32.gmra.mrb[0].mxu0 %v1607
        %v1772 = vpop.f32.mrb[0].mxu0
        %v1773 = vadd.f32 %v1452, %v1772
        %v1774 = vpop.f32.mrb[0].mxu0
        %1775 = vmatprep.mubr.f32.mxu0 0.0
        %1776 = vmatmul.mubr.f32.gmra.mrb[0].mxu0 %v1610
        %v1777 = vpop.f32.mrb[0].mxu0
        %v1778 = vadd.f32 %v1457, %v1777
        %v1779 = vpop.f32.mrb[0].mxu0
        %1780 = vmatprep.mubr.f32.mxu0 0.0
        %1781 = vmatmul.mubr.f32.gmra.mrb[0].mxu0 %v1613
        %v1782 = vpop.f32.mrb[0].mxu0
        %v1783 = vadd.f32 %v1462, %v1782
        %v1784 = vpop.f32.mrb[0].mxu0
        %1785 = vmatprep.mubr.f32.mxu0 0.0
        %1786 = vmatmul.mubr.f32.gmra.mrb[0].mxu0 %v1616
        %v1787 = vpop.f32.mrb[0].mxu0
        %v1788 = vadd.f32 %v1467, %v1787
        %v1789 = vpop.f32.mrb[0].mxu0
        %1790 = vmatprep.mubr.f32.mxu0 0.0
        %1791 = vmatmul.mubr.f32.gmra.mrb[0].mxu0 %v1619
        %v1792 = vpop.f32.mrb[0].mxu0
        %v1793 = vadd.f32 %v1472, %v1792
        %v1794 = vpop.f32.mrb[0].mxu0
        %1795 = vmatprep.mubr.f32.mxu0 0.0
        %1796 = vmatmul.mubr.f32.gmra.mrb[0].mxu0 %v1622
        %v1797 = vpop.f32.mrb[0].mxu0
        %v1798 = vadd.f32 %v1477, %v1797
        %v1799 = vpop.f32.mrb[0].mxu0
        %1800 = vmatprep.mubr.f32.mxu0 0.0
        %1801 = vmatmul.mubr.f32.gmra.mrb[0].mxu0 %v1625
        %v1802 = vpop.f32.mrb[0].mxu0
        %v1803 = vadd.f32 %v1482, %v1802
        %v1804 = vpop.f32.mrb[0].mxu0
        %1805 = vmatprep.mubr.f32.mxu0 0.0
        %1806 = vmatmul.mubr.f32.gmra.mrb[0].mxu0 %v1628
        %v1807 = vpop.f32.mrb[0].mxu0
        %v1808 = vadd.f32 %v1487, %v1807
        %v1809 = vpop.f32.mrb[0].mxu0
        %1810 = vmatprep.mubr.f32.mxu0 0.0
        %1811 = vmatmul.mubr.f32.gmra.mrb[0].mxu0 %v1631
        %v1812 = vpop.f32.mrb[0].mxu0
        %v1813 = vadd.f32 %v1492, %v1812
        %v1814 = vpop.f32.mrb[0].mxu0
        %1815 = vmatprep.mubr.f32.mxu0 0.0
        %1816 = vmatmul.mubr.f32.gmra.mrb[0].mxu0 %v1634
        %v1817 = vpop.f32.mrb[0].mxu0
        %v1818 = vadd.f32 %v1497, %v1817
        %v1819 = vpop.f32.mrb[0].mxu0
        %1820 = vmatprep.mubr.f32.mxu0 0.0
        %1821 = vmatmul.mubr.f32.gmra.mrb[0].mxu0 %v1637
        %v1822 = vpop.f32.mrb[0].mxu0
        %v1823 = vadd.f32 %v1502, %v1822
        %v1824 = vpop.f32.mrb[0].mxu0
        %1825 = vmatprep.mubr.f32.mxu0 0.0
        %1826 = vmatmul.mubr.f32.gmra.mrb[0].mxu0 %v1640
        %v1827 = vpop.f32.mrb[0].mxu0
        %v1828 = vadd.f32 %v1507, %v1827
        %v1829 = vpop.f32.mrb[0].mxu0
        %1830 = vmatprep.mubr.f32.mxu0 0.0
        %1831 = vmatmul.mubr.f32.gmra.mrb[0].mxu0 %v1643
        %v1832 = vpop.f32.mrb[0].mxu0
        %v1833 = vadd.f32 %v1512, %v1832
        %v1834 = vpop.f32.mrb[0].mxu0
        %1835 = vmatprep.mubr.f32.mxu0 0.0
        %1836 = vmatmul.mubr.f32.gmra.mrb[0].mxu0 %v1646
        %v1837 = vpop.f32.mrb[0].mxu0
        %v1838 = vadd.f32 %v1517, %v1837
        %v1839 = vpop.f32.mrb[0].mxu0
        %1840 = vmatprep.mubr.f32.mxu0 0.0
        %1841 = vmatmul.mubr.f32.gmra.mrb[0].mxu0 %v1649
        %v1842 = vpop.f32.mrb[0].mxu0
        %v1843 = vadd.f32 %v1522, %v1842
        %v1844 = vpop.f32.mrb[0].mxu0
        %1845 = vmatprep.mubr.f32.mxu0 0.0
        %1846 = vmatmul.mubr.f32.gmra.mrb[0].mxu0 %v1652
        %v1847 = vpop.f32.mrb[0].mxu0
        %v1848 = vadd.f32 %v1527, %v1847
        %v1849 = vpop.f32.mrb[0].mxu0
        %1850 = vmatprep.mubr.f32.mxu0 0.0
        %1851 = vmatmul.mubr.f32.gmra.mrb[0].mxu0 %v1655
        %v1852 = vpop.f32.mrb[0].mxu0
        %v1853 = vadd.f32 %v1532, %v1852
        %v1854 = vpop.f32.mrb[0].mxu0
        %1855 = vmatprep.mubr.f32.mxu0 0.0
        %1856 = vmatmul.mubr.f32.gmra.mrb[0].mxu0 %v1658
        %v1857 = vpop.f32.mrb[0].mxu0
        %v1858 = vadd.f32 %v1537, %v1857
        %v1859 = vpop.f32.mrb[0].mxu0
        %1860 = vmatprep.mubr.f32.mxu0 0.0
        %1861 = vmatmul.mubr.f32.gmra.mrb[0].mxu0 %v1661
        %v1862 = vpop.f32.mrb[0].mxu0
        %v1863 = vadd.f32 %v1542, %v1862
        %v1864 = vpop.f32.mrb[0].mxu0
        %1865 = vmatprep.mubr.f32.mxu0 0.0
        %1866 = vmatmul.mubr.f32.gmra.mrb[0].mxu0 %v1664
        %v1867 = vpop.f32.mrb[0].mxu0
        %v1868 = vadd.f32 %v1547, %v1867
        %v1869 = vpop.f32.mrb[0].mxu0
        %1870 = vmatprep.mubr.f32.mxu0 0.0
        %1871 = vmatmul.mubr.f32.gmra.mrb[0].mxu0 %v1667
        %v1872 = vpop.f32.mrb[0].mxu0
        %v1873 = vadd.f32 %v1552, %v1872
        %v1874 = vpop.f32.mrb[0].mxu0
        %1875 = vmatprep.mubr.f32.mxu0 0.0
        %1876 = vmatmul.mubr.f32.gmra.mrb[0].mxu0 %v1670
        %v1877 = vpop.f32.mrb[0].mxu0
        %v1878 = vadd.f32 %v1557, %v1877
        %v1879 = vpop.f32.mrb[0].mxu0
        %1880 = vmatprep.mubr.f32.mxu0 0.0
        %1881 = vmatmul.mubr.f32.gmra.mrb[0].mxu0 %v1673
        %v1882 = vpop.f32.mrb[0].mxu0
        %v1883 = vadd.f32 %v1562, %v1882
        %v1884 = vpop.f32.mrb[0].mxu0
        %1885 = vmatprep.mubr.f32.mxu0 0.0
        %1886 = vmatmul.mubr.f32.gmra.mrb[0].mxu0 %v1676
        %v1887 = vpop.f32.mrb[0].mxu0
        %v1888 = vadd.f32 %v1567, %v1887
        %v1889 = vpop.f32.mrb[0].mxu0
        %1890 = vmatprep.mubr.f32.mxu0 0.0
        %1891 = vmatmul.mubr.f32.gmra.mrb[0].mxu0 %v1679
        %v1892 = vpop.f32.mrb[0].mxu0
        %v1893 = vadd.f32 %v1572, %v1892
        %v1894 = vpop.f32.mrb[0].mxu0
        %1895 = vmatprep.mubr.f32.mxu0 0.0
        %1896 = vmatmul.mubr.f32.gmra.mrb[0].mxu0 %v1682
        %v1897 = vpop.f32.mrb[0].mxu0
        %v1898 = vadd.f32 %v1577, %v1897
        %v1899 = vpop.f32.mrb[0].mxu0
        %1900 = vmatprep.mubr.f32.mxu0 0.0
        %1901 = vmatmul.mubr.f32.gmra.mrb[0].mxu0 %v1685
        %v1902 = vpop.f32.mrb[0].mxu0
        %v1903 = vadd.f32 %v1582, %v1902
        %v1904 = vpop.f32.mrb[0].mxu0
        %1905 = vmatprep.mubr.f32.mxu0 0.0
        %1906 = vmatmul.mubr.f32.gmra.mrb[0].mxu0 %v1688
        %v1907 = vpop.f32.mrb[0].mxu0
        %v1908 = vadd.f32 %v1587, %v1907
        %v1909 = vpop.f32.mrb[0].mxu0
        %1910 = vmatprep.mubr.f32.mxu0 0.0
        %1911 = vmatmul.mubr.f32.gmra.mrb[0].mxu0 %v1691
        %v1912 = vpop.f32.mrb[0].mxu0
        %v1913 = vadd.f32 %v1592, %v1912
        %v1914 = vpop.f32.mrb[0].mxu0
        %1915 = vmatprep.mubr.f32.mxu0 0.0
        %1916 = vmatmul.mubr.f32.gmra.mrb[0].mxu0 %v1694
        %v1917 = vpop.f32.mrb[0].mxu0
        %v1918 = vadd.f32 %v1597, %v1917
        %v1919 = vpop.f32.mrb[0].mxu0
        %1920 = vdwg.mxu0
        %v1921 = vld [vmem:[#allocation2 + $0x2] sm:$0xff]
        %v1922 = vld [vmem:[#allocation2 + $0xa] sm:$0xff]
        %v1923 = vld [vmem:[#allocation2 + $0x1a] sm:$0xff]
        %v1924 = vld [vmem:[#allocation2 + $0x22] sm:$0xff]
        %v1925 = vld [vmem:[#allocation2 + $0x32] sm:$0xff]
        %v1926 = vld [vmem:[#allocation2 + $0x3a] sm:$0xff]
        %v1927 = vld [vmem:[#allocation2 + $0x4a] sm:$0xff]
        %v1928 = vld [vmem:[#allocation2 + $0x52] sm:$0xff]
        %v1929 = vld [vmem:[#allocation2 + $0x62] sm:$0xff]
        %v1930 = vld [vmem:[#allocation2 + $0x6a] sm:$0xff]
        %v1931 = vld [vmem:[#allocation2 + $0x7a] sm:$0xff]
        %v1932 = vld [vmem:[#allocation2 + $0x82] sm:$0xff]
        %v1933 = vld [vmem:[#allocation2 + $0x92] sm:$0xff]
        %v1934 = vld [vmem:[#allocation2 + $0x9a] sm:$0xff]
        %v1935 = vld [vmem:[#allocation2 + $0xaa] sm:$0xff]
        %v1936 = vld [vmem:[#allocation2 + $0xb2] sm:$0xff]
        %v1937 = vld [vmem:[#allocation2 + $0xc2] sm:$0xff]
        %v1938 = vld [vmem:[#allocation2 + $0xca] sm:$0xff]
        %v1939 = vld [vmem:[#allocation2 + $0xda] sm:$0xff]
        %v1940 = vld [vmem:[#allocation2 + $0xe2] sm:$0xff]
        %v1941 = vld [vmem:[#allocation2 + $0xf2] sm:$0xff]
        %v1942 = vld [vmem:[#allocation2 + $0xfa] sm:$0xff]
        %v1943 = vld [vmem:[#allocation2 + $0x10a] sm:$0xff]
        %v1944 = vld [vmem:[#allocation2 + $0x112] sm:$0xff]
        %v1945 = vld [vmem:[#allocation2 + $0x122] sm:$0xff]
        %v1946 = vld [vmem:[#allocation2 + $0x12a] sm:$0xff]
        %v1947 = vld [vmem:[#allocation2 + $0x13a] sm:$0xff]
        %v1948 = vld [vmem:[#allocation2 + $0x142] sm:$0xff]
        %v1949 = vld [vmem:[#allocation2 + $0x152] sm:$0xff]
        %v1950 = vld [vmem:[#allocation2 + $0x15a] sm:$0xff]
        %v1951 = vld [vmem:[#allocation2 + $0x16a] sm:$0xff]
        %v1952 = vld [vmem:[#allocation2 + $0x172] sm:$0xff]
        %s1953 = scalar_lea.vmem %s6, 128
        %v1954 = vld [vmem:[%s1953] sm:$0xff]
        %v1955 = vld [vmem:[%s1953 + $0x8] sm:$0xff]
        %v1956 = vld [vmem:[%s1953 + $0x10] sm:$0xff]
        %v1957 = vld [vmem:[%s1953 + $0x18] sm:$0xff]
        %v1958 = vld [vmem:[%s1953 + $0x20] sm:$0xff]
        %v1959 = vld [vmem:[%s1953 + $0x28] sm:$0xff]
        %v1960 = vld [vmem:[%s1953 + $0x30] sm:$0xff]
        %v1961 = vld [vmem:[%s1953 + $0x38] sm:$0xff]
        %v1963 = vsel %vm1109, %v1921, 0
        %v1966 = vsel %vm1109, %v1922, 0
        %v1969 = vsel %vm1109, %v1923, 0
        %v1972 = vsel %vm1109, %v1924, 0
        %v1975 = vsel %vm1109, %v1925, 0
        %v1978 = vsel %vm1109, %v1926, 0
        %v1981 = vsel %vm1109, %v1927, 0
        %v1984 = vsel %vm1109, %v1928, 0
        %v1987 = vsel %vm1109, %v1929, 0
        %v1990 = vsel %vm1109, %v1930, 0
        %v1993 = vsel %vm1109, %v1931, 0
        %v1996 = vsel %vm1109, %v1932, 0
        %v1999 = vsel %vm1109, %v1933, 0
        %v2002 = vsel %vm1109, %v1934, 0
        %v2005 = vsel %vm1109, %v1935, 0
        %v2008 = vsel %vm1109, %v1936, 0
        %v2011 = vsel %vm1109, %v1937, 0
        %v2014 = vsel %vm1109, %v1938, 0
        %v2017 = vsel %vm1109, %v1939, 0
        %v2020 = vsel %vm1109, %v1940, 0
        %v2023 = vsel %vm1109, %v1941, 0
        %v2026 = vsel %vm1109, %v1942, 0
        %v2029 = vsel %vm1109, %v1943, 0
        %v2032 = vsel %vm1109, %v1944, 0
        %v2035 = vsel %vm1109, %v1945, 0
        %v2038 = vsel %vm1109, %v1946, 0
        %v2041 = vsel %vm1109, %v1947, 0
        %v2044 = vsel %vm1109, %v1948, 0
        %v2047 = vsel %vm1109, %v1949, 0
        %v2050 = vsel %vm1109, %v1950, 0
        %v2053 = vsel %vm1109, %v1951, 0
        %v2056 = vsel %vm1109, %v1952, 0
        %2058 = vmatprep.subr.mxu0 0.0
        %2059 = vmatpush1.msra.mxu0 %v1954
        %2060 = vmatprep.subr.mxu0 0.0
        %2061 = vmatpush1.msra.mxu0 %v1955
        %2062 = vmatprep.subr.mxu0 0.0
        %2063 = vmatpush1.msra.mxu0 %v1956
        %2064 = vmatprep.subr.mxu0 0.0
        %2065 = vmatpush1.msra.mxu0 %v1957
        %2066 = vmatprep.subr.mxu0 0.0
        %2067 = vmatpush1.msra.mxu0 %v1958
        %2068 = vmatprep.subr.mxu0 0.0
        %2069 = vmatpush1.msra.mxu0 %v1959
        %2070 = vmatprep.subr.mxu0 0.0
        %2071 = vmatpush1.msra.mxu0 %v1960
        %2072 = vmatprep.subr.mxu0 0.0
        %2073 = vmatpush1.msra.mxu0 %v1961
        %2074 = vmatprep.subr.mxu0 0.0
        %2075 = vmatpush1.msra.mxu0 0.0
        %2076 = vmatprep.subr.mxu0 0.0
        %2077 = vmatpush1.msra.mxu0 0.0
        %2078 = vmatprep.subr.mxu0 0.0
        %2079 = vmatpush1.msra.mxu0 0.0
        %2080 = vmatprep.subr.mxu0 0.0
        %2081 = vmatpush1.msra.mxu0 0.0
        %2082 = vmatprep.subr.mxu0 0.0
        %2083 = vmatpush1.msra.mxu0 0.0
        %2084 = vmatprep.subr.mxu0 0.0
        %2085 = vmatpush1.msra.mxu0 0.0
        %2086 = vmatprep.subr.mxu0 0.0
        %2087 = vmatpush1.msra.mxu0 0.0
        %2088 = vmatprep.subr.mxu0 0.0
        %2089 = vmatpush1.msra.mxu0 0.0
        %2090 = vmatprep.subr.mxu0 0.0
        %2091 = vmatpush1.msra.mxu0 0.0
        %2092 = vmatprep.subr.mxu0 0.0
        %2093 = vmatpush1.msra.mxu0 0.0
        %2094 = vmatprep.subr.mxu0 0.0
        %2095 = vmatpush1.msra.mxu0 0.0
        %2096 = vmatprep.subr.mxu0 0.0
        %2097 = vmatpush1.msra.mxu0 0.0
        %2098 = vmatprep.subr.mxu0 0.0
        %2099 = vmatpush1.msra.mxu0 0.0
        %2100 = vmatprep.subr.mxu0 0.0
        %2101 = vmatpush1.msra.mxu0 0.0
        %2102 = vmatprep.subr.mxu0 0.0
        %2103 = vmatpush1.msra.mxu0 0.0
        %2104 = vmatprep.subr.mxu0 0.0
        %2105 = vmatpush1.msra.mxu0 0.0
        %2106 = vmatprep.subr.mxu0 0.0
        %2107 = vmatpush1.msra.mxu0 0.0
        %2108 = vmatprep.subr.mxu0 0.0
        %2109 = vmatpush1.msra.mxu0 0.0
        %2110 = vmatprep.subr.mxu0 0.0
        %2111 = vmatpush1.msra.mxu0 0.0
        %2112 = vmatprep.subr.mxu0 0.0
        %2113 = vmatpush1.msra.mxu0 0.0
        %2114 = vmatprep.subr.mxu0 0.0
        %2115 = vmatpush1.msra.mxu0 0.0
        %2116 = vmatprep.subr.mxu0 0.0
        %2117 = vmatpush1.msra.mxu0 0.0
        %2118 = vmatprep.subr.mxu0 0.0
        %2119 = vmatpush1.msra.mxu0 0.0
        %2120 = vmatprep.subr.mxu0 0.0
        %2121 = vmatpush1.msra.mxu0 0.0
        %2122 = vmatprep.mubr.f32.mxu0 0.0
        %2123 = vmatmul.mubr.f32.gmra.mrb[0].mxu0 %v1963
        %v2124 = vpop.f32.mrb[0].mxu0
        %v2125 = vadd.f32 0.0, %v2124
        %v2126 = vpop.f32.mrb[0].mxu0
        %2127 = vmatprep.mubr.f32.mxu0 0.0
        %2128 = vmatmul.mubr.f32.gmra.mrb[0].mxu0 %v1966
        %v2129 = vpop.f32.mrb[0].mxu0
        %v2130 = vadd.f32 0.0, %v2129
        %v2131 = vpop.f32.mrb[0].mxu0
        %2132 = vmatprep.mubr.f32.mxu0 0.0
        %2133 = vmatmul.mubr.f32.gmra.mrb[0].mxu0 %v1969
        %v2134 = vpop.f32.mrb[0].mxu0
        %v2135 = vadd.f32 0.0, %v2134
        %v2136 = vpop.f32.mrb[0].mxu0
        %2137 = vmatprep.mubr.f32.mxu0 0.0
        %2138 = vmatmul.mubr.f32.gmra.mrb[0].mxu0 %v1972
        %v2139 = vpop.f32.mrb[0].mxu0
        %v2140 = vadd.f32 0.0, %v2139
        %v2141 = vpop.f32.mrb[0].mxu0
        %2142 = vmatprep.mubr.f32.mxu0 0.0
        %2143 = vmatmul.mubr.f32.gmra.mrb[0].mxu0 %v1975
        %v2144 = vpop.f32.mrb[0].mxu0
        %v2145 = vadd.f32 0.0, %v2144
        %v2146 = vpop.f32.mrb[0].mxu0
        %2147 = vmatprep.mubr.f32.mxu0 0.0
        %2148 = vmatmul.mubr.f32.gmra.mrb[0].mxu0 %v1978
        %v2149 = vpop.f32.mrb[0].mxu0
        %v2150 = vadd.f32 0.0, %v2149
        %v2151 = vpop.f32.mrb[0].mxu0
        %2152 = vmatprep.mubr.f32.mxu0 0.0
        %2153 = vmatmul.mubr.f32.gmra.mrb[0].mxu0 %v1981
        %v2154 = vpop.f32.mrb[0].mxu0
        %v2155 = vadd.f32 0.0, %v2154
        %v2156 = vpop.f32.mrb[0].mxu0
        %2157 = vmatprep.mubr.f32.mxu0 0.0
        %2158 = vmatmul.mubr.f32.gmra.mrb[0].mxu0 %v1984
        %v2159 = vpop.f32.mrb[0].mxu0
        %v2160 = vadd.f32 0.0, %v2159
        %v2161 = vpop.f32.mrb[0].mxu0
        %2162 = vmatprep.mubr.f32.mxu0 0.0
        %2163 = vmatmul.mubr.f32.gmra.mrb[0].mxu0 %v1987
        %v2164 = vpop.f32.mrb[0].mxu0
        %v2165 = vadd.f32 0.0, %v2164
        %v2166 = vpop.f32.mrb[0].mxu0
        %2167 = vmatprep.mubr.f32.mxu0 0.0
        %2168 = vmatmul.mubr.f32.gmra.mrb[0].mxu0 %v1990
        %v2169 = vpop.f32.mrb[0].mxu0
        %v2170 = vadd.f32 0.0, %v2169
        %v2171 = vpop.f32.mrb[0].mxu0
        %2172 = vmatprep.mubr.f32.mxu0 0.0
        %2173 = vmatmul.mubr.f32.gmra.mrb[0].mxu0 %v1993
        %v2174 = vpop.f32.mrb[0].mxu0
        %v2175 = vadd.f32 0.0, %v2174
        %v2176 = vpop.f32.mrb[0].mxu0
        %2177 = vmatprep.mubr.f32.mxu0 0.0
        %2178 = vmatmul.mubr.f32.gmra.mrb[0].mxu0 %v1996
        %v2179 = vpop.f32.mrb[0].mxu0
        %v2180 = vadd.f32 0.0, %v2179
        %v2181 = vpop.f32.mrb[0].mxu0
        %2182 = vmatprep.mubr.f32.mxu0 0.0
        %2183 = vmatmul.mubr.f32.gmra.mrb[0].mxu0 %v1999
        %v2184 = vpop.f32.mrb[0].mxu0
        %v2185 = vadd.f32 0.0, %v2184
        %v2186 = vpop.f32.mrb[0].mxu0
        %2187 = vmatprep.mubr.f32.mxu0 0.0
        %2188 = vmatmul.mubr.f32.gmra.mrb[0].mxu0 %v2002
        %v2189 = vpop.f32.mrb[0].mxu0
        %v2190 = vadd.f32 0.0, %v2189
        %v2191 = vpop.f32.mrb[0].mxu0
        %2192 = vmatprep.mubr.f32.mxu0 0.0
        %2193 = vmatmul.mubr.f32.gmra.mrb[0].mxu0 %v2005
        %v2194 = vpop.f32.mrb[0].mxu0
        %v2195 = vadd.f32 0.0, %v2194
        %v2196 = vpop.f32.mrb[0].mxu0
        %2197 = vmatprep.mubr.f32.mxu0 0.0
        %2198 = vmatmul.mubr.f32.gmra.mrb[0].mxu0 %v2008
        %v2199 = vpop.f32.mrb[0].mxu0
        %v2200 = vadd.f32 0.0, %v2199
        %v2201 = vpop.f32.mrb[0].mxu0
        %2202 = vmatprep.mubr.f32.mxu0 0.0
        %2203 = vmatmul.mubr.f32.gmra.mrb[0].mxu0 %v2011
        %v2204 = vpop.f32.mrb[0].mxu0
        %v2205 = vadd.f32 0.0, %v2204
        %v2206 = vpop.f32.mrb[0].mxu0
        %2207 = vmatprep.mubr.f32.mxu0 0.0
        %2208 = vmatmul.mubr.f32.gmra.mrb[0].mxu0 %v2014
        %v2209 = vpop.f32.mrb[0].mxu0
        %v2210 = vadd.f32 0.0, %v2209
        %v2211 = vpop.f32.mrb[0].mxu0
        %2212 = vmatprep.mubr.f32.mxu0 0.0
        %2213 = vmatmul.mubr.f32.gmra.mrb[0].mxu0 %v2017
        %v2214 = vpop.f32.mrb[0].mxu0
        %v2215 = vadd.f32 0.0, %v2214
        %v2216 = vpop.f32.mrb[0].mxu0
        %2217 = vmatprep.mubr.f32.mxu0 0.0
        %2218 = vmatmul.mubr.f32.gmra.mrb[0].mxu0 %v2020
        %v2219 = vpop.f32.mrb[0].mxu0
        %v2220 = vadd.f32 0.0, %v2219
        %v2221 = vpop.f32.mrb[0].mxu0
        %2222 = vmatprep.mubr.f32.mxu0 0.0
        %2223 = vmatmul.mubr.f32.gmra.mrb[0].mxu0 %v2023
        %v2224 = vpop.f32.mrb[0].mxu0
        %v2225 = vadd.f32 0.0, %v2224
        %v2226 = vpop.f32.mrb[0].mxu0
        %2227 = vmatprep.mubr.f32.mxu0 0.0
        %2228 = vmatmul.mubr.f32.gmra.mrb[0].mxu0 %v2026
        %v2229 = vpop.f32.mrb[0].mxu0
        %v2230 = vadd.f32 0.0, %v2229
        %v2231 = vpop.f32.mrb[0].mxu0
        %2232 = vmatprep.mubr.f32.mxu0 0.0
        %2233 = vmatmul.mubr.f32.gmra.mrb[0].mxu0 %v2029
        %v2234 = vpop.f32.mrb[0].mxu0
        %v2235 = vadd.f32 0.0, %v2234
        %v2236 = vpop.f32.mrb[0].mxu0
        %2237 = vmatprep.mubr.f32.mxu0 0.0
        %2238 = vmatmul.mubr.f32.gmra.mrb[0].mxu0 %v2032
        %v2239 = vpop.f32.mrb[0].mxu0
        %v2240 = vadd.f32 0.0, %v2239
        %v2241 = vpop.f32.mrb[0].mxu0
        %2242 = vmatprep.mubr.f32.mxu0 0.0
        %2243 = vmatmul.mubr.f32.gmra.mrb[0].mxu0 %v2035
        %v2244 = vpop.f32.mrb[0].mxu0
        %v2245 = vadd.f32 0.0, %v2244
        %v2246 = vpop.f32.mrb[0].mxu0
        %2247 = vmatprep.mubr.f32.mxu0 0.0
        %2248 = vmatmul.mubr.f32.gmra.mrb[0].mxu0 %v2038
        %v2249 = vpop.f32.mrb[0].mxu0
        %v2250 = vadd.f32 0.0, %v2249
        %v2251 = vpop.f32.mrb[0].mxu0
        %2252 = vmatprep.mubr.f32.mxu0 0.0
        %2253 = vmatmul.mubr.f32.gmra.mrb[0].mxu0 %v2041
        %v2254 = vpop.f32.mrb[0].mxu0
        %v2255 = vadd.f32 0.0, %v2254
        %v2256 = vpop.f32.mrb[0].mxu0
        %2257 = vmatprep.mubr.f32.mxu0 0.0
        %2258 = vmatmul.mubr.f32.gmra.mrb[0].mxu0 %v2044
        %v2259 = vpop.f32.mrb[0].mxu0
        %v2260 = vadd.f32 0.0, %v2259
        %v2261 = vpop.f32.mrb[0].mxu0
        %2262 = vmatprep.mubr.f32.mxu0 0.0
        %2263 = vmatmul.mubr.f32.gmra.mrb[0].mxu0 %v2047
        %v2264 = vpop.f32.mrb[0].mxu0
        %v2265 = vadd.f32 0.0, %v2264
        %v2266 = vpop.f32.mrb[0].mxu0
        %2267 = vmatprep.mubr.f32.mxu0 0.0
        %2268 = vmatmul.mubr.f32.gmra.mrb[0].mxu0 %v2050
        %v2269 = vpop.f32.mrb[0].mxu0
        %v2270 = vadd.f32 0.0, %v2269
        %v2271 = vpop.f32.mrb[0].mxu0
        %2272 = vmatprep.mubr.f32.mxu0 0.0
        %2273 = vmatmul.mubr.f32.gmra.mrb[0].mxu0 %v2053
        %v2274 = vpop.f32.mrb[0].mxu0
        %v2275 = vadd.f32 0.0, %v2274
        %v2276 = vpop.f32.mrb[0].mxu0
        %2277 = vmatprep.mubr.f32.mxu0 0.0
        %2278 = vmatmul.mubr.f32.gmra.mrb[0].mxu0 %v2056
        %v2279 = vpop.f32.mrb[0].mxu0
        %v2280 = vadd.f32 0.0, %v2279
        %v2281 = vpop.f32.mrb[0].mxu0
        %2282 = vdwg.mxu0
        %v2283 = vadd.f32 %v1763, %v2125
        %v2284 = vadd.f32 %v1768, %v2130
        %v2285 = vadd.f32 %v1773, %v2135
        %v2286 = vadd.f32 %v1778, %v2140
        %v2287 = vadd.f32 %v1783, %v2145
        %v2288 = vadd.f32 %v1788, %v2150
        %v2289 = vadd.f32 %v1793, %v2155
        %v2290 = vadd.f32 %v1798, %v2160
        %v2291 = vadd.f32 %v1803, %v2165
        %v2292 = vadd.f32 %v1808, %v2170
        %v2293 = vadd.f32 %v1813, %v2175
        %v2294 = vadd.f32 %v1818, %v2180
        %v2295 = vadd.f32 %v1823, %v2185
        %v2296 = vadd.f32 %v1828, %v2190
        %v2297 = vadd.f32 %v1833, %v2195
        %v2298 = vadd.f32 %v1838, %v2200
        %v2299 = vadd.f32 %v1843, %v2205
        %v2300 = vadd.f32 %v1848, %v2210
        %v2301 = vadd.f32 %v1853, %v2215
        %v2302 = vadd.f32 %v1858, %v2220
        %v2303 = vadd.f32 %v1863, %v2225
        %v2304 = vadd.f32 %v1868, %v2230
        %v2305 = vadd.f32 %v1873, %v2235
        %v2306 = vadd.f32 %v1878, %v2240
        %v2307 = vadd.f32 %v1883, %v2245
        %v2308 = vadd.f32 %v1888, %v2250
        %v2309 = vadd.f32 %v1893, %v2255
        %v2310 = vadd.f32 %v1898, %v2260
        %v2311 = vadd.f32 %v1903, %v2265
        %v2312 = vadd.f32 %v1908, %v2270
        %v2313 = vadd.f32 %v1913, %v2275
        %v2314 = vadd.f32 %v1918, %v2280
        %v2315 = vld [vmem:[%s1165] sm:$0xff]
        %v2316 = vld [vmem:[%s1165 + $0x8] sm:$0xff]
        %v2317 = vld [vmem:[%s1165 + $0x18] sm:$0xff]
        %v2318 = vld [vmem:[%s1165 + $0x20] sm:$0xff]
        %v2319 = vld [vmem:[%s1165 + $0x30] sm:$0xff]
        %v2320 = vld [vmem:[%s1165 + $0x38] sm:$0xff]
        %v2321 = vld [vmem:[%s1165 + $0x48] sm:$0xff]
        %v2322 = vld [vmem:[%s1165 + $0x50] sm:$0xff]
        %v2323 = vld [vmem:[%s1165 + $0x60] sm:$0xff]
        %v2324 = vld [vmem:[%s1165 + $0x68] sm:$0xff]
        %v2325 = vld [vmem:[%s1165 + $0x78] sm:$0xff]
        %v2326 = vld [vmem:[%s1165 + $0x80] sm:$0xff]
        %v2327 = vld [vmem:[%s1165 + $0x90] sm:$0xff]
        %v2328 = vld [vmem:[%s1165 + $0x98] sm:$0xff]
        %v2329 = vld [vmem:[%s1165 + $0xa8] sm:$0xff]
        %v2330 = vld [vmem:[%s1165 + $0xb0] sm:$0xff]
        %v2331 = vld [vmem:[%s1165 + $0xc0] sm:$0xff]
        %v2332 = vld [vmem:[%s1165 + $0xc8] sm:$0xff]
        %v2333 = vld [vmem:[%s1165 + $0xd8] sm:$0xff]
        %v2334 = vld [vmem:[%s1165 + $0xe0] sm:$0xff]
        %v2335 = vld [vmem:[%s1165 + $0xf0] sm:$0xff]
        %v2336 = vld [vmem:[%s1165 + $0xf8] sm:$0xff]
        %v2337 = vld [vmem:[%s1165 + $0x108] sm:$0xff]
        %v2338 = vld [vmem:[%s1165 + $0x110] sm:$0xff]
        %v2339 = vld [vmem:[%s1165 + $0x120] sm:$0xff]
        %v2340 = vld [vmem:[%s1165 + $0x128] sm:$0xff]
        %v2341 = vld [vmem:[%s1165 + $0x138] sm:$0xff]
        %v2342 = vld [vmem:[%s1165 + $0x140] sm:$0xff]
        %v2343 = vld [vmem:[%s1165 + $0x150] sm:$0xff]
        %v2344 = vld [vmem:[%s1165 + $0x158] sm:$0xff]
        %v2345 = vld [vmem:[%s1165 + $0x168] sm:$0xff]
        %v2346 = vld [vmem:[%s1165 + $0x170] sm:$0xff]
        %s2347 = scalar_lea.vmem %s6, 192
        %v2348 = vld [vmem:[%s2347] sm:$0xff]
        %v2349 = vld [vmem:[%s2347 + $0x8] sm:$0xff]
        %v2350 = vld [vmem:[%s2347 + $0x10] sm:$0xff]
        %v2351 = vld [vmem:[%s2347 + $0x18] sm:$0xff]
        %v2352 = vld [vmem:[%s2347 + $0x20] sm:$0xff]
        %v2353 = vld [vmem:[%s2347 + $0x28] sm:$0xff]
        %v2354 = vld [vmem:[%s2347 + $0x30] sm:$0xff]
        %v2355 = vld [vmem:[%s2347 + $0x38] sm:$0xff]
        %v2357 = vsel %vm1109, %v2315, 0
        %v2360 = vsel %vm1109, %v2316, 0
        %v2363 = vsel %vm1109, %v2317, 0
        %v2366 = vsel %vm1109, %v2318, 0
        %v2369 = vsel %vm1109, %v2319, 0
        %v2372 = vsel %vm1109, %v2320, 0
        %v2375 = vsel %vm1109, %v2321, 0
        %v2378 = vsel %vm1109, %v2322, 0
        %v2381 = vsel %vm1109, %v2323, 0
        %v2384 = vsel %vm1109, %v2324, 0
        %v2387 = vsel %vm1109, %v2325, 0
        %v2390 = vsel %vm1109, %v2326, 0
        %v2393 = vsel %vm1109, %v2327, 0
        %v2396 = vsel %vm1109, %v2328, 0
        %v2399 = vsel %vm1109, %v2329, 0
        %v2402 = vsel %vm1109, %v2330, 0
        %v2405 = vsel %vm1109, %v2331, 0
        %v2408 = vsel %vm1109, %v2332, 0
        %v2411 = vsel %vm1109, %v2333, 0
        %v2414 = vsel %vm1109, %v2334, 0
        %v2417 = vsel %vm1109, %v2335, 0
        %v2420 = vsel %vm1109, %v2336, 0
        %v2423 = vsel %vm1109, %v2337, 0
        %v2426 = vsel %vm1109, %v2338, 0
        %v2429 = vsel %vm1109, %v2339, 0
        %v2432 = vsel %vm1109, %v2340, 0
        %v2435 = vsel %vm1109, %v2341, 0
        %v2438 = vsel %vm1109, %v2342, 0
        %v2441 = vsel %vm1109, %v2343, 0
        %v2444 = vsel %vm1109, %v2344, 0
        %v2447 = vsel %vm1109, %v2345, 0
        %v2450 = vsel %vm1109, %v2346, 0
        %2452 = vmatprep.subr.mxu0 0.0
        %2453 = vmatpush1.msra.mxu0 %v2348
        %2454 = vmatprep.subr.mxu0 0.0
        %2455 = vmatpush1.msra.mxu0 %v2349
        %2456 = vmatprep.subr.mxu0 0.0
        %2457 = vmatpush1.msra.mxu0 %v2350
        %2458 = vmatprep.subr.mxu0 0.0
        %2459 = vmatpush1.msra.mxu0 %v2351
        %2460 = vmatprep.subr.mxu0 0.0
        %2461 = vmatpush1.msra.mxu0 %v2352
        %2462 = vmatprep.subr.mxu0 0.0
        %2463 = vmatpush1.msra.mxu0 %v2353
        %2464 = vmatprep.subr.mxu0 0.0
        %2465 = vmatpush1.msra.mxu0 %v2354
        %2466 = vmatprep.subr.mxu0 0.0
        %2467 = vmatpush1.msra.mxu0 %v2355
        %2468 = vmatprep.subr.mxu0 0.0
        %2469 = vmatpush1.msra.mxu0 0.0
        %2470 = vmatprep.subr.mxu0 0.0
        %2471 = vmatpush1.msra.mxu0 0.0
        %2472 = vmatprep.subr.mxu0 0.0
        %2473 = vmatpush1.msra.mxu0 0.0
        %2474 = vmatprep.subr.mxu0 0.0
        %2475 = vmatpush1.msra.mxu0 0.0
        %2476 = vmatprep.subr.mxu0 0.0
        %2477 = vmatpush1.msra.mxu0 0.0
        %2478 = vmatprep.subr.mxu0 0.0
        %2479 = vmatpush1.msra.mxu0 0.0
        %2480 = vmatprep.subr.mxu0 0.0
        %2481 = vmatpush1.msra.mxu0 0.0
        %2482 = vmatprep.subr.mxu0 0.0
        %2483 = vmatpush1.msra.mxu0 0.0
        %2484 = vmatprep.subr.mxu0 0.0
        %2485 = vmatpush1.msra.mxu0 0.0
        %2486 = vmatprep.subr.mxu0 0.0
        %2487 = vmatpush1.msra.mxu0 0.0
        %2488 = vmatprep.subr.mxu0 0.0
        %2489 = vmatpush1.msra.mxu0 0.0
        %2490 = vmatprep.subr.mxu0 0.0
        %2491 = vmatpush1.msra.mxu0 0.0
        %2492 = vmatprep.subr.mxu0 0.0
        %2493 = vmatpush1.msra.mxu0 0.0
        %2494 = vmatprep.subr.mxu0 0.0
        %2495 = vmatpush1.msra.mxu0 0.0
        %2496 = vmatprep.subr.mxu0 0.0
        %2497 = vmatpush1.msra.mxu0 0.0
        %2498 = vmatprep.subr.mxu0 0.0
        %2499 = vmatpush1.msra.mxu0 0.0
        %2500 = vmatprep.subr.mxu0 0.0
        %2501 = vmatpush1.msra.mxu0 0.0
        %2502 = vmatprep.subr.mxu0 0.0
        %2503 = vmatpush1.msra.mxu0 0.0
        %2504 = vmatprep.subr.mxu0 0.0
        %2505 = vmatpush1.msra.mxu0 0.0
        %2506 = vmatprep.subr.mxu0 0.0
        %2507 = vmatpush1.msra.mxu0 0.0
        %2508 = vmatprep.subr.mxu0 0.0
        %2509 = vmatpush1.msra.mxu0 0.0
        %2510 = vmatprep.subr.mxu0 0.0
        %2511 = vmatpush1.msra.mxu0 0.0
        %2512 = vmatprep.subr.mxu0 0.0
        %2513 = vmatpush1.msra.mxu0 0.0
        %2514 = vmatprep.subr.mxu0 0.0
        %2515 = vmatpush1.msra.mxu0 0.0
        %2516 = vmatprep.mubr.f32.mxu0 0.0
        %2517 = vmatmul.mubr.f32.gmra.mrb[0].mxu0 %v2357
        %v2518 = vpop.f32.mrb[0].mxu0
        %v2519 = vadd.f32 0.0, %v2518
        %v2520 = vpop.f32.mrb[0].mxu0
        %2521 = vmatprep.mubr.f32.mxu0 0.0
        %2522 = vmatmul.mubr.f32.gmra.mrb[0].mxu0 %v2360
        %v2523 = vpop.f32.mrb[0].mxu0
        %v2524 = vadd.f32 0.0, %v2523
        %v2525 = vpop.f32.mrb[0].mxu0
        %2526 = vmatprep.mubr.f32.mxu0 0.0
        %2527 = vmatmul.mubr.f32.gmra.mrb[0].mxu0 %v2363
        %v2528 = vpop.f32.mrb[0].mxu0
        %v2529 = vadd.f32 0.0, %v2528
        %v2530 = vpop.f32.mrb[0].mxu0
        %2531 = vmatprep.mubr.f32.mxu0 0.0
        %2532 = vmatmul.mubr.f32.gmra.mrb[0].mxu0 %v2366
        %v2533 = vpop.f32.mrb[0].mxu0
        %v2534 = vadd.f32 0.0, %v2533
        %v2535 = vpop.f32.mrb[0].mxu0
        %2536 = vmatprep.mubr.f32.mxu0 0.0
        %2537 = vmatmul.mubr.f32.gmra.mrb[0].mxu0 %v2369
        %v2538 = vpop.f32.mrb[0].mxu0
        %v2539 = vadd.f32 0.0, %v2538
        %v2540 = vpop.f32.mrb[0].mxu0
        %2541 = vmatprep.mubr.f32.mxu0 0.0
        %2542 = vmatmul.mubr.f32.gmra.mrb[0].mxu0 %v2372
        %v2543 = vpop.f32.mrb[0].mxu0
        %v2544 = vadd.f32 0.0, %v2543
        %v2545 = vpop.f32.mrb[0].mxu0
        %2546 = vmatprep.mubr.f32.mxu0 0.0
        %2547 = vmatmul.mubr.f32.gmra.mrb[0].mxu0 %v2375
        %v2548 = vpop.f32.mrb[0].mxu0
        %v2549 = vadd.f32 0.0, %v2548
        %v2550 = vpop.f32.mrb[0].mxu0
        %2551 = vmatprep.mubr.f32.mxu0 0.0
        %2552 = vmatmul.mubr.f32.gmra.mrb[0].mxu0 %v2378
        %v2553 = vpop.f32.mrb[0].mxu0
        %v2554 = vadd.f32 0.0, %v2553
        %v2555 = vpop.f32.mrb[0].mxu0
        %2556 = vmatprep.mubr.f32.mxu0 0.0
        %2557 = vmatmul.mubr.f32.gmra.mrb[0].mxu0 %v2381
        %v2558 = vpop.f32.mrb[0].mxu0
        %v2559 = vadd.f32 0.0, %v2558
        %v2560 = vpop.f32.mrb[0].mxu0
        %2561 = vmatprep.mubr.f32.mxu0 0.0
        %2562 = vmatmul.mubr.f32.gmra.mrb[0].mxu0 %v2384
        %v2563 = vpop.f32.mrb[0].mxu0
        %v2564 = vadd.f32 0.0, %v2563
        %v2565 = vpop.f32.mrb[0].mxu0
        %2566 = vmatprep.mubr.f32.mxu0 0.0
        %2567 = vmatmul.mubr.f32.gmra.mrb[0].mxu0 %v2387
        %v2568 = vpop.f32.mrb[0].mxu0
        %v2569 = vadd.f32 0.0, %v2568
        %v2570 = vpop.f32.mrb[0].mxu0
        %2571 = vmatprep.mubr.f32.mxu0 0.0
        %2572 = vmatmul.mubr.f32.gmra.mrb[0].mxu0 %v2390
        %v2573 = vpop.f32.mrb[0].mxu0
        %v2574 = vadd.f32 0.0, %v2573
        %v2575 = vpop.f32.mrb[0].mxu0
        %2576 = vmatprep.mubr.f32.mxu0 0.0
        %2577 = vmatmul.mubr.f32.gmra.mrb[0].mxu0 %v2393
        %v2578 = vpop.f32.mrb[0].mxu0
        %v2579 = vadd.f32 0.0, %v2578
        %v2580 = vpop.f32.mrb[0].mxu0
        %2581 = vmatprep.mubr.f32.mxu0 0.0
        %2582 = vmatmul.mubr.f32.gmra.mrb[0].mxu0 %v2396
        %v2583 = vpop.f32.mrb[0].mxu0
        %v2584 = vadd.f32 0.0, %v2583
        %v2585 = vpop.f32.mrb[0].mxu0
        %2586 = vmatprep.mubr.f32.mxu0 0.0
        %2587 = vmatmul.mubr.f32.gmra.mrb[0].mxu0 %v2399
        %v2588 = vpop.f32.mrb[0].mxu0
        %v2589 = vadd.f32 0.0, %v2588
        %v2590 = vpop.f32.mrb[0].mxu0
        %2591 = vmatprep.mubr.f32.mxu0 0.0
        %2592 = vmatmul.mubr.f32.gmra.mrb[0].mxu0 %v2402
        %v2593 = vpop.f32.mrb[0].mxu0
        %v2594 = vadd.f32 0.0, %v2593
        %v2595 = vpop.f32.mrb[0].mxu0
        %2596 = vmatprep.mubr.f32.mxu0 0.0
        %2597 = vmatmul.mubr.f32.gmra.mrb[0].mxu0 %v2405
        %v2598 = vpop.f32.mrb[0].mxu0
        %v2599 = vadd.f32 0.0, %v2598
        %v2600 = vpop.f32.mrb[0].mxu0
        %2601 = vmatprep.mubr.f32.mxu0 0.0
        %2602 = vmatmul.mubr.f32.gmra.mrb[0].mxu0 %v2408
        %v2603 = vpop.f32.mrb[0].mxu0
        %v2604 = vadd.f32 0.0, %v2603
        %v2605 = vpop.f32.mrb[0].mxu0
        %2606 = vmatprep.mubr.f32.mxu0 0.0
        %2607 = vmatmul.mubr.f32.gmra.mrb[0].mxu0 %v2411
        %v2608 = vpop.f32.mrb[0].mxu0
        %v2609 = vadd.f32 0.0, %v2608
        %v2610 = vpop.f32.mrb[0].mxu0
        %2611 = vmatprep.mubr.f32.mxu0 0.0
        %2612 = vmatmul.mubr.f32.gmra.mrb[0].mxu0 %v2414
        %v2613 = vpop.f32.mrb[0].mxu0
        %v2614 = vadd.f32 0.0, %v2613
        %v2615 = vpop.f32.mrb[0].mxu0
        %2616 = vmatprep.mubr.f32.mxu0 0.0
        %2617 = vmatmul.mubr.f32.gmra.mrb[0].mxu0 %v2417
        %v2618 = vpop.f32.mrb[0].mxu0
        %v2619 = vadd.f32 0.0, %v2618
        %v2620 = vpop.f32.mrb[0].mxu0
        %2621 = vmatprep.mubr.f32.mxu0 0.0
        %2622 = vmatmul.mubr.f32.gmra.mrb[0].mxu0 %v2420
        %v2623 = vpop.f32.mrb[0].mxu0
        %v2624 = vadd.f32 0.0, %v2623
        %v2625 = vpop.f32.mrb[0].mxu0
        %2626 = vmatprep.mubr.f32.mxu0 0.0
        %2627 = vmatmul.mubr.f32.gmra.mrb[0].mxu0 %v2423
        %v2628 = vpop.f32.mrb[0].mxu0
        %v2629 = vadd.f32 0.0, %v2628
        %v2630 = vpop.f32.mrb[0].mxu0
        %2631 = vmatprep.mubr.f32.mxu0 0.0
        %2632 = vmatmul.mubr.f32.gmra.mrb[0].mxu0 %v2426
        %v2633 = vpop.f32.mrb[0].mxu0
        %v2634 = vadd.f32 0.0, %v2633
        %v2635 = vpop.f32.mrb[0].mxu0
        %2636 = vmatprep.mubr.f32.mxu0 0.0
        %2637 = vmatmul.mubr.f32.gmra.mrb[0].mxu0 %v2429
        %v2638 = vpop.f32.mrb[0].mxu0
        %v2639 = vadd.f32 0.0, %v2638
        %v2640 = vpop.f32.mrb[0].mxu0
        %2641 = vmatprep.mubr.f32.mxu0 0.0
        %2642 = vmatmul.mubr.f32.gmra.mrb[0].mxu0 %v2432
        %v2643 = vpop.f32.mrb[0].mxu0
        %v2644 = vadd.f32 0.0, %v2643
        %v2645 = vpop.f32.mrb[0].mxu0
        %2646 = vmatprep.mubr.f32.mxu0 0.0
        %2647 = vmatmul.mubr.f32.gmra.mrb[0].mxu0 %v2435
        %v2648 = vpop.f32.mrb[0].mxu0
        %v2649 = vadd.f32 0.0, %v2648
        %v2650 = vpop.f32.mrb[0].mxu0
        %2651 = vmatprep.mubr.f32.mxu0 0.0
        %2652 = vmatmul.mubr.f32.gmra.mrb[0].mxu0 %v2438
        %v2653 = vpop.f32.mrb[0].mxu0
        %v2654 = vadd.f32 0.0, %v2653
        %v2655 = vpop.f32.mrb[0].mxu0
        %2656 = vmatprep.mubr.f32.mxu0 0.0
        %2657 = vmatmul.mubr.f32.gmra.mrb[0].mxu0 %v2441
        %v2658 = vpop.f32.mrb[0].mxu0
        %v2659 = vadd.f32 0.0, %v2658
        %v2660 = vpop.f32.mrb[0].mxu0
        %2661 = vmatprep.mubr.f32.mxu0 0.0
        %2662 = vmatmul.mubr.f32.gmra.mrb[0].mxu0 %v2444
        %v2663 = vpop.f32.mrb[0].mxu0
        %v2664 = vadd.f32 0.0, %v2663
        %v2665 = vpop.f32.mrb[0].mxu0
        %2666 = vmatprep.mubr.f32.mxu0 0.0
        %2667 = vmatmul.mubr.f32.gmra.mrb[0].mxu0 %v2447
        %v2668 = vpop.f32.mrb[0].mxu0
        %v2669 = vadd.f32 0.0, %v2668
        %v2670 = vpop.f32.mrb[0].mxu0
        %2671 = vmatprep.mubr.f32.mxu0 0.0
        %2672 = vmatmul.mubr.f32.gmra.mrb[0].mxu0 %v2450
        %v2673 = vpop.f32.mrb[0].mxu0
        %v2674 = vadd.f32 0.0, %v2673
        %v2675 = vpop.f32.mrb[0].mxu0
        %2676 = vdwg.mxu0
        %v2677 = vadd.f32 %v2283, %v2519
        %v2678 = vadd.f32 %v2284, %v2524
        %v2679 = vadd.f32 %v2285, %v2529
        %v2680 = vadd.f32 %v2286, %v2534
        %v2681 = vadd.f32 %v2287, %v2539
        %v2682 = vadd.f32 %v2288, %v2544
        %v2683 = vadd.f32 %v2289, %v2549
        %v2684 = vadd.f32 %v2290, %v2554
        %v2685 = vadd.f32 %v2291, %v2559
        %v2686 = vadd.f32 %v2292, %v2564
        %v2687 = vadd.f32 %v2293, %v2569
        %v2688 = vadd.f32 %v2294, %v2574
        %v2689 = vadd.f32 %v2295, %v2579
        %v2690 = vadd.f32 %v2296, %v2584
        %v2691 = vadd.f32 %v2297, %v2589
        %v2692 = vadd.f32 %v2298, %v2594
        %v2693 = vadd.f32 %v2299, %v2599
        %v2694 = vadd.f32 %v2300, %v2604
        %v2695 = vadd.f32 %v2301, %v2609
        %v2696 = vadd.f32 %v2302, %v2614
        %v2697 = vadd.f32 %v2303, %v2619
        %v2698 = vadd.f32 %v2304, %v2624
        %v2699 = vadd.f32 %v2305, %v2629
        %v2700 = vadd.f32 %v2306, %v2634
        %v2701 = vadd.f32 %v2307, %v2639
        %v2702 = vadd.f32 %v2308, %v2644
        %v2703 = vadd.f32 %v2309, %v2649
        %v2704 = vadd.f32 %v2310, %v2654
        %v2705 = vadd.f32 %v2311, %v2659
        %v2706 = vadd.f32 %v2312, %v2664
        %v2707 = vadd.f32 %v2313, %v2669
        %v2708 = vadd.f32 %v2314, %v2674
        %v2709 = vld [vmem:[%s1165 + $0x1] sm:$0xff]
        %v2710 = vld [vmem:[%s1165 + $0x9] sm:$0xff]
        %v2711 = vld [vmem:[%s1165 + $0x19] sm:$0xff]
        %v2712 = vld [vmem:[%s1165 + $0x21] sm:$0xff]
        %v2713 = vld [vmem:[%s1165 + $0x31] sm:$0xff]
        %v2714 = vld [vmem:[%s1165 + $0x39] sm:$0xff]
        %v2715 = vld [vmem:[%s1165 + $0x49] sm:$0xff]
        %v2716 = vld [vmem:[%s1165 + $0x51] sm:$0xff]
        %v2717 = vld [vmem:[%s1165 + $0x61] sm:$0xff]
        %v2718 = vld [vmem:[%s1165 + $0x69] sm:$0xff]
        %v2719 = vld [vmem:[%s1165 + $0x79] sm:$0xff]
        %v2720 = vld [vmem:[%s1165 + $0x81] sm:$0xff]
        %v2721 = vld [vmem:[%s1165 + $0x91] sm:$0xff]
        %v2722 = vld [vmem:[%s1165 + $0x99] sm:$0xff]
        %v2723 = vld [vmem:[%s1165 + $0xa9] sm:$0xff]
        %v2724 = vld [vmem:[%s1165 + $0xb1] sm:$0xff]
        %v2725 = vld [vmem:[%s1165 + $0xc1] sm:$0xff]
        %v2726 = vld [vmem:[%s1165 + $0xc9] sm:$0xff]
        %v2727 = vld [vmem:[%s1165 + $0xd9] sm:$0xff]
        %v2728 = vld [vmem:[%s1165 + $0xe1] sm:$0xff]
        %v2729 = vld [vmem:[%s1165 + $0xf1] sm:$0xff]
        %v2730 = vld [vmem:[%s1165 + $0xf9] sm:$0xff]
        %v2731 = vld [vmem:[%s1165 + $0x109] sm:$0xff]
        %v2732 = vld [vmem:[%s1165 + $0x111] sm:$0xff]
        %v2733 = vld [vmem:[%s1165 + $0x121] sm:$0xff]
        %v2734 = vld [vmem:[%s1165 + $0x129] sm:$0xff]
        %v2735 = vld [vmem:[%s1165 + $0x139] sm:$0xff]
        %v2736 = vld [vmem:[%s1165 + $0x141] sm:$0xff]
        %v2737 = vld [vmem:[%s1165 + $0x151] sm:$0xff]
        %v2738 = vld [vmem:[%s1165 + $0x159] sm:$0xff]
        %v2739 = vld [vmem:[%s1165 + $0x169] sm:$0xff]
        %v2740 = vld [vmem:[%s1165 + $0x171] sm:$0xff]
        %s2741 = scalar_lea.vmem %s6, 256
        %v2742 = vld [vmem:[%s2741] sm:$0xff]
        %v2743 = vld [vmem:[%s2741 + $0x8] sm:$0xff]
        %v2744 = vld [vmem:[%s2741 + $0x10] sm:$0xff]
        %v2745 = vld [vmem:[%s2741 + $0x18] sm:$0xff]
        %v2746 = vld [vmem:[%s2741 + $0x20] sm:$0xff]
        %v2747 = vld [vmem:[%s2741 + $0x28] sm:$0xff]
        %v2748 = vld [vmem:[%s2741 + $0x30] sm:$0xff]
        %v2749 = vld [vmem:[%s2741 + $0x38] sm:$0xff]
        %v2751 = vsel %vm1109, %v2709, 0
        %v2754 = vsel %vm1109, %v2710, 0
        %v2757 = vsel %vm1109, %v2711, 0
        %v2760 = vsel %vm1109, %v2712, 0
        %v2763 = vsel %vm1109, %v2713, 0
        %v2766 = vsel %vm1109, %v2714, 0
        %v2769 = vsel %vm1109, %v2715, 0
        %v2772 = vsel %vm1109, %v2716, 0
        %v2775 = vsel %vm1109, %v2717, 0
        %v2778 = vsel %vm1109, %v2718, 0
        %v2781 = vsel %vm1109, %v2719, 0
        %v2784 = vsel %vm1109, %v2720, 0
        %v2787 = vsel %vm1109, %v2721, 0
        %v2790 = vsel %vm1109, %v2722, 0
        %v2793 = vsel %vm1109, %v2723, 0
        %v2796 = vsel %vm1109, %v2724, 0
        %v2799 = vsel %vm1109, %v2725, 0
        %v2802 = vsel %vm1109, %v2726, 0
        %v2805 = vsel %vm1109, %v2727, 0
        %v2808 = vsel %vm1109, %v2728, 0
        %v2811 = vsel %vm1109, %v2729, 0
        %v2814 = vsel %vm1109, %v2730, 0
        %v2817 = vsel %vm1109, %v2731, 0
        %v2820 = vsel %vm1109, %v2732, 0
        %v2823 = vsel %vm1109, %v2733, 0
        %v2826 = vsel %vm1109, %v2734, 0
        %v2829 = vsel %vm1109, %v2735, 0
        %v2832 = vsel %vm1109, %v2736, 0
        %v2835 = vsel %vm1109, %v2737, 0
        %v2838 = vsel %vm1109, %v2738, 0
        %v2841 = vsel %vm1109, %v2739, 0
        %v2844 = vsel %vm1109, %v2740, 0
        %2846 = vmatprep.subr.mxu0 0.0
        %2847 = vmatpush1.msra.mxu0 %v2742
        %2848 = vmatprep.subr.mxu0 0.0
        %2849 = vmatpush1.msra.mxu0 %v2743
        %2850 = vmatprep.subr.mxu0 0.0
        %2851 = vmatpush1.msra.mxu0 %v2744
        %2852 = vmatprep.subr.mxu0 0.0
        %2853 = vmatpush1.msra.mxu0 %v2745
        %2854 = vmatprep.subr.mxu0 0.0
        %2855 = vmatpush1.msra.mxu0 %v2746
        %2856 = vmatprep.subr.mxu0 0.0
        %2857 = vmatpush1.msra.mxu0 %v2747
        %2858 = vmatprep.subr.mxu0 0.0
        %2859 = vmatpush1.msra.mxu0 %v2748
        %2860 = vmatprep.subr.mxu0 0.0
        %2861 = vmatpush1.msra.mxu0 %v2749
        %2862 = vmatprep.subr.mxu0 0.0
        %2863 = vmatpush1.msra.mxu0 0.0
        %2864 = vmatprep.subr.mxu0 0.0
        %2865 = vmatpush1.msra.mxu0 0.0
        %2866 = vmatprep.subr.mxu0 0.0
        %2867 = vmatpush1.msra.mxu0 0.0
        %2868 = vmatprep.subr.mxu0 0.0
        %2869 = vmatpush1.msra.mxu0 0.0
        %2870 = vmatprep.subr.mxu0 0.0
        %2871 = vmatpush1.msra.mxu0 0.0
        %2872 = vmatprep.subr.mxu0 0.0
        %2873 = vmatpush1.msra.mxu0 0.0
        %2874 = vmatprep.subr.mxu0 0.0
        %2875 = vmatpush1.msra.mxu0 0.0
        %2876 = vmatprep.subr.mxu0 0.0
        %2877 = vmatpush1.msra.mxu0 0.0
        %2878 = vmatprep.subr.mxu0 0.0
        %2879 = vmatpush1.msra.mxu0 0.0
        %2880 = vmatprep.subr.mxu0 0.0
        %2881 = vmatpush1.msra.mxu0 0.0
        %2882 = vmatprep.subr.mxu0 0.0
        %2883 = vmatpush1.msra.mxu0 0.0
        %2884 = vmatprep.subr.mxu0 0.0
        %2885 = vmatpush1.msra.mxu0 0.0
        %2886 = vmatprep.subr.mxu0 0.0
        %2887 = vmatpush1.msra.mxu0 0.0
        %2888 = vmatprep.subr.mxu0 0.0
        %2889 = vmatpush1.msra.mxu0 0.0
        %2890 = vmatprep.subr.mxu0 0.0
        %2891 = vmatpush1.msra.mxu0 0.0
        %2892 = vmatprep.subr.mxu0 0.0
        %2893 = vmatpush1.msra.mxu0 0.0
        %2894 = vmatprep.subr.mxu0 0.0
        %2895 = vmatpush1.msra.mxu0 0.0
        %2896 = vmatprep.subr.mxu0 0.0
        %2897 = vmatpush1.msra.mxu0 0.0
        %2898 = vmatprep.subr.mxu0 0.0
        %2899 = vmatpush1.msra.mxu0 0.0
        %2900 = vmatprep.subr.mxu0 0.0
        %2901 = vmatpush1.msra.mxu0 0.0
        %2902 = vmatprep.subr.mxu0 0.0
        %2903 = vmatpush1.msra.mxu0 0.0
        %2904 = vmatprep.subr.mxu0 0.0
        %2905 = vmatpush1.msra.mxu0 0.0
        %2906 = vmatprep.subr.mxu0 0.0
        %2907 = vmatpush1.msra.mxu0 0.0
        %2908 = vmatprep.subr.mxu0 0.0
        %2909 = vmatpush1.msra.mxu0 0.0
        %2910 = vmatprep.mubr.f32.mxu0 0.0
        %2911 = vmatmul.mubr.f32.gmra.mrb[0].mxu0 %v2751
        %v2912 = vpop.f32.mrb[0].mxu0
        %v2913 = vadd.f32 0.0, %v2912
        %v2914 = vpop.f32.mrb[0].mxu0
        %2915 = vmatprep.mubr.f32.mxu0 0.0
        %2916 = vmatmul.mubr.f32.gmra.mrb[0].mxu0 %v2754
        %v2917 = vpop.f32.mrb[0].mxu0
        %v2918 = vadd.f32 0.0, %v2917
        %v2919 = vpop.f32.mrb[0].mxu0
        %2920 = vmatprep.mubr.f32.mxu0 0.0
        %2921 = vmatmul.mubr.f32.gmra.mrb[0].mxu0 %v2757
        %v2922 = vpop.f32.mrb[0].mxu0
        %v2923 = vadd.f32 0.0, %v2922
        %v2924 = vpop.f32.mrb[0].mxu0
        %2925 = vmatprep.mubr.f32.mxu0 0.0
        %2926 = vmatmul.mubr.f32.gmra.mrb[0].mxu0 %v2760
        %v2927 = vpop.f32.mrb[0].mxu0
        %v2928 = vadd.f32 0.0, %v2927
        %v2929 = vpop.f32.mrb[0].mxu0
        %2930 = vmatprep.mubr.f32.mxu0 0.0
        %2931 = vmatmul.mubr.f32.gmra.mrb[0].mxu0 %v2763
        %v2932 = vpop.f32.mrb[0].mxu0
        %v2933 = vadd.f32 0.0, %v2932
        %v2934 = vpop.f32.mrb[0].mxu0
        %2935 = vmatprep.mubr.f32.mxu0 0.0
        %2936 = vmatmul.mubr.f32.gmra.mrb[0].mxu0 %v2766
        %v2937 = vpop.f32.mrb[0].mxu0
        %v2938 = vadd.f32 0.0, %v2937
        %v2939 = vpop.f32.mrb[0].mxu0
        %2940 = vmatprep.mubr.f32.mxu0 0.0
        %2941 = vmatmul.mubr.f32.gmra.mrb[0].mxu0 %v2769
        %v2942 = vpop.f32.mrb[0].mxu0
        %v2943 = vadd.f32 0.0, %v2942
        %v2944 = vpop.f32.mrb[0].mxu0
        %2945 = vmatprep.mubr.f32.mxu0 0.0
        %2946 = vmatmul.mubr.f32.gmra.mrb[0].mxu0 %v2772
        %v2947 = vpop.f32.mrb[0].mxu0
        %v2948 = vadd.f32 0.0, %v2947
        %v2949 = vpop.f32.mrb[0].mxu0
        %2950 = vmatprep.mubr.f32.mxu0 0.0
        %2951 = vmatmul.mubr.f32.gmra.mrb[0].mxu0 %v2775
        %v2952 = vpop.f32.mrb[0].mxu0
        %v2953 = vadd.f32 0.0, %v2952
        %v2954 = vpop.f32.mrb[0].mxu0
        %2955 = vmatprep.mubr.f32.mxu0 0.0
        %2956 = vmatmul.mubr.f32.gmra.mrb[0].mxu0 %v2778
        %v2957 = vpop.f32.mrb[0].mxu0
        %v2958 = vadd.f32 0.0, %v2957
        %v2959 = vpop.f32.mrb[0].mxu0
        %2960 = vmatprep.mubr.f32.mxu0 0.0
        %2961 = vmatmul.mubr.f32.gmra.mrb[0].mxu0 %v2781
        %v2962 = vpop.f32.mrb[0].mxu0
        %v2963 = vadd.f32 0.0, %v2962
        %v2964 = vpop.f32.mrb[0].mxu0
        %2965 = vmatprep.mubr.f32.mxu0 0.0
        %2966 = vmatmul.mubr.f32.gmra.mrb[0].mxu0 %v2784
        %v2967 = vpop.f32.mrb[0].mxu0
        %v2968 = vadd.f32 0.0, %v2967
        %v2969 = vpop.f32.mrb[0].mxu0
        %2970 = vmatprep.mubr.f32.mxu0 0.0
        %2971 = vmatmul.mubr.f32.gmra.mrb[0].mxu0 %v2787
        %v2972 = vpop.f32.mrb[0].mxu0
        %v2973 = vadd.f32 0.0, %v2972
        %v2974 = vpop.f32.mrb[0].mxu0
        %2975 = vmatprep.mubr.f32.mxu0 0.0
        %2976 = vmatmul.mubr.f32.gmra.mrb[0].mxu0 %v2790
        %v2977 = vpop.f32.mrb[0].mxu0
        %v2978 = vadd.f32 0.0, %v2977
        %v2979 = vpop.f32.mrb[0].mxu0
        %2980 = vmatprep.mubr.f32.mxu0 0.0
        %2981 = vmatmul.mubr.f32.gmra.mrb[0].mxu0 %v2793
        %v2982 = vpop.f32.mrb[0].mxu0
        %v2983 = vadd.f32 0.0, %v2982
        %v2984 = vpop.f32.mrb[0].mxu0
        %2985 = vmatprep.mubr.f32.mxu0 0.0
        %2986 = vmatmul.mubr.f32.gmra.mrb[0].mxu0 %v2796
        %v2987 = vpop.f32.mrb[0].mxu0
        %v2988 = vadd.f32 0.0, %v2987
        %v2989 = vpop.f32.mrb[0].mxu0
        %2990 = vmatprep.mubr.f32.mxu0 0.0
        %2991 = vmatmul.mubr.f32.gmra.mrb[0].mxu0 %v2799
        %v2992 = vpop.f32.mrb[0].mxu0
        %v2993 = vadd.f32 0.0, %v2992
        %v2994 = vpop.f32.mrb[0].mxu0
        %2995 = vmatprep.mubr.f32.mxu0 0.0
        %2996 = vmatmul.mubr.f32.gmra.mrb[0].mxu0 %v2802
        %v2997 = vpop.f32.mrb[0].mxu0
        %v2998 = vadd.f32 0.0, %v2997
        %v2999 = vpop.f32.mrb[0].mxu0
        %3000 = vmatprep.mubr.f32.mxu0 0.0
        %3001 = vmatmul.mubr.f32.gmra.mrb[0].mxu0 %v2805
        %v3002 = vpop.f32.mrb[0].mxu0
        %v3003 = vadd.f32 0.0, %v3002
        %v3004 = vpop.f32.mrb[0].mxu0
        %3005 = vmatprep.mubr.f32.mxu0 0.0
        %3006 = vmatmul.mubr.f32.gmra.mrb[0].mxu0 %v2808
        %v3007 = vpop.f32.mrb[0].mxu0
        %v3008 = vadd.f32 0.0, %v3007
        %v3009 = vpop.f32.mrb[0].mxu0
        %3010 = vmatprep.mubr.f32.mxu0 0.0
        %3011 = vmatmul.mubr.f32.gmra.mrb[0].mxu0 %v2811
        %v3012 = vpop.f32.mrb[0].mxu0
        %v3013 = vadd.f32 0.0, %v3012
        %v3014 = vpop.f32.mrb[0].mxu0
        %3015 = vmatprep.mubr.f32.mxu0 0.0
        %3016 = vmatmul.mubr.f32.gmra.mrb[0].mxu0 %v2814
        %v3017 = vpop.f32.mrb[0].mxu0
        %v3018 = vadd.f32 0.0, %v3017
        %v3019 = vpop.f32.mrb[0].mxu0
        %3020 = vmatprep.mubr.f32.mxu0 0.0
        %3021 = vmatmul.mubr.f32.gmra.mrb[0].mxu0 %v2817
        %v3022 = vpop.f32.mrb[0].mxu0
        %v3023 = vadd.f32 0.0, %v3022
        %v3024 = vpop.f32.mrb[0].mxu0
        %3025 = vmatprep.mubr.f32.mxu0 0.0
        %3026 = vmatmul.mubr.f32.gmra.mrb[0].mxu0 %v2820
        %v3027 = vpop.f32.mrb[0].mxu0
        %v3028 = vadd.f32 0.0, %v3027
        %v3029 = vpop.f32.mrb[0].mxu0
        %3030 = vmatprep.mubr.f32.mxu0 0.0
        %3031 = vmatmul.mubr.f32.gmra.mrb[0].mxu0 %v2823
        %v3032 = vpop.f32.mrb[0].mxu0
        %v3033 = vadd.f32 0.0, %v3032
        %v3034 = vpop.f32.mrb[0].mxu0
        %3035 = vmatprep.mubr.f32.mxu0 0.0
        %3036 = vmatmul.mubr.f32.gmra.mrb[0].mxu0 %v2826
        %v3037 = vpop.f32.mrb[0].mxu0
        %v3038 = vadd.f32 0.0, %v3037
        %v3039 = vpop.f32.mrb[0].mxu0
        %3040 = vmatprep.mubr.f32.mxu0 0.0
        %3041 = vmatmul.mubr.f32.gmra.mrb[0].mxu0 %v2829
        %v3042 = vpop.f32.mrb[0].mxu0
        %v3043 = vadd.f32 0.0, %v3042
        %v3044 = vpop.f32.mrb[0].mxu0
        %3045 = vmatprep.mubr.f32.mxu0 0.0
        %3046 = vmatmul.mubr.f32.gmra.mrb[0].mxu0 %v2832
        %v3047 = vpop.f32.mrb[0].mxu0
        %v3048 = vadd.f32 0.0, %v3047
        %v3049 = vpop.f32.mrb[0].mxu0
        %3050 = vmatprep.mubr.f32.mxu0 0.0
        %3051 = vmatmul.mubr.f32.gmra.mrb[0].mxu0 %v2835
        %v3052 = vpop.f32.mrb[0].mxu0
        %v3053 = vadd.f32 0.0, %v3052
        %v3054 = vpop.f32.mrb[0].mxu0
        %3055 = vmatprep.mubr.f32.mxu0 0.0
        %3056 = vmatmul.mubr.f32.gmra.mrb[0].mxu0 %v2838
        %v3057 = vpop.f32.mrb[0].mxu0
        %v3058 = vadd.f32 0.0, %v3057
        %v3059 = vpop.f32.mrb[0].mxu0
        %3060 = vmatprep.mubr.f32.mxu0 0.0
        %3061 = vmatmul.mubr.f32.gmra.mrb[0].mxu0 %v2841
        %v3062 = vpop.f32.mrb[0].mxu0
        %v3063 = vadd.f32 0.0, %v3062
        %v3064 = vpop.f32.mrb[0].mxu0
        %3065 = vmatprep.mubr.f32.mxu0 0.0
        %3066 = vmatmul.mubr.f32.gmra.mrb[0].mxu0 %v2844
        %v3067 = vpop.f32.mrb[0].mxu0
        %v3068 = vadd.f32 0.0, %v3067
        %v3069 = vpop.f32.mrb[0].mxu0
        %3070 = vdwg.mxu0
        %v3071 = vadd.f32 %v2677, %v2913
        %v3072 = vadd.f32 %v2678, %v2918
        %v3073 = vadd.f32 %v2679, %v2923
        %v3074 = vadd.f32 %v2680, %v2928
        %v3075 = vadd.f32 %v2681, %v2933
        %v3076 = vadd.f32 %v2682, %v2938
        %v3077 = vadd.f32 %v2683, %v2943
        %v3078 = vadd.f32 %v2684, %v2948
        %v3079 = vadd.f32 %v2685, %v2953
        %v3080 = vadd.f32 %v2686, %v2958
        %v3081 = vadd.f32 %v2687, %v2963
        %v3082 = vadd.f32 %v2688, %v2968
        %v3083 = vadd.f32 %v2689, %v2973
        %v3084 = vadd.f32 %v2690, %v2978
        %v3085 = vadd.f32 %v2691, %v2983
        %v3086 = vadd.f32 %v2692, %v2988
        %v3087 = vadd.f32 %v2693, %v2993
        %v3088 = vadd.f32 %v2694, %v2998
        %v3089 = vadd.f32 %v2695, %v3003
        %v3090 = vadd.f32 %v2696, %v3008
        %v3091 = vadd.f32 %v2697, %v3013
        %v3092 = vadd.f32 %v2698, %v3018
        %v3093 = vadd.f32 %v2699, %v3023
        %v3094 = vadd.f32 %v2700, %v3028
        %v3095 = vadd.f32 %v2701, %v3033
        %v3096 = vadd.f32 %v2702, %v3038
        %v3097 = vadd.f32 %v2703, %v3043
        %v3098 = vadd.f32 %v2704, %v3048
        %v3099 = vadd.f32 %v2705, %v3053
        %v3100 = vadd.f32 %v2706, %v3058
        %v3101 = vadd.f32 %v2707, %v3063
        %v3102 = vadd.f32 %v2708, %v3068
        %v3103 = vld [vmem:[%s1165 + $0x2] sm:$0xff]
        %v3104 = vld [vmem:[%s1165 + $0xa] sm:$0xff]
        %v3105 = vld [vmem:[%s1165 + $0x1a] sm:$0xff]
        %v3106 = vld [vmem:[%s1165 + $0x22] sm:$0xff]
        %v3107 = vld [vmem:[%s1165 + $0x32] sm:$0xff]
        %v3108 = vld [vmem:[%s1165 + $0x3a] sm:$0xff]
        %v3109 = vld [vmem:[%s1165 + $0x4a] sm:$0xff]
        %v3110 = vld [vmem:[%s1165 + $0x52] sm:$0xff]
        %v3111 = vld [vmem:[%s1165 + $0x62] sm:$0xff]
        %v3112 = vld [vmem:[%s1165 + $0x6a] sm:$0xff]
        %v3113 = vld [vmem:[%s1165 + $0x7a] sm:$0xff]
        %v3114 = vld [vmem:[%s1165 + $0x82] sm:$0xff]
        %v3115 = vld [vmem:[%s1165 + $0x92] sm:$0xff]
        %v3116 = vld [vmem:[%s1165 + $0x9a] sm:$0xff]
        %v3117 = vld [vmem:[%s1165 + $0xaa] sm:$0xff]
        %v3118 = vld [vmem:[%s1165 + $0xb2] sm:$0xff]
        %v3119 = vld [vmem:[%s1165 + $0xc2] sm:$0xff]
        %v3120 = vld [vmem:[%s1165 + $0xca] sm:$0xff]
        %v3121 = vld [vmem:[%s1165 + $0xda] sm:$0xff]
        %v3122 = vld [vmem:[%s1165 + $0xe2] sm:$0xff]
        %v3123 = vld [vmem:[%s1165 + $0xf2] sm:$0xff]
        %v3124 = vld [vmem:[%s1165 + $0xfa] sm:$0xff]
        %v3125 = vld [vmem:[%s1165 + $0x10a] sm:$0xff]
        %v3126 = vld [vmem:[%s1165 + $0x112] sm:$0xff]
        %v3127 = vld [vmem:[%s1165 + $0x122] sm:$0xff]
        %v3128 = vld [vmem:[%s1165 + $0x12a] sm:$0xff]
        %v3129 = vld [vmem:[%s1165 + $0x13a] sm:$0xff]
        %v3130 = vld [vmem:[%s1165 + $0x142] sm:$0xff]
        %v3131 = vld [vmem:[%s1165 + $0x152] sm:$0xff]
        %v3132 = vld [vmem:[%s1165 + $0x15a] sm:$0xff]
        %v3133 = vld [vmem:[%s1165 + $0x16a] sm:$0xff]
        %v3134 = vld [vmem:[%s1165 + $0x172] sm:$0xff]
        %s3135 = scalar_lea.vmem %s6, 320
        %v3136 = vld [vmem:[%s3135] sm:$0xff]
        %v3137 = vld [vmem:[%s3135 + $0x8] sm:$0xff]
        %v3138 = vld [vmem:[%s3135 + $0x10] sm:$0xff]
        %v3139 = vld [vmem:[%s3135 + $0x18] sm:$0xff]
        %v3140 = vld [vmem:[%s3135 + $0x20] sm:$0xff]
        %v3141 = vld [vmem:[%s3135 + $0x28] sm:$0xff]
        %v3142 = vld [vmem:[%s3135 + $0x30] sm:$0xff]
        %v3143 = vld [vmem:[%s3135 + $0x38] sm:$0xff]
        %v3145 = vsel %vm1109, %v3103, 0
        %v3148 = vsel %vm1109, %v3104, 0
        %v3151 = vsel %vm1109, %v3105, 0
        %v3154 = vsel %vm1109, %v3106, 0
        %v3157 = vsel %vm1109, %v3107, 0
        %v3160 = vsel %vm1109, %v3108, 0
        %v3163 = vsel %vm1109, %v3109, 0
        %v3166 = vsel %vm1109, %v3110, 0
        %v3169 = vsel %vm1109, %v3111, 0
        %v3172 = vsel %vm1109, %v3112, 0
        %v3175 = vsel %vm1109, %v3113, 0
        %v3178 = vsel %vm1109, %v3114, 0
        %v3181 = vsel %vm1109, %v3115, 0
        %v3184 = vsel %vm1109, %v3116, 0
        %v3187 = vsel %vm1109, %v3117, 0
        %v3190 = vsel %vm1109, %v3118, 0
        %v3193 = vsel %vm1109, %v3119, 0
        %v3196 = vsel %vm1109, %v3120, 0
        %v3199 = vsel %vm1109, %v3121, 0
        %v3202 = vsel %vm1109, %v3122, 0
        %v3205 = vsel %vm1109, %v3123, 0
        %v3208 = vsel %vm1109, %v3124, 0
        %v3211 = vsel %vm1109, %v3125, 0
        %v3214 = vsel %vm1109, %v3126, 0
        %v3217 = vsel %vm1109, %v3127, 0
        %v3220 = vsel %vm1109, %v3128, 0
        %v3223 = vsel %vm1109, %v3129, 0
        %v3226 = vsel %vm1109, %v3130, 0
        %v3229 = vsel %vm1109, %v3131, 0
        %v3232 = vsel %vm1109, %v3132, 0
        %v3235 = vsel %vm1109, %v3133, 0
        %v3238 = vsel %vm1109, %v3134, 0
        %3240 = vmatprep.subr.mxu0 0.0
        %3241 = vmatpush1.msra.mxu0 %v3136
        %3242 = vmatprep.subr.mxu0 0.0
        %3243 = vmatpush1.msra.mxu0 %v3137
        %3244 = vmatprep.subr.mxu0 0.0
        %3245 = vmatpush1.msra.mxu0 %v3138
        %3246 = vmatprep.subr.mxu0 0.0
        %3247 = vmatpush1.msra.mxu0 %v3139
        %3248 = vmatprep.subr.mxu0 0.0
        %3249 = vmatpush1.msra.mxu0 %v3140
        %3250 = vmatprep.subr.mxu0 0.0
        %3251 = vmatpush1.msra.mxu0 %v3141
        %3252 = vmatprep.subr.mxu0 0.0
        %3253 = vmatpush1.msra.mxu0 %v3142
        %3254 = vmatprep.subr.mxu0 0.0
        %3255 = vmatpush1.msra.mxu0 %v3143
        %3256 = vmatprep.subr.mxu0 0.0
        %3257 = vmatpush1.msra.mxu0 0.0
        %3258 = vmatprep.subr.mxu0 0.0
        %3259 = vmatpush1.msra.mxu0 0.0
        %3260 = vmatprep.subr.mxu0 0.0
        %3261 = vmatpush1.msra.mxu0 0.0
        %3262 = vmatprep.subr.mxu0 0.0
        %3263 = vmatpush1.msra.mxu0 0.0
        %3264 = vmatprep.subr.mxu0 0.0
        %3265 = vmatpush1.msra.mxu0 0.0
        %3266 = vmatprep.subr.mxu0 0.0
        %3267 = vmatpush1.msra.mxu0 0.0
        %3268 = vmatprep.subr.mxu0 0.0
        %3269 = vmatpush1.msra.mxu0 0.0
        %3270 = vmatprep.subr.mxu0 0.0
        %3271 = vmatpush1.msra.mxu0 0.0
        %3272 = vmatprep.subr.mxu0 0.0
        %3273 = vmatpush1.msra.mxu0 0.0
        %3274 = vmatprep.subr.mxu0 0.0
        %3275 = vmatpush1.msra.mxu0 0.0
        %3276 = vmatprep.subr.mxu0 0.0
        %3277 = vmatpush1.msra.mxu0 0.0
        %3278 = vmatprep.subr.mxu0 0.0
        %3279 = vmatpush1.msra.mxu0 0.0
        %3280 = vmatprep.subr.mxu0 0.0
        %3281 = vmatpush1.msra.mxu0 0.0
        %3282 = vmatprep.subr.mxu0 0.0
        %3283 = vmatpush1.msra.mxu0 0.0
        %3284 = vmatprep.subr.mxu0 0.0
        %3285 = vmatpush1.msra.mxu0 0.0
        %3286 = vmatprep.subr.mxu0 0.0
        %3287 = vmatpush1.msra.mxu0 0.0
        %3288 = vmatprep.subr.mxu0 0.0
        %3289 = vmatpush1.msra.mxu0 0.0
        %3290 = vmatprep.subr.mxu0 0.0
        %3291 = vmatpush1.msra.mxu0 0.0
        %3292 = vmatprep.subr.mxu0 0.0
        %3293 = vmatpush1.msra.mxu0 0.0
        %3294 = vmatprep.subr.mxu0 0.0
        %3295 = vmatpush1.msra.mxu0 0.0
        %3296 = vmatprep.subr.mxu0 0.0
        %3297 = vmatpush1.msra.mxu0 0.0
        %3298 = vmatprep.subr.mxu0 0.0
        %3299 = vmatpush1.msra.mxu0 0.0
        %3300 = vmatprep.subr.mxu0 0.0
        %3301 = vmatpush1.msra.mxu0 0.0
        %3302 = vmatprep.subr.mxu0 0.0
        %3303 = vmatpush1.msra.mxu0 0.0
        %3304 = vmatprep.mubr.f32.mxu0 0.0
        %3305 = vmatmul.mubr.f32.gmra.mrb[0].mxu0 %v3145
        %v3306 = vpop.f32.mrb[0].mxu0
        %v3307 = vadd.f32 0.0, %v3306
        %v3308 = vpop.f32.mrb[0].mxu0
        %3309 = vmatprep.mubr.f32.mxu0 0.0
        %3310 = vmatmul.mubr.f32.gmra.mrb[0].mxu0 %v3148
        %v3311 = vpop.f32.mrb[0].mxu0
        %v3312 = vadd.f32 0.0, %v3311
        %v3313 = vpop.f32.mrb[0].mxu0
        %3314 = vmatprep.mubr.f32.mxu0 0.0
        %3315 = vmatmul.mubr.f32.gmra.mrb[0].mxu0 %v3151
        %v3316 = vpop.f32.mrb[0].mxu0
        %v3317 = vadd.f32 0.0, %v3316
        %v3318 = vpop.f32.mrb[0].mxu0
        %3319 = vmatprep.mubr.f32.mxu0 0.0
        %3320 = vmatmul.mubr.f32.gmra.mrb[0].mxu0 %v3154
        %v3321 = vpop.f32.mrb[0].mxu0
        %v3322 = vadd.f32 0.0, %v3321
        %v3323 = vpop.f32.mrb[0].mxu0
        %3324 = vmatprep.mubr.f32.mxu0 0.0
        %3325 = vmatmul.mubr.f32.gmra.mrb[0].mxu0 %v3157
        %v3326 = vpop.f32.mrb[0].mxu0
        %v3327 = vadd.f32 0.0, %v3326
        %v3328 = vpop.f32.mrb[0].mxu0
        %3329 = vmatprep.mubr.f32.mxu0 0.0
        %3330 = vmatmul.mubr.f32.gmra.mrb[0].mxu0 %v3160
        %v3331 = vpop.f32.mrb[0].mxu0
        %v3332 = vadd.f32 0.0, %v3331
        %v3333 = vpop.f32.mrb[0].mxu0
        %3334 = vmatprep.mubr.f32.mxu0 0.0
        %3335 = vmatmul.mubr.f32.gmra.mrb[0].mxu0 %v3163
        %v3336 = vpop.f32.mrb[0].mxu0
        %v3337 = vadd.f32 0.0, %v3336
        %v3338 = vpop.f32.mrb[0].mxu0
        %3339 = vmatprep.mubr.f32.mxu0 0.0
        %3340 = vmatmul.mubr.f32.gmra.mrb[0].mxu0 %v3166
        %v3341 = vpop.f32.mrb[0].mxu0
        %v3342 = vadd.f32 0.0, %v3341
        %v3343 = vpop.f32.mrb[0].mxu0
        %3344 = vmatprep.mubr.f32.mxu0 0.0
        %3345 = vmatmul.mubr.f32.gmra.mrb[0].mxu0 %v3169
        %v3346 = vpop.f32.mrb[0].mxu0
        %v3347 = vadd.f32 0.0, %v3346
        %v3348 = vpop.f32.mrb[0].mxu0
        %3349 = vmatprep.mubr.f32.mxu0 0.0
        %3350 = vmatmul.mubr.f32.gmra.mrb[0].mxu0 %v3172
        %v3351 = vpop.f32.mrb[0].mxu0
        %v3352 = vadd.f32 0.0, %v3351
        %v3353 = vpop.f32.mrb[0].mxu0
        %3354 = vmatprep.mubr.f32.mxu0 0.0
        %3355 = vmatmul.mubr.f32.gmra.mrb[0].mxu0 %v3175
        %v3356 = vpop.f32.mrb[0].mxu0
        %v3357 = vadd.f32 0.0, %v3356
        %v3358 = vpop.f32.mrb[0].mxu0
        %3359 = vmatprep.mubr.f32.mxu0 0.0
        %3360 = vmatmul.mubr.f32.gmra.mrb[0].mxu0 %v3178
        %v3361 = vpop.f32.mrb[0].mxu0
        %v3362 = vadd.f32 0.0, %v3361
        %v3363 = vpop.f32.mrb[0].mxu0
        %3364 = vmatprep.mubr.f32.mxu0 0.0
        %3365 = vmatmul.mubr.f32.gmra.mrb[0].mxu0 %v3181
        %v3366 = vpop.f32.mrb[0].mxu0
        %v3367 = vadd.f32 0.0, %v3366
        %v3368 = vpop.f32.mrb[0].mxu0
        %3369 = vmatprep.mubr.f32.mxu0 0.0
        %3370 = vmatmul.mubr.f32.gmra.mrb[0].mxu0 %v3184
        %v3371 = vpop.f32.mrb[0].mxu0
        %v3372 = vadd.f32 0.0, %v3371
        %v3373 = vpop.f32.mrb[0].mxu0
        %3374 = vmatprep.mubr.f32.mxu0 0.0
        %3375 = vmatmul.mubr.f32.gmra.mrb[0].mxu0 %v3187
        %v3376 = vpop.f32.mrb[0].mxu0
        %v3377 = vadd.f32 0.0, %v3376
        %v3378 = vpop.f32.mrb[0].mxu0
        %3379 = vmatprep.mubr.f32.mxu0 0.0
        %3380 = vmatmul.mubr.f32.gmra.mrb[0].mxu0 %v3190
        %v3381 = vpop.f32.mrb[0].mxu0
        %v3382 = vadd.f32 0.0, %v3381
        %v3383 = vpop.f32.mrb[0].mxu0
        %3384 = vmatprep.mubr.f32.mxu0 0.0
        %3385 = vmatmul.mubr.f32.gmra.mrb[0].mxu0 %v3193
        %v3386 = vpop.f32.mrb[0].mxu0
        %v3387 = vadd.f32 0.0, %v3386
        %v3388 = vpop.f32.mrb[0].mxu0
        %3389 = vmatprep.mubr.f32.mxu0 0.0
        %3390 = vmatmul.mubr.f32.gmra.mrb[0].mxu0 %v3196
        %v3391 = vpop.f32.mrb[0].mxu0
        %v3392 = vadd.f32 0.0, %v3391
        %v3393 = vpop.f32.mrb[0].mxu0
        %3394 = vmatprep.mubr.f32.mxu0 0.0
        %3395 = vmatmul.mubr.f32.gmra.mrb[0].mxu0 %v3199
        %v3396 = vpop.f32.mrb[0].mxu0
        %v3397 = vadd.f32 0.0, %v3396
        %v3398 = vpop.f32.mrb[0].mxu0
        %3399 = vmatprep.mubr.f32.mxu0 0.0
        %3400 = vmatmul.mubr.f32.gmra.mrb[0].mxu0 %v3202
        %v3401 = vpop.f32.mrb[0].mxu0
        %v3402 = vadd.f32 0.0, %v3401
        %v3403 = vpop.f32.mrb[0].mxu0
        %3404 = vmatprep.mubr.f32.mxu0 0.0
        %3405 = vmatmul.mubr.f32.gmra.mrb[0].mxu0 %v3205
        %v3406 = vpop.f32.mrb[0].mxu0
        %v3407 = vadd.f32 0.0, %v3406
        %v3408 = vpop.f32.mrb[0].mxu0
        %3409 = vmatprep.mubr.f32.mxu0 0.0
        %3410 = vmatmul.mubr.f32.gmra.mrb[0].mxu0 %v3208
        %v3411 = vpop.f32.mrb[0].mxu0
        %v3412 = vadd.f32 0.0, %v3411
        %v3413 = vpop.f32.mrb[0].mxu0
        %3414 = vmatprep.mubr.f32.mxu0 0.0
        %3415 = vmatmul.mubr.f32.gmra.mrb[0].mxu0 %v3211
        %v3416 = vpop.f32.mrb[0].mxu0
        %v3417 = vadd.f32 0.0, %v3416
        %v3418 = vpop.f32.mrb[0].mxu0
        %3419 = vmatprep.mubr.f32.mxu0 0.0
        %3420 = vmatmul.mubr.f32.gmra.mrb[0].mxu0 %v3214
        %v3421 = vpop.f32.mrb[0].mxu0
        %v3422 = vadd.f32 0.0, %v3421
        %v3423 = vpop.f32.mrb[0].mxu0
        %3424 = vmatprep.mubr.f32.mxu0 0.0
        %3425 = vmatmul.mubr.f32.gmra.mrb[0].mxu0 %v3217
        %v3426 = vpop.f32.mrb[0].mxu0
        %v3427 = vadd.f32 0.0, %v3426
        %v3428 = vpop.f32.mrb[0].mxu0
        %3429 = vmatprep.mubr.f32.mxu0 0.0
        %3430 = vmatmul.mubr.f32.gmra.mrb[0].mxu0 %v3220
        %v3431 = vpop.f32.mrb[0].mxu0
        %v3432 = vadd.f32 0.0, %v3431
        %v3433 = vpop.f32.mrb[0].mxu0
        %3434 = vmatprep.mubr.f32.mxu0 0.0
        %3435 = vmatmul.mubr.f32.gmra.mrb[0].mxu0 %v3223
        %v3436 = vpop.f32.mrb[0].mxu0
        %v3437 = vadd.f32 0.0, %v3436
        %v3438 = vpop.f32.mrb[0].mxu0
        %3439 = vmatprep.mubr.f32.mxu0 0.0
        %3440 = vmatmul.mubr.f32.gmra.mrb[0].mxu0 %v3226
        %v3441 = vpop.f32.mrb[0].mxu0
        %v3442 = vadd.f32 0.0, %v3441
        %v3443 = vpop.f32.mrb[0].mxu0
        %3444 = vmatprep.mubr.f32.mxu0 0.0
        %3445 = vmatmul.mubr.f32.gmra.mrb[0].mxu0 %v3229
        %v3446 = vpop.f32.mrb[0].mxu0
        %v3447 = vadd.f32 0.0, %v3446
        %v3448 = vpop.f32.mrb[0].mxu0
        %3449 = vmatprep.mubr.f32.mxu0 0.0
        %3450 = vmatmul.mubr.f32.gmra.mrb[0].mxu0 %v3232
        %v3451 = vpop.f32.mrb[0].mxu0
        %v3452 = vadd.f32 0.0, %v3451
        %v3453 = vpop.f32.mrb[0].mxu0
        %3454 = vmatprep.mubr.f32.mxu0 0.0
        %3455 = vmatmul.mubr.f32.gmra.mrb[0].mxu0 %v3235
        %v3456 = vpop.f32.mrb[0].mxu0
        %v3457 = vadd.f32 0.0, %v3456
        %v3458 = vpop.f32.mrb[0].mxu0
        %3459 = vmatprep.mubr.f32.mxu0 0.0
        %3460 = vmatmul.mubr.f32.gmra.mrb[0].mxu0 %v3238
        %v3461 = vpop.f32.mrb[0].mxu0
        %v3462 = vadd.f32 0.0, %v3461
        %v3463 = vpop.f32.mrb[0].mxu0
        %3464 = vdwg.mxu0
        %v3465 = vadd.f32 %v3071, %v3307
        %v3466 = vadd.f32 %v3072, %v3312
        %v3467 = vadd.f32 %v3073, %v3317
        %v3468 = vadd.f32 %v3074, %v3322
        %v3469 = vadd.f32 %v3075, %v3327
        %v3470 = vadd.f32 %v3076, %v3332
        %v3471 = vadd.f32 %v3077, %v3337
        %v3472 = vadd.f32 %v3078, %v3342
        %v3473 = vadd.f32 %v3079, %v3347
        %v3474 = vadd.f32 %v3080, %v3352
        %v3475 = vadd.f32 %v3081, %v3357
        %v3476 = vadd.f32 %v3082, %v3362
        %v3477 = vadd.f32 %v3083, %v3367
        %v3478 = vadd.f32 %v3084, %v3372
        %v3479 = vadd.f32 %v3085, %v3377
        %v3480 = vadd.f32 %v3086, %v3382
        %v3481 = vadd.f32 %v3087, %v3387
        %v3482 = vadd.f32 %v3088, %v3392
        %v3483 = vadd.f32 %v3089, %v3397
        %v3484 = vadd.f32 %v3090, %v3402
        %v3485 = vadd.f32 %v3091, %v3407
        %v3486 = vadd.f32 %v3092, %v3412
        %v3487 = vadd.f32 %v3093, %v3417
        %v3488 = vadd.f32 %v3094, %v3422
        %v3489 = vadd.f32 %v3095, %v3427
        %v3490 = vadd.f32 %v3096, %v3432
        %v3491 = vadd.f32 %v3097, %v3437
        %v3492 = vadd.f32 %v3098, %v3442
        %v3493 = vadd.f32 %v3099, %v3447
        %v3494 = vadd.f32 %v3100, %v3452
        %v3495 = vadd.f32 %v3101, %v3457
        %v3496 = vadd.f32 %v3102, %v3462
        %s3497 = scalar_lea.vmem [#allocation2], 48
        %v3498 = vld [vmem:[%s3497] sm:$0xff]
        %v3499 = vld [vmem:[%s3497 + $0x8] sm:$0xff]
        %v3500 = vld [vmem:[%s3497 + $0x18] sm:$0xff]
        %v3501 = vld [vmem:[%s3497 + $0x20] sm:$0xff]
        %v3502 = vld [vmem:[%s3497 + $0x30] sm:$0xff]
        %v3503 = vld [vmem:[%s3497 + $0x38] sm:$0xff]
        %v3504 = vld [vmem:[%s3497 + $0x48] sm:$0xff]
        %v3505 = vld [vmem:[%s3497 + $0x50] sm:$0xff]
        %v3506 = vld [vmem:[%s3497 + $0x60] sm:$0xff]
        %v3507 = vld [vmem:[%s3497 + $0x68] sm:$0xff]
        %v3508 = vld [vmem:[%s3497 + $0x78] sm:$0xff]
        %v3509 = vld [vmem:[%s3497 + $0x80] sm:$0xff]
        %v3510 = vld [vmem:[%s3497 + $0x90] sm:$0xff]
        %v3511 = vld [vmem:[%s3497 + $0x98] sm:$0xff]
        %v3512 = vld [vmem:[%s3497 + $0xa8] sm:$0xff]
        %v3513 = vld [vmem:[%s3497 + $0xb0] sm:$0xff]
        %v3514 = vld [vmem:[%s3497 + $0xc0] sm:$0xff]
        %v3515 = vld [vmem:[%s3497 + $0xc8] sm:$0xff]
        %v3516 = vld [vmem:[%s3497 + $0xd8] sm:$0xff]
        %v3517 = vld [vmem:[%s3497 + $0xe0] sm:$0xff]
        %v3518 = vld [vmem:[%s3497 + $0xf0] sm:$0xff]
        %v3519 = vld [vmem:[%s3497 + $0xf8] sm:$0xff]
        %v3520 = vld [vmem:[%s3497 + $0x108] sm:$0xff]
        %v3521 = vld [vmem:[%s3497 + $0x110] sm:$0xff]
        %v3522 = vld [vmem:[%s3497 + $0x120] sm:$0xff]
        %v3523 = vld [vmem:[%s3497 + $0x128] sm:$0xff]
        %v3524 = vld [vmem:[%s3497 + $0x138] sm:$0xff]
        %v3525 = vld [vmem:[%s3497 + $0x140] sm:$0xff]
        %v3526 = vld [vmem:[%s3497 + $0x150] sm:$0xff]
        %v3527 = vld [vmem:[%s3497 + $0x158] sm:$0xff]
        %v3528 = vld [vmem:[%s3497 + $0x168] sm:$0xff]
        %v3529 = vld [vmem:[%s3497 + $0x170] sm:$0xff]
        %s3530 = scalar_lea.vmem %s6, 384
        %v3531 = vld [vmem:[%s3530] sm:$0xff]
        %v3532 = vld [vmem:[%s3530 + $0x8] sm:$0xff]
        %v3533 = vld [vmem:[%s3530 + $0x10] sm:$0xff]
        %v3534 = vld [vmem:[%s3530 + $0x18] sm:$0xff]
        %v3535 = vld [vmem:[%s3530 + $0x20] sm:$0xff]
        %v3536 = vld [vmem:[%s3530 + $0x28] sm:$0xff]
        %v3537 = vld [vmem:[%s3530 + $0x30] sm:$0xff]
        %v3538 = vld [vmem:[%s3530 + $0x38] sm:$0xff]
        %v3540 = vsel %vm1109, %v3498, 0
        %v3543 = vsel %vm1109, %v3499, 0
        %v3546 = vsel %vm1109, %v3500, 0
        %v3549 = vsel %vm1109, %v3501, 0
        %v3552 = vsel %vm1109, %v3502, 0
        %v3555 = vsel %vm1109, %v3503, 0
        %v3558 = vsel %vm1109, %v3504, 0
        %v3561 = vsel %vm1109, %v3505, 0
        %v3564 = vsel %vm1109, %v3506, 0
        %v3567 = vsel %vm1109, %v3507, 0
        %v3570 = vsel %vm1109, %v3508, 0
        %v3573 = vsel %vm1109, %v3509, 0
        %v3576 = vsel %vm1109, %v3510, 0
        %v3579 = vsel %vm1109, %v3511, 0
        %v3582 = vsel %vm1109, %v3512, 0
        %v3585 = vsel %vm1109, %v3513, 0
        %v3588 = vsel %vm1109, %v3514, 0
        %v3591 = vsel %vm1109, %v3515, 0
        %v3594 = vsel %vm1109, %v3516, 0
        %v3597 = vsel %vm1109, %v3517, 0
        %v3600 = vsel %vm1109, %v3518, 0
        %v3603 = vsel %vm1109, %v3519, 0
        %v3606 = vsel %vm1109, %v3520, 0
        %v3609 = vsel %vm1109, %v3521, 0
        %v3612 = vsel %vm1109, %v3522, 0
        %v3615 = vsel %vm1109, %v3523, 0
        %v3618 = vsel %vm1109, %v3524, 0
        %v3621 = vsel %vm1109, %v3525, 0
        %v3624 = vsel %vm1109, %v3526, 0
        %v3627 = vsel %vm1109, %v3527, 0
        %v3630 = vsel %vm1109, %v3528, 0
        %v3633 = vsel %vm1109, %v3529, 0
        %3635 = vmatprep.subr.mxu0 0.0
        %3636 = vmatpush1.msra.mxu0 %v3531
        %3637 = vmatprep.subr.mxu0 0.0
        %3638 = vmatpush1.msra.mxu0 %v3532
        %3639 = vmatprep.subr.mxu0 0.0
        %3640 = vmatpush1.msra.mxu0 %v3533
        %3641 = vmatprep.subr.mxu0 0.0
        %3642 = vmatpush1.msra.mxu0 %v3534
        %3643 = vmatprep.subr.mxu0 0.0
        %3644 = vmatpush1.msra.mxu0 %v3535
        %3645 = vmatprep.subr.mxu0 0.0
        %3646 = vmatpush1.msra.mxu0 %v3536
        %3647 = vmatprep.subr.mxu0 0.0
        %3648 = vmatpush1.msra.mxu0 %v3537
        %3649 = vmatprep.subr.mxu0 0.0
        %3650 = vmatpush1.msra.mxu0 %v3538
        %3651 = vmatprep.subr.mxu0 0.0
        %3652 = vmatpush1.msra.mxu0 0.0
        %3653 = vmatprep.subr.mxu0 0.0
        %3654 = vmatpush1.msra.mxu0 0.0
        %3655 = vmatprep.subr.mxu0 0.0
        %3656 = vmatpush1.msra.mxu0 0.0
        %3657 = vmatprep.subr.mxu0 0.0
        %3658 = vmatpush1.msra.mxu0 0.0
        %3659 = vmatprep.subr.mxu0 0.0
        %3660 = vmatpush1.msra.mxu0 0.0
        %3661 = vmatprep.subr.mxu0 0.0
        %3662 = vmatpush1.msra.mxu0 0.0
        %3663 = vmatprep.subr.mxu0 0.0
        %3664 = vmatpush1.msra.mxu0 0.0
        %3665 = vmatprep.subr.mxu0 0.0
        %3666 = vmatpush1.msra.mxu0 0.0
        %3667 = vmatprep.subr.mxu0 0.0
        %3668 = vmatpush1.msra.mxu0 0.0
        %3669 = vmatprep.subr.mxu0 0.0
        %3670 = vmatpush1.msra.mxu0 0.0
        %3671 = vmatprep.subr.mxu0 0.0
        %3672 = vmatpush1.msra.mxu0 0.0
        %3673 = vmatprep.subr.mxu0 0.0
        %3674 = vmatpush1.msra.mxu0 0.0
        %3675 = vmatprep.subr.mxu0 0.0
        %3676 = vmatpush1.msra.mxu0 0.0
        %3677 = vmatprep.subr.mxu0 0.0
        %3678 = vmatpush1.msra.mxu0 0.0
        %3679 = vmatprep.subr.mxu0 0.0
        %3680 = vmatpush1.msra.mxu0 0.0
        %3681 = vmatprep.subr.mxu0 0.0
        %3682 = vmatpush1.msra.mxu0 0.0
        %3683 = vmatprep.subr.mxu0 0.0
        %3684 = vmatpush1.msra.mxu0 0.0
        %3685 = vmatprep.subr.mxu0 0.0
        %3686 = vmatpush1.msra.mxu0 0.0
        %3687 = vmatprep.subr.mxu0 0.0
        %3688 = vmatpush1.msra.mxu0 0.0
        %3689 = vmatprep.subr.mxu0 0.0
        %3690 = vmatpush1.msra.mxu0 0.0
        %3691 = vmatprep.subr.mxu0 0.0
        %3692 = vmatpush1.msra.mxu0 0.0
        %3693 = vmatprep.subr.mxu0 0.0
        %3694 = vmatpush1.msra.mxu0 0.0
        %3695 = vmatprep.subr.mxu0 0.0
        %3696 = vmatpush1.msra.mxu0 0.0
        %3697 = vmatprep.subr.mxu0 0.0
        %3698 = vmatpush1.msra.mxu0 0.0
        %3699 = vmatprep.mubr.f32.mxu0 0.0
        %3700 = vmatmul.mubr.f32.gmra.mrb[0].mxu0 %v3540
        %v3701 = vpop.f32.mrb[0].mxu0
        %v3702 = vadd.f32 0.0, %v3701
        %v3703 = vpop.f32.mrb[0].mxu0
        %3704 = vmatprep.mubr.f32.mxu0 0.0
        %3705 = vmatmul.mubr.f32.gmra.mrb[0].mxu0 %v3543
        %v3706 = vpop.f32.mrb[0].mxu0
        %v3707 = vadd.f32 0.0, %v3706
        %v3708 = vpop.f32.mrb[0].mxu0
        %3709 = vmatprep.mubr.f32.mxu0 0.0
        %3710 = vmatmul.mubr.f32.gmra.mrb[0].mxu0 %v3546
        %v3711 = vpop.f32.mrb[0].mxu0
        %v3712 = vadd.f32 0.0, %v3711
        %v3713 = vpop.f32.mrb[0].mxu0
        %3714 = vmatprep.mubr.f32.mxu0 0.0
        %3715 = vmatmul.mubr.f32.gmra.mrb[0].mxu0 %v3549
        %v3716 = vpop.f32.mrb[0].mxu0
        %v3717 = vadd.f32 0.0, %v3716
        %v3718 = vpop.f32.mrb[0].mxu0
        %3719 = vmatprep.mubr.f32.mxu0 0.0
        %3720 = vmatmul.mubr.f32.gmra.mrb[0].mxu0 %v3552
        %v3721 = vpop.f32.mrb[0].mxu0
        %v3722 = vadd.f32 0.0, %v3721
        %v3723 = vpop.f32.mrb[0].mxu0
        %3724 = vmatprep.mubr.f32.mxu0 0.0
        %3725 = vmatmul.mubr.f32.gmra.mrb[0].mxu0 %v3555
        %v3726 = vpop.f32.mrb[0].mxu0
        %v3727 = vadd.f32 0.0, %v3726
        %v3728 = vpop.f32.mrb[0].mxu0
        %3729 = vmatprep.mubr.f32.mxu0 0.0
        %3730 = vmatmul.mubr.f32.gmra.mrb[0].mxu0 %v3558
        %v3731 = vpop.f32.mrb[0].mxu0
        %v3732 = vadd.f32 0.0, %v3731
        %v3733 = vpop.f32.mrb[0].mxu0
        %3734 = vmatprep.mubr.f32.mxu0 0.0
        %3735 = vmatmul.mubr.f32.gmra.mrb[0].mxu0 %v3561
        %v3736 = vpop.f32.mrb[0].mxu0
        %v3737 = vadd.f32 0.0, %v3736
        %v3738 = vpop.f32.mrb[0].mxu0
        %3739 = vmatprep.mubr.f32.mxu0 0.0
        %3740 = vmatmul.mubr.f32.gmra.mrb[0].mxu0 %v3564
        %v3741 = vpop.f32.mrb[0].mxu0
        %v3742 = vadd.f32 0.0, %v3741
        %v3743 = vpop.f32.mrb[0].mxu0
        %3744 = vmatprep.mubr.f32.mxu0 0.0
        %3745 = vmatmul.mubr.f32.gmra.mrb[0].mxu0 %v3567
        %v3746 = vpop.f32.mrb[0].mxu0
        %v3747 = vadd.f32 0.0, %v3746
        %v3748 = vpop.f32.mrb[0].mxu0
        %3749 = vmatprep.mubr.f32.mxu0 0.0
        %3750 = vmatmul.mubr.f32.gmra.mrb[0].mxu0 %v3570
        %v3751 = vpop.f32.mrb[0].mxu0
        %v3752 = vadd.f32 0.0, %v3751
        %v3753 = vpop.f32.mrb[0].mxu0
        %3754 = vmatprep.mubr.f32.mxu0 0.0
        %3755 = vmatmul.mubr.f32.gmra.mrb[0].mxu0 %v3573
        %v3756 = vpop.f32.mrb[0].mxu0
        %v3757 = vadd.f32 0.0, %v3756
        %v3758 = vpop.f32.mrb[0].mxu0
        %3759 = vmatprep.mubr.f32.mxu0 0.0
        %3760 = vmatmul.mubr.f32.gmra.mrb[0].mxu0 %v3576
        %v3761 = vpop.f32.mrb[0].mxu0
        %v3762 = vadd.f32 0.0, %v3761
        %v3763 = vpop.f32.mrb[0].mxu0
        %3764 = vmatprep.mubr.f32.mxu0 0.0
        %3765 = vmatmul.mubr.f32.gmra.mrb[0].mxu0 %v3579
        %v3766 = vpop.f32.mrb[0].mxu0
        %v3767 = vadd.f32 0.0, %v3766
        %v3768 = vpop.f32.mrb[0].mxu0
        %3769 = vmatprep.mubr.f32.mxu0 0.0
        %3770 = vmatmul.mubr.f32.gmra.mrb[0].mxu0 %v3582
        %v3771 = vpop.f32.mrb[0].mxu0
        %v3772 = vadd.f32 0.0, %v3771
        %v3773 = vpop.f32.mrb[0].mxu0
        %3774 = vmatprep.mubr.f32.mxu0 0.0
        %3775 = vmatmul.mubr.f32.gmra.mrb[0].mxu0 %v3585
        %v3776 = vpop.f32.mrb[0].mxu0
        %v3777 = vadd.f32 0.0, %v3776
        %v3778 = vpop.f32.mrb[0].mxu0
        %3779 = vmatprep.mubr.f32.mxu0 0.0
        %3780 = vmatmul.mubr.f32.gmra.mrb[0].mxu0 %v3588
        %v3781 = vpop.f32.mrb[0].mxu0
        %v3782 = vadd.f32 0.0, %v3781
        %v3783 = vpop.f32.mrb[0].mxu0
        %3784 = vmatprep.mubr.f32.mxu0 0.0
        %3785 = vmatmul.mubr.f32.gmra.mrb[0].mxu0 %v3591
        %v3786 = vpop.f32.mrb[0].mxu0
        %v3787 = vadd.f32 0.0, %v3786
        %v3788 = vpop.f32.mrb[0].mxu0
        %3789 = vmatprep.mubr.f32.mxu0 0.0
        %3790 = vmatmul.mubr.f32.gmra.mrb[0].mxu0 %v3594
        %v3791 = vpop.f32.mrb[0].mxu0
        %v3792 = vadd.f32 0.0, %v3791
        %v3793 = vpop.f32.mrb[0].mxu0
        %3794 = vmatprep.mubr.f32.mxu0 0.0
        %3795 = vmatmul.mubr.f32.gmra.mrb[0].mxu0 %v3597
        %v3796 = vpop.f32.mrb[0].mxu0
        %v3797 = vadd.f32 0.0, %v3796
        %v3798 = vpop.f32.mrb[0].mxu0
        %3799 = vmatprep.mubr.f32.mxu0 0.0
        %3800 = vmatmul.mubr.f32.gmra.mrb[0].mxu0 %v3600
        %v3801 = vpop.f32.mrb[0].mxu0
        %v3802 = vadd.f32 0.0, %v3801
        %v3803 = vpop.f32.mrb[0].mxu0
        %3804 = vmatprep.mubr.f32.mxu0 0.0
        %3805 = vmatmul.mubr.f32.gmra.mrb[0].mxu0 %v3603
        %v3806 = vpop.f32.mrb[0].mxu0
        %v3807 = vadd.f32 0.0, %v3806
        %v3808 = vpop.f32.mrb[0].mxu0
        %3809 = vmatprep.mubr.f32.mxu0 0.0
        %3810 = vmatmul.mubr.f32.gmra.mrb[0].mxu0 %v3606
        %v3811 = vpop.f32.mrb[0].mxu0
        %v3812 = vadd.f32 0.0, %v3811
        %v3813 = vpop.f32.mrb[0].mxu0
        %3814 = vmatprep.mubr.f32.mxu0 0.0
        %3815 = vmatmul.mubr.f32.gmra.mrb[0].mxu0 %v3609
        %v3816 = vpop.f32.mrb[0].mxu0
        %v3817 = vadd.f32 0.0, %v3816
        %v3818 = vpop.f32.mrb[0].mxu0
        %3819 = vmatprep.mubr.f32.mxu0 0.0
        %3820 = vmatmul.mubr.f32.gmra.mrb[0].mxu0 %v3612
        %v3821 = vpop.f32.mrb[0].mxu0
        %v3822 = vadd.f32 0.0, %v3821
        %v3823 = vpop.f32.mrb[0].mxu0
        %3824 = vmatprep.mubr.f32.mxu0 0.0
        %3825 = vmatmul.mubr.f32.gmra.mrb[0].mxu0 %v3615
        %v3826 = vpop.f32.mrb[0].mxu0
        %v3827 = vadd.f32 0.0, %v3826
        %v3828 = vpop.f32.mrb[0].mxu0
        %3829 = vmatprep.mubr.f32.mxu0 0.0
        %3830 = vmatmul.mubr.f32.gmra.mrb[0].mxu0 %v3618
        %v3831 = vpop.f32.mrb[0].mxu0
        %v3832 = vadd.f32 0.0, %v3831
        %v3833 = vpop.f32.mrb[0].mxu0
        %3834 = vmatprep.mubr.f32.mxu0 0.0
        %3835 = vmatmul.mubr.f32.gmra.mrb[0].mxu0 %v3621
        %v3836 = vpop.f32.mrb[0].mxu0
        %v3837 = vadd.f32 0.0, %v3836
        %v3838 = vpop.f32.mrb[0].mxu0
        %3839 = vmatprep.mubr.f32.mxu0 0.0
        %3840 = vmatmul.mubr.f32.gmra.mrb[0].mxu0 %v3624
        %v3841 = vpop.f32.mrb[0].mxu0
        %v3842 = vadd.f32 0.0, %v3841
        %v3843 = vpop.f32.mrb[0].mxu0
        %3844 = vmatprep.mubr.f32.mxu0 0.0
        %3845 = vmatmul.mubr.f32.gmra.mrb[0].mxu0 %v3627
        %v3846 = vpop.f32.mrb[0].mxu0
        %v3847 = vadd.f32 0.0, %v3846
        %v3848 = vpop.f32.mrb[0].mxu0
        %3849 = vmatprep.mubr.f32.mxu0 0.0
        %3850 = vmatmul.mubr.f32.gmra.mrb[0].mxu0 %v3630
        %v3851 = vpop.f32.mrb[0].mxu0
        %v3852 = vadd.f32 0.0, %v3851
        %v3853 = vpop.f32.mrb[0].mxu0
        %3854 = vmatprep.mubr.f32.mxu0 0.0
        %3855 = vmatmul.mubr.f32.gmra.mrb[0].mxu0 %v3633
        %v3856 = vpop.f32.mrb[0].mxu0
        %v3857 = vadd.f32 0.0, %v3856
        %v3858 = vpop.f32.mrb[0].mxu0
        %3859 = vdwg.mxu0
        %v3860 = vadd.f32 %v3465, %v3702
        %v3861 = vadd.f32 %v3466, %v3707
        %v3862 = vadd.f32 %v3467, %v3712
        %v3863 = vadd.f32 %v3468, %v3717
        %v3864 = vadd.f32 %v3469, %v3722
        %v3865 = vadd.f32 %v3470, %v3727
        %v3866 = vadd.f32 %v3471, %v3732
        %v3867 = vadd.f32 %v3472, %v3737
        %v3868 = vadd.f32 %v3473, %v3742
        %v3869 = vadd.f32 %v3474, %v3747
        %v3870 = vadd.f32 %v3475, %v3752
        %v3871 = vadd.f32 %v3476, %v3757
        %v3872 = vadd.f32 %v3477, %v3762
        %v3873 = vadd.f32 %v3478, %v3767
        %v3874 = vadd.f32 %v3479, %v3772
        %v3875 = vadd.f32 %v3480, %v3777
        %v3876 = vadd.f32 %v3481, %v3782
        %v3877 = vadd.f32 %v3482, %v3787
        %v3878 = vadd.f32 %v3483, %v3792
        %v3879 = vadd.f32 %v3484, %v3797
        %v3880 = vadd.f32 %v3485, %v3802
        %v3881 = vadd.f32 %v3486, %v3807
        %v3882 = vadd.f32 %v3487, %v3812
        %v3883 = vadd.f32 %v3488, %v3817
        %v3884 = vadd.f32 %v3489, %v3822
        %v3885 = vadd.f32 %v3490, %v3827
        %v3886 = vadd.f32 %v3491, %v3832
        %v3887 = vadd.f32 %v3492, %v3837
        %v3888 = vadd.f32 %v3493, %v3842
        %v3889 = vadd.f32 %v3494, %v3847
        %v3890 = vadd.f32 %v3495, %v3852
        %v3891 = vadd.f32 %v3496, %v3857
        %v3892 = vld [vmem:[%s3497 + $0x1] sm:$0xff]
        %v3893 = vld [vmem:[%s3497 + $0x9] sm:$0xff]
        %v3894 = vld [vmem:[%s3497 + $0x19] sm:$0xff]
        %v3895 = vld [vmem:[%s3497 + $0x21] sm:$0xff]
        %v3896 = vld [vmem:[%s3497 + $0x31] sm:$0xff]
        %v3897 = vld [vmem:[%s3497 + $0x39] sm:$0xff]
        %v3898 = vld [vmem:[%s3497 + $0x49] sm:$0xff]
        %v3899 = vld [vmem:[%s3497 + $0x51] sm:$0xff]
        %v3900 = vld [vmem:[%s3497 + $0x61] sm:$0xff]
        %v3901 = vld [vmem:[%s3497 + $0x69] sm:$0xff]
        %v3902 = vld [vmem:[%s3497 + $0x79] sm:$0xff]
        %v3903 = vld [vmem:[%s3497 + $0x81] sm:$0xff]
        %v3904 = vld [vmem:[%s3497 + $0x91] sm:$0xff]
        %v3905 = vld [vmem:[%s3497 + $0x99] sm:$0xff]
        %v3906 = vld [vmem:[%s3497 + $0xa9] sm:$0xff]
        %v3907 = vld [vmem:[%s3497 + $0xb1] sm:$0xff]
        %v3908 = vld [vmem:[%s3497 + $0xc1] sm:$0xff]
        %v3909 = vld [vmem:[%s3497 + $0xc9] sm:$0xff]
        %v3910 = vld [vmem:[%s3497 + $0xd9] sm:$0xff]
        %v3911 = vld [vmem:[%s3497 + $0xe1] sm:$0xff]
        %v3912 = vld [vmem:[%s3497 + $0xf1] sm:$0xff]
        %v3913 = vld [vmem:[%s3497 + $0xf9] sm:$0xff]
        %v3914 = vld [vmem:[%s3497 + $0x109] sm:$0xff]
        %v3915 = vld [vmem:[%s3497 + $0x111] sm:$0xff]
        %v3916 = vld [vmem:[%s3497 + $0x121] sm:$0xff]
        %v3917 = vld [vmem:[%s3497 + $0x129] sm:$0xff]
        %v3918 = vld [vmem:[%s3497 + $0x139] sm:$0xff]
        %v3919 = vld [vmem:[%s3497 + $0x141] sm:$0xff]
        %v3920 = vld [vmem:[%s3497 + $0x151] sm:$0xff]
        %v3921 = vld [vmem:[%s3497 + $0x159] sm:$0xff]
        %v3922 = vld [vmem:[%s3497 + $0x169] sm:$0xff]
        %v3923 = vld [vmem:[%s3497 + $0x171] sm:$0xff]
        %s3924 = scalar_lea.vmem %s6, 448
        %v3925 = vld [vmem:[%s3924] sm:$0xff]
        %v3926 = vld [vmem:[%s3924 + $0x8] sm:$0xff]
        %v3927 = vld [vmem:[%s3924 + $0x10] sm:$0xff]
        %v3928 = vld [vmem:[%s3924 + $0x18] sm:$0xff]
        %v3929 = vld [vmem:[%s3924 + $0x20] sm:$0xff]
        %v3930 = vld [vmem:[%s3924 + $0x28] sm:$0xff]
        %v3931 = vld [vmem:[%s3924 + $0x30] sm:$0xff]
        %v3932 = vld [vmem:[%s3924 + $0x38] sm:$0xff]
        %v3934 = vsel %vm1109, %v3892, 0
        %v3937 = vsel %vm1109, %v3893, 0
        %v3940 = vsel %vm1109, %v3894, 0
        %v3943 = vsel %vm1109, %v3895, 0
        %v3946 = vsel %vm1109, %v3896, 0
        %v3949 = vsel %vm1109, %v3897, 0
        %v3952 = vsel %vm1109, %v3898, 0
        %v3955 = vsel %vm1109, %v3899, 0
        %v3958 = vsel %vm1109, %v3900, 0
        %v3961 = vsel %vm1109, %v3901, 0
        %v3964 = vsel %vm1109, %v3902, 0
        %v3967 = vsel %vm1109, %v3903, 0
        %v3970 = vsel %vm1109, %v3904, 0
        %v3973 = vsel %vm1109, %v3905, 0
        %v3976 = vsel %vm1109, %v3906, 0
        %v3979 = vsel %vm1109, %v3907, 0
        %v3982 = vsel %vm1109, %v3908, 0
        %v3985 = vsel %vm1109, %v3909, 0
        %v3988 = vsel %vm1109, %v3910, 0
        %v3991 = vsel %vm1109, %v3911, 0
        %v3994 = vsel %vm1109, %v3912, 0
        %v3997 = vsel %vm1109, %v3913, 0
        %v4000 = vsel %vm1109, %v3914, 0
        %v4003 = vsel %vm1109, %v3915, 0
        %v4006 = vsel %vm1109, %v3916, 0
        %v4009 = vsel %vm1109, %v3917, 0
        %v4012 = vsel %vm1109, %v3918, 0
        %v4015 = vsel %vm1109, %v3919, 0
        %v4018 = vsel %vm1109, %v3920, 0
        %v4021 = vsel %vm1109, %v3921, 0
        %v4024 = vsel %vm1109, %v3922, 0
        %v4027 = vsel %vm1109, %v3923, 0
        %4029 = vmatprep.subr.mxu0 0.0
        %4030 = vmatpush1.msra.mxu0 %v3925
        %4031 = vmatprep.subr.mxu0 0.0
        %4032 = vmatpush1.msra.mxu0 %v3926
        %4033 = vmatprep.subr.mxu0 0.0
        %4034 = vmatpush1.msra.mxu0 %v3927
        %4035 = vmatprep.subr.mxu0 0.0
        %4036 = vmatpush1.msra.mxu0 %v3928
        %4037 = vmatprep.subr.mxu0 0.0
        %4038 = vmatpush1.msra.mxu0 %v3929
        %4039 = vmatprep.subr.mxu0 0.0
        %4040 = vmatpush1.msra.mxu0 %v3930
        %4041 = vmatprep.subr.mxu0 0.0
        %4042 = vmatpush1.msra.mxu0 %v3931
        %4043 = vmatprep.subr.mxu0 0.0
        %4044 = vmatpush1.msra.mxu0 %v3932
        %4045 = vmatprep.subr.mxu0 0.0
        %4046 = vmatpush1.msra.mxu0 0.0
        %4047 = vmatprep.subr.mxu0 0.0
        %4048 = vmatpush1.msra.mxu0 0.0
        %4049 = vmatprep.subr.mxu0 0.0
        %4050 = vmatpush1.msra.mxu0 0.0
        %4051 = vmatprep.subr.mxu0 0.0
        %4052 = vmatpush1.msra.mxu0 0.0
        %4053 = vmatprep.subr.mxu0 0.0
        %4054 = vmatpush1.msra.mxu0 0.0
        %4055 = vmatprep.subr.mxu0 0.0
        %4056 = vmatpush1.msra.mxu0 0.0
        %4057 = vmatprep.subr.mxu0 0.0
        %4058 = vmatpush1.msra.mxu0 0.0
        %4059 = vmatprep.subr.mxu0 0.0
        %4060 = vmatpush1.msra.mxu0 0.0
        %4061 = vmatprep.subr.mxu0 0.0
        %4062 = vmatpush1.msra.mxu0 0.0
        %4063 = vmatprep.subr.mxu0 0.0
        %4064 = vmatpush1.msra.mxu0 0.0
        %4065 = vmatprep.subr.mxu0 0.0
        %4066 = vmatpush1.msra.mxu0 0.0
        %4067 = vmatprep.subr.mxu0 0.0
        %4068 = vmatpush1.msra.mxu0 0.0
        %4069 = vmatprep.subr.mxu0 0.0
        %4070 = vmatpush1.msra.mxu0 0.0
        %4071 = vmatprep.subr.mxu0 0.0
        %4072 = vmatpush1.msra.mxu0 0.0
        %4073 = vmatprep.subr.mxu0 0.0
        %4074 = vmatpush1.msra.mxu0 0.0
        %4075 = vmatprep.subr.mxu0 0.0
        %4076 = vmatpush1.msra.mxu0 0.0
        %4077 = vmatprep.subr.mxu0 0.0
        %4078 = vmatpush1.msra.mxu0 0.0
        %4079 = vmatprep.subr.mxu0 0.0
        %4080 = vmatpush1.msra.mxu0 0.0
        %4081 = vmatprep.subr.mxu0 0.0
        %4082 = vmatpush1.msra.mxu0 0.0
        %4083 = vmatprep.subr.mxu0 0.0
        %4084 = vmatpush1.msra.mxu0 0.0
        %4085 = vmatprep.subr.mxu0 0.0
        %4086 = vmatpush1.msra.mxu0 0.0
        %4087 = vmatprep.subr.mxu0 0.0
        %4088 = vmatpush1.msra.mxu0 0.0
        %4089 = vmatprep.subr.mxu0 0.0
        %4090 = vmatpush1.msra.mxu0 0.0
        %4091 = vmatprep.subr.mxu0 0.0
        %4092 = vmatpush1.msra.mxu0 0.0
        %4093 = vmatprep.mubr.f32.mxu0 0.0
        %4094 = vmatmul.mubr.f32.gmra.mrb[0].mxu0 %v3934
        %v4095 = vpop.f32.mrb[0].mxu0
        %v4096 = vadd.f32 0.0, %v4095
        %v4097 = vpop.f32.mrb[0].mxu0
        %4098 = vmatprep.mubr.f32.mxu0 0.0
        %4099 = vmatmul.mubr.f32.gmra.mrb[0].mxu0 %v3937
        %v4100 = vpop.f32.mrb[0].mxu0
        %v4101 = vadd.f32 0.0, %v4100
        %v4102 = vpop.f32.mrb[0].mxu0
        %4103 = vmatprep.mubr.f32.mxu0 0.0
        %4104 = vmatmul.mubr.f32.gmra.mrb[0].mxu0 %v3940
        %v4105 = vpop.f32.mrb[0].mxu0
        %v4106 = vadd.f32 0.0, %v4105
        %v4107 = vpop.f32.mrb[0].mxu0
        %4108 = vmatprep.mubr.f32.mxu0 0.0
        %4109 = vmatmul.mubr.f32.gmra.mrb[0].mxu0 %v3943
        %v4110 = vpop.f32.mrb[0].mxu0
        %v4111 = vadd.f32 0.0, %v4110
        %v4112 = vpop.f32.mrb[0].mxu0
        %4113 = vmatprep.mubr.f32.mxu0 0.0
        %4114 = vmatmul.mubr.f32.gmra.mrb[0].mxu0 %v3946
        %v4115 = vpop.f32.mrb[0].mxu0
        %v4116 = vadd.f32 0.0, %v4115
        %v4117 = vpop.f32.mrb[0].mxu0
        %4118 = vmatprep.mubr.f32.mxu0 0.0
        %4119 = vmatmul.mubr.f32.gmra.mrb[0].mxu0 %v3949
        %v4120 = vpop.f32.mrb[0].mxu0
        %v4121 = vadd.f32 0.0, %v4120
        %v4122 = vpop.f32.mrb[0].mxu0
        %4123 = vmatprep.mubr.f32.mxu0 0.0
        %4124 = vmatmul.mubr.f32.gmra.mrb[0].mxu0 %v3952
        %v4125 = vpop.f32.mrb[0].mxu0
        %v4126 = vadd.f32 0.0, %v4125
        %v4127 = vpop.f32.mrb[0].mxu0
        %4128 = vmatprep.mubr.f32.mxu0 0.0
        %4129 = vmatmul.mubr.f32.gmra.mrb[0].mxu0 %v3955
        %v4130 = vpop.f32.mrb[0].mxu0
        %v4131 = vadd.f32 0.0, %v4130
        %v4132 = vpop.f32.mrb[0].mxu0
        %4133 = vmatprep.mubr.f32.mxu0 0.0
        %4134 = vmatmul.mubr.f32.gmra.mrb[0].mxu0 %v3958
        %v4135 = vpop.f32.mrb[0].mxu0
        %v4136 = vadd.f32 0.0, %v4135
        %v4137 = vpop.f32.mrb[0].mxu0
        %4138 = vmatprep.mubr.f32.mxu0 0.0
        %4139 = vmatmul.mubr.f32.gmra.mrb[0].mxu0 %v3961
        %v4140 = vpop.f32.mrb[0].mxu0
        %v4141 = vadd.f32 0.0, %v4140
        %v4142 = vpop.f32.mrb[0].mxu0
        %4143 = vmatprep.mubr.f32.mxu0 0.0
        %4144 = vmatmul.mubr.f32.gmra.mrb[0].mxu0 %v3964
        %v4145 = vpop.f32.mrb[0].mxu0
        %v4146 = vadd.f32 0.0, %v4145
        %v4147 = vpop.f32.mrb[0].mxu0
        %4148 = vmatprep.mubr.f32.mxu0 0.0
        %4149 = vmatmul.mubr.f32.gmra.mrb[0].mxu0 %v3967
        %v4150 = vpop.f32.mrb[0].mxu0
        %v4151 = vadd.f32 0.0, %v4150
        %v4152 = vpop.f32.mrb[0].mxu0
        %4153 = vmatprep.mubr.f32.mxu0 0.0
        %4154 = vmatmul.mubr.f32.gmra.mrb[0].mxu0 %v3970
        %v4155 = vpop.f32.mrb[0].mxu0
        %v4156 = vadd.f32 0.0, %v4155
        %v4157 = vpop.f32.mrb[0].mxu0
        %4158 = vmatprep.mubr.f32.mxu0 0.0
        %4159 = vmatmul.mubr.f32.gmra.mrb[0].mxu0 %v3973
        %v4160 = vpop.f32.mrb[0].mxu0
        %v4161 = vadd.f32 0.0, %v4160
        %v4162 = vpop.f32.mrb[0].mxu0
        %4163 = vmatprep.mubr.f32.mxu0 0.0
        %4164 = vmatmul.mubr.f32.gmra.mrb[0].mxu0 %v3976
        %v4165 = vpop.f32.mrb[0].mxu0
        %v4166 = vadd.f32 0.0, %v4165
        %v4167 = vpop.f32.mrb[0].mxu0
        %4168 = vmatprep.mubr.f32.mxu0 0.0
        %4169 = vmatmul.mubr.f32.gmra.mrb[0].mxu0 %v3979
        %v4170 = vpop.f32.mrb[0].mxu0
        %v4171 = vadd.f32 0.0, %v4170
        %v4172 = vpop.f32.mrb[0].mxu0
        %4173 = vmatprep.mubr.f32.mxu0 0.0
        %4174 = vmatmul.mubr.f32.gmra.mrb[0].mxu0 %v3982
        %v4175 = vpop.f32.mrb[0].mxu0
        %v4176 = vadd.f32 0.0, %v4175
        %v4177 = vpop.f32.mrb[0].mxu0
        %4178 = vmatprep.mubr.f32.mxu0 0.0
        %4179 = vmatmul.mubr.f32.gmra.mrb[0].mxu0 %v3985
        %v4180 = vpop.f32.mrb[0].mxu0
        %v4181 = vadd.f32 0.0, %v4180
        %v4182 = vpop.f32.mrb[0].mxu0
        %4183 = vmatprep.mubr.f32.mxu0 0.0
        %4184 = vmatmul.mubr.f32.gmra.mrb[0].mxu0 %v3988
        %v4185 = vpop.f32.mrb[0].mxu0
        %v4186 = vadd.f32 0.0, %v4185
        %v4187 = vpop.f32.mrb[0].mxu0
        %4188 = vmatprep.mubr.f32.mxu0 0.0
        %4189 = vmatmul.mubr.f32.gmra.mrb[0].mxu0 %v3991
        %v4190 = vpop.f32.mrb[0].mxu0
        %v4191 = vadd.f32 0.0, %v4190
        %v4192 = vpop.f32.mrb[0].mxu0
        %4193 = vmatprep.mubr.f32.mxu0 0.0
        %4194 = vmatmul.mubr.f32.gmra.mrb[0].mxu0 %v3994
        %v4195 = vpop.f32.mrb[0].mxu0
        %v4196 = vadd.f32 0.0, %v4195
        %v4197 = vpop.f32.mrb[0].mxu0
        %4198 = vmatprep.mubr.f32.mxu0 0.0
        %4199 = vmatmul.mubr.f32.gmra.mrb[0].mxu0 %v3997
        %v4200 = vpop.f32.mrb[0].mxu0
        %v4201 = vadd.f32 0.0, %v4200
        %v4202 = vpop.f32.mrb[0].mxu0
        %4203 = vmatprep.mubr.f32.mxu0 0.0
        %4204 = vmatmul.mubr.f32.gmra.mrb[0].mxu0 %v4000
        %v4205 = vpop.f32.mrb[0].mxu0
        %v4206 = vadd.f32 0.0, %v4205
        %v4207 = vpop.f32.mrb[0].mxu0
        %4208 = vmatprep.mubr.f32.mxu0 0.0
        %4209 = vmatmul.mubr.f32.gmra.mrb[0].mxu0 %v4003
        %v4210 = vpop.f32.mrb[0].mxu0
        %v4211 = vadd.f32 0.0, %v4210
        %v4212 = vpop.f32.mrb[0].mxu0
        %4213 = vmatprep.mubr.f32.mxu0 0.0
        %4214 = vmatmul.mubr.f32.gmra.mrb[0].mxu0 %v4006
        %v4215 = vpop.f32.mrb[0].mxu0
        %v4216 = vadd.f32 0.0, %v4215
        %v4217 = vpop.f32.mrb[0].mxu0
        %4218 = vmatprep.mubr.f32.mxu0 0.0
        %4219 = vmatmul.mubr.f32.gmra.mrb[0].mxu0 %v4009
        %v4220 = vpop.f32.mrb[0].mxu0
        %v4221 = vadd.f32 0.0, %v4220
        %v4222 = vpop.f32.mrb[0].mxu0
        %4223 = vmatprep.mubr.f32.mxu0 0.0
        %4224 = vmatmul.mubr.f32.gmra.mrb[0].mxu0 %v4012
        %v4225 = vpop.f32.mrb[0].mxu0
        %v4226 = vadd.f32 0.0, %v4225
        %v4227 = vpop.f32.mrb[0].mxu0
        %4228 = vmatprep.mubr.f32.mxu0 0.0
        %4229 = vmatmul.mubr.f32.gmra.mrb[0].mxu0 %v4015
        %v4230 = vpop.f32.mrb[0].mxu0
        %v4231 = vadd.f32 0.0, %v4230
        %v4232 = vpop.f32.mrb[0].mxu0
        %4233 = vmatprep.mubr.f32.mxu0 0.0
        %4234 = vmatmul.mubr.f32.gmra.mrb[0].mxu0 %v4018
        %v4235 = vpop.f32.mrb[0].mxu0
        %v4236 = vadd.f32 0.0, %v4235
        %v4237 = vpop.f32.mrb[0].mxu0
        %4238 = vmatprep.mubr.f32.mxu0 0.0
        %4239 = vmatmul.mubr.f32.gmra.mrb[0].mxu0 %v4021
        %v4240 = vpop.f32.mrb[0].mxu0
        %v4241 = vadd.f32 0.0, %v4240
        %v4242 = vpop.f32.mrb[0].mxu0
        %4243 = vmatprep.mubr.f32.mxu0 0.0
        %4244 = vmatmul.mubr.f32.gmra.mrb[0].mxu0 %v4024
        %v4245 = vpop.f32.mrb[0].mxu0
        %v4246 = vadd.f32 0.0, %v4245
        %v4247 = vpop.f32.mrb[0].mxu0
        %4248 = vmatprep.mubr.f32.mxu0 0.0
        %4249 = vmatmul.mubr.f32.gmra.mrb[0].mxu0 %v4027
        %v4250 = vpop.f32.mrb[0].mxu0
        %v4251 = vadd.f32 0.0, %v4250
        %v4252 = vpop.f32.mrb[0].mxu0
        %4253 = vdwg.mxu0
        %v4254 = vadd.f32 %v3860, %v4096
        %v4255 = vadd.f32 %v3861, %v4101
        %v4256 = vadd.f32 %v3862, %v4106
        %v4257 = vadd.f32 %v3863, %v4111
        %v4258 = vadd.f32 %v3864, %v4116
        %v4259 = vadd.f32 %v3865, %v4121
        %v4260 = vadd.f32 %v3866, %v4126
        %v4261 = vadd.f32 %v3867, %v4131
        %v4262 = vadd.f32 %v3868, %v4136
        %v4263 = vadd.f32 %v3869, %v4141
        %v4264 = vadd.f32 %v3870, %v4146
        %v4265 = vadd.f32 %v3871, %v4151
        %v4266 = vadd.f32 %v3872, %v4156
        %v4267 = vadd.f32 %v3873, %v4161
        %v4268 = vadd.f32 %v3874, %v4166
        %v4269 = vadd.f32 %v3875, %v4171
        %v4270 = vadd.f32 %v3876, %v4176
        %v4271 = vadd.f32 %v3877, %v4181
        %v4272 = vadd.f32 %v3878, %v4186
        %v4273 = vadd.f32 %v3879, %v4191
        %v4274 = vadd.f32 %v3880, %v4196
        %v4275 = vadd.f32 %v3881, %v4201
        %v4276 = vadd.f32 %v3882, %v4206
        %v4277 = vadd.f32 %v3883, %v4211
        %v4278 = vadd.f32 %v3884, %v4216
        %v4279 = vadd.f32 %v3885, %v4221
        %v4280 = vadd.f32 %v3886, %v4226
        %v4281 = vadd.f32 %v3887, %v4231
        %v4282 = vadd.f32 %v3888, %v4236
        %v4283 = vadd.f32 %v3889, %v4241
        %v4284 = vadd.f32 %v3890, %v4246
        %v4285 = vadd.f32 %v3891, %v4251
        %v4286 = vld [vmem:[%s3497 + $0x2] sm:$0xff]
        %v4287 = vld [vmem:[%s3497 + $0xa] sm:$0xff]
        %v4288 = vld [vmem:[%s3497 + $0x1a] sm:$0xff]
        %v4289 = vld [vmem:[%s3497 + $0x22] sm:$0xff]
        %v4290 = vld [vmem:[%s3497 + $0x32] sm:$0xff]
        %v4291 = vld [vmem:[%s3497 + $0x3a] sm:$0xff]
        %v4292 = vld [vmem:[%s3497 + $0x4a] sm:$0xff]
        %v4293 = vld [vmem:[%s3497 + $0x52] sm:$0xff]
        %v4294 = vld [vmem:[%s3497 + $0x62] sm:$0xff]
        %v4295 = vld [vmem:[%s3497 + $0x6a] sm:$0xff]
        %v4296 = vld [vmem:[%s3497 + $0x7a] sm:$0xff]
        %v4297 = vld [vmem:[%s3497 + $0x82] sm:$0xff]
        %v4298 = vld [vmem:[%s3497 + $0x92] sm:$0xff]
        %v4299 = vld [vmem:[%s3497 + $0x9a] sm:$0xff]
        %v4300 = vld [vmem:[%s3497 + $0xaa] sm:$0xff]
        %v4301 = vld [vmem:[%s3497 + $0xb2] sm:$0xff]
        %v4302 = vld [vmem:[%s3497 + $0xc2] sm:$0xff]
        %v4303 = vld [vmem:[%s3497 + $0xca] sm:$0xff]
        %v4304 = vld [vmem:[%s3497 + $0xda] sm:$0xff]
        %v4305 = vld [vmem:[%s3497 + $0xe2] sm:$0xff]
        %v4306 = vld [vmem:[%s3497 + $0xf2] sm:$0xff]
        %v4307 = vld [vmem:[%s3497 + $0xfa] sm:$0xff]
        %v4308 = vld [vmem:[%s3497 + $0x10a] sm:$0xff]
        %v4309 = vld [vmem:[%s3497 + $0x112] sm:$0xff]
        %v4310 = vld [vmem:[%s3497 + $0x122] sm:$0xff]
        %v4311 = vld [vmem:[%s3497 + $0x12a] sm:$0xff]
        %v4312 = vld [vmem:[%s3497 + $0x13a] sm:$0xff]
        %v4313 = vld [vmem:[%s3497 + $0x142] sm:$0xff]
        %v4314 = vld [vmem:[%s3497 + $0x152] sm:$0xff]
        %v4315 = vld [vmem:[%s3497 + $0x15a] sm:$0xff]
        %v4316 = vld [vmem:[%s3497 + $0x16a] sm:$0xff]
        %v4317 = vld [vmem:[%s3497 + $0x172] sm:$0xff]
        %s4318 = scalar_lea.vmem %s6, 512
        %v4319 = vld [vmem:[%s4318] sm:$0xff]
        %v4320 = vld [vmem:[%s4318 + $0x8] sm:$0xff]
        %v4321 = vld [vmem:[%s4318 + $0x10] sm:$0xff]
        %v4322 = vld [vmem:[%s4318 + $0x18] sm:$0xff]
        %v4323 = vld [vmem:[%s4318 + $0x20] sm:$0xff]
        %v4324 = vld [vmem:[%s4318 + $0x28] sm:$0xff]
        %v4325 = vld [vmem:[%s4318 + $0x30] sm:$0xff]
        %v4326 = vld [vmem:[%s4318 + $0x38] sm:$0xff]
        %v4328 = vsel %vm1109, %v4286, 0
        %v4331 = vsel %vm1109, %v4287, 0
        %v4334 = vsel %vm1109, %v4288, 0
        %v4337 = vsel %vm1109, %v4289, 0
        %v4340 = vsel %vm1109, %v4290, 0
        %v4343 = vsel %vm1109, %v4291, 0
        %v4346 = vsel %vm1109, %v4292, 0
        %v4349 = vsel %vm1109, %v4293, 0
        %v4352 = vsel %vm1109, %v4294, 0
        %v4355 = vsel %vm1109, %v4295, 0
        %v4358 = vsel %vm1109, %v4296, 0
        %v4361 = vsel %vm1109, %v4297, 0
        %v4364 = vsel %vm1109, %v4298, 0
        %v4367 = vsel %vm1109, %v4299, 0
        %v4370 = vsel %vm1109, %v4300, 0
        %v4373 = vsel %vm1109, %v4301, 0
        %v4376 = vsel %vm1109, %v4302, 0
        %v4379 = vsel %vm1109, %v4303, 0
        %v4382 = vsel %vm1109, %v4304, 0
        %v4385 = vsel %vm1109, %v4305, 0
        %v4388 = vsel %vm1109, %v4306, 0
        %v4391 = vsel %vm1109, %v4307, 0
        %v4394 = vsel %vm1109, %v4308, 0
        %v4397 = vsel %vm1109, %v4309, 0
        %v4400 = vsel %vm1109, %v4310, 0
        %v4403 = vsel %vm1109, %v4311, 0
        %v4406 = vsel %vm1109, %v4312, 0
        %v4409 = vsel %vm1109, %v4313, 0
        %v4412 = vsel %vm1109, %v4314, 0
        %v4415 = vsel %vm1109, %v4315, 0
        %v4418 = vsel %vm1109, %v4316, 0
        %v4421 = vsel %vm1109, %v4317, 0
        %4423 = vmatprep.subr.mxu0 0.0
        %4424 = vmatpush1.msra.mxu0 %v4319
        %4425 = vmatprep.subr.mxu0 0.0
        %4426 = vmatpush1.msra.mxu0 %v4320
        %4427 = vmatprep.subr.mxu0 0.0
        %4428 = vmatpush1.msra.mxu0 %v4321
        %4429 = vmatprep.subr.mxu0 0.0
        %4430 = vmatpush1.msra.mxu0 %v4322
        %4431 = vmatprep.subr.mxu0 0.0
        %4432 = vmatpush1.msra.mxu0 %v4323
        %4433 = vmatprep.subr.mxu0 0.0
        %4434 = vmatpush1.msra.mxu0 %v4324
        %4435 = vmatprep.subr.mxu0 0.0
        %4436 = vmatpush1.msra.mxu0 %v4325
        %4437 = vmatprep.subr.mxu0 0.0
        %4438 = vmatpush1.msra.mxu0 %v4326
        %4439 = vmatprep.subr.mxu0 0.0
        %4440 = vmatpush1.msra.mxu0 0.0
        %4441 = vmatprep.subr.mxu0 0.0
        %4442 = vmatpush1.msra.mxu0 0.0
        %4443 = vmatprep.subr.mxu0 0.0
        %4444 = vmatpush1.msra.mxu0 0.0
        %4445 = vmatprep.subr.mxu0 0.0
        %4446 = vmatpush1.msra.mxu0 0.0
        %4447 = vmatprep.subr.mxu0 0.0
        %4448 = vmatpush1.msra.mxu0 0.0
        %4449 = vmatprep.subr.mxu0 0.0
        %4450 = vmatpush1.msra.mxu0 0.0
        %4451 = vmatprep.subr.mxu0 0.0
        %4452 = vmatpush1.msra.mxu0 0.0
        %4453 = vmatprep.subr.mxu0 0.0
        %4454 = vmatpush1.msra.mxu0 0.0
        %4455 = vmatprep.subr.mxu0 0.0
        %4456 = vmatpush1.msra.mxu0 0.0
        %4457 = vmatprep.subr.mxu0 0.0
        %4458 = vmatpush1.msra.mxu0 0.0
        %4459 = vmatprep.subr.mxu0 0.0
        %4460 = vmatpush1.msra.mxu0 0.0
        %4461 = vmatprep.subr.mxu0 0.0
        %4462 = vmatpush1.msra.mxu0 0.0
        %4463 = vmatprep.subr.mxu0 0.0
        %4464 = vmatpush1.msra.mxu0 0.0
        %4465 = vmatprep.subr.mxu0 0.0
        %4466 = vmatpush1.msra.mxu0 0.0
        %4467 = vmatprep.subr.mxu0 0.0
        %4468 = vmatpush1.msra.mxu0 0.0
        %4469 = vmatprep.subr.mxu0 0.0
        %4470 = vmatpush1.msra.mxu0 0.0
        %4471 = vmatprep.subr.mxu0 0.0
        %4472 = vmatpush1.msra.mxu0 0.0
        %4473 = vmatprep.subr.mxu0 0.0
        %4474 = vmatpush1.msra.mxu0 0.0
        %4475 = vmatprep.subr.mxu0 0.0
        %4476 = vmatpush1.msra.mxu0 0.0
        %4477 = vmatprep.subr.mxu0 0.0
        %4478 = vmatpush1.msra.mxu0 0.0
        %4479 = vmatprep.subr.mxu0 0.0
        %4480 = vmatpush1.msra.mxu0 0.0
        %4481 = vmatprep.subr.mxu0 0.0
        %4482 = vmatpush1.msra.mxu0 0.0
        %4483 = vmatprep.subr.mxu0 0.0
        %4484 = vmatpush1.msra.mxu0 0.0
        %4485 = vmatprep.subr.mxu0 0.0
        %4486 = vmatpush1.msra.mxu0 0.0
        %4487 = vmatprep.mubr.f32.mxu0 0.0
        %4488 = vmatmul.mubr.f32.gmra.mrb[0].mxu0 %v4328
        %v4489 = vpop.f32.mrb[0].mxu0
        %v4490 = vadd.f32 0.0, %v4489
        %v4491 = vpop.f32.mrb[0].mxu0
        %4492 = vmatprep.mubr.f32.mxu0 0.0
        %4493 = vmatmul.mubr.f32.gmra.mrb[0].mxu0 %v4331
        %v4494 = vpop.f32.mrb[0].mxu0
        %v4495 = vadd.f32 0.0, %v4494
        %v4496 = vpop.f32.mrb[0].mxu0
        %4497 = vmatprep.mubr.f32.mxu0 0.0
        %4498 = vmatmul.mubr.f32.gmra.mrb[0].mxu0 %v4334
        %v4499 = vpop.f32.mrb[0].mxu0
        %v4500 = vadd.f32 0.0, %v4499
        %v4501 = vpop.f32.mrb[0].mxu0
        %4502 = vmatprep.mubr.f32.mxu0 0.0
        %4503 = vmatmul.mubr.f32.gmra.mrb[0].mxu0 %v4337
        %v4504 = vpop.f32.mrb[0].mxu0
        %v4505 = vadd.f32 0.0, %v4504
        %v4506 = vpop.f32.mrb[0].mxu0
        %4507 = vmatprep.mubr.f32.mxu0 0.0
        %4508 = vmatmul.mubr.f32.gmra.mrb[0].mxu0 %v4340
        %v4509 = vpop.f32.mrb[0].mxu0
        %v4510 = vadd.f32 0.0, %v4509
        %v4511 = vpop.f32.mrb[0].mxu0
        %4512 = vmatprep.mubr.f32.mxu0 0.0
        %4513 = vmatmul.mubr.f32.gmra.mrb[0].mxu0 %v4343
        %v4514 = vpop.f32.mrb[0].mxu0
        %v4515 = vadd.f32 0.0, %v4514
        %v4516 = vpop.f32.mrb[0].mxu0
        %4517 = vmatprep.mubr.f32.mxu0 0.0
        %4518 = vmatmul.mubr.f32.gmra.mrb[0].mxu0 %v4346
        %v4519 = vpop.f32.mrb[0].mxu0
        %v4520 = vadd.f32 0.0, %v4519
        %v4521 = vpop.f32.mrb[0].mxu0
        %4522 = vmatprep.mubr.f32.mxu0 0.0
        %4523 = vmatmul.mubr.f32.gmra.mrb[0].mxu0 %v4349
        %v4524 = vpop.f32.mrb[0].mxu0
        %v4525 = vadd.f32 0.0, %v4524
        %v4526 = vpop.f32.mrb[0].mxu0
        %4527 = vmatprep.mubr.f32.mxu0 0.0
        %4528 = vmatmul.mubr.f32.gmra.mrb[0].mxu0 %v4352
        %v4529 = vpop.f32.mrb[0].mxu0
        %v4530 = vadd.f32 0.0, %v4529
        %v4531 = vpop.f32.mrb[0].mxu0
        %4532 = vmatprep.mubr.f32.mxu0 0.0
        %4533 = vmatmul.mubr.f32.gmra.mrb[0].mxu0 %v4355
        %v4534 = vpop.f32.mrb[0].mxu0
        %v4535 = vadd.f32 0.0, %v4534
        %v4536 = vpop.f32.mrb[0].mxu0
        %4537 = vmatprep.mubr.f32.mxu0 0.0
        %4538 = vmatmul.mubr.f32.gmra.mrb[0].mxu0 %v4358
        %v4539 = vpop.f32.mrb[0].mxu0
        %v4540 = vadd.f32 0.0, %v4539
        %v4541 = vpop.f32.mrb[0].mxu0
        %4542 = vmatprep.mubr.f32.mxu0 0.0
        %4543 = vmatmul.mubr.f32.gmra.mrb[0].mxu0 %v4361
        %v4544 = vpop.f32.mrb[0].mxu0
        %v4545 = vadd.f32 0.0, %v4544
        %v4546 = vpop.f32.mrb[0].mxu0
        %4547 = vmatprep.mubr.f32.mxu0 0.0
        %4548 = vmatmul.mubr.f32.gmra.mrb[0].mxu0 %v4364
        %v4549 = vpop.f32.mrb[0].mxu0
        %v4550 = vadd.f32 0.0, %v4549
        %v4551 = vpop.f32.mrb[0].mxu0
        %4552 = vmatprep.mubr.f32.mxu0 0.0
        %4553 = vmatmul.mubr.f32.gmra.mrb[0].mxu0 %v4367
        %v4554 = vpop.f32.mrb[0].mxu0
        %v4555 = vadd.f32 0.0, %v4554
        %v4556 = vpop.f32.mrb[0].mxu0
        %4557 = vmatprep.mubr.f32.mxu0 0.0
        %4558 = vmatmul.mubr.f32.gmra.mrb[0].mxu0 %v4370
        %v4559 = vpop.f32.mrb[0].mxu0
        %v4560 = vadd.f32 0.0, %v4559
        %v4561 = vpop.f32.mrb[0].mxu0
        %4562 = vmatprep.mubr.f32.mxu0 0.0
        %4563 = vmatmul.mubr.f32.gmra.mrb[0].mxu0 %v4373
        %v4564 = vpop.f32.mrb[0].mxu0
        %v4565 = vadd.f32 0.0, %v4564
        %v4566 = vpop.f32.mrb[0].mxu0
        %4567 = vmatprep.mubr.f32.mxu0 0.0
        %4568 = vmatmul.mubr.f32.gmra.mrb[0].mxu0 %v4376
        %v4569 = vpop.f32.mrb[0].mxu0
        %v4570 = vadd.f32 0.0, %v4569
        %v4571 = vpop.f32.mrb[0].mxu0
        %4572 = vmatprep.mubr.f32.mxu0 0.0
        %4573 = vmatmul.mubr.f32.gmra.mrb[0].mxu0 %v4379
        %v4574 = vpop.f32.mrb[0].mxu0
        %v4575 = vadd.f32 0.0, %v4574
        %v4576 = vpop.f32.mrb[0].mxu0
        %4577 = vmatprep.mubr.f32.mxu0 0.0
        %4578 = vmatmul.mubr.f32.gmra.mrb[0].mxu0 %v4382
        %v4579 = vpop.f32.mrb[0].mxu0
        %v4580 = vadd.f32 0.0, %v4579
        %v4581 = vpop.f32.mrb[0].mxu0
        %4582 = vmatprep.mubr.f32.mxu0 0.0
        %4583 = vmatmul.mubr.f32.gmra.mrb[0].mxu0 %v4385
        %v4584 = vpop.f32.mrb[0].mxu0
        %v4585 = vadd.f32 0.0, %v4584
        %v4586 = vpop.f32.mrb[0].mxu0
        %4587 = vmatprep.mubr.f32.mxu0 0.0
        %4588 = vmatmul.mubr.f32.gmra.mrb[0].mxu0 %v4388
        %v4589 = vpop.f32.mrb[0].mxu0
        %v4590 = vadd.f32 0.0, %v4589
        %v4591 = vpop.f32.mrb[0].mxu0
        %4592 = vmatprep.mubr.f32.mxu0 0.0
        %4593 = vmatmul.mubr.f32.gmra.mrb[0].mxu0 %v4391
        %v4594 = vpop.f32.mrb[0].mxu0
        %v4595 = vadd.f32 0.0, %v4594
        %v4596 = vpop.f32.mrb[0].mxu0
        %4597 = vmatprep.mubr.f32.mxu0 0.0
        %4598 = vmatmul.mubr.f32.gmra.mrb[0].mxu0 %v4394
        %v4599 = vpop.f32.mrb[0].mxu0
        %v4600 = vadd.f32 0.0, %v4599
        %v4601 = vpop.f32.mrb[0].mxu0
        %4602 = vmatprep.mubr.f32.mxu0 0.0
        %4603 = vmatmul.mubr.f32.gmra.mrb[0].mxu0 %v4397
        %v4604 = vpop.f32.mrb[0].mxu0
        %v4605 = vadd.f32 0.0, %v4604
        %v4606 = vpop.f32.mrb[0].mxu0
        %4607 = vmatprep.mubr.f32.mxu0 0.0
        %4608 = vmatmul.mubr.f32.gmra.mrb[0].mxu0 %v4400
        %v4609 = vpop.f32.mrb[0].mxu0
        %v4610 = vadd.f32 0.0, %v4609
        %v4611 = vpop.f32.mrb[0].mxu0
        %4612 = vmatprep.mubr.f32.mxu0 0.0
        %4613 = vmatmul.mubr.f32.gmra.mrb[0].mxu0 %v4403
        %v4614 = vpop.f32.mrb[0].mxu0
        %v4615 = vadd.f32 0.0, %v4614
        %v4616 = vpop.f32.mrb[0].mxu0
        %4617 = vmatprep.mubr.f32.mxu0 0.0
        %4618 = vmatmul.mubr.f32.gmra.mrb[0].mxu0 %v4406
        %v4619 = vpop.f32.mrb[0].mxu0
        %v4620 = vadd.f32 0.0, %v4619
        %v4621 = vpop.f32.mrb[0].mxu0
        %4622 = vmatprep.mubr.f32.mxu0 0.0
        %4623 = vmatmul.mubr.f32.gmra.mrb[0].mxu0 %v4409
        %v4624 = vpop.f32.mrb[0].mxu0
        %v4625 = vadd.f32 0.0, %v4624
        %v4626 = vpop.f32.mrb[0].mxu0
        %4627 = vmatprep.mubr.f32.mxu0 0.0
        %4628 = vmatmul.mubr.f32.gmra.mrb[0].mxu0 %v4412
        %v4629 = vpop.f32.mrb[0].mxu0
        %v4630 = vadd.f32 0.0, %v4629
        %v4631 = vpop.f32.mrb[0].mxu0
        %4632 = vmatprep.mubr.f32.mxu0 0.0
        %4633 = vmatmul.mubr.f32.gmra.mrb[0].mxu0 %v4415
        %v4634 = vpop.f32.mrb[0].mxu0
        %v4635 = vadd.f32 0.0, %v4634
        %v4636 = vpop.f32.mrb[0].mxu0
        %4637 = vmatprep.mubr.f32.mxu0 0.0
        %4638 = vmatmul.mubr.f32.gmra.mrb[0].mxu0 %v4418
        %v4639 = vpop.f32.mrb[0].mxu0
        %v4640 = vadd.f32 0.0, %v4639
        %v4641 = vpop.f32.mrb[0].mxu0
        %4642 = vmatprep.mubr.f32.mxu0 0.0
        %4643 = vmatmul.mubr.f32.gmra.mrb[0].mxu0 %v4421
        %v4644 = vpop.f32.mrb[0].mxu0
        %v4645 = vadd.f32 0.0, %v4644
        %v4646 = vpop.f32.mrb[0].mxu0
        %4647 = vdwg.mxu0
        %v4648 = vadd.f32 %v4254, %v4490
        %v4649 = vadd.f32 %v4255, %v4495
        %v4650 = vadd.f32 %v4256, %v4500
        %v4651 = vadd.f32 %v4257, %v4505
        %v4652 = vadd.f32 %v4258, %v4510
        %v4653 = vadd.f32 %v4259, %v4515
        %v4654 = vadd.f32 %v4260, %v4520
        %v4655 = vadd.f32 %v4261, %v4525
        %v4656 = vadd.f32 %v4262, %v4530
        %v4657 = vadd.f32 %v4263, %v4535
        %v4658 = vadd.f32 %v4264, %v4540
        %v4659 = vadd.f32 %v4265, %v4545
        %v4660 = vadd.f32 %v4266, %v4550
        %v4661 = vadd.f32 %v4267, %v4555
        %v4662 = vadd.f32 %v4268, %v4560
        %v4663 = vadd.f32 %v4269, %v4565
        %v4664 = vadd.f32 %v4270, %v4570
        %v4665 = vadd.f32 %v4271, %v4575
        %v4666 = vadd.f32 %v4272, %v4580
        %v4667 = vadd.f32 %v4273, %v4585
        %v4668 = vadd.f32 %v4274, %v4590
        %v4669 = vadd.f32 %v4275, %v4595
        %v4670 = vadd.f32 %v4276, %v4600
        %v4671 = vadd.f32 %v4277, %v4605
        %v4672 = vadd.f32 %v4278, %v4610
        %v4673 = vadd.f32 %v4279, %v4615
        %v4674 = vadd.f32 %v4280, %v4620
        %v4675 = vadd.f32 %v4281, %v4625
        %v4676 = vadd.f32 %v4282, %v4630
        %v4677 = vadd.f32 %v4283, %v4635
        %v4678 = vadd.f32 %v4284, %v4640
        %v4679 = vadd.f32 %v4285, %v4645
        %v4680 = vld [vmem:[%s7] sm:$0x1]
        %v4682 = vlaneseq
        %v4683 = vshrl.u32 %v4682, 7
        %v4684 = vsub.s32 0, %v4683
        %v4685 = vrot.slane %v4680, %v4684
        %v4687 = vadd.f32 %v4648, %v4685
        %v4688 = vadd.f32 %v4649, %v4685
        %v4689 = vadd.f32 %v4650, %v4685
        %v4690 = vadd.f32 %v4651, %v4685
        %v4691 = vadd.f32 %v4652, %v4685
        %v4692 = vadd.f32 %v4653, %v4685
        %v4693 = vadd.f32 %v4654, %v4685
        %v4694 = vadd.f32 %v4655, %v4685
        %v4695 = vadd.f32 %v4656, %v4685
        %v4696 = vadd.f32 %v4657, %v4685
        %v4697 = vadd.f32 %v4658, %v4685
        %v4698 = vadd.f32 %v4659, %v4685
        %v4699 = vadd.f32 %v4660, %v4685
        %v4700 = vadd.f32 %v4661, %v4685
        %v4701 = vadd.f32 %v4662, %v4685
        %v4702 = vadd.f32 %v4663, %v4685
        %v4703 = vadd.f32 %v4664, %v4685
        %v4704 = vadd.f32 %v4665, %v4685
        %v4705 = vadd.f32 %v4666, %v4685
        %v4706 = vadd.f32 %v4667, %v4685
        %v4707 = vadd.f32 %v4668, %v4685
        %v4708 = vadd.f32 %v4669, %v4685
        %v4709 = vadd.f32 %v4670, %v4685
        %v4710 = vadd.f32 %v4671, %v4685
        %v4711 = vadd.f32 %v4672, %v4685
        %v4712 = vadd.f32 %v4673, %v4685
        %v4713 = vadd.f32 %v4674, %v4685
        %v4714 = vadd.f32 %v4675, %v4685
        %v4715 = vadd.f32 %v4676, %v4685
        %v4716 = vadd.f32 %v4677, %v4685
        %v4717 = vadd.f32 %v4678, %v4685
        %v4718 = vadd.f32 %v4679, %v4685
        %v4719 = vmax.f32 %v4687, 0.0
        %v4720 = vmax.f32 %v4688, 0.0
        %v4721 = vmax.f32 %v4689, 0.0
        %v4722 = vmax.f32 %v4690, 0.0
        %v4723 = vmax.f32 %v4691, 0.0
        %v4724 = vmax.f32 %v4692, 0.0
        %v4725 = vmax.f32 %v4693, 0.0
        %v4726 = vmax.f32 %v4694, 0.0
        %v4727 = vmax.f32 %v4695, 0.0
        %v4728 = vmax.f32 %v4696, 0.0
        %v4729 = vmax.f32 %v4697, 0.0
        %v4730 = vmax.f32 %v4698, 0.0
        %v4731 = vmax.f32 %v4699, 0.0
        %v4732 = vmax.f32 %v4700, 0.0
        %v4733 = vmax.f32 %v4701, 0.0
        %v4734 = vmax.f32 %v4702, 0.0
        %v4735 = vmax.f32 %v4703, 0.0
        %v4736 = vmax.f32 %v4704, 0.0
        %v4737 = vmax.f32 %v4705, 0.0
        %v4738 = vmax.f32 %v4706, 0.0
        %v4739 = vmax.f32 %v4707, 0.0
        %v4740 = vmax.f32 %v4708, 0.0
        %v4741 = vmax.f32 %v4709, 0.0
        %v4742 = vmax.f32 %v4710, 0.0
        %v4743 = vmax.f32 %v4711, 0.0
        %v4744 = vmax.f32 %v4712, 0.0
        %v4745 = vmax.f32 %v4713, 0.0
        %v4746 = vmax.f32 %v4714, 0.0
        %v4747 = vmax.f32 %v4715, 0.0
        %v4748 = vmax.f32 %v4716, 0.0
        %v4749 = vmax.f32 %v4717, 0.0
        %v4750 = vmax.f32 %v4718, 0.0
        %4751 = vst [vmem:[#allocation3] sm:$0xff] 0.0
        %4752 = vst [vmem:[#allocation3 + $0x8] sm:$0xff] 0.0
        %4753 = vst [vmem:[#allocation3 + $0x10] sm:$0x3] 0.0
        %4754 = vst [vmem:[#allocation3 + $0x18] sm:$0xff] 0.0
        %4755 = vst [vmem:[#allocation3 + $0x20] sm:$0xff] 0.0
        %4756 = vst [vmem:[#allocation3 + $0x28] sm:$0x3] 0.0
        %4757 = vst [vmem:[#allocation3 + $0x30] sm:$0xff] 0.0
        %4758 = vst [vmem:[#allocation3 + $0x38] sm:$0xff] 0.0
        %4759 = vst [vmem:[#allocation3 + $0x40] sm:$0x3] 0.0
        %4760 = vst [vmem:[#allocation3 + $0x48] sm:$0xff] 0.0
        %4761 = vst [vmem:[#allocation3 + $0x50] sm:$0xff] 0.0
        %4762 = vst [vmem:[#allocation3 + $0x58] sm:$0x3] 0.0
        %4763 = vst [vmem:[#allocation3 + $0x60] sm:$0xff] 0.0
        %4764 = vst [vmem:[#allocation3 + $0x68] sm:$0xff] 0.0
        %4765 = vst [vmem:[#allocation3 + $0x70] sm:$0x3] 0.0
        %4766 = vst [vmem:[#allocation3 + $0x78] sm:$0xff] 0.0
        %4767 = vst [vmem:[#allocation3 + $0x80] sm:$0xff] 0.0
        %4768 = vst [vmem:[#allocation3 + $0x88] sm:$0x3] 0.0
        %4769 = vst [vmem:[#allocation3 + $0x90] sm:$0xff] 0.0
        %4770 = vst [vmem:[#allocation3 + $0x98] sm:$0xff] 0.0
        %4771 = vst [vmem:[#allocation3 + $0xa0] sm:$0x3] 0.0
        %4772 = vst [vmem:[#allocation3 + $0xa8] sm:$0xff] 0.0
        %4773 = vst [vmem:[#allocation3 + $0xb0] sm:$0xff] 0.0
        %4774 = vst [vmem:[#allocation3 + $0xb8] sm:$0x3] 0.0
        %4775 = vst [vmem:[#allocation3 + $0xc0] sm:$0xff] 0.0
        %4776 = vst [vmem:[#allocation3 + $0xc8] sm:$0xff] 0.0
        %4777 = vst [vmem:[#allocation3 + $0xd0] sm:$0x3] 0.0
        %4778 = vst [vmem:[#allocation3 + $0xd8] sm:$0xff] 0.0
        %4779 = vst [vmem:[#allocation3 + $0xe0] sm:$0xff] 0.0
        %4780 = vst [vmem:[#allocation3 + $0xe8] sm:$0x3] 0.0
        %4781 = vst [vmem:[#allocation3 + $0xf0] sm:$0xff] 0.0
        %4782 = vst [vmem:[#allocation3 + $0xf8] sm:$0xff] 0.0
        %4783 = vst [vmem:[#allocation3 + $0x100] sm:$0x3] 0.0
        %4784 = vst [vmem:[#allocation3 + $0x108] sm:$0xff] 0.0
        %4785 = vst [vmem:[#allocation3 + $0x110] sm:$0xff] 0.0
        %4786 = vst [vmem:[#allocation3 + $0x118] sm:$0x3] 0.0
        %4787 = vst [vmem:[#allocation3 + $0x120] sm:$0xff] 0.0
        %4788 = vst [vmem:[#allocation3 + $0x128] sm:$0xff] 0.0
        %4789 = vst [vmem:[#allocation3 + $0x130] sm:$0x3] 0.0
        %4790 = vst [vmem:[#allocation3 + $0x138] sm:$0xff] 0.0
        %4791 = vst [vmem:[#allocation3 + $0x140] sm:$0xff] 0.0
        %4792 = vst [vmem:[#allocation3 + $0x148] sm:$0x3] 0.0
        %4793 = vst [vmem:[#allocation3 + $0x150] sm:$0xff] 0.0
        %4794 = vst [vmem:[#allocation3 + $0x158] sm:$0xff] 0.0
        %4795 = vst [vmem:[#allocation3 + $0x160] sm:$0x3] 0.0
        %4796 = vst [vmem:[#allocation3 + $0x168] sm:$0xff] 0.0
        %4797 = vst [vmem:[#allocation3 + $0x170] sm:$0xff] 0.0
        %4798 = vst [vmem:[#allocation3 + $0x178] sm:$0x3] 0.0
        %4799 = vst [vmem:[#allocation3 + $0x180] sm:$0xff] 0.0
        %4800 = vst [vmem:[#allocation3 + $0x188] sm:$0xff] 0.0
        %4801 = vst [vmem:[#allocation3 + $0x190] sm:$0x3] 0.0
        %4802 = vst [vmem:[#allocation3 + $0x198] sm:$0xff] 0.0
        %4803 = vst [vmem:[#allocation3 + $0x1a0] sm:$0xff] 0.0
        %4804 = vst [vmem:[#allocation3 + $0x1a8] sm:$0x3] 0.0
        %s4805 = scalar_lea.vmem [#allocation3], 24
        %vm4806 = vcmask 785408
        %4807 = vst.msk [vmem:[%s4805 + $0x1] sm:$0xff] %vm4806, %v765
        %4808 = vst.msk [vmem:[%s4805 + $0x9] sm:$0xff] %vm4806, %v766
        %4809 = vst.msk [vmem:[%s4805 + $0x19] sm:$0xff] %vm4806, %v767
        %4810 = vst.msk [vmem:[%s4805 + $0x21] sm:$0xff] %vm4806, %v768
        %4811 = vst.msk [vmem:[%s4805 + $0x31] sm:$0xff] %vm4806, %v769
        %4812 = vst.msk [vmem:[%s4805 + $0x39] sm:$0xff] %vm4806, %v770
        %4813 = vst.msk [vmem:[%s4805 + $0x49] sm:$0xff] %vm4806, %v771
        %4814 = vst.msk [vmem:[%s4805 + $0x51] sm:$0xff] %vm4806, %v772
        %4815 = vst.msk [vmem:[%s4805 + $0x61] sm:$0xff] %vm4806, %v773
        %4816 = vst.msk [vmem:[%s4805 + $0x69] sm:$0xff] %vm4806, %v774
        %4817 = vst.msk [vmem:[%s4805 + $0x79] sm:$0xff] %vm4806, %v775
        %4818 = vst.msk [vmem:[%s4805 + $0x81] sm:$0xff] %vm4806, %v776
        %4819 = vst.msk [vmem:[%s4805 + $0x91] sm:$0xff] %vm4806, %v777
        %4820 = vst.msk [vmem:[%s4805 + $0x99] sm:$0xff] %vm4806, %v778
        %4821 = vst.msk [vmem:[%s4805 + $0xa9] sm:$0xff] %vm4806, %v779
        %4822 = vst.msk [vmem:[%s4805 + $0xb1] sm:$0xff] %vm4806, %v780
        %4823 = vst.msk [vmem:[%s4805 + $0xc1] sm:$0xff] %vm4806, %v781
        %4824 = vst.msk [vmem:[%s4805 + $0xc9] sm:$0xff] %vm4806, %v782
        %4825 = vst.msk [vmem:[%s4805 + $0xd9] sm:$0xff] %vm4806, %v783
        %4826 = vst.msk [vmem:[%s4805 + $0xe1] sm:$0xff] %vm4806, %v784
        %4827 = vst.msk [vmem:[%s4805 + $0xf1] sm:$0xff] %vm4806, %v785
        %4828 = vst.msk [vmem:[%s4805 + $0xf9] sm:$0xff] %vm4806, %v786
        %4829 = vst.msk [vmem:[%s4805 + $0x109] sm:$0xff] %vm4806, %v787
        %4830 = vst.msk [vmem:[%s4805 + $0x111] sm:$0xff] %vm4806, %v788
        %4831 = vst.msk [vmem:[%s4805 + $0x121] sm:$0xff] %vm4806, %v789
        %4832 = vst.msk [vmem:[%s4805 + $0x129] sm:$0xff] %vm4806, %v790
        %4833 = vst.msk [vmem:[%s4805 + $0x139] sm:$0xff] %vm4806, %v791
        %4834 = vst.msk [vmem:[%s4805 + $0x141] sm:$0xff] %vm4806, %v792
        %4835 = vst.msk [vmem:[%s4805 + $0x151] sm:$0xff] %vm4806, %v793
        %4836 = vst.msk [vmem:[%s4805 + $0x159] sm:$0xff] %vm4806, %v794
        %4837 = vst.msk [vmem:[%s4805 + $0x169] sm:$0xff] %vm4806, %v795
        %4838 = vst.msk [vmem:[%s4805 + $0x171] sm:$0xff] %vm4806, %v796
        %4871 = vrot.lane.b32.xlu0 %v4719, 96
        %v4872 = vpop.permute.xlu0 %4871
        %4873 = vrot.lane.b32.xlu0 %v4720, 96
        %v4874 = vpop.permute.xlu0 %4873
        %4875 = vrot.lane.b32.xlu0 %v4721, 96
        %v4876 = vpop.permute.xlu0 %4875
        %4877 = vrot.lane.b32.xlu0 %v4722, 96
        %v4878 = vpop.permute.xlu0 %4877
        %4879 = vrot.lane.b32.xlu0 %v4723, 96
        %v4880 = vpop.permute.xlu0 %4879
        %4881 = vrot.lane.b32.xlu0 %v4724, 96
        %v4882 = vpop.permute.xlu0 %4881
        %4883 = vrot.lane.b32.xlu0 %v4725, 96
        %v4884 = vpop.permute.xlu0 %4883
        %4885 = vrot.lane.b32.xlu0 %v4726, 96
        %v4886 = vpop.permute.xlu0 %4885
        %4887 = vrot.lane.b32.xlu0 %v4727, 96
        %v4888 = vpop.permute.xlu0 %4887
        %4889 = vrot.lane.b32.xlu0 %v4728, 96
        %v4890 = vpop.permute.xlu0 %4889
        %4891 = vrot.lane.b32.xlu0 %v4729, 96
        %v4892 = vpop.permute.xlu0 %4891
        %4893 = vrot.lane.b32.xlu0 %v4730, 96
        %v4894 = vpop.permute.xlu0 %4893
        %4895 = vrot.lane.b32.xlu0 %v4731, 96
        %v4896 = vpop.permute.xlu0 %4895
        %4897 = vrot.lane.b32.xlu0 %v4732, 96
        %v4898 = vpop.permute.xlu0 %4897
        %4899 = vrot.lane.b32.xlu0 %v4733, 96
        %v4900 = vpop.permute.xlu0 %4899
        %4901 = vrot.lane.b32.xlu0 %v4734, 96
        %v4902 = vpop.permute.xlu0 %4901
        %4903 = vrot.lane.b32.xlu0 %v4735, 96
        %v4904 = vpop.permute.xlu0 %4903
        %4905 = vrot.lane.b32.xlu0 %v4736, 96
        %v4906 = vpop.permute.xlu0 %4905
        %4907 = vrot.lane.b32.xlu0 %v4737, 96
        %v4908 = vpop.permute.xlu0 %4907
        %4909 = vrot.lane.b32.xlu0 %v4738, 96
        %v4910 = vpop.permute.xlu0 %4909
        %4911 = vrot.lane.b32.xlu0 %v4739, 96
        %v4912 = vpop.permute.xlu0 %4911
        %4913 = vrot.lane.b32.xlu0 %v4740, 96
        %v4914 = vpop.permute.xlu0 %4913
        %4915 = vrot.lane.b32.xlu0 %v4741, 96
        %v4916 = vpop.permute.xlu0 %4915
        %4917 = vrot.lane.b32.xlu0 %v4742, 96
        %v4918 = vpop.permute.xlu0 %4917
        %4919 = vrot.lane.b32.xlu0 %v4743, 96
        %v4920 = vpop.permute.xlu0 %4919
        %4921 = vrot.lane.b32.xlu0 %v4744, 96
        %v4922 = vpop.permute.xlu0 %4921
        %4923 = vrot.lane.b32.xlu0 %v4745, 96
        %v4924 = vpop.permute.xlu0 %4923
        %4925 = vrot.lane.b32.xlu0 %v4746, 96
        %v4926 = vpop.permute.xlu0 %4925
        %4927 = vrot.lane.b32.xlu0 %v4747, 96
        %v4928 = vpop.permute.xlu0 %4927
        %4929 = vrot.lane.b32.xlu0 %v4748, 96
        %v4930 = vpop.permute.xlu0 %4929
        %4931 = vrot.lane.b32.xlu0 %v4749, 96
        %v4932 = vpop.permute.xlu0 %4931
        %4933 = vrot.lane.b32.xlu0 %v4750, 96
        %v4934 = vpop.permute.xlu0 %4933
        %vm4967 = vcmask 1048320
        %4968 = vst.msk [vmem:[%s4805 + $0x1] sm:$0xff] %vm4967, %v4872
        %4969 = vst.msk [vmem:[%s4805 + $0x9] sm:$0xff] %vm4967, %v4874
        %4970 = vst.msk [vmem:[%s4805 + $0x19] sm:$0xff] %vm4967, %v4876
        %4971 = vst.msk [vmem:[%s4805 + $0x21] sm:$0xff] %vm4967, %v4878
        %4972 = vst.msk [vmem:[%s4805 + $0x31] sm:$0xff] %vm4967, %v4880
        %4973 = vst.msk [vmem:[%s4805 + $0x39] sm:$0xff] %vm4967, %v4882
        %4974 = vst.msk [vmem:[%s4805 + $0x49] sm:$0xff] %vm4967, %v4884
        %4975 = vst.msk [vmem:[%s4805 + $0x51] sm:$0xff] %vm4967, %v4886
        %4976 = vst.msk [vmem:[%s4805 + $0x61] sm:$0xff] %vm4967, %v4888
        %4977 = vst.msk [vmem:[%s4805 + $0x69] sm:$0xff] %vm4967, %v4890
        %4978 = vst.msk [vmem:[%s4805 + $0x79] sm:$0xff] %vm4967, %v4892
        %4979 = vst.msk [vmem:[%s4805 + $0x81] sm:$0xff] %vm4967, %v4894
        %4980 = vst.msk [vmem:[%s4805 + $0x91] sm:$0xff] %vm4967, %v4896
        %4981 = vst.msk [vmem:[%s4805 + $0x99] sm:$0xff] %vm4967, %v4898
        %4982 = vst.msk [vmem:[%s4805 + $0xa9] sm:$0xff] %vm4967, %v4900
        %4983 = vst.msk [vmem:[%s4805 + $0xb1] sm:$0xff] %vm4967, %v4902
        %4984 = vst.msk [vmem:[%s4805 + $0xc1] sm:$0xff] %vm4967, %v4904
        %4985 = vst.msk [vmem:[%s4805 + $0xc9] sm:$0xff] %vm4967, %v4906
        %4986 = vst.msk [vmem:[%s4805 + $0xd9] sm:$0xff] %vm4967, %v4908
        %4987 = vst.msk [vmem:[%s4805 + $0xe1] sm:$0xff] %vm4967, %v4910
        %4988 = vst.msk [vmem:[%s4805 + $0xf1] sm:$0xff] %vm4967, %v4912
        %4989 = vst.msk [vmem:[%s4805 + $0xf9] sm:$0xff] %vm4967, %v4914
        %4990 = vst.msk [vmem:[%s4805 + $0x109] sm:$0xff] %vm4967, %v4916
        %4991 = vst.msk [vmem:[%s4805 + $0x111] sm:$0xff] %vm4967, %v4918
        %4992 = vst.msk [vmem:[%s4805 + $0x121] sm:$0xff] %vm4967, %v4920
        %4993 = vst.msk [vmem:[%s4805 + $0x129] sm:$0xff] %vm4967, %v4922
        %4994 = vst.msk [vmem:[%s4805 + $0x139] sm:$0xff] %vm4967, %v4924
        %4995 = vst.msk [vmem:[%s4805 + $0x141] sm:$0xff] %vm4967, %v4926
        %4996 = vst.msk [vmem:[%s4805 + $0x151] sm:$0xff] %vm4967, %v4928
        %4997 = vst.msk [vmem:[%s4805 + $0x159] sm:$0xff] %vm4967, %v4930
        %4998 = vst.msk [vmem:[%s4805 + $0x169] sm:$0xff] %vm4967, %v4932
        %4999 = vst.msk [vmem:[%s4805 + $0x171] sm:$0xff] %vm4967, %v4934
        %v5000 = vld [vmem:[#allocation3] sm:$0xff]
        %v5001 = vld [vmem:[#allocation3 + $0x8] sm:$0xff]
        %v5002 = vld [vmem:[#allocation3 + $0x18] sm:$0xff]
        %v5003 = vld [vmem:[#allocation3 + $0x20] sm:$0xff]
        %v5004 = vld [vmem:[#allocation3 + $0x30] sm:$0xff]
        %v5005 = vld [vmem:[#allocation3 + $0x38] sm:$0xff]
        %v5006 = vld [vmem:[#allocation3 + $0x48] sm:$0xff]
        %v5007 = vld [vmem:[#allocation3 + $0x50] sm:$0xff]
        %v5008 = vld [vmem:[#allocation3 + $0x60] sm:$0xff]
        %v5009 = vld [vmem:[#allocation3 + $0x68] sm:$0xff]
        %v5010 = vld [vmem:[#allocation3 + $0x78] sm:$0xff]
        %v5011 = vld [vmem:[#allocation3 + $0x80] sm:$0xff]
        %v5012 = vld [vmem:[#allocation3 + $0x90] sm:$0xff]
        %v5013 = vld [vmem:[#allocation3 + $0x98] sm:$0xff]
        %v5014 = vld [vmem:[#allocation3 + $0xa8] sm:$0xff]
        %v5015 = vld [vmem:[#allocation3 + $0xb0] sm:$0xff]
        %v5016 = vld [vmem:[#allocation3 + $0xc0] sm:$0xff]
        %v5017 = vld [vmem:[#allocation3 + $0xc8] sm:$0xff]
        %v5018 = vld [vmem:[#allocation3 + $0xd8] sm:$0xff]
        %v5019 = vld [vmem:[#allocation3 + $0xe0] sm:$0xff]
        %v5020 = vld [vmem:[#allocation3 + $0xf0] sm:$0xff]
        %v5021 = vld [vmem:[#allocation3 + $0xf8] sm:$0xff]
        %v5022 = vld [vmem:[#allocation3 + $0x108] sm:$0xff]
        %v5023 = vld [vmem:[#allocation3 + $0x110] sm:$0xff]
        %v5024 = vld [vmem:[#allocation3 + $0x120] sm:$0xff]
        %v5025 = vld [vmem:[#allocation3 + $0x128] sm:$0xff]
        %v5026 = vld [vmem:[#allocation3 + $0x138] sm:$0xff]
        %v5027 = vld [vmem:[#allocation3 + $0x140] sm:$0xff]
        %v5028 = vld [vmem:[#allocation3 + $0x150] sm:$0xff]
        %v5029 = vld [vmem:[#allocation3 + $0x158] sm:$0xff]
        %v5030 = vld [vmem:[#allocation3 + $0x168] sm:$0xff]
        %v5031 = vld [vmem:[#allocation3 + $0x170] sm:$0xff]
        %v5032 = vld [vmem:[%s8] sm:$0xff]
        %v5033 = vld [vmem:[%s8 + $0x8] sm:$0xff]
        %v5034 = vld [vmem:[%s8 + $0x10] sm:$0xff]
        %v5035 = vld [vmem:[%s8 + $0x18] sm:$0xff]
        %v5036 = vld [vmem:[%s8 + $0x20] sm:$0xff]
        %v5037 = vld [vmem:[%s8 + $0x28] sm:$0xff]
        %v5038 = vld [vmem:[%s8 + $0x30] sm:$0xff]
        %v5039 = vld [vmem:[%s8 + $0x38] sm:$0xff]
        %v5040 = vld [vmem:[%s8 + $0x40] sm:$0xff]
        %v5041 = vld [vmem:[%s8 + $0x48] sm:$0xff]
        %v5042 = vld [vmem:[%s8 + $0x50] sm:$0xff]
        %v5043 = vld [vmem:[%s8 + $0x58] sm:$0xff]
        %v5044 = vld [vmem:[%s8 + $0x60] sm:$0xff]
        %v5045 = vld [vmem:[%s8 + $0x68] sm:$0xff]
        %v5046 = vld [vmem:[%s8 + $0x70] sm:$0xff]
        %v5047 = vld [vmem:[%s8 + $0x78] sm:$0xff]
        %v5048 = vld [vmem:[#allocation3 + $0x1] sm:$0xff]
        %v5049 = vld [vmem:[#allocation3 + $0x9] sm:$0xff]
        %v5050 = vld [vmem:[#allocation3 + $0x19] sm:$0xff]
        %v5051 = vld [vmem:[#allocation3 + $0x21] sm:$0xff]
        %v5052 = vld [vmem:[#allocation3 + $0x31] sm:$0xff]
        %v5053 = vld [vmem:[#allocation3 + $0x39] sm:$0xff]
        %v5054 = vld [vmem:[#allocation3 + $0x49] sm:$0xff]
        %v5055 = vld [vmem:[#allocation3 + $0x51] sm:$0xff]
        %v5056 = vld [vmem:[#allocation3 + $0x61] sm:$0xff]
        %v5057 = vld [vmem:[#allocation3 + $0x69] sm:$0xff]
        %v5058 = vld [vmem:[#allocation3 + $0x79] sm:$0xff]
        %v5059 = vld [vmem:[#allocation3 + $0x81] sm:$0xff]
        %v5060 = vld [vmem:[#allocation3 + $0x91] sm:$0xff]
        %v5061 = vld [vmem:[#allocation3 + $0x99] sm:$0xff]
        %v5062 = vld [vmem:[#allocation3 + $0xa9] sm:$0xff]
        %v5063 = vld [vmem:[#allocation3 + $0xb1] sm:$0xff]
        %v5064 = vld [vmem:[#allocation3 + $0xc1] sm:$0xff]
        %v5065 = vld [vmem:[#allocation3 + $0xc9] sm:$0xff]
        %v5066 = vld [vmem:[#allocation3 + $0xd9] sm:$0xff]
        %v5067 = vld [vmem:[#allocation3 + $0xe1] sm:$0xff]
        %v5068 = vld [vmem:[#allocation3 + $0xf1] sm:$0xff]
        %v5069 = vld [vmem:[#allocation3 + $0xf9] sm:$0xff]
        %v5070 = vld [vmem:[#allocation3 + $0x109] sm:$0xff]
        %v5071 = vld [vmem:[#allocation3 + $0x111] sm:$0xff]
        %v5072 = vld [vmem:[#allocation3 + $0x121] sm:$0xff]
        %v5073 = vld [vmem:[#allocation3 + $0x129] sm:$0xff]
        %v5074 = vld [vmem:[#allocation3 + $0x139] sm:$0xff]
        %v5075 = vld [vmem:[#allocation3 + $0x141] sm:$0xff]
        %v5076 = vld [vmem:[#allocation3 + $0x151] sm:$0xff]
        %v5077 = vld [vmem:[#allocation3 + $0x159] sm:$0xff]
        %v5078 = vld [vmem:[#allocation3 + $0x169] sm:$0xff]
        %v5079 = vld [vmem:[#allocation3 + $0x171] sm:$0xff]
        %s5080 = scalar_lea.vmem %s8, 128
        %v5081 = vld [vmem:[%s5080] sm:$0xff]
        %v5082 = vld [vmem:[%s5080 + $0x8] sm:$0xff]
        %v5083 = vld [vmem:[%s5080 + $0x10] sm:$0xff]
        %v5084 = vld [vmem:[%s5080 + $0x18] sm:$0xff]
        %v5085 = vld [vmem:[%s5080 + $0x20] sm:$0xff]
        %v5086 = vld [vmem:[%s5080 + $0x28] sm:$0xff]
        %v5087 = vld [vmem:[%s5080 + $0x30] sm:$0xff]
        %v5088 = vld [vmem:[%s5080 + $0x38] sm:$0xff]
        %v5089 = vld [vmem:[%s5080 + $0x40] sm:$0xff]
        %v5090 = vld [vmem:[%s5080 + $0x48] sm:$0xff]
        %v5091 = vld [vmem:[%s5080 + $0x50] sm:$0xff]
        %v5092 = vld [vmem:[%s5080 + $0x58] sm:$0xff]
        %v5093 = vld [vmem:[%s5080 + $0x60] sm:$0xff]
        %v5094 = vld [vmem:[%s5080 + $0x68] sm:$0xff]
        %v5095 = vld [vmem:[%s5080 + $0x70] sm:$0xff]
        %v5096 = vld [vmem:[%s5080 + $0x78] sm:$0xff]
        %5097 = vmatprep.subr.mxu0 0.0
        %5098 = vmatpush1.msra.mxu0 %v5081
        %5099 = vmatprep.subr.mxu0 0.0
        %5100 = vmatpush1.msra.mxu0 %v5082
        %5101 = vmatprep.subr.mxu0 0.0
        %5102 = vmatpush1.msra.mxu0 %v5083
        %5103 = vmatprep.subr.mxu0 0.0
        %5104 = vmatpush1.msra.mxu0 %v5084
        %5105 = vmatprep.subr.mxu0 0.0
        %5106 = vmatpush1.msra.mxu0 %v5085
        %5107 = vmatprep.subr.mxu0 0.0
        %5108 = vmatpush1.msra.mxu0 %v5086
        %5109 = vmatprep.subr.mxu0 0.0
        %5110 = vmatpush1.msra.mxu0 %v5087
        %5111 = vmatprep.subr.mxu0 0.0
        %5112 = vmatpush1.msra.mxu0 %v5088
        %5113 = vmatprep.subr.mxu0 0.0
        %5114 = vmatpush1.msra.mxu0 %v5089
        %5115 = vmatprep.subr.mxu0 0.0
        %5116 = vmatpush1.msra.mxu0 %v5090
        %5117 = vmatprep.subr.mxu0 0.0
        %5118 = vmatpush1.msra.mxu0 %v5091
        %5119 = vmatprep.subr.mxu0 0.0
        %5120 = vmatpush1.msra.mxu0 %v5092
        %5121 = vmatprep.subr.mxu0 0.0
        %5122 = vmatpush1.msra.mxu0 %v5093
        %5123 = vmatprep.subr.mxu0 0.0
        %5124 = vmatpush1.msra.mxu0 %v5094
        %5125 = vmatprep.subr.mxu0 0.0
        %5126 = vmatpush1.msra.mxu0 %v5095
        %5127 = vmatprep.subr.mxu0 0.0
        %5128 = vmatpush1.msra.mxu0 %v5096
        %5129 = vmatprep.subr.mxu0 0.0
        %5130 = vmatpush1.msra.mxu0 0.0
        %5131 = vmatprep.subr.mxu0 0.0
        %5132 = vmatpush1.msra.mxu0 0.0
        %5133 = vmatprep.subr.mxu0 0.0
        %5134 = vmatpush1.msra.mxu0 0.0
        %5135 = vmatprep.subr.mxu0 0.0
        %5136 = vmatpush1.msra.mxu0 0.0
        %5137 = vmatprep.subr.mxu0 0.0
        %5138 = vmatpush1.msra.mxu0 0.0
        %5139 = vmatprep.subr.mxu0 0.0
        %5140 = vmatpush1.msra.mxu0 0.0
        %5141 = vmatprep.subr.mxu0 0.0
        %5142 = vmatpush1.msra.mxu0 0.0
        %5143 = vmatprep.subr.mxu0 0.0
        %5144 = vmatpush1.msra.mxu0 0.0
        %5145 = vmatprep.subr.mxu0 0.0
        %5146 = vmatpush1.msra.mxu0 0.0
        %5147 = vmatprep.subr.mxu0 0.0
        %5148 = vmatpush1.msra.mxu0 0.0
        %5149 = vmatprep.subr.mxu0 0.0
        %5150 = vmatpush1.msra.mxu0 0.0
        %5151 = vmatprep.subr.mxu0 0.0
        %5152 = vmatpush1.msra.mxu0 0.0
        %5153 = vmatprep.subr.mxu0 0.0
        %5154 = vmatpush1.msra.mxu0 0.0
        %5155 = vmatprep.subr.mxu0 0.0
        %5156 = vmatpush1.msra.mxu0 0.0
        %5157 = vmatprep.subr.mxu0 0.0
        %5158 = vmatpush1.msra.mxu0 0.0
        %5159 = vmatprep.subr.mxu0 0.0
        %5160 = vmatpush1.msra.mxu0 0.0
        %5161 = vmatprep.mubr.f32.mxu0 0.0
        %5162 = vmatmul.mubr.f32.gmra.mrb[0].mxu0 %v5048
        %v5163 = vpop.f32.mrb[0].mxu0
        %v5164 = vadd.f32 0.0, %v5163
        %v5165 = vpop.f32.mrb[0].mxu0
        %5166 = vmatprep.mubr.f32.mxu0 0.0
        %5167 = vmatmul.mubr.f32.gmra.mrb[0].mxu0 %v5049
        %v5168 = vpop.f32.mrb[0].mxu0
        %v5169 = vadd.f32 0.0, %v5168
        %v5170 = vpop.f32.mrb[0].mxu0
        %5171 = vmatprep.mubr.f32.mxu0 0.0
        %5172 = vmatmul.mubr.f32.gmra.mrb[0].mxu0 %v5050
        %v5173 = vpop.f32.mrb[0].mxu0
        %v5174 = vadd.f32 0.0, %v5173
        %v5175 = vpop.f32.mrb[0].mxu0
        %5176 = vmatprep.mubr.f32.mxu0 0.0
        %5177 = vmatmul.mubr.f32.gmra.mrb[0].mxu0 %v5051
        %v5178 = vpop.f32.mrb[0].mxu0
        %v5179 = vadd.f32 0.0, %v5178
        %v5180 = vpop.f32.mrb[0].mxu0
        %5181 = vmatprep.mubr.f32.mxu0 0.0
        %5182 = vmatmul.mubr.f32.gmra.mrb[0].mxu0 %v5052
        %v5183 = vpop.f32.mrb[0].mxu0
        %v5184 = vadd.f32 0.0, %v5183
        %v5185 = vpop.f32.mrb[0].mxu0
        %5186 = vmatprep.mubr.f32.mxu0 0.0
        %5187 = vmatmul.mubr.f32.gmra.mrb[0].mxu0 %v5053
        %v5188 = vpop.f32.mrb[0].mxu0
        %v5189 = vadd.f32 0.0, %v5188
        %v5190 = vpop.f32.mrb[0].mxu0
        %5191 = vmatprep.mubr.f32.mxu0 0.0
        %5192 = vmatmul.mubr.f32.gmra.mrb[0].mxu0 %v5054
        %v5193 = vpop.f32.mrb[0].mxu0
        %v5194 = vadd.f32 0.0, %v5193
        %v5195 = vpop.f32.mrb[0].mxu0
        %5196 = vmatprep.mubr.f32.mxu0 0.0
        %5197 = vmatmul.mubr.f32.gmra.mrb[0].mxu0 %v5055
        %v5198 = vpop.f32.mrb[0].mxu0
        %v5199 = vadd.f32 0.0, %v5198
        %v5200 = vpop.f32.mrb[0].mxu0
        %5201 = vmatprep.mubr.f32.mxu0 0.0
        %5202 = vmatmul.mubr.f32.gmra.mrb[0].mxu0 %v5056
        %v5203 = vpop.f32.mrb[0].mxu0
        %v5204 = vadd.f32 0.0, %v5203
        %v5205 = vpop.f32.mrb[0].mxu0
        %5206 = vmatprep.mubr.f32.mxu0 0.0
        %5207 = vmatmul.mubr.f32.gmra.mrb[0].mxu0 %v5057
        %v5208 = vpop.f32.mrb[0].mxu0
        %v5209 = vadd.f32 0.0, %v5208
        %v5210 = vpop.f32.mrb[0].mxu0
        %5211 = vmatprep.mubr.f32.mxu0 0.0
        %5212 = vmatmul.mubr.f32.gmra.mrb[0].mxu0 %v5058
        %v5213 = vpop.f32.mrb[0].mxu0
        %v5214 = vadd.f32 0.0, %v5213
        %v5215 = vpop.f32.mrb[0].mxu0
        %5216 = vmatprep.mubr.f32.mxu0 0.0
        %5217 = vmatmul.mubr.f32.gmra.mrb[0].mxu0 %v5059
        %v5218 = vpop.f32.mrb[0].mxu0
        %v5219 = vadd.f32 0.0, %v5218
        %v5220 = vpop.f32.mrb[0].mxu0
        %5221 = vmatprep.mubr.f32.mxu0 0.0
        %5222 = vmatmul.mubr.f32.gmra.mrb[0].mxu0 %v5060
        %v5223 = vpop.f32.mrb[0].mxu0
        %v5224 = vadd.f32 0.0, %v5223
        %v5225 = vpop.f32.mrb[0].mxu0
        %5226 = vmatprep.mubr.f32.mxu0 0.0
        %5227 = vmatmul.mubr.f32.gmra.mrb[0].mxu0 %v5061
        %v5228 = vpop.f32.mrb[0].mxu0
        %v5229 = vadd.f32 0.0, %v5228
        %v5230 = vpop.f32.mrb[0].mxu0
        %5231 = vmatprep.mubr.f32.mxu0 0.0
        %5232 = vmatmul.mubr.f32.gmra.mrb[0].mxu0 %v5062
        %v5233 = vpop.f32.mrb[0].mxu0
        %v5234 = vadd.f32 0.0, %v5233
        %v5235 = vpop.f32.mrb[0].mxu0
        %5236 = vmatprep.mubr.f32.mxu0 0.0
        %5237 = vmatmul.mubr.f32.gmra.mrb[0].mxu0 %v5063
        %v5238 = vpop.f32.mrb[0].mxu0
        %v5239 = vadd.f32 0.0, %v5238
        %v5240 = vpop.f32.mrb[0].mxu0
        %5241 = vmatprep.mubr.f32.mxu0 0.0
        %5242 = vmatmul.mubr.f32.gmra.mrb[0].mxu0 %v5064
        %v5243 = vpop.f32.mrb[0].mxu0
        %v5244 = vadd.f32 0.0, %v5243
        %v5245 = vpop.f32.mrb[0].mxu0
        %5246 = vmatprep.mubr.f32.mxu0 0.0
        %5247 = vmatmul.mubr.f32.gmra.mrb[0].mxu0 %v5065
        %v5248 = vpop.f32.mrb[0].mxu0
        %v5249 = vadd.f32 0.0, %v5248
        %v5250 = vpop.f32.mrb[0].mxu0
        %5251 = vmatprep.mubr.f32.mxu0 0.0
        %5252 = vmatmul.mubr.f32.gmra.mrb[0].mxu0 %v5066
        %v5253 = vpop.f32.mrb[0].mxu0
        %v5254 = vadd.f32 0.0, %v5253
        %v5255 = vpop.f32.mrb[0].mxu0
        %5256 = vmatprep.mubr.f32.mxu0 0.0
        %5257 = vmatmul.mubr.f32.gmra.mrb[0].mxu0 %v5067
        %v5258 = vpop.f32.mrb[0].mxu0
        %v5259 = vadd.f32 0.0, %v5258
        %v5260 = vpop.f32.mrb[0].mxu0
        %5261 = vmatprep.mubr.f32.mxu0 0.0
        %5262 = vmatmul.mubr.f32.gmra.mrb[0].mxu0 %v5068
        %v5263 = vpop.f32.mrb[0].mxu0
        %v5264 = vadd.f32 0.0, %v5263
        %v5265 = vpop.f32.mrb[0].mxu0
        %5266 = vmatprep.mubr.f32.mxu0 0.0
        %5267 = vmatmul.mubr.f32.gmra.mrb[0].mxu0 %v5069
        %v5268 = vpop.f32.mrb[0].mxu0
        %v5269 = vadd.f32 0.0, %v5268
        %v5270 = vpop.f32.mrb[0].mxu0
        %5271 = vmatprep.mubr.f32.mxu0 0.0
        %5272 = vmatmul.mubr.f32.gmra.mrb[0].mxu0 %v5070
        %v5273 = vpop.f32.mrb[0].mxu0
        %v5274 = vadd.f32 0.0, %v5273
        %v5275 = vpop.f32.mrb[0].mxu0
        %5276 = vmatprep.mubr.f32.mxu0 0.0
        %5277 = vmatmul.mubr.f32.gmra.mrb[0].mxu0 %v5071
        %v5278 = vpop.f32.mrb[0].mxu0
        %v5279 = vadd.f32 0.0, %v5278
        %v5280 = vpop.f32.mrb[0].mxu0
        %5281 = vmatprep.mubr.f32.mxu0 0.0
        %5282 = vmatmul.mubr.f32.gmra.mrb[0].mxu0 %v5072
        %v5283 = vpop.f32.mrb[0].mxu0
        %v5284 = vadd.f32 0.0, %v5283
        %v5285 = vpop.f32.mrb[0].mxu0
        %5286 = vmatprep.mubr.f32.mxu0 0.0
        %5287 = vmatmul.mubr.f32.gmra.mrb[0].mxu0 %v5073
        %v5288 = vpop.f32.mrb[0].mxu0
        %v5289 = vadd.f32 0.0, %v5288
        %v5290 = vpop.f32.mrb[0].mxu0
        %5291 = vmatprep.mubr.f32.mxu0 0.0
        %5292 = vmatmul.mubr.f32.gmra.mrb[0].mxu0 %v5074
        %v5293 = vpop.f32.mrb[0].mxu0
        %v5294 = vadd.f32 0.0, %v5293
        %v5295 = vpop.f32.mrb[0].mxu0
        %5296 = vmatprep.mubr.f32.mxu0 0.0
        %5297 = vmatmul.mubr.f32.gmra.mrb[0].mxu0 %v5075
        %v5298 = vpop.f32.mrb[0].mxu0
        %v5299 = vadd.f32 0.0, %v5298
        %v5300 = vpop.f32.mrb[0].mxu0
        %5301 = vmatprep.mubr.f32.mxu0 0.0
        %5302 = vmatmul.mubr.f32.gmra.mrb[0].mxu0 %v5076
        %v5303 = vpop.f32.mrb[0].mxu0
        %v5304 = vadd.f32 0.0, %v5303
        %v5305 = vpop.f32.mrb[0].mxu0
        %5306 = vmatprep.mubr.f32.mxu0 0.0
        %5307 = vmatmul.mubr.f32.gmra.mrb[0].mxu0 %v5077
        %v5308 = vpop.f32.mrb[0].mxu0
        %v5309 = vadd.f32 0.0, %v5308
        %v5310 = vpop.f32.mrb[0].mxu0
        %5311 = vmatprep.mubr.f32.mxu0 0.0
        %5312 = vmatmul.mubr.f32.gmra.mrb[0].mxu0 %v5078
        %v5313 = vpop.f32.mrb[0].mxu0
        %v5314 = vadd.f32 0.0, %v5313
        %v5315 = vpop.f32.mrb[0].mxu0
        %5316 = vmatprep.mubr.f32.mxu0 0.0
        %5317 = vmatmul.mubr.f32.gmra.mrb[0].mxu0 %v5079
        %v5318 = vpop.f32.mrb[0].mxu0
        %v5319 = vadd.f32 0.0, %v5318
        %v5320 = vpop.f32.mrb[0].mxu0
        %5321 = vdwg.mxu0
        %5322 = vmatprep.subr.mxu0 0.0
        %5323 = vmatpush1.msra.mxu0 %v5032
        %5324 = vmatprep.subr.mxu0 0.0
        %5325 = vmatpush1.msra.mxu0 %v5033
        %5326 = vmatprep.subr.mxu0 0.0
        %5327 = vmatpush1.msra.mxu0 %v5034
        %5328 = vmatprep.subr.mxu0 0.0
        %5329 = vmatpush1.msra.mxu0 %v5035
        %5330 = vmatprep.subr.mxu0 0.0
        %5331 = vmatpush1.msra.mxu0 %v5036
        %5332 = vmatprep.subr.mxu0 0.0
        %5333 = vmatpush1.msra.mxu0 %v5037
        %5334 = vmatprep.subr.mxu0 0.0
        %5335 = vmatpush1.msra.mxu0 %v5038
        %5336 = vmatprep.subr.mxu0 0.0
        %5337 = vmatpush1.msra.mxu0 %v5039
        %5338 = vmatprep.subr.mxu0 0.0
        %5339 = vmatpush1.msra.mxu0 %v5040
        %5340 = vmatprep.subr.mxu0 0.0
        %5341 = vmatpush1.msra.mxu0 %v5041
        %5342 = vmatprep.subr.mxu0 0.0
        %5343 = vmatpush1.msra.mxu0 %v5042
        %5344 = vmatprep.subr.mxu0 0.0
        %5345 = vmatpush1.msra.mxu0 %v5043
        %5346 = vmatprep.subr.mxu0 0.0
        %5347 = vmatpush1.msra.mxu0 %v5044
        %5348 = vmatprep.subr.mxu0 0.0
        %5349 = vmatpush1.msra.mxu0 %v5045
        %5350 = vmatprep.subr.mxu0 0.0
        %5351 = vmatpush1.msra.mxu0 %v5046
        %5352 = vmatprep.subr.mxu0 0.0
        %5353 = vmatpush1.msra.mxu0 %v5047
        %5354 = vmatprep.subr.mxu0 0.0
        %5355 = vmatpush1.msra.mxu0 0.0
        %5356 = vmatprep.subr.mxu0 0.0
        %5357 = vmatpush1.msra.mxu0 0.0
        %5358 = vmatprep.subr.mxu0 0.0
        %5359 = vmatpush1.msra.mxu0 0.0
        %5360 = vmatprep.subr.mxu0 0.0
        %5361 = vmatpush1.msra.mxu0 0.0
        %5362 = vmatprep.subr.mxu0 0.0
        %5363 = vmatpush1.msra.mxu0 0.0
        %5364 = vmatprep.subr.mxu0 0.0
        %5365 = vmatpush1.msra.mxu0 0.0
        %5366 = vmatprep.subr.mxu0 0.0
        %5367 = vmatpush1.msra.mxu0 0.0
        %5368 = vmatprep.subr.mxu0 0.0
        %5369 = vmatpush1.msra.mxu0 0.0
        %5370 = vmatprep.subr.mxu0 0.0
        %5371 = vmatpush1.msra.mxu0 0.0
        %5372 = vmatprep.subr.mxu0 0.0
        %5373 = vmatpush1.msra.mxu0 0.0
        %5374 = vmatprep.subr.mxu0 0.0
        %5375 = vmatpush1.msra.mxu0 0.0
        %5376 = vmatprep.subr.mxu0 0.0
        %5377 = vmatpush1.msra.mxu0 0.0
        %5378 = vmatprep.subr.mxu0 0.0
        %5379 = vmatpush1.msra.mxu0 0.0
        %5380 = vmatprep.subr.mxu0 0.0
        %5381 = vmatpush1.msra.mxu0 0.0
        %5382 = vmatprep.subr.mxu0 0.0
        %5383 = vmatpush1.msra.mxu0 0.0
        %5384 = vmatprep.subr.mxu0 0.0
        %5385 = vmatpush1.msra.mxu0 0.0
        %5386 = vmatprep.mubr.f32.mxu0 0.0
        %5387 = vmatmul.mubr.f32.gmra.mrb[0].mxu0 %v5000
        %v5388 = vpop.f32.mrb[0].mxu0
        %v5389 = vadd.f32 %v5164, %v5388
        %v5390 = vpop.f32.mrb[0].mxu0
        %5391 = vmatprep.mubr.f32.mxu0 0.0
        %5392 = vmatmul.mubr.f32.gmra.mrb[0].mxu0 %v5001
        %v5393 = vpop.f32.mrb[0].mxu0
        %v5394 = vadd.f32 %v5169, %v5393
        %v5395 = vpop.f32.mrb[0].mxu0
        %5396 = vmatprep.mubr.f32.mxu0 0.0
        %5397 = vmatmul.mubr.f32.gmra.mrb[0].mxu0 %v5002
        %v5398 = vpop.f32.mrb[0].mxu0
        %v5399 = vadd.f32 %v5174, %v5398
        %v5400 = vpop.f32.mrb[0].mxu0
        %5401 = vmatprep.mubr.f32.mxu0 0.0
        %5402 = vmatmul.mubr.f32.gmra.mrb[0].mxu0 %v5003
        %v5403 = vpop.f32.mrb[0].mxu0
        %v5404 = vadd.f32 %v5179, %v5403
        %v5405 = vpop.f32.mrb[0].mxu0
        %5406 = vmatprep.mubr.f32.mxu0 0.0
        %5407 = vmatmul.mubr.f32.gmra.mrb[0].mxu0 %v5004
        %v5408 = vpop.f32.mrb[0].mxu0
        %v5409 = vadd.f32 %v5184, %v5408
        %v5410 = vpop.f32.mrb[0].mxu0
        %5411 = vmatprep.mubr.f32.mxu0 0.0
        %5412 = vmatmul.mubr.f32.gmra.mrb[0].mxu0 %v5005
        %v5413 = vpop.f32.mrb[0].mxu0
        %v5414 = vadd.f32 %v5189, %v5413
        %v5415 = vpop.f32.mrb[0].mxu0
        %5416 = vmatprep.mubr.f32.mxu0 0.0
        %5417 = vmatmul.mubr.f32.gmra.mrb[0].mxu0 %v5006
        %v5418 = vpop.f32.mrb[0].mxu0
        %v5419 = vadd.f32 %v5194, %v5418
        %v5420 = vpop.f32.mrb[0].mxu0
        %5421 = vmatprep.mubr.f32.mxu0 0.0
        %5422 = vmatmul.mubr.f32.gmra.mrb[0].mxu0 %v5007
        %v5423 = vpop.f32.mrb[0].mxu0
        %v5424 = vadd.f32 %v5199, %v5423
        %v5425 = vpop.f32.mrb[0].mxu0
        %5426 = vmatprep.mubr.f32.mxu0 0.0
        %5427 = vmatmul.mubr.f32.gmra.mrb[0].mxu0 %v5008
        %v5428 = vpop.f32.mrb[0].mxu0
        %v5429 = vadd.f32 %v5204, %v5428
        %v5430 = vpop.f32.mrb[0].mxu0
        %5431 = vmatprep.mubr.f32.mxu0 0.0
        %5432 = vmatmul.mubr.f32.gmra.mrb[0].mxu0 %v5009
        %v5433 = vpop.f32.mrb[0].mxu0
        %v5434 = vadd.f32 %v5209, %v5433
        %v5435 = vpop.f32.mrb[0].mxu0
        %5436 = vmatprep.mubr.f32.mxu0 0.0
        %5437 = vmatmul.mubr.f32.gmra.mrb[0].mxu0 %v5010
        %v5438 = vpop.f32.mrb[0].mxu0
        %v5439 = vadd.f32 %v5214, %v5438
        %v5440 = vpop.f32.mrb[0].mxu0
        %5441 = vmatprep.mubr.f32.mxu0 0.0
        %5442 = vmatmul.mubr.f32.gmra.mrb[0].mxu0 %v5011
        %v5443 = vpop.f32.mrb[0].mxu0
        %v5444 = vadd.f32 %v5219, %v5443
        %v5445 = vpop.f32.mrb[0].mxu0
        %5446 = vmatprep.mubr.f32.mxu0 0.0
        %5447 = vmatmul.mubr.f32.gmra.mrb[0].mxu0 %v5012
        %v5448 = vpop.f32.mrb[0].mxu0
        %v5449 = vadd.f32 %v5224, %v5448
        %v5450 = vpop.f32.mrb[0].mxu0
        %5451 = vmatprep.mubr.f32.mxu0 0.0
        %5452 = vmatmul.mubr.f32.gmra.mrb[0].mxu0 %v5013
        %v5453 = vpop.f32.mrb[0].mxu0
        %v5454 = vadd.f32 %v5229, %v5453
        %v5455 = vpop.f32.mrb[0].mxu0
        %5456 = vmatprep.mubr.f32.mxu0 0.0
        %5457 = vmatmul.mubr.f32.gmra.mrb[0].mxu0 %v5014
        %v5458 = vpop.f32.mrb[0].mxu0
        %v5459 = vadd.f32 %v5234, %v5458
        %v5460 = vpop.f32.mrb[0].mxu0
        %5461 = vmatprep.mubr.f32.mxu0 0.0
        %5462 = vmatmul.mubr.f32.gmra.mrb[0].mxu0 %v5015
        %v5463 = vpop.f32.mrb[0].mxu0
        %v5464 = vadd.f32 %v5239, %v5463
        %v5465 = vpop.f32.mrb[0].mxu0
        %5466 = vmatprep.mubr.f32.mxu0 0.0
        %5467 = vmatmul.mubr.f32.gmra.mrb[0].mxu0 %v5016
        %v5468 = vpop.f32.mrb[0].mxu0
        %v5469 = vadd.f32 %v5244, %v5468
        %v5470 = vpop.f32.mrb[0].mxu0
        %5471 = vmatprep.mubr.f32.mxu0 0.0
        %5472 = vmatmul.mubr.f32.gmra.mrb[0].mxu0 %v5017
        %v5473 = vpop.f32.mrb[0].mxu0
        %v5474 = vadd.f32 %v5249, %v5473
        %v5475 = vpop.f32.mrb[0].mxu0
        %5476 = vmatprep.mubr.f32.mxu0 0.0
        %5477 = vmatmul.mubr.f32.gmra.mrb[0].mxu0 %v5018
        %v5478 = vpop.f32.mrb[0].mxu0
        %v5479 = vadd.f32 %v5254, %v5478
        %v5480 = vpop.f32.mrb[0].mxu0
        %5481 = vmatprep.mubr.f32.mxu0 0.0
        %5482 = vmatmul.mubr.f32.gmra.mrb[0].mxu0 %v5019
        %v5483 = vpop.f32.mrb[0].mxu0
        %v5484 = vadd.f32 %v5259, %v5483
        %v5485 = vpop.f32.mrb[0].mxu0
        %5486 = vmatprep.mubr.f32.mxu0 0.0
        %5487 = vmatmul.mubr.f32.gmra.mrb[0].mxu0 %v5020
        %v5488 = vpop.f32.mrb[0].mxu0
        %v5489 = vadd.f32 %v5264, %v5488
        %v5490 = vpop.f32.mrb[0].mxu0
        %5491 = vmatprep.mubr.f32.mxu0 0.0
        %5492 = vmatmul.mubr.f32.gmra.mrb[0].mxu0 %v5021
        %v5493 = vpop.f32.mrb[0].mxu0
        %v5494 = vadd.f32 %v5269, %v5493
        %v5495 = vpop.f32.mrb[0].mxu0
        %5496 = vmatprep.mubr.f32.mxu0 0.0
        %5497 = vmatmul.mubr.f32.gmra.mrb[0].mxu0 %v5022
        %v5498 = vpop.f32.mrb[0].mxu0
        %v5499 = vadd.f32 %v5274, %v5498
        %v5500 = vpop.f32.mrb[0].mxu0
        %5501 = vmatprep.mubr.f32.mxu0 0.0
        %5502 = vmatmul.mubr.f32.gmra.mrb[0].mxu0 %v5023
        %v5503 = vpop.f32.mrb[0].mxu0
        %v5504 = vadd.f32 %v5279, %v5503
        %v5505 = vpop.f32.mrb[0].mxu0
        %5506 = vmatprep.mubr.f32.mxu0 0.0
        %5507 = vmatmul.mubr.f32.gmra.mrb[0].mxu0 %v5024
        %v5508 = vpop.f32.mrb[0].mxu0
        %v5509 = vadd.f32 %v5284, %v5508
        %v5510 = vpop.f32.mrb[0].mxu0
        %5511 = vmatprep.mubr.f32.mxu0 0.0
        %5512 = vmatmul.mubr.f32.gmra.mrb[0].mxu0 %v5025
        %v5513 = vpop.f32.mrb[0].mxu0
        %v5514 = vadd.f32 %v5289, %v5513
        %v5515 = vpop.f32.mrb[0].mxu0
        %5516 = vmatprep.mubr.f32.mxu0 0.0
        %5517 = vmatmul.mubr.f32.gmra.mrb[0].mxu0 %v5026
        %v5518 = vpop.f32.mrb[0].mxu0
        %v5519 = vadd.f32 %v5294, %v5518
        %v5520 = vpop.f32.mrb[0].mxu0
        %5521 = vmatprep.mubr.f32.mxu0 0.0
        %5522 = vmatmul.mubr.f32.gmra.mrb[0].mxu0 %v5027
        %v5523 = vpop.f32.mrb[0].mxu0
        %v5524 = vadd.f32 %v5299, %v5523
        %v5525 = vpop.f32.mrb[0].mxu0
        %5526 = vmatprep.mubr.f32.mxu0 0.0
        %5527 = vmatmul.mubr.f32.gmra.mrb[0].mxu0 %v5028
        %v5528 = vpop.f32.mrb[0].mxu0
        %v5529 = vadd.f32 %v5304, %v5528
        %v5530 = vpop.f32.mrb[0].mxu0
        %5531 = vmatprep.mubr.f32.mxu0 0.0
        %5532 = vmatmul.mubr.f32.gmra.mrb[0].mxu0 %v5029
        %v5533 = vpop.f32.mrb[0].mxu0
        %v5534 = vadd.f32 %v5309, %v5533
        %v5535 = vpop.f32.mrb[0].mxu0
        %5536 = vmatprep.mubr.f32.mxu0 0.0
        %5537 = vmatmul.mubr.f32.gmra.mrb[0].mxu0 %v5030
        %v5538 = vpop.f32.mrb[0].mxu0
        %v5539 = vadd.f32 %v5314, %v5538
        %v5540 = vpop.f32.mrb[0].mxu0
        %5541 = vmatprep.mubr.f32.mxu0 0.0
        %5542 = vmatmul.mubr.f32.gmra.mrb[0].mxu0 %v5031
        %v5543 = vpop.f32.mrb[0].mxu0
        %v5544 = vadd.f32 %v5319, %v5543
        %v5545 = vpop.f32.mrb[0].mxu0
        %5546 = vdwg.mxu0
        %v5547 = vld [vmem:[#allocation3 + $0x2] sm:$0xff]
        %v5548 = vld [vmem:[#allocation3 + $0xa] sm:$0xff]
        %v5549 = vld [vmem:[#allocation3 + $0x1a] sm:$0xff]
        %v5550 = vld [vmem:[#allocation3 + $0x22] sm:$0xff]
        %v5551 = vld [vmem:[#allocation3 + $0x32] sm:$0xff]
        %v5552 = vld [vmem:[#allocation3 + $0x3a] sm:$0xff]
        %v5553 = vld [vmem:[#allocation3 + $0x4a] sm:$0xff]
        %v5554 = vld [vmem:[#allocation3 + $0x52] sm:$0xff]
        %v5555 = vld [vmem:[#allocation3 + $0x62] sm:$0xff]
        %v5556 = vld [vmem:[#allocation3 + $0x6a] sm:$0xff]
        %v5557 = vld [vmem:[#allocation3 + $0x7a] sm:$0xff]
        %v5558 = vld [vmem:[#allocation3 + $0x82] sm:$0xff]
        %v5559 = vld [vmem:[#allocation3 + $0x92] sm:$0xff]
        %v5560 = vld [vmem:[#allocation3 + $0x9a] sm:$0xff]
        %v5561 = vld [vmem:[#allocation3 + $0xaa] sm:$0xff]
        %v5562 = vld [vmem:[#allocation3 + $0xb2] sm:$0xff]
        %v5563 = vld [vmem:[#allocation3 + $0xc2] sm:$0xff]
        %v5564 = vld [vmem:[#allocation3 + $0xca] sm:$0xff]
        %v5565 = vld [vmem:[#allocation3 + $0xda] sm:$0xff]
        %v5566 = vld [vmem:[#allocation3 + $0xe2] sm:$0xff]
        %v5567 = vld [vmem:[#allocation3 + $0xf2] sm:$0xff]
        %v5568 = vld [vmem:[#allocation3 + $0xfa] sm:$0xff]
        %v5569 = vld [vmem:[#allocation3 + $0x10a] sm:$0xff]
        %v5570 = vld [vmem:[#allocation3 + $0x112] sm:$0xff]
        %v5571 = vld [vmem:[#allocation3 + $0x122] sm:$0xff]
        %v5572 = vld [vmem:[#allocation3 + $0x12a] sm:$0xff]
        %v5573 = vld [vmem:[#allocation3 + $0x13a] sm:$0xff]
        %v5574 = vld [vmem:[#allocation3 + $0x142] sm:$0xff]
        %v5575 = vld [vmem:[#allocation3 + $0x152] sm:$0xff]
        %v5576 = vld [vmem:[#allocation3 + $0x15a] sm:$0xff]
        %v5577 = vld [vmem:[#allocation3 + $0x16a] sm:$0xff]
        %v5578 = vld [vmem:[#allocation3 + $0x172] sm:$0xff]
        %s5579 = scalar_lea.vmem %s8, 256
        %v5580 = vld [vmem:[%s5579] sm:$0xff]
        %v5581 = vld [vmem:[%s5579 + $0x8] sm:$0xff]
        %v5582 = vld [vmem:[%s5579 + $0x10] sm:$0xff]
        %v5583 = vld [vmem:[%s5579 + $0x18] sm:$0xff]
        %v5584 = vld [vmem:[%s5579 + $0x20] sm:$0xff]
        %v5585 = vld [vmem:[%s5579 + $0x28] sm:$0xff]
        %v5586 = vld [vmem:[%s5579 + $0x30] sm:$0xff]
        %v5587 = vld [vmem:[%s5579 + $0x38] sm:$0xff]
        %v5588 = vld [vmem:[%s5579 + $0x40] sm:$0xff]
        %v5589 = vld [vmem:[%s5579 + $0x48] sm:$0xff]
        %v5590 = vld [vmem:[%s5579 + $0x50] sm:$0xff]
        %v5591 = vld [vmem:[%s5579 + $0x58] sm:$0xff]
        %v5592 = vld [vmem:[%s5579 + $0x60] sm:$0xff]
        %v5593 = vld [vmem:[%s5579 + $0x68] sm:$0xff]
        %v5594 = vld [vmem:[%s5579 + $0x70] sm:$0xff]
        %v5595 = vld [vmem:[%s5579 + $0x78] sm:$0xff]
        %5596 = vmatprep.subr.mxu0 0.0
        %5597 = vmatpush1.msra.mxu0 %v5580
        %5598 = vmatprep.subr.mxu0 0.0
        %5599 = vmatpush1.msra.mxu0 %v5581
        %5600 = vmatprep.subr.mxu0 0.0
        %5601 = vmatpush1.msra.mxu0 %v5582
        %5602 = vmatprep.subr.mxu0 0.0
        %5603 = vmatpush1.msra.mxu0 %v5583
        %5604 = vmatprep.subr.mxu0 0.0
        %5605 = vmatpush1.msra.mxu0 %v5584
        %5606 = vmatprep.subr.mxu0 0.0
        %5607 = vmatpush1.msra.mxu0 %v5585
        %5608 = vmatprep.subr.mxu0 0.0
        %5609 = vmatpush1.msra.mxu0 %v5586
        %5610 = vmatprep.subr.mxu0 0.0
        %5611 = vmatpush1.msra.mxu0 %v5587
        %5612 = vmatprep.subr.mxu0 0.0
        %5613 = vmatpush1.msra.mxu0 %v5588
        %5614 = vmatprep.subr.mxu0 0.0
        %5615 = vmatpush1.msra.mxu0 %v5589
        %5616 = vmatprep.subr.mxu0 0.0
        %5617 = vmatpush1.msra.mxu0 %v5590
        %5618 = vmatprep.subr.mxu0 0.0
        %5619 = vmatpush1.msra.mxu0 %v5591
        %5620 = vmatprep.subr.mxu0 0.0
        %5621 = vmatpush1.msra.mxu0 %v5592
        %5622 = vmatprep.subr.mxu0 0.0
        %5623 = vmatpush1.msra.mxu0 %v5593
        %5624 = vmatprep.subr.mxu0 0.0
        %5625 = vmatpush1.msra.mxu0 %v5594
        %5626 = vmatprep.subr.mxu0 0.0
        %5627 = vmatpush1.msra.mxu0 %v5595
        %5628 = vmatprep.subr.mxu0 0.0
        %5629 = vmatpush1.msra.mxu0 0.0
        %5630 = vmatprep.subr.mxu0 0.0
        %5631 = vmatpush1.msra.mxu0 0.0
        %5632 = vmatprep.subr.mxu0 0.0
        %5633 = vmatpush1.msra.mxu0 0.0
        %5634 = vmatprep.subr.mxu0 0.0
        %5635 = vmatpush1.msra.mxu0 0.0
        %5636 = vmatprep.subr.mxu0 0.0
        %5637 = vmatpush1.msra.mxu0 0.0
        %5638 = vmatprep.subr.mxu0 0.0
        %5639 = vmatpush1.msra.mxu0 0.0
        %5640 = vmatprep.subr.mxu0 0.0
        %5641 = vmatpush1.msra.mxu0 0.0
        %5642 = vmatprep.subr.mxu0 0.0
        %5643 = vmatpush1.msra.mxu0 0.0
        %5644 = vmatprep.subr.mxu0 0.0
        %5645 = vmatpush1.msra.mxu0 0.0
        %5646 = vmatprep.subr.mxu0 0.0
        %5647 = vmatpush1.msra.mxu0 0.0
        %5648 = vmatprep.subr.mxu0 0.0
        %5649 = vmatpush1.msra.mxu0 0.0
        %5650 = vmatprep.subr.mxu0 0.0
        %5651 = vmatpush1.msra.mxu0 0.0
        %5652 = vmatprep.subr.mxu0 0.0
        %5653 = vmatpush1.msra.mxu0 0.0
        %5654 = vmatprep.subr.mxu0 0.0
        %5655 = vmatpush1.msra.mxu0 0.0
        %5656 = vmatprep.subr.mxu0 0.0
        %5657 = vmatpush1.msra.mxu0 0.0
        %5658 = vmatprep.subr.mxu0 0.0
        %5659 = vmatpush1.msra.mxu0 0.0
        %5660 = vmatprep.mubr.f32.mxu0 0.0
        %5661 = vmatmul.mubr.f32.gmra.mrb[0].mxu0 %v5547
        %v5662 = vpop.f32.mrb[0].mxu0
        %v5663 = vadd.f32 0.0, %v5662
        %v5664 = vpop.f32.mrb[0].mxu0
        %5665 = vmatprep.mubr.f32.mxu0 0.0
        %5666 = vmatmul.mubr.f32.gmra.mrb[0].mxu0 %v5548
        %v5667 = vpop.f32.mrb[0].mxu0
        %v5668 = vadd.f32 0.0, %v5667
        %v5669 = vpop.f32.mrb[0].mxu0
        %5670 = vmatprep.mubr.f32.mxu0 0.0
        %5671 = vmatmul.mubr.f32.gmra.mrb[0].mxu0 %v5549
        %v5672 = vpop.f32.mrb[0].mxu0
        %v5673 = vadd.f32 0.0, %v5672
        %v5674 = vpop.f32.mrb[0].mxu0
        %5675 = vmatprep.mubr.f32.mxu0 0.0
        %5676 = vmatmul.mubr.f32.gmra.mrb[0].mxu0 %v5550
        %v5677 = vpop.f32.mrb[0].mxu0
        %v5678 = vadd.f32 0.0, %v5677
        %v5679 = vpop.f32.mrb[0].mxu0
        %5680 = vmatprep.mubr.f32.mxu0 0.0
        %5681 = vmatmul.mubr.f32.gmra.mrb[0].mxu0 %v5551
        %v5682 = vpop.f32.mrb[0].mxu0
        %v5683 = vadd.f32 0.0, %v5682
        %v5684 = vpop.f32.mrb[0].mxu0
        %5685 = vmatprep.mubr.f32.mxu0 0.0
        %5686 = vmatmul.mubr.f32.gmra.mrb[0].mxu0 %v5552
        %v5687 = vpop.f32.mrb[0].mxu0
        %v5688 = vadd.f32 0.0, %v5687
        %v5689 = vpop.f32.mrb[0].mxu0
        %5690 = vmatprep.mubr.f32.mxu0 0.0
        %5691 = vmatmul.mubr.f32.gmra.mrb[0].mxu0 %v5553
        %v5692 = vpop.f32.mrb[0].mxu0
        %v5693 = vadd.f32 0.0, %v5692
        %v5694 = vpop.f32.mrb[0].mxu0
        %5695 = vmatprep.mubr.f32.mxu0 0.0
        %5696 = vmatmul.mubr.f32.gmra.mrb[0].mxu0 %v5554
        %v5697 = vpop.f32.mrb[0].mxu0
        %v5698 = vadd.f32 0.0, %v5697
        %v5699 = vpop.f32.mrb[0].mxu0
        %5700 = vmatprep.mubr.f32.mxu0 0.0
        %5701 = vmatmul.mubr.f32.gmra.mrb[0].mxu0 %v5555
        %v5702 = vpop.f32.mrb[0].mxu0
        %v5703 = vadd.f32 0.0, %v5702
        %v5704 = vpop.f32.mrb[0].mxu0
        %5705 = vmatprep.mubr.f32.mxu0 0.0
        %5706 = vmatmul.mubr.f32.gmra.mrb[0].mxu0 %v5556
        %v5707 = vpop.f32.mrb[0].mxu0
        %v5708 = vadd.f32 0.0, %v5707
        %v5709 = vpop.f32.mrb[0].mxu0
        %5710 = vmatprep.mubr.f32.mxu0 0.0
        %5711 = vmatmul.mubr.f32.gmra.mrb[0].mxu0 %v5557
        %v5712 = vpop.f32.mrb[0].mxu0
        %v5713 = vadd.f32 0.0, %v5712
        %v5714 = vpop.f32.mrb[0].mxu0
        %5715 = vmatprep.mubr.f32.mxu0 0.0
        %5716 = vmatmul.mubr.f32.gmra.mrb[0].mxu0 %v5558
        %v5717 = vpop.f32.mrb[0].mxu0
        %v5718 = vadd.f32 0.0, %v5717
        %v5719 = vpop.f32.mrb[0].mxu0
        %5720 = vmatprep.mubr.f32.mxu0 0.0
        %5721 = vmatmul.mubr.f32.gmra.mrb[0].mxu0 %v5559
        %v5722 = vpop.f32.mrb[0].mxu0
        %v5723 = vadd.f32 0.0, %v5722
        %v5724 = vpop.f32.mrb[0].mxu0
        %5725 = vmatprep.mubr.f32.mxu0 0.0
        %5726 = vmatmul.mubr.f32.gmra.mrb[0].mxu0 %v5560
        %v5727 = vpop.f32.mrb[0].mxu0
        %v5728 = vadd.f32 0.0, %v5727
        %v5729 = vpop.f32.mrb[0].mxu0
        %5730 = vmatprep.mubr.f32.mxu0 0.0
        %5731 = vmatmul.mubr.f32.gmra.mrb[0].mxu0 %v5561
        %v5732 = vpop.f32.mrb[0].mxu0
        %v5733 = vadd.f32 0.0, %v5732
        %v5734 = vpop.f32.mrb[0].mxu0
        %5735 = vmatprep.mubr.f32.mxu0 0.0
        %5736 = vmatmul.mubr.f32.gmra.mrb[0].mxu0 %v5562
        %v5737 = vpop.f32.mrb[0].mxu0
        %v5738 = vadd.f32 0.0, %v5737
        %v5739 = vpop.f32.mrb[0].mxu0
        %5740 = vmatprep.mubr.f32.mxu0 0.0
        %5741 = vmatmul.mubr.f32.gmra.mrb[0].mxu0 %v5563
        %v5742 = vpop.f32.mrb[0].mxu0
        %v5743 = vadd.f32 0.0, %v5742
        %v5744 = vpop.f32.mrb[0].mxu0
        %5745 = vmatprep.mubr.f32.mxu0 0.0
        %5746 = vmatmul.mubr.f32.gmra.mrb[0].mxu0 %v5564
        %v5747 = vpop.f32.mrb[0].mxu0
        %v5748 = vadd.f32 0.0, %v5747
        %v5749 = vpop.f32.mrb[0].mxu0
        %5750 = vmatprep.mubr.f32.mxu0 0.0
        %5751 = vmatmul.mubr.f32.gmra.mrb[0].mxu0 %v5565
        %v5752 = vpop.f32.mrb[0].mxu0
        %v5753 = vadd.f32 0.0, %v5752
        %v5754 = vpop.f32.mrb[0].mxu0
        %5755 = vmatprep.mubr.f32.mxu0 0.0
        %5756 = vmatmul.mubr.f32.gmra.mrb[0].mxu0 %v5566
        %v5757 = vpop.f32.mrb[0].mxu0
        %v5758 = vadd.f32 0.0, %v5757
        %v5759 = vpop.f32.mrb[0].mxu0
        %5760 = vmatprep.mubr.f32.mxu0 0.0
        %5761 = vmatmul.mubr.f32.gmra.mrb[0].mxu0 %v5567
        %v5762 = vpop.f32.mrb[0].mxu0
        %v5763 = vadd.f32 0.0, %v5762
        %v5764 = vpop.f32.mrb[0].mxu0
        %5765 = vmatprep.mubr.f32.mxu0 0.0
        %5766 = vmatmul.mubr.f32.gmra.mrb[0].mxu0 %v5568
        %v5767 = vpop.f32.mrb[0].mxu0
        %v5768 = vadd.f32 0.0, %v5767
        %v5769 = vpop.f32.mrb[0].mxu0
        %5770 = vmatprep.mubr.f32.mxu0 0.0
        %5771 = vmatmul.mubr.f32.gmra.mrb[0].mxu0 %v5569
        %v5772 = vpop.f32.mrb[0].mxu0
        %v5773 = vadd.f32 0.0, %v5772
        %v5774 = vpop.f32.mrb[0].mxu0
        %5775 = vmatprep.mubr.f32.mxu0 0.0
        %5776 = vmatmul.mubr.f32.gmra.mrb[0].mxu0 %v5570
        %v5777 = vpop.f32.mrb[0].mxu0
        %v5778 = vadd.f32 0.0, %v5777
        %v5779 = vpop.f32.mrb[0].mxu0
        %5780 = vmatprep.mubr.f32.mxu0 0.0
        %5781 = vmatmul.mubr.f32.gmra.mrb[0].mxu0 %v5571
        %v5782 = vpop.f32.mrb[0].mxu0
        %v5783 = vadd.f32 0.0, %v5782
        %v5784 = vpop.f32.mrb[0].mxu0
        %5785 = vmatprep.mubr.f32.mxu0 0.0
        %5786 = vmatmul.mubr.f32.gmra.mrb[0].mxu0 %v5572
        %v5787 = vpop.f32.mrb[0].mxu0
        %v5788 = vadd.f32 0.0, %v5787
        %v5789 = vpop.f32.mrb[0].mxu0
        %5790 = vmatprep.mubr.f32.mxu0 0.0
        %5791 = vmatmul.mubr.f32.gmra.mrb[0].mxu0 %v5573
        %v5792 = vpop.f32.mrb[0].mxu0
        %v5793 = vadd.f32 0.0, %v5792
        %v5794 = vpop.f32.mrb[0].mxu0
        %5795 = vmatprep.mubr.f32.mxu0 0.0
        %5796 = vmatmul.mubr.f32.gmra.mrb[0].mxu0 %v5574
        %v5797 = vpop.f32.mrb[0].mxu0
        %v5798 = vadd.f32 0.0, %v5797
        %v5799 = vpop.f32.mrb[0].mxu0
        %5800 = vmatprep.mubr.f32.mxu0 0.0
        %5801 = vmatmul.mubr.f32.gmra.mrb[0].mxu0 %v5575
        %v5802 = vpop.f32.mrb[0].mxu0
        %v5803 = vadd.f32 0.0, %v5802
        %v5804 = vpop.f32.mrb[0].mxu0
        %5805 = vmatprep.mubr.f32.mxu0 0.0
        %5806 = vmatmul.mubr.f32.gmra.mrb[0].mxu0 %v5576
        %v5807 = vpop.f32.mrb[0].mxu0
        %v5808 = vadd.f32 0.0, %v5807
        %v5809 = vpop.f32.mrb[0].mxu0
        %5810 = vmatprep.mubr.f32.mxu0 0.0
        %5811 = vmatmul.mubr.f32.gmra.mrb[0].mxu0 %v5577
        %v5812 = vpop.f32.mrb[0].mxu0
        %v5813 = vadd.f32 0.0, %v5812
        %v5814 = vpop.f32.mrb[0].mxu0
        %5815 = vmatprep.mubr.f32.mxu0 0.0
        %5816 = vmatmul.mubr.f32.gmra.mrb[0].mxu0 %v5578
        %v5817 = vpop.f32.mrb[0].mxu0
        %v5818 = vadd.f32 0.0, %v5817
        %v5819 = vpop.f32.mrb[0].mxu0
        %5820 = vdwg.mxu0
        %v5821 = vadd.f32 %v5389, %v5663
        %v5822 = vadd.f32 %v5394, %v5668
        %v5823 = vadd.f32 %v5399, %v5673
        %v5824 = vadd.f32 %v5404, %v5678
        %v5825 = vadd.f32 %v5409, %v5683
        %v5826 = vadd.f32 %v5414, %v5688
        %v5827 = vadd.f32 %v5419, %v5693
        %v5828 = vadd.f32 %v5424, %v5698
        %v5829 = vadd.f32 %v5429, %v5703
        %v5830 = vadd.f32 %v5434, %v5708
        %v5831 = vadd.f32 %v5439, %v5713
        %v5832 = vadd.f32 %v5444, %v5718
        %v5833 = vadd.f32 %v5449, %v5723
        %v5834 = vadd.f32 %v5454, %v5728
        %v5835 = vadd.f32 %v5459, %v5733
        %v5836 = vadd.f32 %v5464, %v5738
        %v5837 = vadd.f32 %v5469, %v5743
        %v5838 = vadd.f32 %v5474, %v5748
        %v5839 = vadd.f32 %v5479, %v5753
        %v5840 = vadd.f32 %v5484, %v5758
        %v5841 = vadd.f32 %v5489, %v5763
        %v5842 = vadd.f32 %v5494, %v5768
        %v5843 = vadd.f32 %v5499, %v5773
        %v5844 = vadd.f32 %v5504, %v5778
        %v5845 = vadd.f32 %v5509, %v5783
        %v5846 = vadd.f32 %v5514, %v5788
        %v5847 = vadd.f32 %v5519, %v5793
        %v5848 = vadd.f32 %v5524, %v5798
        %v5849 = vadd.f32 %v5529, %v5803
        %v5850 = vadd.f32 %v5534, %v5808
        %v5851 = vadd.f32 %v5539, %v5813
        %v5852 = vadd.f32 %v5544, %v5818
        %v5853 = vld [vmem:[%s4805] sm:$0xff]
        %v5854 = vld [vmem:[%s4805 + $0x8] sm:$0xff]
        %v5855 = vld [vmem:[%s4805 + $0x18] sm:$0xff]
        %v5856 = vld [vmem:[%s4805 + $0x20] sm:$0xff]
        %v5857 = vld [vmem:[%s4805 + $0x30] sm:$0xff]
        %v5858 = vld [vmem:[%s4805 + $0x38] sm:$0xff]
        %v5859 = vld [vmem:[%s4805 + $0x48] sm:$0xff]
        %v5860 = vld [vmem:[%s4805 + $0x50] sm:$0xff]
        %v5861 = vld [vmem:[%s4805 + $0x60] sm:$0xff]
        %v5862 = vld [vmem:[%s4805 + $0x68] sm:$0xff]
        %v5863 = vld [vmem:[%s4805 + $0x78] sm:$0xff]
        %v5864 = vld [vmem:[%s4805 + $0x80] sm:$0xff]
        %v5865 = vld [vmem:[%s4805 + $0x90] sm:$0xff]
        %v5866 = vld [vmem:[%s4805 + $0x98] sm:$0xff]
        %v5867 = vld [vmem:[%s4805 + $0xa8] sm:$0xff]
        %v5868 = vld [vmem:[%s4805 + $0xb0] sm:$0xff]
        %v5869 = vld [vmem:[%s4805 + $0xc0] sm:$0xff]
        %v5870 = vld [vmem:[%s4805 + $0xc8] sm:$0xff]
        %v5871 = vld [vmem:[%s4805 + $0xd8] sm:$0xff]
        %v5872 = vld [vmem:[%s4805 + $0xe0] sm:$0xff]
        %v5873 = vld [vmem:[%s4805 + $0xf0] sm:$0xff]
        %v5874 = vld [vmem:[%s4805 + $0xf8] sm:$0xff]
        %v5875 = vld [vmem:[%s4805 + $0x108] sm:$0xff]
        %v5876 = vld [vmem:[%s4805 + $0x110] sm:$0xff]
        %v5877 = vld [vmem:[%s4805 + $0x120] sm:$0xff]
        %v5878 = vld [vmem:[%s4805 + $0x128] sm:$0xff]
        %v5879 = vld [vmem:[%s4805 + $0x138] sm:$0xff]
        %v5880 = vld [vmem:[%s4805 + $0x140] sm:$0xff]
        %v5881 = vld [vmem:[%s4805 + $0x150] sm:$0xff]
        %v5882 = vld [vmem:[%s4805 + $0x158] sm:$0xff]
        %v5883 = vld [vmem:[%s4805 + $0x168] sm:$0xff]
        %v5884 = vld [vmem:[%s4805 + $0x170] sm:$0xff]
        %s5885 = scalar_lea.vmem %s8, 384
        %v5886 = vld [vmem:[%s5885] sm:$0xff]
        %v5887 = vld [vmem:[%s5885 + $0x8] sm:$0xff]
        %v5888 = vld [vmem:[%s5885 + $0x10] sm:$0xff]
        %v5889 = vld [vmem:[%s5885 + $0x18] sm:$0xff]
        %v5890 = vld [vmem:[%s5885 + $0x20] sm:$0xff]
        %v5891 = vld [vmem:[%s5885 + $0x28] sm:$0xff]
        %v5892 = vld [vmem:[%s5885 + $0x30] sm:$0xff]
        %v5893 = vld [vmem:[%s5885 + $0x38] sm:$0xff]
        %v5894 = vld [vmem:[%s5885 + $0x40] sm:$0xff]
        %v5895 = vld [vmem:[%s5885 + $0x48] sm:$0xff]
        %v5896 = vld [vmem:[%s5885 + $0x50] sm:$0xff]
        %v5897 = vld [vmem:[%s5885 + $0x58] sm:$0xff]
        %v5898 = vld [vmem:[%s5885 + $0x60] sm:$0xff]
        %v5899 = vld [vmem:[%s5885 + $0x68] sm:$0xff]
        %v5900 = vld [vmem:[%s5885 + $0x70] sm:$0xff]
        %v5901 = vld [vmem:[%s5885 + $0x78] sm:$0xff]
        %5902 = vmatprep.subr.mxu0 0.0
        %5903 = vmatpush1.msra.mxu0 %v5886
        %5904 = vmatprep.subr.mxu0 0.0
        %5905 = vmatpush1.msra.mxu0 %v5887
        %5906 = vmatprep.subr.mxu0 0.0
        %5907 = vmatpush1.msra.mxu0 %v5888
        %5908 = vmatprep.subr.mxu0 0.0
        %5909 = vmatpush1.msra.mxu0 %v5889
        %5910 = vmatprep.subr.mxu0 0.0
        %5911 = vmatpush1.msra.mxu0 %v5890
        %5912 = vmatprep.subr.mxu0 0.0
        %5913 = vmatpush1.msra.mxu0 %v5891
        %5914 = vmatprep.subr.mxu0 0.0
        %5915 = vmatpush1.msra.mxu0 %v5892
        %5916 = vmatprep.subr.mxu0 0.0
        %5917 = vmatpush1.msra.mxu0 %v5893
        %5918 = vmatprep.subr.mxu0 0.0
        %5919 = vmatpush1.msra.mxu0 %v5894
        %5920 = vmatprep.subr.mxu0 0.0
        %5921 = vmatpush1.msra.mxu0 %v5895
        %5922 = vmatprep.subr.mxu0 0.0
        %5923 = vmatpush1.msra.mxu0 %v5896
        %5924 = vmatprep.subr.mxu0 0.0
        %5925 = vmatpush1.msra.mxu0 %v5897
        %5926 = vmatprep.subr.mxu0 0.0
        %5927 = vmatpush1.msra.mxu0 %v5898
        %5928 = vmatprep.subr.mxu0 0.0
        %5929 = vmatpush1.msra.mxu0 %v5899
        %5930 = vmatprep.subr.mxu0 0.0
        %5931 = vmatpush1.msra.mxu0 %v5900
        %5932 = vmatprep.subr.mxu0 0.0
        %5933 = vmatpush1.msra.mxu0 %v5901
        %5934 = vmatprep.subr.mxu0 0.0
        %5935 = vmatpush1.msra.mxu0 0.0
        %5936 = vmatprep.subr.mxu0 0.0
        %5937 = vmatpush1.msra.mxu0 0.0
        %5938 = vmatprep.subr.mxu0 0.0
        %5939 = vmatpush1.msra.mxu0 0.0
        %5940 = vmatprep.subr.mxu0 0.0
        %5941 = vmatpush1.msra.mxu0 0.0
        %5942 = vmatprep.subr.mxu0 0.0
        %5943 = vmatpush1.msra.mxu0 0.0
        %5944 = vmatprep.subr.mxu0 0.0
        %5945 = vmatpush1.msra.mxu0 0.0
        %5946 = vmatprep.subr.mxu0 0.0
        %5947 = vmatpush1.msra.mxu0 0.0
        %5948 = vmatprep.subr.mxu0 0.0
        %5949 = vmatpush1.msra.mxu0 0.0
        %5950 = vmatprep.subr.mxu0 0.0
        %5951 = vmatpush1.msra.mxu0 0.0
        %5952 = vmatprep.subr.mxu0 0.0
        %5953 = vmatpush1.msra.mxu0 0.0
        %5954 = vmatprep.subr.mxu0 0.0
        %5955 = vmatpush1.msra.mxu0 0.0
        %5956 = vmatprep.subr.mxu0 0.0
        %5957 = vmatpush1.msra.mxu0 0.0
        %5958 = vmatprep.subr.mxu0 0.0
        %5959 = vmatpush1.msra.mxu0 0.0
        %5960 = vmatprep.subr.mxu0 0.0
        %5961 = vmatpush1.msra.mxu0 0.0
        %5962 = vmatprep.subr.mxu0 0.0
        %5963 = vmatpush1.msra.mxu0 0.0
        %5964 = vmatprep.subr.mxu0 0.0
        %5965 = vmatpush1.msra.mxu0 0.0
        %5966 = vmatprep.mubr.f32.mxu0 0.0
        %5967 = vmatmul.mubr.f32.gmra.mrb[0].mxu0 %v5853
        %v5968 = vpop.f32.mrb[0].mxu0
        %v5969 = vadd.f32 0.0, %v5968
        %v5970 = vpop.f32.mrb[0].mxu0
        %5971 = vmatprep.mubr.f32.mxu0 0.0
        %5972 = vmatmul.mubr.f32.gmra.mrb[0].mxu0 %v5854
        %v5973 = vpop.f32.mrb[0].mxu0
        %v5974 = vadd.f32 0.0, %v5973
        %v5975 = vpop.f32.mrb[0].mxu0
        %5976 = vmatprep.mubr.f32.mxu0 0.0
        %5977 = vmatmul.mubr.f32.gmra.mrb[0].mxu0 %v5855
        %v5978 = vpop.f32.mrb[0].mxu0
        %v5979 = vadd.f32 0.0, %v5978
        %v5980 = vpop.f32.mrb[0].mxu0
        %5981 = vmatprep.mubr.f32.mxu0 0.0
        %5982 = vmatmul.mubr.f32.gmra.mrb[0].mxu0 %v5856
        %v5983 = vpop.f32.mrb[0].mxu0
        %v5984 = vadd.f32 0.0, %v5983
        %v5985 = vpop.f32.mrb[0].mxu0
        %5986 = vmatprep.mubr.f32.mxu0 0.0
        %5987 = vmatmul.mubr.f32.gmra.mrb[0].mxu0 %v5857
        %v5988 = vpop.f32.mrb[0].mxu0
        %v5989 = vadd.f32 0.0, %v5988
        %v5990 = vpop.f32.mrb[0].mxu0
        %5991 = vmatprep.mubr.f32.mxu0 0.0
        %5992 = vmatmul.mubr.f32.gmra.mrb[0].mxu0 %v5858
        %v5993 = vpop.f32.mrb[0].mxu0
        %v5994 = vadd.f32 0.0, %v5993
        %v5995 = vpop.f32.mrb[0].mxu0
        %5996 = vmatprep.mubr.f32.mxu0 0.0
        %5997 = vmatmul.mubr.f32.gmra.mrb[0].mxu0 %v5859
        %v5998 = vpop.f32.mrb[0].mxu0
        %v5999 = vadd.f32 0.0, %v5998
        %v6000 = vpop.f32.mrb[0].mxu0
        %6001 = vmatprep.mubr.f32.mxu0 0.0
        %6002 = vmatmul.mubr.f32.gmra.mrb[0].mxu0 %v5860
        %v6003 = vpop.f32.mrb[0].mxu0
        %v6004 = vadd.f32 0.0, %v6003
        %v6005 = vpop.f32.mrb[0].mxu0
        %6006 = vmatprep.mubr.f32.mxu0 0.0
        %6007 = vmatmul.mubr.f32.gmra.mrb[0].mxu0 %v5861
        %v6008 = vpop.f32.mrb[0].mxu0
        %v6009 = vadd.f32 0.0, %v6008
        %v6010 = vpop.f32.mrb[0].mxu0
        %6011 = vmatprep.mubr.f32.mxu0 0.0
        %6012 = vmatmul.mubr.f32.gmra.mrb[0].mxu0 %v5862
        %v6013 = vpop.f32.mrb[0].mxu0
        %v6014 = vadd.f32 0.0, %v6013
        %v6015 = vpop.f32.mrb[0].mxu0
        %6016 = vmatprep.mubr.f32.mxu0 0.0
        %6017 = vmatmul.mubr.f32.gmra.mrb[0].mxu0 %v5863
        %v6018 = vpop.f32.mrb[0].mxu0
        %v6019 = vadd.f32 0.0, %v6018
        %v6020 = vpop.f32.mrb[0].mxu0
        %6021 = vmatprep.mubr.f32.mxu0 0.0
        %6022 = vmatmul.mubr.f32.gmra.mrb[0].mxu0 %v5864
        %v6023 = vpop.f32.mrb[0].mxu0
        %v6024 = vadd.f32 0.0, %v6023
        %v6025 = vpop.f32.mrb[0].mxu0
        %6026 = vmatprep.mubr.f32.mxu0 0.0
        %6027 = vmatmul.mubr.f32.gmra.mrb[0].mxu0 %v5865
        %v6028 = vpop.f32.mrb[0].mxu0
        %v6029 = vadd.f32 0.0, %v6028
        %v6030 = vpop.f32.mrb[0].mxu0
        %6031 = vmatprep.mubr.f32.mxu0 0.0
        %6032 = vmatmul.mubr.f32.gmra.mrb[0].mxu0 %v5866
        %v6033 = vpop.f32.mrb[0].mxu0
        %v6034 = vadd.f32 0.0, %v6033
        %v6035 = vpop.f32.mrb[0].mxu0
        %6036 = vmatprep.mubr.f32.mxu0 0.0
        %6037 = vmatmul.mubr.f32.gmra.mrb[0].mxu0 %v5867
        %v6038 = vpop.f32.mrb[0].mxu0
        %v6039 = vadd.f32 0.0, %v6038
        %v6040 = vpop.f32.mrb[0].mxu0
        %6041 = vmatprep.mubr.f32.mxu0 0.0
        %6042 = vmatmul.mubr.f32.gmra.mrb[0].mxu0 %v5868
        %v6043 = vpop.f32.mrb[0].mxu0
        %v6044 = vadd.f32 0.0, %v6043
        %v6045 = vpop.f32.mrb[0].mxu0
        %6046 = vmatprep.mubr.f32.mxu0 0.0
        %6047 = vmatmul.mubr.f32.gmra.mrb[0].mxu0 %v5869
        %v6048 = vpop.f32.mrb[0].mxu0
        %v6049 = vadd.f32 0.0, %v6048
        %v6050 = vpop.f32.mrb[0].mxu0
        %6051 = vmatprep.mubr.f32.mxu0 0.0
        %6052 = vmatmul.mubr.f32.gmra.mrb[0].mxu0 %v5870
        %v6053 = vpop.f32.mrb[0].mxu0
        %v6054 = vadd.f32 0.0, %v6053
        %v6055 = vpop.f32.mrb[0].mxu0
        %6056 = vmatprep.mubr.f32.mxu0 0.0
        %6057 = vmatmul.mubr.f32.gmra.mrb[0].mxu0 %v5871
        %v6058 = vpop.f32.mrb[0].mxu0
        %v6059 = vadd.f32 0.0, %v6058
        %v6060 = vpop.f32.mrb[0].mxu0
        %6061 = vmatprep.mubr.f32.mxu0 0.0
        %6062 = vmatmul.mubr.f32.gmra.mrb[0].mxu0 %v5872
        %v6063 = vpop.f32.mrb[0].mxu0
        %v6064 = vadd.f32 0.0, %v6063
        %v6065 = vpop.f32.mrb[0].mxu0
        %6066 = vmatprep.mubr.f32.mxu0 0.0
        %6067 = vmatmul.mubr.f32.gmra.mrb[0].mxu0 %v5873
        %v6068 = vpop.f32.mrb[0].mxu0
        %v6069 = vadd.f32 0.0, %v6068
        %v6070 = vpop.f32.mrb[0].mxu0
        %6071 = vmatprep.mubr.f32.mxu0 0.0
        %6072 = vmatmul.mubr.f32.gmra.mrb[0].mxu0 %v5874
        %v6073 = vpop.f32.mrb[0].mxu0
        %v6074 = vadd.f32 0.0, %v6073
        %v6075 = vpop.f32.mrb[0].mxu0
        %6076 = vmatprep.mubr.f32.mxu0 0.0
        %6077 = vmatmul.mubr.f32.gmra.mrb[0].mxu0 %v5875
        %v6078 = vpop.f32.mrb[0].mxu0
        %v6079 = vadd.f32 0.0, %v6078
        %v6080 = vpop.f32.mrb[0].mxu0
        %6081 = vmatprep.mubr.f32.mxu0 0.0
        %6082 = vmatmul.mubr.f32.gmra.mrb[0].mxu0 %v5876
        %v6083 = vpop.f32.mrb[0].mxu0
        %v6084 = vadd.f32 0.0, %v6083
        %v6085 = vpop.f32.mrb[0].mxu0
        %6086 = vmatprep.mubr.f32.mxu0 0.0
        %6087 = vmatmul.mubr.f32.gmra.mrb[0].mxu0 %v5877
        %v6088 = vpop.f32.mrb[0].mxu0
        %v6089 = vadd.f32 0.0, %v6088
        %v6090 = vpop.f32.mrb[0].mxu0
        %6091 = vmatprep.mubr.f32.mxu0 0.0
        %6092 = vmatmul.mubr.f32.gmra.mrb[0].mxu0 %v5878
        %v6093 = vpop.f32.mrb[0].mxu0
        %v6094 = vadd.f32 0.0, %v6093
        %v6095 = vpop.f32.mrb[0].mxu0
        %6096 = vmatprep.mubr.f32.mxu0 0.0
        %6097 = vmatmul.mubr.f32.gmra.mrb[0].mxu0 %v5879
        %v6098 = vpop.f32.mrb[0].mxu0
        %v6099 = vadd.f32 0.0, %v6098
        %v6100 = vpop.f32.mrb[0].mxu0
        %6101 = vmatprep.mubr.f32.mxu0 0.0
        %6102 = vmatmul.mubr.f32.gmra.mrb[0].mxu0 %v5880
        %v6103 = vpop.f32.mrb[0].mxu0
        %v6104 = vadd.f32 0.0, %v6103
        %v6105 = vpop.f32.mrb[0].mxu0
        %6106 = vmatprep.mubr.f32.mxu0 0.0
        %6107 = vmatmul.mubr.f32.gmra.mrb[0].mxu0 %v5881
        %v6108 = vpop.f32.mrb[0].mxu0
        %v6109 = vadd.f32 0.0, %v6108
        %v6110 = vpop.f32.mrb[0].mxu0
        %6111 = vmatprep.mubr.f32.mxu0 0.0
        %6112 = vmatmul.mubr.f32.gmra.mrb[0].mxu0 %v5882
        %v6113 = vpop.f32.mrb[0].mxu0
        %v6114 = vadd.f32 0.0, %v6113
        %v6115 = vpop.f32.mrb[0].mxu0
        %6116 = vmatprep.mubr.f32.mxu0 0.0
        %6117 = vmatmul.mubr.f32.gmra.mrb[0].mxu0 %v5883
        %v6118 = vpop.f32.mrb[0].mxu0
        %v6119 = vadd.f32 0.0, %v6118
        %v6120 = vpop.f32.mrb[0].mxu0
        %6121 = vmatprep.mubr.f32.mxu0 0.0
        %6122 = vmatmul.mubr.f32.gmra.mrb[0].mxu0 %v5884
        %v6123 = vpop.f32.mrb[0].mxu0
        %v6124 = vadd.f32 0.0, %v6123
        %v6125 = vpop.f32.mrb[0].mxu0
        %6126 = vdwg.mxu0
        %v6127 = vadd.f32 %v5821, %v5969
        %v6128 = vadd.f32 %v5822, %v5974
        %v6129 = vadd.f32 %v5823, %v5979
        %v6130 = vadd.f32 %v5824, %v5984
        %v6131 = vadd.f32 %v5825, %v5989
        %v6132 = vadd.f32 %v5826, %v5994
        %v6133 = vadd.f32 %v5827, %v5999
        %v6134 = vadd.f32 %v5828, %v6004
        %v6135 = vadd.f32 %v5829, %v6009
        %v6136 = vadd.f32 %v5830, %v6014
        %v6137 = vadd.f32 %v5831, %v6019
        %v6138 = vadd.f32 %v5832, %v6024
        %v6139 = vadd.f32 %v5833, %v6029
        %v6140 = vadd.f32 %v5834, %v6034
        %v6141 = vadd.f32 %v5835, %v6039
        %v6142 = vadd.f32 %v5836, %v6044
        %v6143 = vadd.f32 %v5837, %v6049
        %v6144 = vadd.f32 %v5838, %v6054
        %v6145 = vadd.f32 %v5839, %v6059
        %v6146 = vadd.f32 %v5840, %v6064
        %v6147 = vadd.f32 %v5841, %v6069
        %v6148 = vadd.f32 %v5842, %v6074
        %v6149 = vadd.f32 %v5843, %v6079
        %v6150 = vadd.f32 %v5844, %v6084
        %v6151 = vadd.f32 %v5845, %v6089
        %v6152 = vadd.f32 %v5846, %v6094
        %v6153 = vadd.f32 %v5847, %v6099
        %v6154 = vadd.f32 %v5848, %v6104
        %v6155 = vadd.f32 %v5849, %v6109
        %v6156 = vadd.f32 %v5850, %v6114
        %v6157 = vadd.f32 %v5851, %v6119
        %v6158 = vadd.f32 %v5852, %v6124
        %v6159 = vld [vmem:[%s4805 + $0x1] sm:$0xff]
        %v6160 = vld [vmem:[%s4805 + $0x9] sm:$0xff]
        %v6161 = vld [vmem:[%s4805 + $0x19] sm:$0xff]
        %v6162 = vld [vmem:[%s4805 + $0x21] sm:$0xff]
        %v6163 = vld [vmem:[%s4805 + $0x31] sm:$0xff]
        %v6164 = vld [vmem:[%s4805 + $0x39] sm:$0xff]
        %v6165 = vld [vmem:[%s4805 + $0x49] sm:$0xff]
        %v6166 = vld [vmem:[%s4805 + $0x51] sm:$0xff]
        %v6167 = vld [vmem:[%s4805 + $0x61] sm:$0xff]
        %v6168 = vld [vmem:[%s4805 + $0x69] sm:$0xff]
        %v6169 = vld [vmem:[%s4805 + $0x79] sm:$0xff]
        %v6170 = vld [vmem:[%s4805 + $0x81] sm:$0xff]
        %v6171 = vld [vmem:[%s4805 + $0x91] sm:$0xff]
        %v6172 = vld [vmem:[%s4805 + $0x99] sm:$0xff]
        %v6173 = vld [vmem:[%s4805 + $0xa9] sm:$0xff]
        %v6174 = vld [vmem:[%s4805 + $0xb1] sm:$0xff]
        %v6175 = vld [vmem:[%s4805 + $0xc1] sm:$0xff]
        %v6176 = vld [vmem:[%s4805 + $0xc9] sm:$0xff]
        %v6177 = vld [vmem:[%s4805 + $0xd9] sm:$0xff]
        %v6178 = vld [vmem:[%s4805 + $0xe1] sm:$0xff]
        %v6179 = vld [vmem:[%s4805 + $0xf1] sm:$0xff]
        %v6180 = vld [vmem:[%s4805 + $0xf9] sm:$0xff]
        %v6181 = vld [vmem:[%s4805 + $0x109] sm:$0xff]
        %v6182 = vld [vmem:[%s4805 + $0x111] sm:$0xff]
        %v6183 = vld [vmem:[%s4805 + $0x121] sm:$0xff]
        %v6184 = vld [vmem:[%s4805 + $0x129] sm:$0xff]
        %v6185 = vld [vmem:[%s4805 + $0x139] sm:$0xff]
        %v6186 = vld [vmem:[%s4805 + $0x141] sm:$0xff]
        %v6187 = vld [vmem:[%s4805 + $0x151] sm:$0xff]
        %v6188 = vld [vmem:[%s4805 + $0x159] sm:$0xff]
        %v6189 = vld [vmem:[%s4805 + $0x169] sm:$0xff]
        %v6190 = vld [vmem:[%s4805 + $0x171] sm:$0xff]
        %s6191 = scalar_lea.vmem %s8, 512
        %v6192 = vld [vmem:[%s6191] sm:$0xff]
        %v6193 = vld [vmem:[%s6191 + $0x8] sm:$0xff]
        %v6194 = vld [vmem:[%s6191 + $0x10] sm:$0xff]
        %v6195 = vld [vmem:[%s6191 + $0x18] sm:$0xff]
        %v6196 = vld [vmem:[%s6191 + $0x20] sm:$0xff]
        %v6197 = vld [vmem:[%s6191 + $0x28] sm:$0xff]
        %v6198 = vld [vmem:[%s6191 + $0x30] sm:$0xff]
        %v6199 = vld [vmem:[%s6191 + $0x38] sm:$0xff]
        %v6200 = vld [vmem:[%s6191 + $0x40] sm:$0xff]
        %v6201 = vld [vmem:[%s6191 + $0x48] sm:$0xff]
        %v6202 = vld [vmem:[%s6191 + $0x50] sm:$0xff]
        %v6203 = vld [vmem:[%s6191 + $0x58] sm:$0xff]
        %v6204 = vld [vmem:[%s6191 + $0x60] sm:$0xff]
        %v6205 = vld [vmem:[%s6191 + $0x68] sm:$0xff]
        %v6206 = vld [vmem:[%s6191 + $0x70] sm:$0xff]
        %v6207 = vld [vmem:[%s6191 + $0x78] sm:$0xff]
        %6208 = vmatprep.subr.mxu0 0.0
        %6209 = vmatpush1.msra.mxu0 %v6192
        %6210 = vmatprep.subr.mxu0 0.0
        %6211 = vmatpush1.msra.mxu0 %v6193
        %6212 = vmatprep.subr.mxu0 0.0
        %6213 = vmatpush1.msra.mxu0 %v6194
        %6214 = vmatprep.subr.mxu0 0.0
        %6215 = vmatpush1.msra.mxu0 %v6195
        %6216 = vmatprep.subr.mxu0 0.0
        %6217 = vmatpush1.msra.mxu0 %v6196
        %6218 = vmatprep.subr.mxu0 0.0
        %6219 = vmatpush1.msra.mxu0 %v6197
        %6220 = vmatprep.subr.mxu0 0.0
        %6221 = vmatpush1.msra.mxu0 %v6198
        %6222 = vmatprep.subr.mxu0 0.0
        %6223 = vmatpush1.msra.mxu0 %v6199
        %6224 = vmatprep.subr.mxu0 0.0
        %6225 = vmatpush1.msra.mxu0 %v6200
        %6226 = vmatprep.subr.mxu0 0.0
        %6227 = vmatpush1.msra.mxu0 %v6201
        %6228 = vmatprep.subr.mxu0 0.0
        %6229 = vmatpush1.msra.mxu0 %v6202
        %6230 = vmatprep.subr.mxu0 0.0
        %6231 = vmatpush1.msra.mxu0 %v6203
        %6232 = vmatprep.subr.mxu0 0.0
        %6233 = vmatpush1.msra.mxu0 %v6204
        %6234 = vmatprep.subr.mxu0 0.0
        %6235 = vmatpush1.msra.mxu0 %v6205
        %6236 = vmatprep.subr.mxu0 0.0
        %6237 = vmatpush1.msra.mxu0 %v6206
        %6238 = vmatprep.subr.mxu0 0.0
        %6239 = vmatpush1.msra.mxu0 %v6207
        %6240 = vmatprep.subr.mxu0 0.0
        %6241 = vmatpush1.msra.mxu0 0.0
        %6242 = vmatprep.subr.mxu0 0.0
        %6243 = vmatpush1.msra.mxu0 0.0
        %6244 = vmatprep.subr.mxu0 0.0
        %6245 = vmatpush1.msra.mxu0 0.0
        %6246 = vmatprep.subr.mxu0 0.0
        %6247 = vmatpush1.msra.mxu0 0.0
        %6248 = vmatprep.subr.mxu0 0.0
        %6249 = vmatpush1.msra.mxu0 0.0
        %6250 = vmatprep.subr.mxu0 0.0
        %6251 = vmatpush1.msra.mxu0 0.0
        %6252 = vmatprep.subr.mxu0 0.0
        %6253 = vmatpush1.msra.mxu0 0.0
        %6254 = vmatprep.subr.mxu0 0.0
        %6255 = vmatpush1.msra.mxu0 0.0
        %6256 = vmatprep.subr.mxu0 0.0
        %6257 = vmatpush1.msra.mxu0 0.0
        %6258 = vmatprep.subr.mxu0 0.0
        %6259 = vmatpush1.msra.mxu0 0.0
        %6260 = vmatprep.subr.mxu0 0.0
        %6261 = vmatpush1.msra.mxu0 0.0
        %6262 = vmatprep.subr.mxu0 0.0
        %6263 = vmatpush1.msra.mxu0 0.0
        %6264 = vmatprep.subr.mxu0 0.0
        %6265 = vmatpush1.msra.mxu0 0.0
        %6266 = vmatprep.subr.mxu0 0.0
        %6267 = vmatpush1.msra.mxu0 0.0
        %6268 = vmatprep.subr.mxu0 0.0
        %6269 = vmatpush1.msra.mxu0 0.0
        %6270 = vmatprep.subr.mxu0 0.0
        %6271 = vmatpush1.msra.mxu0 0.0
        %6272 = vmatprep.mubr.f32.mxu0 0.0
        %6273 = vmatmul.mubr.f32.gmra.mrb[0].mxu0 %v6159
        %v6274 = vpop.f32.mrb[0].mxu0
        %v6275 = vadd.f32 0.0, %v6274
        %v6276 = vpop.f32.mrb[0].mxu0
        %6277 = vmatprep.mubr.f32.mxu0 0.0
        %6278 = vmatmul.mubr.f32.gmra.mrb[0].mxu0 %v6160
        %v6279 = vpop.f32.mrb[0].mxu0
        %v6280 = vadd.f32 0.0, %v6279
        %v6281 = vpop.f32.mrb[0].mxu0
        %6282 = vmatprep.mubr.f32.mxu0 0.0
        %6283 = vmatmul.mubr.f32.gmra.mrb[0].mxu0 %v6161
        %v6284 = vpop.f32.mrb[0].mxu0
        %v6285 = vadd.f32 0.0, %v6284
        %v6286 = vpop.f32.mrb[0].mxu0
        %6287 = vmatprep.mubr.f32.mxu0 0.0
        %6288 = vmatmul.mubr.f32.gmra.mrb[0].mxu0 %v6162
        %v6289 = vpop.f32.mrb[0].mxu0
        %v6290 = vadd.f32 0.0, %v6289
        %v6291 = vpop.f32.mrb[0].mxu0
        %6292 = vmatprep.mubr.f32.mxu0 0.0
        %6293 = vmatmul.mubr.f32.gmra.mrb[0].mxu0 %v6163
        %v6294 = vpop.f32.mrb[0].mxu0
        %v6295 = vadd.f32 0.0, %v6294
        %v6296 = vpop.f32.mrb[0].mxu0
        %6297 = vmatprep.mubr.f32.mxu0 0.0
        %6298 = vmatmul.mubr.f32.gmra.mrb[0].mxu0 %v6164
        %v6299 = vpop.f32.mrb[0].mxu0
        %v6300 = vadd.f32 0.0, %v6299
        %v6301 = vpop.f32.mrb[0].mxu0
        %6302 = vmatprep.mubr.f32.mxu0 0.0
        %6303 = vmatmul.mubr.f32.gmra.mrb[0].mxu0 %v6165
        %v6304 = vpop.f32.mrb[0].mxu0
        %v6305 = vadd.f32 0.0, %v6304
        %v6306 = vpop.f32.mrb[0].mxu0
        %6307 = vmatprep.mubr.f32.mxu0 0.0
        %6308 = vmatmul.mubr.f32.gmra.mrb[0].mxu0 %v6166
        %v6309 = vpop.f32.mrb[0].mxu0
        %v6310 = vadd.f32 0.0, %v6309
        %v6311 = vpop.f32.mrb[0].mxu0
        %6312 = vmatprep.mubr.f32.mxu0 0.0
        %6313 = vmatmul.mubr.f32.gmra.mrb[0].mxu0 %v6167
        %v6314 = vpop.f32.mrb[0].mxu0
        %v6315 = vadd.f32 0.0, %v6314
        %v6316 = vpop.f32.mrb[0].mxu0
        %6317 = vmatprep.mubr.f32.mxu0 0.0
        %6318 = vmatmul.mubr.f32.gmra.mrb[0].mxu0 %v6168
        %v6319 = vpop.f32.mrb[0].mxu0
        %v6320 = vadd.f32 0.0, %v6319
        %v6321 = vpop.f32.mrb[0].mxu0
        %6322 = vmatprep.mubr.f32.mxu0 0.0
        %6323 = vmatmul.mubr.f32.gmra.mrb[0].mxu0 %v6169
        %v6324 = vpop.f32.mrb[0].mxu0
        %v6325 = vadd.f32 0.0, %v6324
        %v6326 = vpop.f32.mrb[0].mxu0
        %6327 = vmatprep.mubr.f32.mxu0 0.0
        %6328 = vmatmul.mubr.f32.gmra.mrb[0].mxu0 %v6170
        %v6329 = vpop.f32.mrb[0].mxu0
        %v6330 = vadd.f32 0.0, %v6329
        %v6331 = vpop.f32.mrb[0].mxu0
        %6332 = vmatprep.mubr.f32.mxu0 0.0
        %6333 = vmatmul.mubr.f32.gmra.mrb[0].mxu0 %v6171
        %v6334 = vpop.f32.mrb[0].mxu0
        %v6335 = vadd.f32 0.0, %v6334
        %v6336 = vpop.f32.mrb[0].mxu0
        %6337 = vmatprep.mubr.f32.mxu0 0.0
        %6338 = vmatmul.mubr.f32.gmra.mrb[0].mxu0 %v6172
        %v6339 = vpop.f32.mrb[0].mxu0
        %v6340 = vadd.f32 0.0, %v6339
        %v6341 = vpop.f32.mrb[0].mxu0
        %6342 = vmatprep.mubr.f32.mxu0 0.0
        %6343 = vmatmul.mubr.f32.gmra.mrb[0].mxu0 %v6173
        %v6344 = vpop.f32.mrb[0].mxu0
        %v6345 = vadd.f32 0.0, %v6344
        %v6346 = vpop.f32.mrb[0].mxu0
        %6347 = vmatprep.mubr.f32.mxu0 0.0
        %6348 = vmatmul.mubr.f32.gmra.mrb[0].mxu0 %v6174
        %v6349 = vpop.f32.mrb[0].mxu0
        %v6350 = vadd.f32 0.0, %v6349
        %v6351 = vpop.f32.mrb[0].mxu0
        %6352 = vmatprep.mubr.f32.mxu0 0.0
        %6353 = vmatmul.mubr.f32.gmra.mrb[0].mxu0 %v6175
        %v6354 = vpop.f32.mrb[0].mxu0
        %v6355 = vadd.f32 0.0, %v6354
        %v6356 = vpop.f32.mrb[0].mxu0
        %6357 = vmatprep.mubr.f32.mxu0 0.0
        %6358 = vmatmul.mubr.f32.gmra.mrb[0].mxu0 %v6176
        %v6359 = vpop.f32.mrb[0].mxu0
        %v6360 = vadd.f32 0.0, %v6359
        %v6361 = vpop.f32.mrb[0].mxu0
        %6362 = vmatprep.mubr.f32.mxu0 0.0
        %6363 = vmatmul.mubr.f32.gmra.mrb[0].mxu0 %v6177
        %v6364 = vpop.f32.mrb[0].mxu0
        %v6365 = vadd.f32 0.0, %v6364
        %v6366 = vpop.f32.mrb[0].mxu0
        %6367 = vmatprep.mubr.f32.mxu0 0.0
        %6368 = vmatmul.mubr.f32.gmra.mrb[0].mxu0 %v6178
        %v6369 = vpop.f32.mrb[0].mxu0
        %v6370 = vadd.f32 0.0, %v6369
        %v6371 = vpop.f32.mrb[0].mxu0
        %6372 = vmatprep.mubr.f32.mxu0 0.0
        %6373 = vmatmul.mubr.f32.gmra.mrb[0].mxu0 %v6179
        %v6374 = vpop.f32.mrb[0].mxu0
        %v6375 = vadd.f32 0.0, %v6374
        %v6376 = vpop.f32.mrb[0].mxu0
        %6377 = vmatprep.mubr.f32.mxu0 0.0
        %6378 = vmatmul.mubr.f32.gmra.mrb[0].mxu0 %v6180
        %v6379 = vpop.f32.mrb[0].mxu0
        %v6380 = vadd.f32 0.0, %v6379
        %v6381 = vpop.f32.mrb[0].mxu0
        %6382 = vmatprep.mubr.f32.mxu0 0.0
        %6383 = vmatmul.mubr.f32.gmra.mrb[0].mxu0 %v6181
        %v6384 = vpop.f32.mrb[0].mxu0
        %v6385 = vadd.f32 0.0, %v6384
        %v6386 = vpop.f32.mrb[0].mxu0
        %6387 = vmatprep.mubr.f32.mxu0 0.0
        %6388 = vmatmul.mubr.f32.gmra.mrb[0].mxu0 %v6182
        %v6389 = vpop.f32.mrb[0].mxu0
        %v6390 = vadd.f32 0.0, %v6389
        %v6391 = vpop.f32.mrb[0].mxu0
        %6392 = vmatprep.mubr.f32.mxu0 0.0
        %6393 = vmatmul.mubr.f32.gmra.mrb[0].mxu0 %v6183
        %v6394 = vpop.f32.mrb[0].mxu0
        %v6395 = vadd.f32 0.0, %v6394
        %v6396 = vpop.f32.mrb[0].mxu0
        %6397 = vmatprep.mubr.f32.mxu0 0.0
        %6398 = vmatmul.mubr.f32.gmra.mrb[0].mxu0 %v6184
        %v6399 = vpop.f32.mrb[0].mxu0
        %v6400 = vadd.f32 0.0, %v6399
        %v6401 = vpop.f32.mrb[0].mxu0
        %6402 = vmatprep.mubr.f32.mxu0 0.0
        %6403 = vmatmul.mubr.f32.gmra.mrb[0].mxu0 %v6185
        %v6404 = vpop.f32.mrb[0].mxu0
        %v6405 = vadd.f32 0.0, %v6404
        %v6406 = vpop.f32.mrb[0].mxu0
        %6407 = vmatprep.mubr.f32.mxu0 0.0
        %6408 = vmatmul.mubr.f32.gmra.mrb[0].mxu0 %v6186
        %v6409 = vpop.f32.mrb[0].mxu0
        %v6410 = vadd.f32 0.0, %v6409
        %v6411 = vpop.f32.mrb[0].mxu0
        %6412 = vmatprep.mubr.f32.mxu0 0.0
        %6413 = vmatmul.mubr.f32.gmra.mrb[0].mxu0 %v6187
        %v6414 = vpop.f32.mrb[0].mxu0
        %v6415 = vadd.f32 0.0, %v6414
        %v6416 = vpop.f32.mrb[0].mxu0
        %6417 = vmatprep.mubr.f32.mxu0 0.0
        %6418 = vmatmul.mubr.f32.gmra.mrb[0].mxu0 %v6188
        %v6419 = vpop.f32.mrb[0].mxu0
        %v6420 = vadd.f32 0.0, %v6419
        %v6421 = vpop.f32.mrb[0].mxu0
        %6422 = vmatprep.mubr.f32.mxu0 0.0
        %6423 = vmatmul.mubr.f32.gmra.mrb[0].mxu0 %v6189
        %v6424 = vpop.f32.mrb[0].mxu0
        %v6425 = vadd.f32 0.0, %v6424
        %v6426 = vpop.f32.mrb[0].mxu0
        %6427 = vmatprep.mubr.f32.mxu0 0.0
        %6428 = vmatmul.mubr.f32.gmra.mrb[0].mxu0 %v6190
        %v6429 = vpop.f32.mrb[0].mxu0
        %v6430 = vadd.f32 0.0, %v6429
        %v6431 = vpop.f32.mrb[0].mxu0
        %6432 = vdwg.mxu0
        %v6433 = vadd.f32 %v6127, %v6275
        %v6434 = vadd.f32 %v6128, %v6280
        %v6435 = vadd.f32 %v6129, %v6285
        %v6436 = vadd.f32 %v6130, %v6290
        %v6437 = vadd.f32 %v6131, %v6295
        %v6438 = vadd.f32 %v6132, %v6300
        %v6439 = vadd.f32 %v6133, %v6305
        %v6440 = vadd.f32 %v6134, %v6310
        %v6441 = vadd.f32 %v6135, %v6315
        %v6442 = vadd.f32 %v6136, %v6320
        %v6443 = vadd.f32 %v6137, %v6325
        %v6444 = vadd.f32 %v6138, %v6330
        %v6445 = vadd.f32 %v6139, %v6335
        %v6446 = vadd.f32 %v6140, %v6340
        %v6447 = vadd.f32 %v6141, %v6345
        %v6448 = vadd.f32 %v6142, %v6350
        %v6449 = vadd.f32 %v6143, %v6355
        %v6450 = vadd.f32 %v6144, %v6360
        %v6451 = vadd.f32 %v6145, %v6365
        %v6452 = vadd.f32 %v6146, %v6370
        %v6453 = vadd.f32 %v6147, %v6375
        %v6454 = vadd.f32 %v6148, %v6380
        %v6455 = vadd.f32 %v6149, %v6385
        %v6456 = vadd.f32 %v6150, %v6390
        %v6457 = vadd.f32 %v6151, %v6395
        %v6458 = vadd.f32 %v6152, %v6400
        %v6459 = vadd.f32 %v6153, %v6405
        %v6460 = vadd.f32 %v6154, %v6410
        %v6461 = vadd.f32 %v6155, %v6415
        %v6462 = vadd.f32 %v6156, %v6420
        %v6463 = vadd.f32 %v6157, %v6425
        %v6464 = vadd.f32 %v6158, %v6430
        %v6465 = vld [vmem:[%s4805 + $0x2] sm:$0xff]
        %v6466 = vld [vmem:[%s4805 + $0xa] sm:$0xff]
        %v6467 = vld [vmem:[%s4805 + $0x1a] sm:$0xff]
        %v6468 = vld [vmem:[%s4805 + $0x22] sm:$0xff]
        %v6469 = vld [vmem:[%s4805 + $0x32] sm:$0xff]
        %v6470 = vld [vmem:[%s4805 + $0x3a] sm:$0xff]
        %v6471 = vld [vmem:[%s4805 + $0x4a] sm:$0xff]
        %v6472 = vld [vmem:[%s4805 + $0x52] sm:$0xff]
        %v6473 = vld [vmem:[%s4805 + $0x62] sm:$0xff]
        %v6474 = vld [vmem:[%s4805 + $0x6a] sm:$0xff]
        %v6475 = vld [vmem:[%s4805 + $0x7a] sm:$0xff]
        %v6476 = vld [vmem:[%s4805 + $0x82] sm:$0xff]
        %v6477 = vld [vmem:[%s4805 + $0x92] sm:$0xff]
        %v6478 = vld [vmem:[%s4805 + $0x9a] sm:$0xff]
        %v6479 = vld [vmem:[%s4805 + $0xaa] sm:$0xff]
        %v6480 = vld [vmem:[%s4805 + $0xb2] sm:$0xff]
        %v6481 = vld [vmem:[%s4805 + $0xc2] sm:$0xff]
        %v6482 = vld [vmem:[%s4805 + $0xca] sm:$0xff]
        %v6483 = vld [vmem:[%s4805 + $0xda] sm:$0xff]
        %v6484 = vld [vmem:[%s4805 + $0xe2] sm:$0xff]
        %v6485 = vld [vmem:[%s4805 + $0xf2] sm:$0xff]
        %v6486 = vld [vmem:[%s4805 + $0xfa] sm:$0xff]
        %v6487 = vld [vmem:[%s4805 + $0x10a] sm:$0xff]
        %v6488 = vld [vmem:[%s4805 + $0x112] sm:$0xff]
        %v6489 = vld [vmem:[%s4805 + $0x122] sm:$0xff]
        %v6490 = vld [vmem:[%s4805 + $0x12a] sm:$0xff]
        %v6491 = vld [vmem:[%s4805 + $0x13a] sm:$0xff]
        %v6492 = vld [vmem:[%s4805 + $0x142] sm:$0xff]
        %v6493 = vld [vmem:[%s4805 + $0x152] sm:$0xff]
        %v6494 = vld [vmem:[%s4805 + $0x15a] sm:$0xff]
        %v6495 = vld [vmem:[%s4805 + $0x16a] sm:$0xff]
        %v6496 = vld [vmem:[%s4805 + $0x172] sm:$0xff]
        %s6497 = scalar_lea.vmem %s8, 640
        %v6498 = vld [vmem:[%s6497] sm:$0xff]
        %v6499 = vld [vmem:[%s6497 + $0x8] sm:$0xff]
        %v6500 = vld [vmem:[%s6497 + $0x10] sm:$0xff]
        %v6501 = vld [vmem:[%s6497 + $0x18] sm:$0xff]
        %v6502 = vld [vmem:[%s6497 + $0x20] sm:$0xff]
        %v6503 = vld [vmem:[%s6497 + $0x28] sm:$0xff]
        %v6504 = vld [vmem:[%s6497 + $0x30] sm:$0xff]
        %v6505 = vld [vmem:[%s6497 + $0x38] sm:$0xff]
        %v6506 = vld [vmem:[%s6497 + $0x40] sm:$0xff]
        %v6507 = vld [vmem:[%s6497 + $0x48] sm:$0xff]
        %v6508 = vld [vmem:[%s6497 + $0x50] sm:$0xff]
        %v6509 = vld [vmem:[%s6497 + $0x58] sm:$0xff]
        %v6510 = vld [vmem:[%s6497 + $0x60] sm:$0xff]
        %v6511 = vld [vmem:[%s6497 + $0x68] sm:$0xff]
        %v6512 = vld [vmem:[%s6497 + $0x70] sm:$0xff]
        %v6513 = vld [vmem:[%s6497 + $0x78] sm:$0xff]
        %6514 = vmatprep.subr.mxu0 0.0
        %6515 = vmatpush1.msra.mxu0 %v6498
        %6516 = vmatprep.subr.mxu0 0.0
        %6517 = vmatpush1.msra.mxu0 %v6499
        %6518 = vmatprep.subr.mxu0 0.0
        %6519 = vmatpush1.msra.mxu0 %v6500
        %6520 = vmatprep.subr.mxu0 0.0
        %6521 = vmatpush1.msra.mxu0 %v6501
        %6522 = vmatprep.subr.mxu0 0.0
        %6523 = vmatpush1.msra.mxu0 %v6502
        %6524 = vmatprep.subr.mxu0 0.0
        %6525 = vmatpush1.msra.mxu0 %v6503
        %6526 = vmatprep.subr.mxu0 0.0
        %6527 = vmatpush1.msra.mxu0 %v6504
        %6528 = vmatprep.subr.mxu0 0.0
        %6529 = vmatpush1.msra.mxu0 %v6505
        %6530 = vmatprep.subr.mxu0 0.0
        %6531 = vmatpush1.msra.mxu0 %v6506
        %6532 = vmatprep.subr.mxu0 0.0
        %6533 = vmatpush1.msra.mxu0 %v6507
        %6534 = vmatprep.subr.mxu0 0.0
        %6535 = vmatpush1.msra.mxu0 %v6508
        %6536 = vmatprep.subr.mxu0 0.0
        %6537 = vmatpush1.msra.mxu0 %v6509
        %6538 = vmatprep.subr.mxu0 0.0
        %6539 = vmatpush1.msra.mxu0 %v6510
        %6540 = vmatprep.subr.mxu0 0.0
        %6541 = vmatpush1.msra.mxu0 %v6511
        %6542 = vmatprep.subr.mxu0 0.0
        %6543 = vmatpush1.msra.mxu0 %v6512
        %6544 = vmatprep.subr.mxu0 0.0
        %6545 = vmatpush1.msra.mxu0 %v6513
        %6546 = vmatprep.subr.mxu0 0.0
        %6547 = vmatpush1.msra.mxu0 0.0
        %6548 = vmatprep.subr.mxu0 0.0
        %6549 = vmatpush1.msra.mxu0 0.0
        %6550 = vmatprep.subr.mxu0 0.0
        %6551 = vmatpush1.msra.mxu0 0.0
        %6552 = vmatprep.subr.mxu0 0.0
        %6553 = vmatpush1.msra.mxu0 0.0
        %6554 = vmatprep.subr.mxu0 0.0
        %6555 = vmatpush1.msra.mxu0 0.0
        %6556 = vmatprep.subr.mxu0 0.0
        %6557 = vmatpush1.msra.mxu0 0.0
        %6558 = vmatprep.subr.mxu0 0.0
        %6559 = vmatpush1.msra.mxu0 0.0
        %6560 = vmatprep.subr.mxu0 0.0
        %6561 = vmatpush1.msra.mxu0 0.0
        %6562 = vmatprep.subr.mxu0 0.0
        %6563 = vmatpush1.msra.mxu0 0.0
        %6564 = vmatprep.subr.mxu0 0.0
        %6565 = vmatpush1.msra.mxu0 0.0
        %6566 = vmatprep.subr.mxu0 0.0
        %6567 = vmatpush1.msra.mxu0 0.0
        %6568 = vmatprep.subr.mxu0 0.0
        %6569 = vmatpush1.msra.mxu0 0.0
        %6570 = vmatprep.subr.mxu0 0.0
        %6571 = vmatpush1.msra.mxu0 0.0
        %6572 = vmatprep.subr.mxu0 0.0
        %6573 = vmatpush1.msra.mxu0 0.0
        %6574 = vmatprep.subr.mxu0 0.0
        %6575 = vmatpush1.msra.mxu0 0.0
        %6576 = vmatprep.subr.mxu0 0.0
        %6577 = vmatpush1.msra.mxu0 0.0
        %6578 = vmatprep.mubr.f32.mxu0 0.0
        %6579 = vmatmul.mubr.f32.gmra.mrb[0].mxu0 %v6465
        %v6580 = vpop.f32.mrb[0].mxu0
        %v6581 = vadd.f32 0.0, %v6580
        %v6582 = vpop.f32.mrb[0].mxu0
        %6583 = vmatprep.mubr.f32.mxu0 0.0
        %6584 = vmatmul.mubr.f32.gmra.mrb[0].mxu0 %v6466
        %v6585 = vpop.f32.mrb[0].mxu0
        %v6586 = vadd.f32 0.0, %v6585
        %v6587 = vpop.f32.mrb[0].mxu0
        %6588 = vmatprep.mubr.f32.mxu0 0.0
        %6589 = vmatmul.mubr.f32.gmra.mrb[0].mxu0 %v6467
        %v6590 = vpop.f32.mrb[0].mxu0
        %v6591 = vadd.f32 0.0, %v6590
        %v6592 = vpop.f32.mrb[0].mxu0
        %6593 = vmatprep.mubr.f32.mxu0 0.0
        %6594 = vmatmul.mubr.f32.gmra.mrb[0].mxu0 %v6468
        %v6595 = vpop.f32.mrb[0].mxu0
        %v6596 = vadd.f32 0.0, %v6595
        %v6597 = vpop.f32.mrb[0].mxu0
        %6598 = vmatprep.mubr.f32.mxu0 0.0
        %6599 = vmatmul.mubr.f32.gmra.mrb[0].mxu0 %v6469
        %v6600 = vpop.f32.mrb[0].mxu0
        %v6601 = vadd.f32 0.0, %v6600
        %v6602 = vpop.f32.mrb[0].mxu0
        %6603 = vmatprep.mubr.f32.mxu0 0.0
        %6604 = vmatmul.mubr.f32.gmra.mrb[0].mxu0 %v6470
        %v6605 = vpop.f32.mrb[0].mxu0
        %v6606 = vadd.f32 0.0, %v6605
        %v6607 = vpop.f32.mrb[0].mxu0
        %6608 = vmatprep.mubr.f32.mxu0 0.0
        %6609 = vmatmul.mubr.f32.gmra.mrb[0].mxu0 %v6471
        %v6610 = vpop.f32.mrb[0].mxu0
        %v6611 = vadd.f32 0.0, %v6610
        %v6612 = vpop.f32.mrb[0].mxu0
        %6613 = vmatprep.mubr.f32.mxu0 0.0
        %6614 = vmatmul.mubr.f32.gmra.mrb[0].mxu0 %v6472
        %v6615 = vpop.f32.mrb[0].mxu0
        %v6616 = vadd.f32 0.0, %v6615
        %v6617 = vpop.f32.mrb[0].mxu0
        %6618 = vmatprep.mubr.f32.mxu0 0.0
        %6619 = vmatmul.mubr.f32.gmra.mrb[0].mxu0 %v6473
        %v6620 = vpop.f32.mrb[0].mxu0
        %v6621 = vadd.f32 0.0, %v6620
        %v6622 = vpop.f32.mrb[0].mxu0
        %6623 = vmatprep.mubr.f32.mxu0 0.0
        %6624 = vmatmul.mubr.f32.gmra.mrb[0].mxu0 %v6474
        %v6625 = vpop.f32.mrb[0].mxu0
        %v6626 = vadd.f32 0.0, %v6625
        %v6627 = vpop.f32.mrb[0].mxu0
        %6628 = vmatprep.mubr.f32.mxu0 0.0
        %6629 = vmatmul.mubr.f32.gmra.mrb[0].mxu0 %v6475
        %v6630 = vpop.f32.mrb[0].mxu0
        %v6631 = vadd.f32 0.0, %v6630
        %v6632 = vpop.f32.mrb[0].mxu0
        %6633 = vmatprep.mubr.f32.mxu0 0.0
        %6634 = vmatmul.mubr.f32.gmra.mrb[0].mxu0 %v6476
        %v6635 = vpop.f32.mrb[0].mxu0
        %v6636 = vadd.f32 0.0, %v6635
        %v6637 = vpop.f32.mrb[0].mxu0
        %6638 = vmatprep.mubr.f32.mxu0 0.0
        %6639 = vmatmul.mubr.f32.gmra.mrb[0].mxu0 %v6477
        %v6640 = vpop.f32.mrb[0].mxu0
        %v6641 = vadd.f32 0.0, %v6640
        %v6642 = vpop.f32.mrb[0].mxu0
        %6643 = vmatprep.mubr.f32.mxu0 0.0
        %6644 = vmatmul.mubr.f32.gmra.mrb[0].mxu0 %v6478
        %v6645 = vpop.f32.mrb[0].mxu0
        %v6646 = vadd.f32 0.0, %v6645
        %v6647 = vpop.f32.mrb[0].mxu0
        %6648 = vmatprep.mubr.f32.mxu0 0.0
        %6649 = vmatmul.mubr.f32.gmra.mrb[0].mxu0 %v6479
        %v6650 = vpop.f32.mrb[0].mxu0
        %v6651 = vadd.f32 0.0, %v6650
        %v6652 = vpop.f32.mrb[0].mxu0
        %6653 = vmatprep.mubr.f32.mxu0 0.0
        %6654 = vmatmul.mubr.f32.gmra.mrb[0].mxu0 %v6480
        %v6655 = vpop.f32.mrb[0].mxu0
        %v6656 = vadd.f32 0.0, %v6655
        %v6657 = vpop.f32.mrb[0].mxu0
        %6658 = vmatprep.mubr.f32.mxu0 0.0
        %6659 = vmatmul.mubr.f32.gmra.mrb[0].mxu0 %v6481
        %v6660 = vpop.f32.mrb[0].mxu0
        %v6661 = vadd.f32 0.0, %v6660
        %v6662 = vpop.f32.mrb[0].mxu0
        %6663 = vmatprep.mubr.f32.mxu0 0.0
        %6664 = vmatmul.mubr.f32.gmra.mrb[0].mxu0 %v6482
        %v6665 = vpop.f32.mrb[0].mxu0
        %v6666 = vadd.f32 0.0, %v6665
        %v6667 = vpop.f32.mrb[0].mxu0
        %6668 = vmatprep.mubr.f32.mxu0 0.0
        %6669 = vmatmul.mubr.f32.gmra.mrb[0].mxu0 %v6483
        %v6670 = vpop.f32.mrb[0].mxu0
        %v6671 = vadd.f32 0.0, %v6670
        %v6672 = vpop.f32.mrb[0].mxu0
        %6673 = vmatprep.mubr.f32.mxu0 0.0
        %6674 = vmatmul.mubr.f32.gmra.mrb[0].mxu0 %v6484
        %v6675 = vpop.f32.mrb[0].mxu0
        %v6676 = vadd.f32 0.0, %v6675
        %v6677 = vpop.f32.mrb[0].mxu0
        %6678 = vmatprep.mubr.f32.mxu0 0.0
        %6679 = vmatmul.mubr.f32.gmra.mrb[0].mxu0 %v6485
        %v6680 = vpop.f32.mrb[0].mxu0
        %v6681 = vadd.f32 0.0, %v6680
        %v6682 = vpop.f32.mrb[0].mxu0
        %6683 = vmatprep.mubr.f32.mxu0 0.0
        %6684 = vmatmul.mubr.f32.gmra.mrb[0].mxu0 %v6486
        %v6685 = vpop.f32.mrb[0].mxu0
        %v6686 = vadd.f32 0.0, %v6685
        %v6687 = vpop.f32.mrb[0].mxu0
        %6688 = vmatprep.mubr.f32.mxu0 0.0
        %6689 = vmatmul.mubr.f32.gmra.mrb[0].mxu0 %v6487
        %v6690 = vpop.f32.mrb[0].mxu0
        %v6691 = vadd.f32 0.0, %v6690
        %v6692 = vpop.f32.mrb[0].mxu0
        %6693 = vmatprep.mubr.f32.mxu0 0.0
        %6694 = vmatmul.mubr.f32.gmra.mrb[0].mxu0 %v6488
        %v6695 = vpop.f32.mrb[0].mxu0
        %v6696 = vadd.f32 0.0, %v6695
        %v6697 = vpop.f32.mrb[0].mxu0
        %6698 = vmatprep.mubr.f32.mxu0 0.0
        %6699 = vmatmul.mubr.f32.gmra.mrb[0].mxu0 %v6489
        %v6700 = vpop.f32.mrb[0].mxu0
        %v6701 = vadd.f32 0.0, %v6700
        %v6702 = vpop.f32.mrb[0].mxu0
        %6703 = vmatprep.mubr.f32.mxu0 0.0
        %6704 = vmatmul.mubr.f32.gmra.mrb[0].mxu0 %v6490
        %v6705 = vpop.f32.mrb[0].mxu0
        %v6706 = vadd.f32 0.0, %v6705
        %v6707 = vpop.f32.mrb[0].mxu0
        %6708 = vmatprep.mubr.f32.mxu0 0.0
        %6709 = vmatmul.mubr.f32.gmra.mrb[0].mxu0 %v6491
        %v6710 = vpop.f32.mrb[0].mxu0
        %v6711 = vadd.f32 0.0, %v6710
        %v6712 = vpop.f32.mrb[0].mxu0
        %6713 = vmatprep.mubr.f32.mxu0 0.0
        %6714 = vmatmul.mubr.f32.gmra.mrb[0].mxu0 %v6492
        %v6715 = vpop.f32.mrb[0].mxu0
        %v6716 = vadd.f32 0.0, %v6715
        %v6717 = vpop.f32.mrb[0].mxu0
        %6718 = vmatprep.mubr.f32.mxu0 0.0
        %6719 = vmatmul.mubr.f32.gmra.mrb[0].mxu0 %v6493
        %v6720 = vpop.f32.mrb[0].mxu0
        %v6721 = vadd.f32 0.0, %v6720
        %v6722 = vpop.f32.mrb[0].mxu0
        %6723 = vmatprep.mubr.f32.mxu0 0.0
        %6724 = vmatmul.mubr.f32.gmra.mrb[0].mxu0 %v6494
        %v6725 = vpop.f32.mrb[0].mxu0
        %v6726 = vadd.f32 0.0, %v6725
        %v6727 = vpop.f32.mrb[0].mxu0
        %6728 = vmatprep.mubr.f32.mxu0 0.0
        %6729 = vmatmul.mubr.f32.gmra.mrb[0].mxu0 %v6495
        %v6730 = vpop.f32.mrb[0].mxu0
        %v6731 = vadd.f32 0.0, %v6730
        %v6732 = vpop.f32.mrb[0].mxu0
        %6733 = vmatprep.mubr.f32.mxu0 0.0
        %6734 = vmatmul.mubr.f32.gmra.mrb[0].mxu0 %v6496
        %v6735 = vpop.f32.mrb[0].mxu0
        %v6736 = vadd.f32 0.0, %v6735
        %v6737 = vpop.f32.mrb[0].mxu0
        %6738 = vdwg.mxu0
        %v6739 = vadd.f32 %v6433, %v6581
        %v6740 = vadd.f32 %v6434, %v6586
        %v6741 = vadd.f32 %v6435, %v6591
        %v6742 = vadd.f32 %v6436, %v6596
        %v6743 = vadd.f32 %v6437, %v6601
        %v6744 = vadd.f32 %v6438, %v6606
        %v6745 = vadd.f32 %v6439, %v6611
        %v6746 = vadd.f32 %v6440, %v6616
        %v6747 = vadd.f32 %v6441, %v6621
        %v6748 = vadd.f32 %v6442, %v6626
        %v6749 = vadd.f32 %v6443, %v6631
        %v6750 = vadd.f32 %v6444, %v6636
        %v6751 = vadd.f32 %v6445, %v6641
        %v6752 = vadd.f32 %v6446, %v6646
        %v6753 = vadd.f32 %v6447, %v6651
        %v6754 = vadd.f32 %v6448, %v6656
        %v6755 = vadd.f32 %v6449, %v6661
        %v6756 = vadd.f32 %v6450, %v6666
        %v6757 = vadd.f32 %v6451, %v6671
        %v6758 = vadd.f32 %v6452, %v6676
        %v6759 = vadd.f32 %v6453, %v6681
        %v6760 = vadd.f32 %v6454, %v6686
        %v6761 = vadd.f32 %v6455, %v6691
        %v6762 = vadd.f32 %v6456, %v6696
        %v6763 = vadd.f32 %v6457, %v6701
        %v6764 = vadd.f32 %v6458, %v6706
        %v6765 = vadd.f32 %v6459, %v6711
        %v6766 = vadd.f32 %v6460, %v6716
        %v6767 = vadd.f32 %v6461, %v6721
        %v6768 = vadd.f32 %v6462, %v6726
        %v6769 = vadd.f32 %v6463, %v6731
        %v6770 = vadd.f32 %v6464, %v6736
        %s6771 = scalar_lea.vmem [#allocation3], 48
        %v6772 = vld [vmem:[%s6771] sm:$0xff]
        %v6773 = vld [vmem:[%s6771 + $0x8] sm:$0xff]
        %v6774 = vld [vmem:[%s6771 + $0x18] sm:$0xff]
        %v6775 = vld [vmem:[%s6771 + $0x20] sm:$0xff]
        %v6776 = vld [vmem:[%s6771 + $0x30] sm:$0xff]
        %v6777 = vld [vmem:[%s6771 + $0x38] sm:$0xff]
        %v6778 = vld [vmem:[%s6771 + $0x48] sm:$0xff]
        %v6779 = vld [vmem:[%s6771 + $0x50] sm:$0xff]
        %v6780 = vld [vmem:[%s6771 + $0x60] sm:$0xff]
        %v6781 = vld [vmem:[%s6771 + $0x68] sm:$0xff]
        %v6782 = vld [vmem:[%s6771 + $0x78] sm:$0xff]
        %v6783 = vld [vmem:[%s6771 + $0x80] sm:$0xff]
        %v6784 = vld [vmem:[%s6771 + $0x90] sm:$0xff]
        %v6785 = vld [vmem:[%s6771 + $0x98] sm:$0xff]
        %v6786 = vld [vmem:[%s6771 + $0xa8] sm:$0xff]
        %v6787 = vld [vmem:[%s6771 + $0xb0] sm:$0xff]
        %v6788 = vld [vmem:[%s6771 + $0xc0] sm:$0xff]
        %v6789 = vld [vmem:[%s6771 + $0xc8] sm:$0xff]
        %v6790 = vld [vmem:[%s6771 + $0xd8] sm:$0xff]
        %v6791 = vld [vmem:[%s6771 + $0xe0] sm:$0xff]
        %v6792 = vld [vmem:[%s6771 + $0xf0] sm:$0xff]
        %v6793 = vld [vmem:[%s6771 + $0xf8] sm:$0xff]
        %v6794 = vld [vmem:[%s6771 + $0x108] sm:$0xff]
        %v6795 = vld [vmem:[%s6771 + $0x110] sm:$0xff]
        %v6796 = vld [vmem:[%s6771 + $0x120] sm:$0xff]
        %v6797 = vld [vmem:[%s6771 + $0x128] sm:$0xff]
        %v6798 = vld [vmem:[%s6771 + $0x138] sm:$0xff]
        %v6799 = vld [vmem:[%s6771 + $0x140] sm:$0xff]
        %v6800 = vld [vmem:[%s6771 + $0x150] sm:$0xff]
        %v6801 = vld [vmem:[%s6771 + $0x158] sm:$0xff]
        %v6802 = vld [vmem:[%s6771 + $0x168] sm:$0xff]
        %v6803 = vld [vmem:[%s6771 + $0x170] sm:$0xff]
        %s6804 = scalar_lea.vmem %s8, 768
        %v6805 = vld [vmem:[%s6804] sm:$0xff]
        %v6806 = vld [vmem:[%s6804 + $0x8] sm:$0xff]
        %v6807 = vld [vmem:[%s6804 + $0x10] sm:$0xff]
        %v6808 = vld [vmem:[%s6804 + $0x18] sm:$0xff]
        %v6809 = vld [vmem:[%s6804 + $0x20] sm:$0xff]
        %v6810 = vld [vmem:[%s6804 + $0x28] sm:$0xff]
        %v6811 = vld [vmem:[%s6804 + $0x30] sm:$0xff]
        %v6812 = vld [vmem:[%s6804 + $0x38] sm:$0xff]
        %v6813 = vld [vmem:[%s6804 + $0x40] sm:$0xff]
        %v6814 = vld [vmem:[%s6804 + $0x48] sm:$0xff]
        %v6815 = vld [vmem:[%s6804 + $0x50] sm:$0xff]
        %v6816 = vld [vmem:[%s6804 + $0x58] sm:$0xff]
        %v6817 = vld [vmem:[%s6804 + $0x60] sm:$0xff]
        %v6818 = vld [vmem:[%s6804 + $0x68] sm:$0xff]
        %v6819 = vld [vmem:[%s6804 + $0x70] sm:$0xff]
        %v6820 = vld [vmem:[%s6804 + $0x78] sm:$0xff]
        %6821 = vmatprep.subr.mxu0 0.0
        %6822 = vmatpush1.msra.mxu0 %v6805
        %6823 = vmatprep.subr.mxu0 0.0
        %6824 = vmatpush1.msra.mxu0 %v6806
        %6825 = vmatprep.subr.mxu0 0.0
        %6826 = vmatpush1.msra.mxu0 %v6807
        %6827 = vmatprep.subr.mxu0 0.0
        %6828 = vmatpush1.msra.mxu0 %v6808
        %6829 = vmatprep.subr.mxu0 0.0
        %6830 = vmatpush1.msra.mxu0 %v6809
        %6831 = vmatprep.subr.mxu0 0.0
        %6832 = vmatpush1.msra.mxu0 %v6810
        %6833 = vmatprep.subr.mxu0 0.0
        %6834 = vmatpush1.msra.mxu0 %v6811
        %6835 = vmatprep.subr.mxu0 0.0
        %6836 = vmatpush1.msra.mxu0 %v6812
        %6837 = vmatprep.subr.mxu0 0.0
        %6838 = vmatpush1.msra.mxu0 %v6813
        %6839 = vmatprep.subr.mxu0 0.0
        %6840 = vmatpush1.msra.mxu0 %v6814
        %6841 = vmatprep.subr.mxu0 0.0
        %6842 = vmatpush1.msra.mxu0 %v6815
        %6843 = vmatprep.subr.mxu0 0.0
        %6844 = vmatpush1.msra.mxu0 %v6816
        %6845 = vmatprep.subr.mxu0 0.0
        %6846 = vmatpush1.msra.mxu0 %v6817
        %6847 = vmatprep.subr.mxu0 0.0
        %6848 = vmatpush1.msra.mxu0 %v6818
        %6849 = vmatprep.subr.mxu0 0.0
        %6850 = vmatpush1.msra.mxu0 %v6819
        %6851 = vmatprep.subr.mxu0 0.0
        %6852 = vmatpush1.msra.mxu0 %v6820
        %6853 = vmatprep.subr.mxu0 0.0
        %6854 = vmatpush1.msra.mxu0 0.0
        %6855 = vmatprep.subr.mxu0 0.0
        %6856 = vmatpush1.msra.mxu0 0.0
        %6857 = vmatprep.subr.mxu0 0.0
        %6858 = vmatpush1.msra.mxu0 0.0
        %6859 = vmatprep.subr.mxu0 0.0
        %6860 = vmatpush1.msra.mxu0 0.0
        %6861 = vmatprep.subr.mxu0 0.0
        %6862 = vmatpush1.msra.mxu0 0.0
        %6863 = vmatprep.subr.mxu0 0.0
        %6864 = vmatpush1.msra.mxu0 0.0
        %6865 = vmatprep.subr.mxu0 0.0
        %6866 = vmatpush1.msra.mxu0 0.0
        %6867 = vmatprep.subr.mxu0 0.0
        %6868 = vmatpush1.msra.mxu0 0.0
        %6869 = vmatprep.subr.mxu0 0.0
        %6870 = vmatpush1.msra.mxu0 0.0
        %6871 = vmatprep.subr.mxu0 0.0
        %6872 = vmatpush1.msra.mxu0 0.0
        %6873 = vmatprep.subr.mxu0 0.0
        %6874 = vmatpush1.msra.mxu0 0.0
        %6875 = vmatprep.subr.mxu0 0.0
        %6876 = vmatpush1.msra.mxu0 0.0
        %6877 = vmatprep.subr.mxu0 0.0
        %6878 = vmatpush1.msra.mxu0 0.0
        %6879 = vmatprep.subr.mxu0 0.0
        %6880 = vmatpush1.msra.mxu0 0.0
        %6881 = vmatprep.subr.mxu0 0.0
        %6882 = vmatpush1.msra.mxu0 0.0
        %6883 = vmatprep.subr.mxu0 0.0
        %6884 = vmatpush1.msra.mxu0 0.0
        %6885 = vmatprep.mubr.f32.mxu0 0.0
        %6886 = vmatmul.mubr.f32.gmra.mrb[0].mxu0 %v6772
        %v6887 = vpop.f32.mrb[0].mxu0
        %v6888 = vadd.f32 0.0, %v6887
        %v6889 = vpop.f32.mrb[0].mxu0
        %6890 = vmatprep.mubr.f32.mxu0 0.0
        %6891 = vmatmul.mubr.f32.gmra.mrb[0].mxu0 %v6773
        %v6892 = vpop.f32.mrb[0].mxu0
        %v6893 = vadd.f32 0.0, %v6892
        %v6894 = vpop.f32.mrb[0].mxu0
        %6895 = vmatprep.mubr.f32.mxu0 0.0
        %6896 = vmatmul.mubr.f32.gmra.mrb[0].mxu0 %v6774
        %v6897 = vpop.f32.mrb[0].mxu0
        %v6898 = vadd.f32 0.0, %v6897
        %v6899 = vpop.f32.mrb[0].mxu0
        %6900 = vmatprep.mubr.f32.mxu0 0.0
        %6901 = vmatmul.mubr.f32.gmra.mrb[0].mxu0 %v6775
        %v6902 = vpop.f32.mrb[0].mxu0
        %v6903 = vadd.f32 0.0, %v6902
        %v6904 = vpop.f32.mrb[0].mxu0
        %6905 = vmatprep.mubr.f32.mxu0 0.0
        %6906 = vmatmul.mubr.f32.gmra.mrb[0].mxu0 %v6776
        %v6907 = vpop.f32.mrb[0].mxu0
        %v6908 = vadd.f32 0.0, %v6907
        %v6909 = vpop.f32.mrb[0].mxu0
        %6910 = vmatprep.mubr.f32.mxu0 0.0
        %6911 = vmatmul.mubr.f32.gmra.mrb[0].mxu0 %v6777
        %v6912 = vpop.f32.mrb[0].mxu0
        %v6913 = vadd.f32 0.0, %v6912
        %v6914 = vpop.f32.mrb[0].mxu0
        %6915 = vmatprep.mubr.f32.mxu0 0.0
        %6916 = vmatmul.mubr.f32.gmra.mrb[0].mxu0 %v6778
        %v6917 = vpop.f32.mrb[0].mxu0
        %v6918 = vadd.f32 0.0, %v6917
        %v6919 = vpop.f32.mrb[0].mxu0
        %6920 = vmatprep.mubr.f32.mxu0 0.0
        %6921 = vmatmul.mubr.f32.gmra.mrb[0].mxu0 %v6779
        %v6922 = vpop.f32.mrb[0].mxu0
        %v6923 = vadd.f32 0.0, %v6922
        %v6924 = vpop.f32.mrb[0].mxu0
        %6925 = vmatprep.mubr.f32.mxu0 0.0
        %6926 = vmatmul.mubr.f32.gmra.mrb[0].mxu0 %v6780
        %v6927 = vpop.f32.mrb[0].mxu0
        %v6928 = vadd.f32 0.0, %v6927
        %v6929 = vpop.f32.mrb[0].mxu0
        %6930 = vmatprep.mubr.f32.mxu0 0.0
        %6931 = vmatmul.mubr.f32.gmra.mrb[0].mxu0 %v6781
        %v6932 = vpop.f32.mrb[0].mxu0
        %v6933 = vadd.f32 0.0, %v6932
        %v6934 = vpop.f32.mrb[0].mxu0
        %6935 = vmatprep.mubr.f32.mxu0 0.0
        %6936 = vmatmul.mubr.f32.gmra.mrb[0].mxu0 %v6782
        %v6937 = vpop.f32.mrb[0].mxu0
        %v6938 = vadd.f32 0.0, %v6937
        %v6939 = vpop.f32.mrb[0].mxu0
        %6940 = vmatprep.mubr.f32.mxu0 0.0
        %6941 = vmatmul.mubr.f32.gmra.mrb[0].mxu0 %v6783
        %v6942 = vpop.f32.mrb[0].mxu0
        %v6943 = vadd.f32 0.0, %v6942
        %v6944 = vpop.f32.mrb[0].mxu0
        %6945 = vmatprep.mubr.f32.mxu0 0.0
        %6946 = vmatmul.mubr.f32.gmra.mrb[0].mxu0 %v6784
        %v6947 = vpop.f32.mrb[0].mxu0
        %v6948 = vadd.f32 0.0, %v6947
        %v6949 = vpop.f32.mrb[0].mxu0
        %6950 = vmatprep.mubr.f32.mxu0 0.0
        %6951 = vmatmul.mubr.f32.gmra.mrb[0].mxu0 %v6785
        %v6952 = vpop.f32.mrb[0].mxu0
        %v6953 = vadd.f32 0.0, %v6952
        %v6954 = vpop.f32.mrb[0].mxu0
        %6955 = vmatprep.mubr.f32.mxu0 0.0
        %6956 = vmatmul.mubr.f32.gmra.mrb[0].mxu0 %v6786
        %v6957 = vpop.f32.mrb[0].mxu0
        %v6958 = vadd.f32 0.0, %v6957
        %v6959 = vpop.f32.mrb[0].mxu0
        %6960 = vmatprep.mubr.f32.mxu0 0.0
        %6961 = vmatmul.mubr.f32.gmra.mrb[0].mxu0 %v6787
        %v6962 = vpop.f32.mrb[0].mxu0
        %v6963 = vadd.f32 0.0, %v6962
        %v6964 = vpop.f32.mrb[0].mxu0
        %6965 = vmatprep.mubr.f32.mxu0 0.0
        %6966 = vmatmul.mubr.f32.gmra.mrb[0].mxu0 %v6788
        %v6967 = vpop.f32.mrb[0].mxu0
        %v6968 = vadd.f32 0.0, %v6967
        %v6969 = vpop.f32.mrb[0].mxu0
        %6970 = vmatprep.mubr.f32.mxu0 0.0
        %6971 = vmatmul.mubr.f32.gmra.mrb[0].mxu0 %v6789
        %v6972 = vpop.f32.mrb[0].mxu0
        %v6973 = vadd.f32 0.0, %v6972
        %v6974 = vpop.f32.mrb[0].mxu0
        %6975 = vmatprep.mubr.f32.mxu0 0.0
        %6976 = vmatmul.mubr.f32.gmra.mrb[0].mxu0 %v6790
        %v6977 = vpop.f32.mrb[0].mxu0
        %v6978 = vadd.f32 0.0, %v6977
        %v6979 = vpop.f32.mrb[0].mxu0
        %6980 = vmatprep.mubr.f32.mxu0 0.0
        %6981 = vmatmul.mubr.f32.gmra.mrb[0].mxu0 %v6791
        %v6982 = vpop.f32.mrb[0].mxu0
        %v6983 = vadd.f32 0.0, %v6982
        %v6984 = vpop.f32.mrb[0].mxu0
        %6985 = vmatprep.mubr.f32.mxu0 0.0
        %6986 = vmatmul.mubr.f32.gmra.mrb[0].mxu0 %v6792
        %v6987 = vpop.f32.mrb[0].mxu0
        %v6988 = vadd.f32 0.0, %v6987
        %v6989 = vpop.f32.mrb[0].mxu0
        %6990 = vmatprep.mubr.f32.mxu0 0.0
        %6991 = vmatmul.mubr.f32.gmra.mrb[0].mxu0 %v6793
        %v6992 = vpop.f32.mrb[0].mxu0
        %v6993 = vadd.f32 0.0, %v6992
        %v6994 = vpop.f32.mrb[0].mxu0
        %6995 = vmatprep.mubr.f32.mxu0 0.0
        %6996 = vmatmul.mubr.f32.gmra.mrb[0].mxu0 %v6794
        %v6997 = vpop.f32.mrb[0].mxu0
        %v6998 = vadd.f32 0.0, %v6997
        %v6999 = vpop.f32.mrb[0].mxu0
        %7000 = vmatprep.mubr.f32.mxu0 0.0
        %7001 = vmatmul.mubr.f32.gmra.mrb[0].mxu0 %v6795
        %v7002 = vpop.f32.mrb[0].mxu0
        %v7003 = vadd.f32 0.0, %v7002
        %v7004 = vpop.f32.mrb[0].mxu0
        %7005 = vmatprep.mubr.f32.mxu0 0.0
        %7006 = vmatmul.mubr.f32.gmra.mrb[0].mxu0 %v6796
        %v7007 = vpop.f32.mrb[0].mxu0
        %v7008 = vadd.f32 0.0, %v7007
        %v7009 = vpop.f32.mrb[0].mxu0
        %7010 = vmatprep.mubr.f32.mxu0 0.0
        %7011 = vmatmul.mubr.f32.gmra.mrb[0].mxu0 %v6797
        %v7012 = vpop.f32.mrb[0].mxu0
        %v7013 = vadd.f32 0.0, %v7012
        %v7014 = vpop.f32.mrb[0].mxu0
        %7015 = vmatprep.mubr.f32.mxu0 0.0
        %7016 = vmatmul.mubr.f32.gmra.mrb[0].mxu0 %v6798
        %v7017 = vpop.f32.mrb[0].mxu0
        %v7018 = vadd.f32 0.0, %v7017
        %v7019 = vpop.f32.mrb[0].mxu0
        %7020 = vmatprep.mubr.f32.mxu0 0.0
        %7021 = vmatmul.mubr.f32.gmra.mrb[0].mxu0 %v6799
        %v7022 = vpop.f32.mrb[0].mxu0
        %v7023 = vadd.f32 0.0, %v7022
        %v7024 = vpop.f32.mrb[0].mxu0
        %7025 = vmatprep.mubr.f32.mxu0 0.0
        %7026 = vmatmul.mubr.f32.gmra.mrb[0].mxu0 %v6800
        %v7027 = vpop.f32.mrb[0].mxu0
        %v7028 = vadd.f32 0.0, %v7027
        %v7029 = vpop.f32.mrb[0].mxu0
        %7030 = vmatprep.mubr.f32.mxu0 0.0
        %7031 = vmatmul.mubr.f32.gmra.mrb[0].mxu0 %v6801
        %v7032 = vpop.f32.mrb[0].mxu0
        %v7033 = vadd.f32 0.0, %v7032
        %v7034 = vpop.f32.mrb[0].mxu0
        %7035 = vmatprep.mubr.f32.mxu0 0.0
        %7036 = vmatmul.mubr.f32.gmra.mrb[0].mxu0 %v6802
        %v7037 = vpop.f32.mrb[0].mxu0
        %v7038 = vadd.f32 0.0, %v7037
        %v7039 = vpop.f32.mrb[0].mxu0
        %7040 = vmatprep.mubr.f32.mxu0 0.0
        %7041 = vmatmul.mubr.f32.gmra.mrb[0].mxu0 %v6803
        %v7042 = vpop.f32.mrb[0].mxu0
        %v7043 = vadd.f32 0.0, %v7042
        %v7044 = vpop.f32.mrb[0].mxu0
        %7045 = vdwg.mxu0
        %v7046 = vadd.f32 %v6739, %v6888
        %v7047 = vadd.f32 %v6740, %v6893
        %v7048 = vadd.f32 %v6741, %v6898
        %v7049 = vadd.f32 %v6742, %v6903
        %v7050 = vadd.f32 %v6743, %v6908
        %v7051 = vadd.f32 %v6744, %v6913
        %v7052 = vadd.f32 %v6745, %v6918
        %v7053 = vadd.f32 %v6746, %v6923
        %v7054 = vadd.f32 %v6747, %v6928
        %v7055 = vadd.f32 %v6748, %v6933
        %v7056 = vadd.f32 %v6749, %v6938
        %v7057 = vadd.f32 %v6750, %v6943
        %v7058 = vadd.f32 %v6751, %v6948
        %v7059 = vadd.f32 %v6752, %v6953
        %v7060 = vadd.f32 %v6753, %v6958
        %v7061 = vadd.f32 %v6754, %v6963
        %v7062 = vadd.f32 %v6755, %v6968
        %v7063 = vadd.f32 %v6756, %v6973
        %v7064 = vadd.f32 %v6757, %v6978
        %v7065 = vadd.f32 %v6758, %v6983
        %v7066 = vadd.f32 %v6759, %v6988
        %v7067 = vadd.f32 %v6760, %v6993
        %v7068 = vadd.f32 %v6761, %v6998
        %v7069 = vadd.f32 %v6762, %v7003
        %v7070 = vadd.f32 %v6763, %v7008
        %v7071 = vadd.f32 %v6764, %v7013
        %v7072 = vadd.f32 %v6765, %v7018
        %v7073 = vadd.f32 %v6766, %v7023
        %v7074 = vadd.f32 %v6767, %v7028
        %v7075 = vadd.f32 %v6768, %v7033
        %v7076 = vadd.f32 %v6769, %v7038
        %v7077 = vadd.f32 %v6770, %v7043
        %v7078 = vld [vmem:[%s6771 + $0x1] sm:$0xff]
        %v7079 = vld [vmem:[%s6771 + $0x9] sm:$0xff]
        %v7080 = vld [vmem:[%s6771 + $0x19] sm:$0xff]
        %v7081 = vld [vmem:[%s6771 + $0x21] sm:$0xff]
        %v7082 = vld [vmem:[%s6771 + $0x31] sm:$0xff]
        %v7083 = vld [vmem:[%s6771 + $0x39] sm:$0xff]
        %v7084 = vld [vmem:[%s6771 + $0x49] sm:$0xff]
        %v7085 = vld [vmem:[%s6771 + $0x51] sm:$0xff]
        %v7086 = vld [vmem:[%s6771 + $0x61] sm:$0xff]
        %v7087 = vld [vmem:[%s6771 + $0x69] sm:$0xff]
        %v7088 = vld [vmem:[%s6771 + $0x79] sm:$0xff]
        %v7089 = vld [vmem:[%s6771 + $0x81] sm:$0xff]
        %v7090 = vld [vmem:[%s6771 + $0x91] sm:$0xff]
        %v7091 = vld [vmem:[%s6771 + $0x99] sm:$0xff]
        %v7092 = vld [vmem:[%s6771 + $0xa9] sm:$0xff]
        %v7093 = vld [vmem:[%s6771 + $0xb1] sm:$0xff]
        %v7094 = vld [vmem:[%s6771 + $0xc1] sm:$0xff]
        %v7095 = vld [vmem:[%s6771 + $0xc9] sm:$0xff]
        %v7096 = vld [vmem:[%s6771 + $0xd9] sm:$0xff]
        %v7097 = vld [vmem:[%s6771 + $0xe1] sm:$0xff]
        %v7098 = vld [vmem:[%s6771 + $0xf1] sm:$0xff]
        %v7099 = vld [vmem:[%s6771 + $0xf9] sm:$0xff]
        %v7100 = vld [vmem:[%s6771 + $0x109] sm:$0xff]
        %v7101 = vld [vmem:[%s6771 + $0x111] sm:$0xff]
        %v7102 = vld [vmem:[%s6771 + $0x121] sm:$0xff]
        %v7103 = vld [vmem:[%s6771 + $0x129] sm:$0xff]
        %v7104 = vld [vmem:[%s6771 + $0x139] sm:$0xff]
        %v7105 = vld [vmem:[%s6771 + $0x141] sm:$0xff]
        %v7106 = vld [vmem:[%s6771 + $0x151] sm:$0xff]
        %v7107 = vld [vmem:[%s6771 + $0x159] sm:$0xff]
        %v7108 = vld [vmem:[%s6771 + $0x169] sm:$0xff]
        %v7109 = vld [vmem:[%s6771 + $0x171] sm:$0xff]
        %s7110 = scalar_lea.vmem %s8, 896
        %v7111 = vld [vmem:[%s7110] sm:$0xff]
        %v7112 = vld [vmem:[%s7110 + $0x8] sm:$0xff]
        %v7113 = vld [vmem:[%s7110 + $0x10] sm:$0xff]
        %v7114 = vld [vmem:[%s7110 + $0x18] sm:$0xff]
        %v7115 = vld [vmem:[%s7110 + $0x20] sm:$0xff]
        %v7116 = vld [vmem:[%s7110 + $0x28] sm:$0xff]
        %v7117 = vld [vmem:[%s7110 + $0x30] sm:$0xff]
        %v7118 = vld [vmem:[%s7110 + $0x38] sm:$0xff]
        %v7119 = vld [vmem:[%s7110 + $0x40] sm:$0xff]
        %v7120 = vld [vmem:[%s7110 + $0x48] sm:$0xff]
        %v7121 = vld [vmem:[%s7110 + $0x50] sm:$0xff]
        %v7122 = vld [vmem:[%s7110 + $0x58] sm:$0xff]
        %v7123 = vld [vmem:[%s7110 + $0x60] sm:$0xff]
        %v7124 = vld [vmem:[%s7110 + $0x68] sm:$0xff]
        %v7125 = vld [vmem:[%s7110 + $0x70] sm:$0xff]
        %v7126 = vld [vmem:[%s7110 + $0x78] sm:$0xff]
        %7127 = vmatprep.subr.mxu0 0.0
        %7128 = vmatpush1.msra.mxu0 %v7111
        %7129 = vmatprep.subr.mxu0 0.0
        %7130 = vmatpush1.msra.mxu0 %v7112
        %7131 = vmatprep.subr.mxu0 0.0
        %7132 = vmatpush1.msra.mxu0 %v7113
        %7133 = vmatprep.subr.mxu0 0.0
        %7134 = vmatpush1.msra.mxu0 %v7114
        %7135 = vmatprep.subr.mxu0 0.0
        %7136 = vmatpush1.msra.mxu0 %v7115
        %7137 = vmatprep.subr.mxu0 0.0
        %7138 = vmatpush1.msra.mxu0 %v7116
        %7139 = vmatprep.subr.mxu0 0.0
        %7140 = vmatpush1.msra.mxu0 %v7117
        %7141 = vmatprep.subr.mxu0 0.0
        %7142 = vmatpush1.msra.mxu0 %v7118
        %7143 = vmatprep.subr.mxu0 0.0
        %7144 = vmatpush1.msra.mxu0 %v7119
        %7145 = vmatprep.subr.mxu0 0.0
        %7146 = vmatpush1.msra.mxu0 %v7120
        %7147 = vmatprep.subr.mxu0 0.0
        %7148 = vmatpush1.msra.mxu0 %v7121
        %7149 = vmatprep.subr.mxu0 0.0
        %7150 = vmatpush1.msra.mxu0 %v7122
        %7151 = vmatprep.subr.mxu0 0.0
        %7152 = vmatpush1.msra.mxu0 %v7123
        %7153 = vmatprep.subr.mxu0 0.0
        %7154 = vmatpush1.msra.mxu0 %v7124
        %7155 = vmatprep.subr.mxu0 0.0
        %7156 = vmatpush1.msra.mxu0 %v7125
        %7157 = vmatprep.subr.mxu0 0.0
        %7158 = vmatpush1.msra.mxu0 %v7126
        %7159 = vmatprep.subr.mxu0 0.0
        %7160 = vmatpush1.msra.mxu0 0.0
        %7161 = vmatprep.subr.mxu0 0.0
        %7162 = vmatpush1.msra.mxu0 0.0
        %7163 = vmatprep.subr.mxu0 0.0
        %7164 = vmatpush1.msra.mxu0 0.0
        %7165 = vmatprep.subr.mxu0 0.0
        %7166 = vmatpush1.msra.mxu0 0.0
        %7167 = vmatprep.subr.mxu0 0.0
        %7168 = vmatpush1.msra.mxu0 0.0
        %7169 = vmatprep.subr.mxu0 0.0
        %7170 = vmatpush1.msra.mxu0 0.0
        %7171 = vmatprep.subr.mxu0 0.0
        %7172 = vmatpush1.msra.mxu0 0.0
        %7173 = vmatprep.subr.mxu0 0.0
        %7174 = vmatpush1.msra.mxu0 0.0
        %7175 = vmatprep.subr.mxu0 0.0
        %7176 = vmatpush1.msra.mxu0 0.0
        %7177 = vmatprep.subr.mxu0 0.0
        %7178 = vmatpush1.msra.mxu0 0.0
        %7179 = vmatprep.subr.mxu0 0.0
        %7180 = vmatpush1.msra.mxu0 0.0
        %7181 = vmatprep.subr.mxu0 0.0
        %7182 = vmatpush1.msra.mxu0 0.0
        %7183 = vmatprep.subr.mxu0 0.0
        %7184 = vmatpush1.msra.mxu0 0.0
        %7185 = vmatprep.subr.mxu0 0.0
        %7186 = vmatpush1.msra.mxu0 0.0
        %7187 = vmatprep.subr.mxu0 0.0
        %7188 = vmatpush1.msra.mxu0 0.0
        %7189 = vmatprep.subr.mxu0 0.0
        %7190 = vmatpush1.msra.mxu0 0.0
        %7191 = vmatprep.mubr.f32.mxu0 0.0
        %7192 = vmatmul.mubr.f32.gmra.mrb[0].mxu0 %v7078
        %v7193 = vpop.f32.mrb[0].mxu0
        %v7194 = vadd.f32 0.0, %v7193
        %v7195 = vpop.f32.mrb[0].mxu0
        %7196 = vmatprep.mubr.f32.mxu0 0.0
        %7197 = vmatmul.mubr.f32.gmra.mrb[0].mxu0 %v7079
        %v7198 = vpop.f32.mrb[0].mxu0
        %v7199 = vadd.f32 0.0, %v7198
        %v7200 = vpop.f32.mrb[0].mxu0
        %7201 = vmatprep.mubr.f32.mxu0 0.0
        %7202 = vmatmul.mubr.f32.gmra.mrb[0].mxu0 %v7080
        %v7203 = vpop.f32.mrb[0].mxu0
        %v7204 = vadd.f32 0.0, %v7203
        %v7205 = vpop.f32.mrb[0].mxu0
        %7206 = vmatprep.mubr.f32.mxu0 0.0
        %7207 = vmatmul.mubr.f32.gmra.mrb[0].mxu0 %v7081
        %v7208 = vpop.f32.mrb[0].mxu0
        %v7209 = vadd.f32 0.0, %v7208
        %v7210 = vpop.f32.mrb[0].mxu0
        %7211 = vmatprep.mubr.f32.mxu0 0.0
        %7212 = vmatmul.mubr.f32.gmra.mrb[0].mxu0 %v7082
        %v7213 = vpop.f32.mrb[0].mxu0
        %v7214 = vadd.f32 0.0, %v7213
        %v7215 = vpop.f32.mrb[0].mxu0
        %7216 = vmatprep.mubr.f32.mxu0 0.0
        %7217 = vmatmul.mubr.f32.gmra.mrb[0].mxu0 %v7083
        %v7218 = vpop.f32.mrb[0].mxu0
        %v7219 = vadd.f32 0.0, %v7218
        %v7220 = vpop.f32.mrb[0].mxu0
        %7221 = vmatprep.mubr.f32.mxu0 0.0
        %7222 = vmatmul.mubr.f32.gmra.mrb[0].mxu0 %v7084
        %v7223 = vpop.f32.mrb[0].mxu0
        %v7224 = vadd.f32 0.0, %v7223
        %v7225 = vpop.f32.mrb[0].mxu0
        %7226 = vmatprep.mubr.f32.mxu0 0.0
        %7227 = vmatmul.mubr.f32.gmra.mrb[0].mxu0 %v7085
        %v7228 = vpop.f32.mrb[0].mxu0
        %v7229 = vadd.f32 0.0, %v7228
        %v7230 = vpop.f32.mrb[0].mxu0
        %7231 = vmatprep.mubr.f32.mxu0 0.0
        %7232 = vmatmul.mubr.f32.gmra.mrb[0].mxu0 %v7086
        %v7233 = vpop.f32.mrb[0].mxu0
        %v7234 = vadd.f32 0.0, %v7233
        %v7235 = vpop.f32.mrb[0].mxu0
        %7236 = vmatprep.mubr.f32.mxu0 0.0
        %7237 = vmatmul.mubr.f32.gmra.mrb[0].mxu0 %v7087
        %v7238 = vpop.f32.mrb[0].mxu0
        %v7239 = vadd.f32 0.0, %v7238
        %v7240 = vpop.f32.mrb[0].mxu0
        %7241 = vmatprep.mubr.f32.mxu0 0.0
        %7242 = vmatmul.mubr.f32.gmra.mrb[0].mxu0 %v7088
        %v7243 = vpop.f32.mrb[0].mxu0
        %v7244 = vadd.f32 0.0, %v7243
        %v7245 = vpop.f32.mrb[0].mxu0
        %7246 = vmatprep.mubr.f32.mxu0 0.0
        %7247 = vmatmul.mubr.f32.gmra.mrb[0].mxu0 %v7089
        %v7248 = vpop.f32.mrb[0].mxu0
        %v7249 = vadd.f32 0.0, %v7248
        %v7250 = vpop.f32.mrb[0].mxu0
        %7251 = vmatprep.mubr.f32.mxu0 0.0
        %7252 = vmatmul.mubr.f32.gmra.mrb[0].mxu0 %v7090
        %v7253 = vpop.f32.mrb[0].mxu0
        %v7254 = vadd.f32 0.0, %v7253
        %v7255 = vpop.f32.mrb[0].mxu0
        %7256 = vmatprep.mubr.f32.mxu0 0.0
        %7257 = vmatmul.mubr.f32.gmra.mrb[0].mxu0 %v7091
        %v7258 = vpop.f32.mrb[0].mxu0
        %v7259 = vadd.f32 0.0, %v7258
        %v7260 = vpop.f32.mrb[0].mxu0
        %7261 = vmatprep.mubr.f32.mxu0 0.0
        %7262 = vmatmul.mubr.f32.gmra.mrb[0].mxu0 %v7092
        %v7263 = vpop.f32.mrb[0].mxu0
        %v7264 = vadd.f32 0.0, %v7263
        %v7265 = vpop.f32.mrb[0].mxu0
        %7266 = vmatprep.mubr.f32.mxu0 0.0
        %7267 = vmatmul.mubr.f32.gmra.mrb[0].mxu0 %v7093
        %v7268 = vpop.f32.mrb[0].mxu0
        %v7269 = vadd.f32 0.0, %v7268
        %v7270 = vpop.f32.mrb[0].mxu0
        %7271 = vmatprep.mubr.f32.mxu0 0.0
        %7272 = vmatmul.mubr.f32.gmra.mrb[0].mxu0 %v7094
        %v7273 = vpop.f32.mrb[0].mxu0
        %v7274 = vadd.f32 0.0, %v7273
        %v7275 = vpop.f32.mrb[0].mxu0
        %7276 = vmatprep.mubr.f32.mxu0 0.0
        %7277 = vmatmul.mubr.f32.gmra.mrb[0].mxu0 %v7095
        %v7278 = vpop.f32.mrb[0].mxu0
        %v7279 = vadd.f32 0.0, %v7278
        %v7280 = vpop.f32.mrb[0].mxu0
        %7281 = vmatprep.mubr.f32.mxu0 0.0
        %7282 = vmatmul.mubr.f32.gmra.mrb[0].mxu0 %v7096
        %v7283 = vpop.f32.mrb[0].mxu0
        %v7284 = vadd.f32 0.0, %v7283
        %v7285 = vpop.f32.mrb[0].mxu0
        %7286 = vmatprep.mubr.f32.mxu0 0.0
        %7287 = vmatmul.mubr.f32.gmra.mrb[0].mxu0 %v7097
        %v7288 = vpop.f32.mrb[0].mxu0
        %v7289 = vadd.f32 0.0, %v7288
        %v7290 = vpop.f32.mrb[0].mxu0
        %7291 = vmatprep.mubr.f32.mxu0 0.0
        %7292 = vmatmul.mubr.f32.gmra.mrb[0].mxu0 %v7098
        %v7293 = vpop.f32.mrb[0].mxu0
        %v7294 = vadd.f32 0.0, %v7293
        %v7295 = vpop.f32.mrb[0].mxu0
        %7296 = vmatprep.mubr.f32.mxu0 0.0
        %7297 = vmatmul.mubr.f32.gmra.mrb[0].mxu0 %v7099
        %v7298 = vpop.f32.mrb[0].mxu0
        %v7299 = vadd.f32 0.0, %v7298
        %v7300 = vpop.f32.mrb[0].mxu0
        %7301 = vmatprep.mubr.f32.mxu0 0.0
        %7302 = vmatmul.mubr.f32.gmra.mrb[0].mxu0 %v7100
        %v7303 = vpop.f32.mrb[0].mxu0
        %v7304 = vadd.f32 0.0, %v7303
        %v7305 = vpop.f32.mrb[0].mxu0
        %7306 = vmatprep.mubr.f32.mxu0 0.0
        %7307 = vmatmul.mubr.f32.gmra.mrb[0].mxu0 %v7101
        %v7308 = vpop.f32.mrb[0].mxu0
        %v7309 = vadd.f32 0.0, %v7308
        %v7310 = vpop.f32.mrb[0].mxu0
        %7311 = vmatprep.mubr.f32.mxu0 0.0
        %7312 = vmatmul.mubr.f32.gmra.mrb[0].mxu0 %v7102
        %v7313 = vpop.f32.mrb[0].mxu0
        %v7314 = vadd.f32 0.0, %v7313
        %v7315 = vpop.f32.mrb[0].mxu0
        %7316 = vmatprep.mubr.f32.mxu0 0.0
        %7317 = vmatmul.mubr.f32.gmra.mrb[0].mxu0 %v7103
        %v7318 = vpop.f32.mrb[0].mxu0
        %v7319 = vadd.f32 0.0, %v7318
        %v7320 = vpop.f32.mrb[0].mxu0
        %7321 = vmatprep.mubr.f32.mxu0 0.0
        %7322 = vmatmul.mubr.f32.gmra.mrb[0].mxu0 %v7104
        %v7323 = vpop.f32.mrb[0].mxu0
        %v7324 = vadd.f32 0.0, %v7323
        %v7325 = vpop.f32.mrb[0].mxu0
        %7326 = vmatprep.mubr.f32.mxu0 0.0
        %7327 = vmatmul.mubr.f32.gmra.mrb[0].mxu0 %v7105
        %v7328 = vpop.f32.mrb[0].mxu0
        %v7329 = vadd.f32 0.0, %v7328
        %v7330 = vpop.f32.mrb[0].mxu0
        %7331 = vmatprep.mubr.f32.mxu0 0.0
        %7332 = vmatmul.mubr.f32.gmra.mrb[0].mxu0 %v7106
        %v7333 = vpop.f32.mrb[0].mxu0
        %v7334 = vadd.f32 0.0, %v7333
        %v7335 = vpop.f32.mrb[0].mxu0
        %7336 = vmatprep.mubr.f32.mxu0 0.0
        %7337 = vmatmul.mubr.f32.gmra.mrb[0].mxu0 %v7107
        %v7338 = vpop.f32.mrb[0].mxu0
        %v7339 = vadd.f32 0.0, %v7338
        %v7340 = vpop.f32.mrb[0].mxu0
        %7341 = vmatprep.mubr.f32.mxu0 0.0
        %7342 = vmatmul.mubr.f32.gmra.mrb[0].mxu0 %v7108
        %v7343 = vpop.f32.mrb[0].mxu0
        %v7344 = vadd.f32 0.0, %v7343
        %v7345 = vpop.f32.mrb[0].mxu0
        %7346 = vmatprep.mubr.f32.mxu0 0.0
        %7347 = vmatmul.mubr.f32.gmra.mrb[0].mxu0 %v7109
        %v7348 = vpop.f32.mrb[0].mxu0
        %v7349 = vadd.f32 0.0, %v7348
        %v7350 = vpop.f32.mrb[0].mxu0
        %7351 = vdwg.mxu0
        %v7352 = vadd.f32 %v7046, %v7194
        %v7353 = vadd.f32 %v7047, %v7199
        %v7354 = vadd.f32 %v7048, %v7204
        %v7355 = vadd.f32 %v7049, %v7209
        %v7356 = vadd.f32 %v7050, %v7214
        %v7357 = vadd.f32 %v7051, %v7219
        %v7358 = vadd.f32 %v7052, %v7224
        %v7359 = vadd.f32 %v7053, %v7229
        %v7360 = vadd.f32 %v7054, %v7234
        %v7361 = vadd.f32 %v7055, %v7239
        %v7362 = vadd.f32 %v7056, %v7244
        %v7363 = vadd.f32 %v7057, %v7249
        %v7364 = vadd.f32 %v7058, %v7254
        %v7365 = vadd.f32 %v7059, %v7259
        %v7366 = vadd.f32 %v7060, %v7264
        %v7367 = vadd.f32 %v7061, %v7269
        %v7368 = vadd.f32 %v7062, %v7274
        %v7369 = vadd.f32 %v7063, %v7279
        %v7370 = vadd.f32 %v7064, %v7284
        %v7371 = vadd.f32 %v7065, %v7289
        %v7372 = vadd.f32 %v7066, %v7294
        %v7373 = vadd.f32 %v7067, %v7299
        %v7374 = vadd.f32 %v7068, %v7304
        %v7375 = vadd.f32 %v7069, %v7309
        %v7376 = vadd.f32 %v7070, %v7314
        %v7377 = vadd.f32 %v7071, %v7319
        %v7378 = vadd.f32 %v7072, %v7324
        %v7379 = vadd.f32 %v7073, %v7329
        %v7380 = vadd.f32 %v7074, %v7334
        %v7381 = vadd.f32 %v7075, %v7339
        %v7382 = vadd.f32 %v7076, %v7344
        %v7383 = vadd.f32 %v7077, %v7349
        %v7384 = vld [vmem:[%s6771 + $0x2] sm:$0xff]
        %v7385 = vld [vmem:[%s6771 + $0xa] sm:$0xff]
        %v7386 = vld [vmem:[%s6771 + $0x1a] sm:$0xff]
        %v7387 = vld [vmem:[%s6771 + $0x22] sm:$0xff]
        %v7388 = vld [vmem:[%s6771 + $0x32] sm:$0xff]
        %v7389 = vld [vmem:[%s6771 + $0x3a] sm:$0xff]
        %v7390 = vld [vmem:[%s6771 + $0x4a] sm:$0xff]
        %v7391 = vld [vmem:[%s6771 + $0x52] sm:$0xff]
        %v7392 = vld [vmem:[%s6771 + $0x62] sm:$0xff]
        %v7393 = vld [vmem:[%s6771 + $0x6a] sm:$0xff]
        %v7394 = vld [vmem:[%s6771 + $0x7a] sm:$0xff]
        %v7395 = vld [vmem:[%s6771 + $0x82] sm:$0xff]
        %v7396 = vld [vmem:[%s6771 + $0x92] sm:$0xff]
        %v7397 = vld [vmem:[%s6771 + $0x9a] sm:$0xff]
        %v7398 = vld [vmem:[%s6771 + $0xaa] sm:$0xff]
        %v7399 = vld [vmem:[%s6771 + $0xb2] sm:$0xff]
        %v7400 = vld [vmem:[%s6771 + $0xc2] sm:$0xff]
        %v7401 = vld [vmem:[%s6771 + $0xca] sm:$0xff]
        %v7402 = vld [vmem:[%s6771 + $0xda] sm:$0xff]
        %v7403 = vld [vmem:[%s6771 + $0xe2] sm:$0xff]
        %v7404 = vld [vmem:[%s6771 + $0xf2] sm:$0xff]
        %v7405 = vld [vmem:[%s6771 + $0xfa] sm:$0xff]
        %v7406 = vld [vmem:[%s6771 + $0x10a] sm:$0xff]
        %v7407 = vld [vmem:[%s6771 + $0x112] sm:$0xff]
        %v7408 = vld [vmem:[%s6771 + $0x122] sm:$0xff]
        %v7409 = vld [vmem:[%s6771 + $0x12a] sm:$0xff]
        %v7410 = vld [vmem:[%s6771 + $0x13a] sm:$0xff]
        %v7411 = vld [vmem:[%s6771 + $0x142] sm:$0xff]
        %v7412 = vld [vmem:[%s6771 + $0x152] sm:$0xff]
        %v7413 = vld [vmem:[%s6771 + $0x15a] sm:$0xff]
        %v7414 = vld [vmem:[%s6771 + $0x16a] sm:$0xff]
        %v7415 = vld [vmem:[%s6771 + $0x172] sm:$0xff]
        %s7416 = scalar_lea.vmem %s8, 1024
        %v7417 = vld [vmem:[%s7416] sm:$0xff]
        %v7418 = vld [vmem:[%s7416 + $0x8] sm:$0xff]
        %v7419 = vld [vmem:[%s7416 + $0x10] sm:$0xff]
        %v7420 = vld [vmem:[%s7416 + $0x18] sm:$0xff]
        %v7421 = vld [vmem:[%s7416 + $0x20] sm:$0xff]
        %v7422 = vld [vmem:[%s7416 + $0x28] sm:$0xff]
        %v7423 = vld [vmem:[%s7416 + $0x30] sm:$0xff]
        %v7424 = vld [vmem:[%s7416 + $0x38] sm:$0xff]
        %v7425 = vld [vmem:[%s7416 + $0x40] sm:$0xff]
        %v7426 = vld [vmem:[%s7416 + $0x48] sm:$0xff]
        %v7427 = vld [vmem:[%s7416 + $0x50] sm:$0xff]
        %v7428 = vld [vmem:[%s7416 + $0x58] sm:$0xff]
        %v7429 = vld [vmem:[%s7416 + $0x60] sm:$0xff]
        %v7430 = vld [vmem:[%s7416 + $0x68] sm:$0xff]
        %v7431 = vld [vmem:[%s7416 + $0x70] sm:$0xff]
        %v7432 = vld [vmem:[%s7416 + $0x78] sm:$0xff]
        %7433 = vmatprep.subr.mxu0 0.0
        %7434 = vmatpush1.msra.mxu0 %v7417
        %7435 = vmatprep.subr.mxu0 0.0
        %7436 = vmatpush1.msra.mxu0 %v7418
        %7437 = vmatprep.subr.mxu0 0.0
        %7438 = vmatpush1.msra.mxu0 %v7419
        %7439 = vmatprep.subr.mxu0 0.0
        %7440 = vmatpush1.msra.mxu0 %v7420
        %7441 = vmatprep.subr.mxu0 0.0
        %7442 = vmatpush1.msra.mxu0 %v7421
        %7443 = vmatprep.subr.mxu0 0.0
        %7444 = vmatpush1.msra.mxu0 %v7422
        %7445 = vmatprep.subr.mxu0 0.0
        %7446 = vmatpush1.msra.mxu0 %v7423
        %7447 = vmatprep.subr.mxu0 0.0
        %7448 = vmatpush1.msra.mxu0 %v7424
        %7449 = vmatprep.subr.mxu0 0.0
        %7450 = vmatpush1.msra.mxu0 %v7425
        %7451 = vmatprep.subr.mxu0 0.0
        %7452 = vmatpush1.msra.mxu0 %v7426
        %7453 = vmatprep.subr.mxu0 0.0
        %7454 = vmatpush1.msra.mxu0 %v7427
        %7455 = vmatprep.subr.mxu0 0.0
        %7456 = vmatpush1.msra.mxu0 %v7428
        %7457 = vmatprep.subr.mxu0 0.0
        %7458 = vmatpush1.msra.mxu0 %v7429
        %7459 = vmatprep.subr.mxu0 0.0
        %7460 = vmatpush1.msra.mxu0 %v7430
        %7461 = vmatprep.subr.mxu0 0.0
        %7462 = vmatpush1.msra.mxu0 %v7431
        %7463 = vmatprep.subr.mxu0 0.0
        %7464 = vmatpush1.msra.mxu0 %v7432
        %7465 = vmatprep.subr.mxu0 0.0
        %7466 = vmatpush1.msra.mxu0 0.0
        %7467 = vmatprep.subr.mxu0 0.0
        %7468 = vmatpush1.msra.mxu0 0.0
        %7469 = vmatprep.subr.mxu0 0.0
        %7470 = vmatpush1.msra.mxu0 0.0
        %7471 = vmatprep.subr.mxu0 0.0
        %7472 = vmatpush1.msra.mxu0 0.0
        %7473 = vmatprep.subr.mxu0 0.0
        %7474 = vmatpush1.msra.mxu0 0.0
        %7475 = vmatprep.subr.mxu0 0.0
        %7476 = vmatpush1.msra.mxu0 0.0
        %7477 = vmatprep.subr.mxu0 0.0
        %7478 = vmatpush1.msra.mxu0 0.0
        %7479 = vmatprep.subr.mxu0 0.0
        %7480 = vmatpush1.msra.mxu0 0.0
        %7481 = vmatprep.subr.mxu0 0.0
        %7482 = vmatpush1.msra.mxu0 0.0
        %7483 = vmatprep.subr.mxu0 0.0
        %7484 = vmatpush1.msra.mxu0 0.0
        %7485 = vmatprep.subr.mxu0 0.0
        %7486 = vmatpush1.msra.mxu0 0.0
        %7487 = vmatprep.subr.mxu0 0.0
        %7488 = vmatpush1.msra.mxu0 0.0
        %7489 = vmatprep.subr.mxu0 0.0
        %7490 = vmatpush1.msra.mxu0 0.0
        %7491 = vmatprep.subr.mxu0 0.0
        %7492 = vmatpush1.msra.mxu0 0.0
        %7493 = vmatprep.subr.mxu0 0.0
        %7494 = vmatpush1.msra.mxu0 0.0
        %7495 = vmatprep.subr.mxu0 0.0
        %7496 = vmatpush1.msra.mxu0 0.0
        %7497 = vmatprep.mubr.f32.mxu0 0.0
        %7498 = vmatmul.mubr.f32.gmra.mrb[0].mxu0 %v7384
        %v7499 = vpop.f32.mrb[0].mxu0
        %v7500 = vadd.f32 0.0, %v7499
        %v7501 = vpop.f32.mrb[0].mxu0
        %7502 = vmatprep.mubr.f32.mxu0 0.0
        %7503 = vmatmul.mubr.f32.gmra.mrb[0].mxu0 %v7385
        %v7504 = vpop.f32.mrb[0].mxu0
        %v7505 = vadd.f32 0.0, %v7504
        %v7506 = vpop.f32.mrb[0].mxu0
        %7507 = vmatprep.mubr.f32.mxu0 0.0
        %7508 = vmatmul.mubr.f32.gmra.mrb[0].mxu0 %v7386
        %v7509 = vpop.f32.mrb[0].mxu0
        %v7510 = vadd.f32 0.0, %v7509
        %v7511 = vpop.f32.mrb[0].mxu0
        %7512 = vmatprep.mubr.f32.mxu0 0.0
        %7513 = vmatmul.mubr.f32.gmra.mrb[0].mxu0 %v7387
        %v7514 = vpop.f32.mrb[0].mxu0
        %v7515 = vadd.f32 0.0, %v7514
        %v7516 = vpop.f32.mrb[0].mxu0
        %7517 = vmatprep.mubr.f32.mxu0 0.0
        %7518 = vmatmul.mubr.f32.gmra.mrb[0].mxu0 %v7388
        %v7519 = vpop.f32.mrb[0].mxu0
        %v7520 = vadd.f32 0.0, %v7519
        %v7521 = vpop.f32.mrb[0].mxu0
        %7522 = vmatprep.mubr.f32.mxu0 0.0
        %7523 = vmatmul.mubr.f32.gmra.mrb[0].mxu0 %v7389
        %v7524 = vpop.f32.mrb[0].mxu0
        %v7525 = vadd.f32 0.0, %v7524
        %v7526 = vpop.f32.mrb[0].mxu0
        %7527 = vmatprep.mubr.f32.mxu0 0.0
        %7528 = vmatmul.mubr.f32.gmra.mrb[0].mxu0 %v7390
        %v7529 = vpop.f32.mrb[0].mxu0
        %v7530 = vadd.f32 0.0, %v7529
        %v7531 = vpop.f32.mrb[0].mxu0
        %7532 = vmatprep.mubr.f32.mxu0 0.0
        %7533 = vmatmul.mubr.f32.gmra.mrb[0].mxu0 %v7391
        %v7534 = vpop.f32.mrb[0].mxu0
        %v7535 = vadd.f32 0.0, %v7534
        %v7536 = vpop.f32.mrb[0].mxu0
        %7537 = vmatprep.mubr.f32.mxu0 0.0
        %7538 = vmatmul.mubr.f32.gmra.mrb[0].mxu0 %v7392
        %v7539 = vpop.f32.mrb[0].mxu0
        %v7540 = vadd.f32 0.0, %v7539
        %v7541 = vpop.f32.mrb[0].mxu0
        %7542 = vmatprep.mubr.f32.mxu0 0.0
        %7543 = vmatmul.mubr.f32.gmra.mrb[0].mxu0 %v7393
        %v7544 = vpop.f32.mrb[0].mxu0
        %v7545 = vadd.f32 0.0, %v7544
        %v7546 = vpop.f32.mrb[0].mxu0
        %7547 = vmatprep.mubr.f32.mxu0 0.0
        %7548 = vmatmul.mubr.f32.gmra.mrb[0].mxu0 %v7394
        %v7549 = vpop.f32.mrb[0].mxu0
        %v7550 = vadd.f32 0.0, %v7549
        %v7551 = vpop.f32.mrb[0].mxu0
        %7552 = vmatprep.mubr.f32.mxu0 0.0
        %7553 = vmatmul.mubr.f32.gmra.mrb[0].mxu0 %v7395
        %v7554 = vpop.f32.mrb[0].mxu0
        %v7555 = vadd.f32 0.0, %v7554
        %v7556 = vpop.f32.mrb[0].mxu0
        %7557 = vmatprep.mubr.f32.mxu0 0.0
        %7558 = vmatmul.mubr.f32.gmra.mrb[0].mxu0 %v7396
        %v7559 = vpop.f32.mrb[0].mxu0
        %v7560 = vadd.f32 0.0, %v7559
        %v7561 = vpop.f32.mrb[0].mxu0
        %7562 = vmatprep.mubr.f32.mxu0 0.0
        %7563 = vmatmul.mubr.f32.gmra.mrb[0].mxu0 %v7397
        %v7564 = vpop.f32.mrb[0].mxu0
        %v7565 = vadd.f32 0.0, %v7564
        %v7566 = vpop.f32.mrb[0].mxu0
        %7567 = vmatprep.mubr.f32.mxu0 0.0
        %7568 = vmatmul.mubr.f32.gmra.mrb[0].mxu0 %v7398
        %v7569 = vpop.f32.mrb[0].mxu0
        %v7570 = vadd.f32 0.0, %v7569
        %v7571 = vpop.f32.mrb[0].mxu0
        %7572 = vmatprep.mubr.f32.mxu0 0.0
        %7573 = vmatmul.mubr.f32.gmra.mrb[0].mxu0 %v7399
        %v7574 = vpop.f32.mrb[0].mxu0
        %v7575 = vadd.f32 0.0, %v7574
        %v7576 = vpop.f32.mrb[0].mxu0
        %7577 = vmatprep.mubr.f32.mxu0 0.0
        %7578 = vmatmul.mubr.f32.gmra.mrb[0].mxu0 %v7400
        %v7579 = vpop.f32.mrb[0].mxu0
        %v7580 = vadd.f32 0.0, %v7579
        %v7581 = vpop.f32.mrb[0].mxu0
        %7582 = vmatprep.mubr.f32.mxu0 0.0
        %7583 = vmatmul.mubr.f32.gmra.mrb[0].mxu0 %v7401
        %v7584 = vpop.f32.mrb[0].mxu0
        %v7585 = vadd.f32 0.0, %v7584
        %v7586 = vpop.f32.mrb[0].mxu0
        %7587 = vmatprep.mubr.f32.mxu0 0.0
        %7588 = vmatmul.mubr.f32.gmra.mrb[0].mxu0 %v7402
        %v7589 = vpop.f32.mrb[0].mxu0
        %v7590 = vadd.f32 0.0, %v7589
        %v7591 = vpop.f32.mrb[0].mxu0
        %7592 = vmatprep.mubr.f32.mxu0 0.0
        %7593 = vmatmul.mubr.f32.gmra.mrb[0].mxu0 %v7403
        %v7594 = vpop.f32.mrb[0].mxu0
        %v7595 = vadd.f32 0.0, %v7594
        %v7596 = vpop.f32.mrb[0].mxu0
        %7597 = vmatprep.mubr.f32.mxu0 0.0
        %7598 = vmatmul.mubr.f32.gmra.mrb[0].mxu0 %v7404
        %v7599 = vpop.f32.mrb[0].mxu0
        %v7600 = vadd.f32 0.0, %v7599
        %v7601 = vpop.f32.mrb[0].mxu0
        %7602 = vmatprep.mubr.f32.mxu0 0.0
        %7603 = vmatmul.mubr.f32.gmra.mrb[0].mxu0 %v7405
        %v7604 = vpop.f32.mrb[0].mxu0
        %v7605 = vadd.f32 0.0, %v7604
        %v7606 = vpop.f32.mrb[0].mxu0
        %7607 = vmatprep.mubr.f32.mxu0 0.0
        %7608 = vmatmul.mubr.f32.gmra.mrb[0].mxu0 %v7406
        %v7609 = vpop.f32.mrb[0].mxu0
        %v7610 = vadd.f32 0.0, %v7609
        %v7611 = vpop.f32.mrb[0].mxu0
        %7612 = vmatprep.mubr.f32.mxu0 0.0
        %7613 = vmatmul.mubr.f32.gmra.mrb[0].mxu0 %v7407
        %v7614 = vpop.f32.mrb[0].mxu0
        %v7615 = vadd.f32 0.0, %v7614
        %v7616 = vpop.f32.mrb[0].mxu0
        %7617 = vmatprep.mubr.f32.mxu0 0.0
        %7618 = vmatmul.mubr.f32.gmra.mrb[0].mxu0 %v7408
        %v7619 = vpop.f32.mrb[0].mxu0
        %v7620 = vadd.f32 0.0, %v7619
        %v7621 = vpop.f32.mrb[0].mxu0
        %7622 = vmatprep.mubr.f32.mxu0 0.0
        %7623 = vmatmul.mubr.f32.gmra.mrb[0].mxu0 %v7409
        %v7624 = vpop.f32.mrb[0].mxu0
        %v7625 = vadd.f32 0.0, %v7624
        %v7626 = vpop.f32.mrb[0].mxu0
        %7627 = vmatprep.mubr.f32.mxu0 0.0
        %7628 = vmatmul.mubr.f32.gmra.mrb[0].mxu0 %v7410
        %v7629 = vpop.f32.mrb[0].mxu0
        %v7630 = vadd.f32 0.0, %v7629
        %v7631 = vpop.f32.mrb[0].mxu0
        %7632 = vmatprep.mubr.f32.mxu0 0.0
        %7633 = vmatmul.mubr.f32.gmra.mrb[0].mxu0 %v7411
        %v7634 = vpop.f32.mrb[0].mxu0
        %v7635 = vadd.f32 0.0, %v7634
        %v7636 = vpop.f32.mrb[0].mxu0
        %7637 = vmatprep.mubr.f32.mxu0 0.0
        %7638 = vmatmul.mubr.f32.gmra.mrb[0].mxu0 %v7412
        %v7639 = vpop.f32.mrb[0].mxu0
        %v7640 = vadd.f32 0.0, %v7639
        %v7641 = vpop.f32.mrb[0].mxu0
        %7642 = vmatprep.mubr.f32.mxu0 0.0
        %7643 = vmatmul.mubr.f32.gmra.mrb[0].mxu0 %v7413
        %v7644 = vpop.f32.mrb[0].mxu0
        %v7645 = vadd.f32 0.0, %v7644
        %v7646 = vpop.f32.mrb[0].mxu0
        %7647 = vmatprep.mubr.f32.mxu0 0.0
        %7648 = vmatmul.mubr.f32.gmra.mrb[0].mxu0 %v7414
        %v7649 = vpop.f32.mrb[0].mxu0
        %v7650 = vadd.f32 0.0, %v7649
        %v7651 = vpop.f32.mrb[0].mxu0
        %7652 = vmatprep.mubr.f32.mxu0 0.0
        %7653 = vmatmul.mubr.f32.gmra.mrb[0].mxu0 %v7415
        %v7654 = vpop.f32.mrb[0].mxu0
        %v7655 = vadd.f32 0.0, %v7654
        %v7656 = vpop.f32.mrb[0].mxu0
        %7657 = vdwg.mxu0
        %v7658 = vadd.f32 %v7352, %v7500
        %v7659 = vadd.f32 %v7353, %v7505
        %v7660 = vadd.f32 %v7354, %v7510
        %v7661 = vadd.f32 %v7355, %v7515
        %v7662 = vadd.f32 %v7356, %v7520
        %v7663 = vadd.f32 %v7357, %v7525
        %v7664 = vadd.f32 %v7358, %v7530
        %v7665 = vadd.f32 %v7359, %v7535
        %v7666 = vadd.f32 %v7360, %v7540
        %v7667 = vadd.f32 %v7361, %v7545
        %v7668 = vadd.f32 %v7362, %v7550
        %v7669 = vadd.f32 %v7363, %v7555
        %v7670 = vadd.f32 %v7364, %v7560
        %v7671 = vadd.f32 %v7365, %v7565
        %v7672 = vadd.f32 %v7366, %v7570
        %v7673 = vadd.f32 %v7367, %v7575
        %v7674 = vadd.f32 %v7368, %v7580
        %v7675 = vadd.f32 %v7369, %v7585
        %v7676 = vadd.f32 %v7370, %v7590
        %v7677 = vadd.f32 %v7371, %v7595
        %v7678 = vadd.f32 %v7372, %v7600
        %v7679 = vadd.f32 %v7373, %v7605
        %v7680 = vadd.f32 %v7374, %v7610
        %v7681 = vadd.f32 %v7375, %v7615
        %v7682 = vadd.f32 %v7376, %v7620
        %v7683 = vadd.f32 %v7377, %v7625
        %v7684 = vadd.f32 %v7378, %v7630
        %v7685 = vadd.f32 %v7379, %v7635
        %v7686 = vadd.f32 %v7380, %v7640
        %v7687 = vadd.f32 %v7381, %v7645
        %v7688 = vadd.f32 %v7382, %v7650
        %v7689 = vadd.f32 %v7383, %v7655
        %v7690 = vld [vmem:[%s9] sm:$0x1]
        %v7692 = vlaneseq
        %v7693 = vshrl.u32 %v7692, 7
        %v7694 = vsub.s32 0, %v7693
        %v7695 = vrot.slane %v7690, %v7694
        %v7697 = vadd.f32 %v7658, %v7695
        %v7698 = vadd.f32 %v7659, %v7695
        %v7699 = vadd.f32 %v7660, %v7695
        %v7700 = vadd.f32 %v7661, %v7695
        %v7701 = vadd.f32 %v7662, %v7695
        %v7702 = vadd.f32 %v7663, %v7695
        %v7703 = vadd.f32 %v7664, %v7695
        %v7704 = vadd.f32 %v7665, %v7695
        %v7705 = vadd.f32 %v7666, %v7695
        %v7706 = vadd.f32 %v7667, %v7695
        %v7707 = vadd.f32 %v7668, %v7695
        %v7708 = vadd.f32 %v7669, %v7695
        %v7709 = vadd.f32 %v7670, %v7695
        %v7710 = vadd.f32 %v7671, %v7695
        %v7711 = vadd.f32 %v7672, %v7695
        %v7712 = vadd.f32 %v7673, %v7695
        %v7713 = vadd.f32 %v7674, %v7695
        %v7714 = vadd.f32 %v7675, %v7695
        %v7715 = vadd.f32 %v7676, %v7695
        %v7716 = vadd.f32 %v7677, %v7695
        %v7717 = vadd.f32 %v7678, %v7695
        %v7718 = vadd.f32 %v7679, %v7695
        %v7719 = vadd.f32 %v7680, %v7695
        %v7720 = vadd.f32 %v7681, %v7695
        %v7721 = vadd.f32 %v7682, %v7695
        %v7722 = vadd.f32 %v7683, %v7695
        %v7723 = vadd.f32 %v7684, %v7695
        %v7724 = vadd.f32 %v7685, %v7695
        %v7725 = vadd.f32 %v7686, %v7695
        %v7726 = vadd.f32 %v7687, %v7695
        %v7727 = vadd.f32 %v7688, %v7695
        %v7728 = vadd.f32 %v7689, %v7695
        %v7729 = vmax.f32 %v7697, 0.0
        %v7730 = vmax.f32 %v7698, 0.0
        %v7731 = vmax.f32 %v7699, 0.0
        %v7732 = vmax.f32 %v7700, 0.0
        %v7733 = vmax.f32 %v7701, 0.0
        %v7734 = vmax.f32 %v7702, 0.0
        %v7735 = vmax.f32 %v7703, 0.0
        %v7736 = vmax.f32 %v7704, 0.0
        %v7737 = vmax.f32 %v7705, 0.0
        %v7738 = vmax.f32 %v7706, 0.0
        %v7739 = vmax.f32 %v7707, 0.0
        %v7740 = vmax.f32 %v7708, 0.0
        %v7741 = vmax.f32 %v7709, 0.0
        %v7742 = vmax.f32 %v7710, 0.0
        %v7743 = vmax.f32 %v7711, 0.0
        %v7744 = vmax.f32 %v7712, 0.0
        %v7745 = vmax.f32 %v7713, 0.0
        %v7746 = vmax.f32 %v7714, 0.0
        %v7747 = vmax.f32 %v7715, 0.0
        %v7748 = vmax.f32 %v7716, 0.0
        %v7749 = vmax.f32 %v7717, 0.0
        %v7750 = vmax.f32 %v7718, 0.0
        %v7751 = vmax.f32 %v7719, 0.0
        %v7752 = vmax.f32 %v7720, 0.0
        %v7753 = vmax.f32 %v7721, 0.0
        %v7754 = vmax.f32 %v7722, 0.0
        %v7755 = vmax.f32 %v7723, 0.0
        %v7756 = vmax.f32 %v7724, 0.0
        %v7757 = vmax.f32 %v7725, 0.0
        %v7758 = vmax.f32 %v7726, 0.0
        %v7759 = vmax.f32 %v7727, 0.0
        %v7760 = vmax.f32 %v7728, 0.0
        %7761 = vst [vmem:[%s392] sm:$0xff] %v7729
        %7762 = vst [vmem:[%s392 + $0x8] sm:$0xff] %v7730
        %7763 = vst [vmem:[%s392 + $0x10] sm:$0xff] %v7731
        %7764 = vst [vmem:[%s392 + $0x18] sm:$0xff] %v7732
        %7765 = vst [vmem:[%s392 + $0x20] sm:$0xff] %v7733
        %7766 = vst [vmem:[%s392 + $0x28] sm:$0xff] %v7734
        %7767 = vst [vmem:[%s392 + $0x30] sm:$0xff] %v7735
        %7768 = vst [vmem:[%s392 + $0x38] sm:$0xff] %v7736
        %7769 = vst [vmem:[%s392 + $0x40] sm:$0xff] %v7737
        %7770 = vst [vmem:[%s392 + $0x48] sm:$0xff] %v7738
        %7771 = vst [vmem:[%s392 + $0x50] sm:$0xff] %v7739
        %7772 = vst [vmem:[%s392 + $0x58] sm:$0xff] %v7740
        %7773 = vst [vmem:[%s392 + $0x60] sm:$0xff] %v7741
        %7774 = vst [vmem:[%s392 + $0x68] sm:$0xff] %v7742
        %7775 = vst [vmem:[%s392 + $0x70] sm:$0xff] %v7743
        %7776 = vst [vmem:[%s392 + $0x78] sm:$0xff] %v7744
        %7777 = vst [vmem:[%s392 + $0x80] sm:$0xff] %v7745
        %7778 = vst [vmem:[%s392 + $0x88] sm:$0xff] %v7746
        %7779 = vst [vmem:[%s392 + $0x90] sm:$0xff] %v7747
        %7780 = vst [vmem:[%s392 + $0x98] sm:$0xff] %v7748
        %7781 = vst [vmem:[%s392 + $0xa0] sm:$0xff] %v7749
        %7782 = vst [vmem:[%s392 + $0xa8] sm:$0xff] %v7750
        %7783 = vst [vmem:[%s392 + $0xb0] sm:$0xff] %v7751
        %7784 = vst [vmem:[%s392 + $0xb8] sm:$0xff] %v7752
        %7785 = vst [vmem:[%s392 + $0xc0] sm:$0xff] %v7753
        %7786 = vst [vmem:[%s392 + $0xc8] sm:$0xff] %v7754
        %7787 = vst [vmem:[%s392 + $0xd0] sm:$0xff] %v7755
        %7788 = vst [vmem:[%s392 + $0xd8] sm:$0xff] %v7756
        %7789 = vst [vmem:[%s392 + $0xe0] sm:$0xff] %v7757
        %7790 = vst [vmem:[%s392 + $0xe8] sm:$0xff] %v7758
        %7791 = vst [vmem:[%s392 + $0xf0] sm:$0xff] %v7759
        %7792 = vst [vmem:[%s392 + $0xf8] sm:$0xff] %v7760
        %v7793 = vld [vmem:[%s351] sm:$0xff]
        %v7794 = vld [vmem:[%s351 + $0x8] sm:$0xff]
        %v7795 = vld [vmem:[%s351 + $0x10] sm:$0xff]
        %v7796 = vld [vmem:[%s351 + $0x18] sm:$0xff]
        %v7797 = vld [vmem:[%s351 + $0x20] sm:$0xff]
        %v7798 = vld [vmem:[%s351 + $0x28] sm:$0xff]
        %v7799 = vld [vmem:[%s351 + $0x30] sm:$0xff]
        %v7800 = vld [vmem:[%s351 + $0x38] sm:$0xff]
        %v7801 = vld [vmem:[%s351 + $0x40] sm:$0xff]
        %v7802 = vld [vmem:[%s351 + $0x48] sm:$0xff]
        %v7803 = vld [vmem:[%s351 + $0x50] sm:$0xff]
        %v7804 = vld [vmem:[%s351 + $0x58] sm:$0xff]
        %v7805 = vld [vmem:[%s351 + $0x60] sm:$0xff]
        %v7806 = vld [vmem:[%s351 + $0x68] sm:$0xff]
        %v7807 = vld [vmem:[%s351 + $0x70] sm:$0xff]
        %v7808 = vld [vmem:[%s351 + $0x78] sm:$0xff]
        %v7809 = vld [vmem:[%s351 + $0x80] sm:$0xff]
        %v7810 = vld [vmem:[%s351 + $0x88] sm:$0xff]
        %v7811 = vld [vmem:[%s351 + $0x90] sm:$0xff]
        %v7812 = vld [vmem:[%s351 + $0x98] sm:$0xff]
        %v7813 = vld [vmem:[%s351 + $0xa0] sm:$0xff]
        %v7814 = vld [vmem:[%s351 + $0xa8] sm:$0xff]
        %v7815 = vld [vmem:[%s351 + $0xb0] sm:$0xff]
        %v7816 = vld [vmem:[%s351 + $0xb8] sm:$0xff]
        %v7817 = vld [vmem:[%s351 + $0xc0] sm:$0xff]
        %v7818 = vld [vmem:[%s351 + $0xc8] sm:$0xff]
        %v7819 = vld [vmem:[%s351 + $0xd0] sm:$0xff]
        %v7820 = vld [vmem:[%s351 + $0xd8] sm:$0xff]
        %v7821 = vld [vmem:[%s351 + $0xe0] sm:$0xff]
        %v7822 = vld [vmem:[%s351 + $0xe8] sm:$0xff]
        %v7823 = vld [vmem:[%s351 + $0xf0] sm:$0xff]
        %v7824 = vld [vmem:[%s351 + $0xf8] sm:$0xff]
        %7857 = vrot.lane.b32.xlu0 %v7793, 32
        %v7858 = vpop.permute.xlu0 %7857
        %7859 = vrot.lane.b32.xlu0 %v7794, 32
        %v7860 = vpop.permute.xlu0 %7859
        %7861 = vrot.lane.b32.xlu0 %v7795, 32
        %v7862 = vpop.permute.xlu0 %7861
        %7863 = vrot.lane.b32.xlu0 %v7796, 32
        %v7864 = vpop.permute.xlu0 %7863
        %7865 = vrot.lane.b32.xlu0 %v7797, 32
        %v7866 = vpop.permute.xlu0 %7865
        %7867 = vrot.lane.b32.xlu0 %v7798, 32
        %v7868 = vpop.permute.xlu0 %7867
        %7869 = vrot.lane.b32.xlu0 %v7799, 32
        %v7870 = vpop.permute.xlu0 %7869
        %7871 = vrot.lane.b32.xlu0 %v7800, 32
        %v7872 = vpop.permute.xlu0 %7871
        %7873 = vrot.lane.b32.xlu0 %v7801, 32
        %v7874 = vpop.permute.xlu0 %7873
        %7875 = vrot.lane.b32.xlu0 %v7802, 32
        %v7876 = vpop.permute.xlu0 %7875
        %7877 = vrot.lane.b32.xlu0 %v7803, 32
        %v7878 = vpop.permute.xlu0 %7877
        %7879 = vrot.lane.b32.xlu0 %v7804, 32
        %v7880 = vpop.permute.xlu0 %7879
        %7881 = vrot.lane.b32.xlu0 %v7805, 32
        %v7882 = vpop.permute.xlu0 %7881
        %7883 = vrot.lane.b32.xlu0 %v7806, 32
        %v7884 = vpop.permute.xlu0 %7883
        %7885 = vrot.lane.b32.xlu0 %v7807, 32
        %v7886 = vpop.permute.xlu0 %7885
        %7887 = vrot.lane.b32.xlu0 %v7808, 32
        %v7888 = vpop.permute.xlu0 %7887
        %7889 = vrot.lane.b32.xlu0 %v7809, 32
        %v7890 = vpop.permute.xlu0 %7889
        %7891 = vrot.lane.b32.xlu0 %v7810, 32
        %v7892 = vpop.permute.xlu0 %7891
        %7893 = vrot.lane.b32.xlu0 %v7811, 32
        %v7894 = vpop.permute.xlu0 %7893
        %7895 = vrot.lane.b32.xlu0 %v7812, 32
        %v7896 = vpop.permute.xlu0 %7895
        %7897 = vrot.lane.b32.xlu0 %v7813, 32
        %v7898 = vpop.permute.xlu0 %7897
        %7899 = vrot.lane.b32.xlu0 %v7814, 32
        %v7900 = vpop.permute.xlu0 %7899
        %7901 = vrot.lane.b32.xlu0 %v7815, 32
        %v7902 = vpop.permute.xlu0 %7901
        %7903 = vrot.lane.b32.xlu0 %v7816, 32
        %v7904 = vpop.permute.xlu0 %7903
        %7905 = vrot.lane.b32.xlu0 %v7817, 32
        %v7906 = vpop.permute.xlu0 %7905
        %7907 = vrot.lane.b32.xlu0 %v7818, 32
        %v7908 = vpop.permute.xlu0 %7907
        %7909 = vrot.lane.b32.xlu0 %v7819, 32
        %v7910 = vpop.permute.xlu0 %7909
        %7911 = vrot.lane.b32.xlu0 %v7820, 32
        %v7912 = vpop.permute.xlu0 %7911
        %7913 = vrot.lane.b32.xlu0 %v7821, 32
        %v7914 = vpop.permute.xlu0 %7913
        %7915 = vrot.lane.b32.xlu0 %v7822, 32
        %v7916 = vpop.permute.xlu0 %7915
        %7917 = vrot.lane.b32.xlu0 %v7823, 32
        %v7918 = vpop.permute.xlu0 %7917
        %7919 = vrot.lane.b32.xlu0 %v7824, 32
        %v7920 = vpop.permute.xlu0 %7919
        %vm7953 = vcmask 671360
        %7954 = vst.msk [vmem:[%s392] sm:$0xff] %vm7953, %v7858
        %7955 = vst.msk [vmem:[%s392 + $0x8] sm:$0xff] %vm7953, %v7860
        %7956 = vst.msk [vmem:[%s392 + $0x10] sm:$0xff] %vm7953, %v7862
        %7957 = vst.msk [vmem:[%s392 + $0x18] sm:$0xff] %vm7953, %v7864
        %7958 = vst.msk [vmem:[%s392 + $0x20] sm:$0xff] %vm7953, %v7866
        %7959 = vst.msk [vmem:[%s392 + $0x28] sm:$0xff] %vm7953, %v7868
        %7960 = vst.msk [vmem:[%s392 + $0x30] sm:$0xff] %vm7953, %v7870
        %7961 = vst.msk [vmem:[%s392 + $0x38] sm:$0xff] %vm7953, %v7872
        %7962 = vst.msk [vmem:[%s392 + $0x40] sm:$0xff] %vm7953, %v7874
        %7963 = vst.msk [vmem:[%s392 + $0x48] sm:$0xff] %vm7953, %v7876
        %7964 = vst.msk [vmem:[%s392 + $0x50] sm:$0xff] %vm7953, %v7878
        %7965 = vst.msk [vmem:[%s392 + $0x58] sm:$0xff] %vm7953, %v7880
        %7966 = vst.msk [vmem:[%s392 + $0x60] sm:$0xff] %vm7953, %v7882
        %7967 = vst.msk [vmem:[%s392 + $0x68] sm:$0xff] %vm7953, %v7884
        %7968 = vst.msk [vmem:[%s392 + $0x70] sm:$0xff] %vm7953, %v7886
        %7969 = vst.msk [vmem:[%s392 + $0x78] sm:$0xff] %vm7953, %v7888
        %7970 = vst.msk [vmem:[%s392 + $0x80] sm:$0xff] %vm7953, %v7890
        %7971 = vst.msk [vmem:[%s392 + $0x88] sm:$0xff] %vm7953, %v7892
        %7972 = vst.msk [vmem:[%s392 + $0x90] sm:$0xff] %vm7953, %v7894
        %7973 = vst.msk [vmem:[%s392 + $0x98] sm:$0xff] %vm7953, %v7896
        %7974 = vst.msk [vmem:[%s392 + $0xa0] sm:$0xff] %vm7953, %v7898
        %7975 = vst.msk [vmem:[%s392 + $0xa8] sm:$0xff] %vm7953, %v7900
        %7976 = vst.msk [vmem:[%s392 + $0xb0] sm:$0xff] %vm7953, %v7902
        %7977 = vst.msk [vmem:[%s392 + $0xb8] sm:$0xff] %vm7953, %v7904
        %7978 = vst.msk [vmem:[%s392 + $0xc0] sm:$0xff] %vm7953, %v7906
        %7979 = vst.msk [vmem:[%s392 + $0xc8] sm:$0xff] %vm7953, %v7908
        %7980 = vst.msk [vmem:[%s392 + $0xd0] sm:$0xff] %vm7953, %v7910
        %7981 = vst.msk [vmem:[%s392 + $0xd8] sm:$0xff] %vm7953, %v7912
        %7982 = vst.msk [vmem:[%s392 + $0xe0] sm:$0xff] %vm7953, %v7914
        %7983 = vst.msk [vmem:[%s392 + $0xe8] sm:$0xff] %vm7953, %v7916
        %7984 = vst.msk [vmem:[%s392 + $0xf0] sm:$0xff] %vm7953, %v7918
        %7985 = vst.msk [vmem:[%s392 + $0xf8] sm:$0xff] %vm7953, %v7920
        %s7986 = sand.u32 %s255, 1
        %s7987 = scalar_lea.sflag [#allocation6], %s7986
        %s7988 = sand.u32 %s255, 1
        %s7989 = smul.addr %s7988, 256
        %s7990 = scalar_lea.vmem [#allocation7], %s7989
        // Predicated region
        $region65: #{tpu_custom_call.1} parent=59 // pred_check
          %p7991 = pneg %p265
        $region66: #{tpu_custom_call.1} parent=59 // pred_check_branch
          %7993 = sbr.rel (%p7991) target = $region68
        $region67: #{tpu_custom_call.1} parent=59 // pred_region
          %s7995 = ssub.s32 4096, 4096
          %7996 = vsyncadd %s7987, %s7995
          %s7997 = smul.addr %s27, 32
          %s7998 = smul.addr %s7997, 128
          %s7999 = scalar_lea.hbm %s10, %s7998
          %s8000 = sshll.u32 %s7990, 4
          %s8001 = int_to_ptr.vmem [resolvable:$true] %s8000
          %8006 = dma.vmem_to_hbm [thread:$0]  %s8001, 4096, %s7999, %s7987, 128, 128, 8
        $region68: #{tpu_custom_call.1} parent=59 // pred_fallthru
          _
      $region60: #{tpu_custom_call.1} parent=5 // pred_fallthru
        _
      %p8007 = scmp.le.s32.totalorder 2, %s22
      // Predicated region
      $region69: #{tpu_custom_call.1} parent=5 // pred_check
        %p8008 = pneg %p8007
      $region70: #{tpu_custom_call.1} parent=5 // pred_check_branch
        %8010 = sbr.rel (%p8008) target = $region72
      $region71: #{tpu_custom_call.1} parent=5 // pred_region
        %s8011 = ssub.s32 %s22, 2
        // Predicated region
        $region73: #{tpu_custom_call.1} parent=71 // pred_check
          %p8012 = pneg %p271
        $region74: #{tpu_custom_call.1} parent=71 // pred_check_branch
          %8014 = sbr.rel (%p8012) target = $region76
        $region75: #{tpu_custom_call.1} parent=71 // pred_region
          %s8015 = sand.u32 %s256, 1
          %s8016 = scalar_lea.sflag [#allocation6], %s8015
          %s8017 = sand.u32 %s256, 1
          %s8018 = smul.addr %s8017, 256
          %s8019 = scalar_lea.vmem [#allocation7], %s8018
          %8020 = dma.done %s8016, 4096
        $region76: #{tpu_custom_call.1} parent=71 // pred_fallthru
          _
      $region72: #{tpu_custom_call.1} parent=5 // pred_fallthru
        _
    $region6: #{tpu_custom_call.1} parent=1 // loop_footer
      %s26 = sadd.s32 1, %s22
    $region7: #{tpu_custom_call.1} parent=1 // loop_footer_branch
      %21 = sbr.rel target = $region3
    $region8: #{tpu_custom_call.1} parent=1 // loop_exit
      _
    %8021 = vsyncpa [#allocation5], 1
    %s8022 = scalar_lea.sflag [#allocation5], 1
    %8023 = vsyncpa %s8022, 1
    %8024 = vsyncpa [#allocation6], 1
    %s8025 = scalar_lea.sflag [#allocation6], 1
    %8026 = vsyncpa %s8025, 1

</llo_original>
